<compile_context>
chip_gen: v7x
topology: tpu7x:2x2x1
jax: 0.10.0
libtpu: 0.0.40
codegen_flags: <defaults>
</compile_context>

<pallas_src>
import functools

import jax
import jax.numpy as jnp
from jax.experimental import pallas as pl


N_KHKW = 16           # conv2 taps (4x4 kernel)
C1_OUT = 16           # conv1 output channels
C2_OUT = 32           # conv2 output channels
K1_FEAT = 4 * 8 * 8   # conv1 patch features = 256 (c1, r, s)
OH2 = OW2 = 9         # conv2 output spatial size
FC1_IN = C2_OUT * OH2 * OW2   # 2592
FC1_OUT = 256


# ---------------------------------------------------------------------------
# Pallas kernels
# ---------------------------------------------------------------------------

def _conv_stack_kernel(p1_ref, w1_ref, b1_ref, w2_ref, b2_ref, o_ref, *,
                       block_rows, valid_rows):
    """Fused conv1 + conv2, transposed orientation (rows = spatial, lanes = C).

    p1_ref : [16*block_rows, 256] bf16  conv1 patches, one block per conv2 tap
             (kh, kw); rows within a block are (b, oh2, ow2) padded to
             block_rows; lanes are conv1 patch features (c1, r, s).
    w1_ref : [256, 16]  bf16  conv1 weight (transposed).
    b1_ref : [1, 16]    f32
    w2_ref : [256, 32]  bf16  conv2 weight, rows ordered (kh, kw, c1).
    b2_ref : [1, 32]    f32
    o_ref  : [valid_rows, 32] bf16  y2^T = relu(conv2), rows (b, oh2, ow2).
    """
    w1 = w1_ref[...]
    b1 = b1_ref[...]
    acc = jnp.zeros((block_rows, C2_OUT), jnp.float32)
    # Static (unrolled) loop over the 16 conv2 taps.  Each iteration is one
    # MXU matmul for conv1 on that tap's patches plus one small accumulate
    # matmul against the matching 16-row slice of the conv2 weight.
    for k in range(N_KHKW):
        patches = p1_ref[pl.ds(k * block_rows, block_rows), :]        # aligned
        y1 = jnp.dot(patches, w1, preferred_element_type=jnp.float32)
        y1 = jnp.maximum(y1 + b1, 0.0).astype(jnp.bfloat16)           # relu(conv1)
        w2k = w2_ref[pl.ds(k * C1_OUT, C1_OUT), :]                    # [16, 32]
        acc = acc + jnp.dot(y1, w2k, preferred_element_type=jnp.float32)
    y2 = jnp.maximum(acc + b2_ref[...], 0.0)                          # relu(conv2)
    o_ref[...] = y2[:valid_rows, :].astype(o_ref.dtype)


def _head_kernel(act_ref, wfc1_ref, bfc1_ref, wh_ref, bh_ref, o_ref, *,
                 n_actions):
    """Fused fc1 (+relu) and dueling head.  wh_ref packs [wa | wv]."""
    h = jnp.dot(act_ref[...], wfc1_ref[...], preferred_element_type=jnp.float32)
    h = jnp.maximum(h + bfc1_ref[...], 0.0)                           # [B, 256] f32
    head = jnp.dot(h.astype(wh_ref.dtype), wh_ref[...],
                   preferred_element_type=jnp.float32) + bh_ref[...]  # [B, A+1]
    adv = head[:, :n_actions]
    val = head[:, n_actions:n_actions + 1]
    adv_mean = jnp.sum(adv, axis=1, keepdims=True) / n_actions
    o_ref[...] = (val + (adv - adv_mean)).astype(o_ref.dtype)


def conv_stack(p1dup, w1t, b1, w2t, b2, *, block_rows, valid_rows):
    """Single-invocation fused conv1+conv2 (no grid, no pipeline machinery)."""
    return pl.pallas_call(
        functools.partial(_conv_stack_kernel,
                          block_rows=block_rows, valid_rows=valid_rows),
        out_shape=jax.ShapeDtypeStruct((valid_rows, C2_OUT), jnp.bfloat16),
    )(p1dup, w1t, b1, w2t, b2)


def fc_dueling_head(act, wfc1, bfc1, whead, bhead, n_actions):
    B = act.shape[0]
    return pl.pallas_call(
        functools.partial(_head_kernel, n_actions=n_actions),
        out_shape=jax.ShapeDtypeStruct((B, n_actions), jnp.float32),
    )(act, wfc1, bfc1, whead, bhead)


# ---------------------------------------------------------------------------
# XLA prologue: conv1 im2col, duplicated per conv2 tap (fuses into a couple of
# XLA kernels; keeps every in-Pallas access contiguous and tile-aligned).
# ---------------------------------------------------------------------------

def build_conv_patches(x, block_rows):
    """x: [B, 4, 84, 84] bf16 -> P1dup^T [16*block_rows, 256]."""
    B = x.shape[0]
    # Standard conv1 im2col (stride 4, kernel 8), feature order (c1, r, s),
    # laid out per conv1 output position: [B, 20, 20, 256].
    slabs = []
    for r in range(8):
        for s in range(8):
            slabs.append(x[:, :, r:r + 77:4, s:s + 77:4])      # [B, 4, 20, 20]
    p1 = jnp.stack(slabs, axis=2)                              # [B, 4, 64, 20, 20]
    p1 = p1.transpose(0, 3, 4, 1, 2).reshape(B, 20, 20, K1_FEAT)

    # Duplicate into the 16 stride-2 shifted blocks conv2's 4x4 window needs.
    blocks = []
    for kh in range(4):
        for kw in range(4):
            blk = p1[:, kh:kh + 17:2, kw:kw + 17:2, :]         # [B, 9, 9, 256]
            blocks.append(blk.reshape(B * OH2 * OW2, K1_FEAT))
    p1dup = jnp.stack(blocks, axis=0)                          # [16, B*81, 256]
    pad = block_rows - B * OH2 * OW2
    p1dup = jnp.pad(p1dup, ((0, 0), (0, pad), (0, 0)))         # align to bf16 tiles
    return p1dup.reshape(N_KHKW * block_rows, K1_FEAT)


# ---------------------------------------------------------------------------
# DQN parameters (torch layout) + one-time packing + forward
# ---------------------------------------------------------------------------

def init_params(key, n_actions):
    def uni(k, shape, fan_in):
        bound = 1.0 / jnp.sqrt(jnp.float32(fan_in))
        return jax.random.uniform(k, shape, jnp.float32, -bound, bound)

    ks = jax.random.split(key, 10)
    return {
        "w1": uni(ks[0], (16, 4, 8, 8), 4 * 8 * 8),
        "b1": uni(ks[1], (16,), 4 * 8 * 8),
        "w2": uni(ks[2], (32, 16, 4, 4), 16 * 4 * 4),
        "b2": uni(ks[3], (32,), 16 * 4 * 4),
        "wfc1": uni(ks[4], (FC1_IN, FC1_OUT), FC1_IN),
        "bfc1": uni(ks[5], (FC1_OUT,), FC1_IN),
        "wa": uni(ks[6], (FC1_OUT, n_actions), FC1_OUT),
        "ba": uni(ks[7], (n_actions,), FC1_OUT),
        "wv": uni(ks[8], (FC1_OUT, 1), FC1_OUT),
        "bv": uni(ks[9], (1,), FC1_OUT),
    }


def pack_params(params):
    """One-time repack to MXU-friendly layouts/dtypes (outside the hot path)."""
    bf, f32 = jnp.bfloat16, jnp.float32
    # conv2 weight rows ordered (kh, kw, c1) to match the kernel's P2^T layout.
    w2t = jnp.transpose(params["w2"], (2, 3, 1, 0)).reshape(K1_FEAT, C2_OUT)
    # fc1 weight rows reordered from torch's (c2, oh, ow) to (oh, ow, c2), so
    # the conv-kernel output reshapes to the fc1 activation for free.
    wfc1 = (params["wfc1"].reshape(C2_OUT, OH2 * OW2, FC1_OUT)
            .transpose(1, 0, 2).reshape(FC1_IN, FC1_OUT))
    return {
        "w1t": params["w1"].reshape(C1_OUT, K1_FEAT).T.astype(bf),   # [256, 16]
        "b1": params["b1"].reshape(1, C1_OUT).astype(f32),
        "w2t": w2t.astype(bf),                                       # [256, 32]
        "b2": params["b2"].reshape(1, C2_OUT).astype(f32),
        "wfc1": wfc1.astype(bf),                                     # [2592, 256]
        "bfc1": params["bfc1"].reshape(1, FC1_OUT).astype(f32),
        # Pack advantage + value streams into one weight: [256, A+1]
        "whead": jnp.concatenate([params["wa"], params["wv"]], axis=1).astype(bf),
        "bhead": jnp.concatenate([params["ba"], params["bv"]]).reshape(1, -1).astype(f32),
    }


def dqn_forward(packed, x, n_actions):
    """x: [B, 4, 84, 84] float32 NCHW -> Q-values [B, n_actions] float32."""
    B = x.shape[0]
    assert x.shape[1:] == (4, 84, 84), "DQN fc1 requires 84x84 inputs"
    valid_rows = B * OH2 * OW2                       # 162 for B=2
    block_rows = ((valid_rows + 15) // 16) * 16      # bf16 sublane-tile aligned

    xb = x.astype(jnp.bfloat16)
    p1dup = build_conv_patches(xb, block_rows)       # [16*block_rows, 256] bf16

    y2t = conv_stack(p1dup, packed["w1t"], packed["b1"],
                     packed["w2t"], packed["b2"],
                     block_rows=block_rows, valid_rows=valid_rows)  # [B*81, 32]

    # Row-major compatible (free) reshape: rows (b, oh, ow), lanes c2
    #   -> act[b, (oh*9+ow)*32 + c2]; wfc1 was repacked to match this order.
    act = y2t.reshape(B, FC1_IN)                     # [B, 2592] bf16

    return fc_dueling_head(act, packed["wfc1"], packed["bfc1"],
                           packed["whead"], packed["bhead"], n_actions)


if __name__ == "__main__":
    n_actions = 4  # Breakout
    key = jax.random.PRNGKey(0)
    kx, kp = jax.random.split(key)
    x = jax.random.uniform(kx, (2, 4, 84, 84), jnp.float32)
    params = init_params(kp, n_actions)
    packed = pack_params(params)     # one-time, outside the jitted forward

    fwd = jax.jit(functools.partial(dqn_forward, n_actions=n_actions))
    out = jax.block_until_ready(fwd(packed, x))
    assert out.shape == (2, n_actions), out.shape
    assert out.dtype == jnp.float32
    assert bool(jnp.all(jnp.isfinite(out)))
    print("KERNEL_OK")
</pallas_src>

<mosaic_0001>
module attributes {stable_mosaic.version = 11 : i64} {
  func.func @_conv_stack_kernel(%arg0: memref<2816x256xbf16, #tpu.memory_space<vmem>>, %arg1: memref<256x16xbf16, #tpu.memory_space<vmem>>, %arg2: memref<1x16xf32, #tpu.memory_space<vmem>>, %arg3: memref<256x32xbf16, #tpu.memory_space<vmem>>, %arg4: memref<1x32xf32, #tpu.memory_space<vmem>>, %arg5: memref<162x32xbf16, #tpu.memory_space<vmem>>) attributes {dimension_semantics = [], scalar_prefetch = 0 : i64, scratch_operands = 0 : i64, tpu.core_type = #tpu.core_type<tc>} {
    %c0 = arith.constant 0 : index
    %c0_0 = arith.constant 0 : index
    %0 = vector.load %arg1[%c0, %c0_0] : memref<256x16xbf16, #tpu.memory_space<vmem>>, vector<256x16xbf16>
    %c0_1 = arith.constant 0 : index
    %c0_2 = arith.constant 0 : index
    %1 = vector.load %arg2[%c0_1, %c0_2] : memref<1x16xf32, #tpu.memory_space<vmem>>, vector<1x16xf32>
    %cst = arith.constant 0.000000e+00 : f32
    %2 = vector.broadcast %cst : f32 to vector<176x32xf32>
    %c0_3 = arith.constant 0 : index
    %c0_4 = arith.constant 0 : index
    %3 = vector.load %arg0[%c0_3, %c0_4] : memref<2816x256xbf16, #tpu.memory_space<vmem>>, vector<176x256xbf16>
    %cst_5 = arith.constant dense<0.000000e+00> : vector<176x16xf32>
    %4 = tpu.matmul %3, %0, %cst_5 {dimension_numbers = #tpu.dot_dimension_numbers<[1], [0], [0], [1], [0, 0, 1, 1], [], []>} : vector<176x256xbf16>, vector<256x16xbf16>, vector<176x16xf32> -> vector<176x16xf32>
    %5 = vector.broadcast %1 : vector<1x16xf32> to vector<176x16xf32>
    %6 = arith.addf %4, %5 : vector<176x16xf32>
    %cst_6 = arith.constant 0.000000e+00 : f32
    %7 = vector.broadcast %cst_6 : f32 to vector<176x16xf32>
    %8 = arith.maximumf %6, %7 : vector<176x16xf32>
    %9 = arith.truncf %8 : vector<176x16xf32> to vector<176x16xbf16>
    %c0_7 = arith.constant 0 : index
    %c0_8 = arith.constant 0 : index
    %10 = vector.load %arg3[%c0_7, %c0_8] : memref<256x32xbf16, #tpu.memory_space<vmem>>, vector<16x32xbf16>
    %cst_9 = arith.constant dense<0.000000e+00> : vector<176x32xf32>
    %11 = tpu.matmul %9, %10, %cst_9 {dimension_numbers = #tpu.dot_dimension_numbers<[1], [0], [0], [1], [0, 0, 1, 1], [], []>} : vector<176x16xbf16>, vector<16x32xbf16>, vector<176x32xf32> -> vector<176x32xf32>
    %12 = arith.addf %2, %11 : vector<176x32xf32>
    %c176 = arith.constant 176 : index
    %c0_10 = arith.constant 0 : index
    %13 = vector.load %arg0[%c176, %c0_10] : memref<2816x256xbf16, #tpu.memory_space<vmem>>, vector<176x256xbf16>
    %cst_11 = arith.constant dense<0.000000e+00> : vector<176x16xf32>
    %14 = tpu.matmul %13, %0, %cst_11 {dimension_numbers = #tpu.dot_dimension_numbers<[1], [0], [0], [1], [0, 0, 1, 1], [], []>} : vector<176x256xbf16>, vector<256x16xbf16>, vector<176x16xf32> -> vector<176x16xf32>
    %15 = vector.broadcast %1 : vector<1x16xf32> to vector<176x16xf32>
    %16 = arith.addf %14, %15 : vector<176x16xf32>
    %cst_12 = arith.constant 0.000000e+00 : f32
    %17 = vector.broadcast %cst_12 : f32 to vector<176x16xf32>
    %18 = arith.maximumf %16, %17 : vector<176x16xf32>
    %19 = arith.truncf %18 : vector<176x16xf32> to vector<176x16xbf16>
    %c16 = arith.constant 16 : index
    %c0_13 = arith.constant 0 : index
    %20 = vector.load %arg3[%c16, %c0_13] : memref<256x32xbf16, #tpu.memory_space<vmem>>, vector<16x32xbf16>
    %cst_14 = arith.constant dense<0.000000e+00> : vector<176x32xf32>
    %21 = tpu.matmul %19, %20, %cst_14 {dimension_numbers = #tpu.dot_dimension_numbers<[1], [0], [0], [1], [0, 0, 1, 1], [], []>} : vector<176x16xbf16>, vector<16x32xbf16>, vector<176x32xf32> -> vector<176x32xf32>
    %22 = arith.addf %12, %21 : vector<176x32xf32>
    %c352 = arith.constant 352 : index
    %c0_15 = arith.constant 0 : index
    %23 = vector.load %arg0[%c352, %c0_15] : memref<2816x256xbf16, #tpu.memory_space<vmem>>, vector<176x256xbf16>
    %cst_16 = arith.constant dense<0.000000e+00> : vector<176x16xf32>
    %24 = tpu.matmul %23, %0, %cst_16 {dimension_numbers = #tpu.dot_dimension_numbers<[1], [0], [0], [1], [0, 0, 1, 1], [], []>} : vector<176x256xbf16>, vector<256x16xbf16>, vector<176x16xf32> -> vector<176x16xf32>
    %25 = vector.broadcast %1 : vector<1x16xf32> to vector<176x16xf32>
    %26 = arith.addf %24, %25 : vector<176x16xf32>
    %cst_17 = arith.constant 0.000000e+00 : f32
    %27 = vector.broadcast %cst_17 : f32 to vector<176x16xf32>
    %28 = arith.maximumf %26, %27 : vector<176x16xf32>
    %29 = arith.truncf %28 : vector<176x16xf32> to vector<176x16xbf16>
    %c32 = arith.constant 32 : index
    %c0_18 = arith.constant 0 : index
    %30 = vector.load %arg3[%c32, %c0_18] : memref<256x32xbf16, #tpu.memory_space<vmem>>, vector<16x32xbf16>
    %cst_19 = arith.constant dense<0.000000e+00> : vector<176x32xf32>
    %31 = tpu.matmul %29, %30, %cst_19 {dimension_numbers = #tpu.dot_dimension_numbers<[1], [0], [0], [1], [0, 0, 1, 1], [], []>} : vector<176x16xbf16>, vector<16x32xbf16>, vector<176x32xf32> -> vector<176x32xf32>
    %32 = arith.addf %22, %31 : vector<176x32xf32>
    %c528 = arith.constant 528 : index
    %c0_20 = arith.constant 0 : index
    %33 = vector.load %arg0[%c528, %c0_20] : memref<2816x256xbf16, #tpu.memory_space<vmem>>, vector<176x256xbf16>
    %cst_21 = arith.constant dense<0.000000e+00> : vector<176x16xf32>
    %34 = tpu.matmul %33, %0, %cst_21 {dimension_numbers = #tpu.dot_dimension_numbers<[1], [0], [0], [1], [0, 0, 1, 1], [], []>} : vector<176x256xbf16>, vector<256x16xbf16>, vector<176x16xf32> -> vector<176x16xf32>
    %35 = vector.broadcast %1 : vector<1x16xf32> to vector<176x16xf32>
    %36 = arith.addf %34, %35 : vector<176x16xf32>
    %cst_22 = arith.constant 0.000000e+00 : f32
    %37 = vector.broadcast %cst_22 : f32 to vector<176x16xf32>
    %38 = arith.maximumf %36, %37 : vector<176x16xf32>
    %39 = arith.truncf %38 : vector<176x16xf32> to vector<176x16xbf16>
    %c48 = arith.constant 48 : index
    %c0_23 = arith.constant 0 : index
    %40 = vector.load %arg3[%c48, %c0_23] : memref<256x32xbf16, #tpu.memory_space<vmem>>, vector<16x32xbf16>
    %cst_24 = arith.constant dense<0.000000e+00> : vector<176x32xf32>
    %41 = tpu.matmul %39, %40, %cst_24 {dimension_numbers = #tpu.dot_dimension_numbers<[1], [0], [0], [1], [0, 0, 1, 1], [], []>} : vector<176x16xbf16>, vector<16x32xbf16>, vector<176x32xf32> -> vector<176x32xf32>
    %42 = arith.addf %32, %41 : vector<176x32xf32>
    %c704 = arith.constant 704 : index
    %c0_25 = arith.constant 0 : index
    %43 = vector.load %arg0[%c704, %c0_25] : memref<2816x256xbf16, #tpu.memory_space<vmem>>, vector<176x256xbf16>
    %cst_26 = arith.constant dense<0.000000e+00> : vector<176x16xf32>
    %44 = tpu.matmul %43, %0, %cst_26 {dimension_numbers = #tpu.dot_dimension_numbers<[1], [0], [0], [1], [0, 0, 1, 1], [], []>} : vector<176x256xbf16>, vector<256x16xbf16>, vector<176x16xf32> -> vector<176x16xf32>
    %45 = vector.broadcast %1 : vector<1x16xf32> to vector<176x16xf32>
    %46 = arith.addf %44, %45 : vector<176x16xf32>
    %cst_27 = arith.constant 0.000000e+00 : f32
    %47 = vector.broadcast %cst_27 : f32 to vector<176x16xf32>
    %48 = arith.maximumf %46, %47 : vector<176x16xf32>
    %49 = arith.truncf %48 : vector<176x16xf32> to vector<176x16xbf16>
    %c64 = arith.constant 64 : index
    %c0_28 = arith.constant 0 : index
    %50 = vector.load %arg3[%c64, %c0_28] : memref<256x32xbf16, #tpu.memory_space<vmem>>, vector<16x32xbf16>
    %cst_29 = arith.constant dense<0.000000e+00> : vector<176x32xf32>
    %51 = tpu.matmul %49, %50, %cst_29 {dimension_numbers = #tpu.dot_dimension_numbers<[1], [0], [0], [1], [0, 0, 1, 1], [], []>} : vector<176x16xbf16>, vector<16x32xbf16>, vector<176x32xf32> -> vector<176x32xf32>
    %52 = arith.addf %42, %51 : vector<176x32xf32>
    %c880 = arith.constant 880 : index
    %c0_30 = arith.constant 0 : index
    %53 = vector.load %arg0[%c880, %c0_30] : memref<2816x256xbf16, #tpu.memory_space<vmem>>, vector<176x256xbf16>
    %cst_31 = arith.constant dense<0.000000e+00> : vector<176x16xf32>
    %54 = tpu.matmul %53, %0, %cst_31 {dimension_numbers = #tpu.dot_dimension_numbers<[1], [0], [0], [1], [0, 0, 1, 1], [], []>} : vector<176x256xbf16>, vector<256x16xbf16>, vector<176x16xf32> -> vector<176x16xf32>
    %55 = vector.broadcast %1 : vector<1x16xf32> to vector<176x16xf32>
    %56 = arith.addf %54, %55 : vector<176x16xf32>
    %cst_32 = arith.constant 0.000000e+00 : f32
    %57 = vector.broadcast %cst_32 : f32 to vector<176x16xf32>
    %58 = arith.maximumf %56, %57 : vector<176x16xf32>
    %59 = arith.truncf %58 : vector<176x16xf32> to vector<176x16xbf16>
    %c80 = arith.constant 80 : index
    %c0_33 = arith.constant 0 : index
    %60 = vector.load %arg3[%c80, %c0_33] : memref<256x32xbf16, #tpu.memory_space<vmem>>, vector<16x32xbf16>
    %cst_34 = arith.constant dense<0.000000e+00> : vector<176x32xf32>
    %61 = tpu.matmul %59, %60, %cst_34 {dimension_numbers = #tpu.dot_dimension_numbers<[1], [0], [0], [1], [0, 0, 1, 1], [], []>} : vector<176x16xbf16>, vector<16x32xbf16>, vector<176x32xf32> -> vector<176x32xf32>
    %62 = arith.addf %52, %61 : vector<176x32xf32>
    %c1056 = arith.constant 1056 : index
    %c0_35 = arith.constant 0 : index
    %63 = vector.load %arg0[%c1056, %c0_35] : memref<2816x256xbf16, #tpu.memory_space<vmem>>, vector<176x256xbf16>
    %cst_36 = arith.constant dense<0.000000e+00> : vector<176x16xf32>
    %64 = tpu.matmul %63, %0, %cst_36 {dimension_numbers = #tpu.dot_dimension_numbers<[1], [0], [0], [1], [0, 0, 1, 1], [], []>} : vector<176x256xbf16>, vector<256x16xbf16>, vector<176x16xf32> -> vector<176x16xf32>
    %65 = vector.broadcast %1 : vector<1x16xf32> to vector<176x16xf32>
    %66 = arith.addf %64, %65 : vector<176x16xf32>
    %cst_37 = arith.constant 0.000000e+00 : f32
    %67 = vector.broadcast %cst_37 : f32 to vector<176x16xf32>
    %68 = arith.maximumf %66, %67 : vector<176x16xf32>
    %69 = arith.truncf %68 : vector<176x16xf32> to vector<176x16xbf16>
    %c96 = arith.constant 96 : index
    %c0_38 = arith.constant 0 : index
    %70 = vector.load %arg3[%c96, %c0_38] : memref<256x32xbf16, #tpu.memory_space<vmem>>, vector<16x32xbf16>
    %cst_39 = arith.constant dense<0.000000e+00> : vector<176x32xf32>
    %71 = tpu.matmul %69, %70, %cst_39 {dimension_numbers = #tpu.dot_dimension_numbers<[1], [0], [0], [1], [0, 0, 1, 1], [], []>} : vector<176x16xbf16>, vector<16x32xbf16>, vector<176x32xf32> -> vector<176x32xf32>
    %72 = arith.addf %62, %71 : vector<176x32xf32>
    %c1232 = arith.constant 1232 : index
    %c0_40 = arith.constant 0 : index
    %73 = vector.load %arg0[%c1232, %c0_40] : memref<2816x256xbf16, #tpu.memory_space<vmem>>, vector<176x256xbf16>
    %cst_41 = arith.constant dense<0.000000e+00> : vector<176x16xf32>
    %74 = tpu.matmul %73, %0, %cst_41 {dimension_numbers = #tpu.dot_dimension_numbers<[1], [0], [0], [1], [0, 0, 1, 1], [], []>} : vector<176x256xbf16>, vector<256x16xbf16>, vector<176x16xf32> -> vector<176x16xf32>
    %75 = vector.broadcast %1 : vector<1x16xf32> to vector<176x16xf32>
    %76 = arith.addf %74, %75 : vector<176x16xf32>
    %cst_42 = arith.constant 0.000000e+00 : f32
    %77 = vector.broadcast %cst_42 : f32 to vector<176x16xf32>
    %78 = arith.maximumf %76, %77 : vector<176x16xf32>
    %79 = arith.truncf %78 : vector<176x16xf32> to vector<176x16xbf16>
    %c112 = arith.constant 112 : index
    %c0_43 = arith.constant 0 : index
    %80 = vector.load %arg3[%c112, %c0_43] : memref<256x32xbf16, #tpu.memory_space<vmem>>, vector<16x32xbf16>
    %cst_44 = arith.constant dense<0.000000e+00> : vector<176x32xf32>
    %81 = tpu.matmul %79, %80, %cst_44 {dimension_numbers = #tpu.dot_dimension_numbers<[1], [0], [0], [1], [0, 0, 1, 1], [], []>} : vector<176x16xbf16>, vector<16x32xbf16>, vector<176x32xf32> -> vector<176x32xf32>
    %82 = arith.addf %72, %81 : vector<176x32xf32>
    %c1408 = arith.constant 1408 : index
    %c0_45 = arith.constant 0 : index
    %83 = vector.load %arg0[%c1408, %c0_45] : memref<2816x256xbf16, #tpu.memory_space<vmem>>, vector<176x256xbf16>
    %cst_46 = arith.constant dense<0.000000e+00> : vector<176x16xf32>
    %84 = tpu.matmul %83, %0, %cst_46 {dimension_numbers = #tpu.dot_dimension_numbers<[1], [0], [0], [1], [0, 0, 1, 1], [], []>} : vector<176x256xbf16>, vector<256x16xbf16>, vector<176x16xf32> -> vector<176x16xf32>
    %85 = vector.broadcast %1 : vector<1x16xf32> to vector<176x16xf32>
    %86 = arith.addf %84, %85 : vector<176x16xf32>
    %cst_47 = arith.constant 0.000000e+00 : f32
    %87 = vector.broadcast %cst_47 : f32 to vector<176x16xf32>
    %88 = arith.maximumf %86, %87 : vector<176x16xf32>
    %89 = arith.truncf %88 : vector<176x16xf32> to vector<176x16xbf16>
    %c128 = arith.constant 128 : index
    %c0_48 = arith.constant 0 : index
    %90 = vector.load %arg3[%c128, %c0_48] : memref<256x32xbf16, #tpu.memory_space<vmem>>, vector<16x32xbf16>
    %cst_49 = arith.constant dense<0.000000e+00> : vector<176x32xf32>
    %91 = tpu.matmul %89, %90, %cst_49 {dimension_numbers = #tpu.dot_dimension_numbers<[1], [0], [0], [1], [0, 0, 1, 1], [], []>} : vector<176x16xbf16>, vector<16x32xbf16>, vector<176x32xf32> -> vector<176x32xf32>
    %92 = arith.addf %82, %91 : vector<176x32xf32>
    %c1584 = arith.constant 1584 : index
    %c0_50 = arith.constant 0 : index
    %93 = vector.load %arg0[%c1584, %c0_50] : memref<2816x256xbf16, #tpu.memory_space<vmem>>, vector<176x256xbf16>
    %cst_51 = arith.constant dense<0.000000e+00> : vector<176x16xf32>
    %94 = tpu.matmul %93, %0, %cst_51 {dimension_numbers = #tpu.dot_dimension_numbers<[1], [0], [0], [1], [0, 0, 1, 1], [], []>} : vector<176x256xbf16>, vector<256x16xbf16>, vector<176x16xf32> -> vector<176x16xf32>
    %95 = vector.broadcast %1 : vector<1x16xf32> to vector<176x16xf32>
    %96 = arith.addf %94, %95 : vector<176x16xf32>
    %cst_52 = arith.constant 0.000000e+00 : f32
    %97 = vector.broadcast %cst_52 : f32 to vector<176x16xf32>
    %98 = arith.maximumf %96, %97 : vector<176x16xf32>
    %99 = arith.truncf %98 : vector<176x16xf32> to vector<176x16xbf16>
    %c144 = arith.constant 144 : index
    %c0_53 = arith.constant 0 : index
    %100 = vector.load %arg3[%c144, %c0_53] : memref<256x32xbf16, #tpu.memory_space<vmem>>, vector<16x32xbf16>
    %cst_54 = arith.constant dense<0.000000e+00> : vector<176x32xf32>
    %101 = tpu.matmul %99, %100, %cst_54 {dimension_numbers = #tpu.dot_dimension_numbers<[1], [0], [0], [1], [0, 0, 1, 1], [], []>} : vector<176x16xbf16>, vector<16x32xbf16>, vector<176x32xf32> -> vector<176x32xf32>
    %102 = arith.addf %92, %101 : vector<176x32xf32>
    %c1760 = arith.constant 1760 : index
    %c0_55 = arith.constant 0 : index
    %103 = vector.load %arg0[%c1760, %c0_55] : memref<2816x256xbf16, #tpu.memory_space<vmem>>, vector<176x256xbf16>
    %cst_56 = arith.constant dense<0.000000e+00> : vector<176x16xf32>
    %104 = tpu.matmul %103, %0, %cst_56 {dimension_numbers = #tpu.dot_dimension_numbers<[1], [0], [0], [1], [0, 0, 1, 1], [], []>} : vector<176x256xbf16>, vector<256x16xbf16>, vector<176x16xf32> -> vector<176x16xf32>
    %105 = vector.broadcast %1 : vector<1x16xf32> to vector<176x16xf32>
    %106 = arith.addf %104, %105 : vector<176x16xf32>
    %cst_57 = arith.constant 0.000000e+00 : f32
    %107 = vector.broadcast %cst_57 : f32 to vector<176x16xf32>
    %108 = arith.maximumf %106, %107 : vector<176x16xf32>
    %109 = arith.truncf %108 : vector<176x16xf32> to vector<176x16xbf16>
    %c160 = arith.constant 160 : index
    %c0_58 = arith.constant 0 : index
    %110 = vector.load %arg3[%c160, %c0_58] : memref<256x32xbf16, #tpu.memory_space<vmem>>, vector<16x32xbf16>
    %cst_59 = arith.constant dense<0.000000e+00> : vector<176x32xf32>
    %111 = tpu.matmul %109, %110, %cst_59 {dimension_numbers = #tpu.dot_dimension_numbers<[1], [0], [0], [1], [0, 0, 1, 1], [], []>} : vector<176x16xbf16>, vector<16x32xbf16>, vector<176x32xf32> -> vector<176x32xf32>
    %112 = arith.addf %102, %111 : vector<176x32xf32>
    %c1936 = arith.constant 1936 : index
    %c0_60 = arith.constant 0 : index
    %113 = vector.load %arg0[%c1936, %c0_60] : memref<2816x256xbf16, #tpu.memory_space<vmem>>, vector<176x256xbf16>
    %cst_61 = arith.constant dense<0.000000e+00> : vector<176x16xf32>
    %114 = tpu.matmul %113, %0, %cst_61 {dimension_numbers = #tpu.dot_dimension_numbers<[1], [0], [0], [1], [0, 0, 1, 1], [], []>} : vector<176x256xbf16>, vector<256x16xbf16>, vector<176x16xf32> -> vector<176x16xf32>
    %115 = vector.broadcast %1 : vector<1x16xf32> to vector<176x16xf32>
    %116 = arith.addf %114, %115 : vector<176x16xf32>
    %cst_62 = arith.constant 0.000000e+00 : f32
    %117 = vector.broadcast %cst_62 : f32 to vector<176x16xf32>
    %118 = arith.maximumf %116, %117 : vector<176x16xf32>
    %119 = arith.truncf %118 : vector<176x16xf32> to vector<176x16xbf16>
    %c176_63 = arith.constant 176 : index
    %c0_64 = arith.constant 0 : index
    %120 = vector.load %arg3[%c176_63, %c0_64] : memref<256x32xbf16, #tpu.memory_space<vmem>>, vector<16x32xbf16>
    %cst_65 = arith.constant dense<0.000000e+00> : vector<176x32xf32>
    %121 = tpu.matmul %119, %120, %cst_65 {dimension_numbers = #tpu.dot_dimension_numbers<[1], [0], [0], [1], [0, 0, 1, 1], [], []>} : vector<176x16xbf16>, vector<16x32xbf16>, vector<176x32xf32> -> vector<176x32xf32>
    %122 = arith.addf %112, %121 : vector<176x32xf32>
    %c2112 = arith.constant 2112 : index
    %c0_66 = arith.constant 0 : index
    %123 = vector.load %arg0[%c2112, %c0_66] : memref<2816x256xbf16, #tpu.memory_space<vmem>>, vector<176x256xbf16>
    %cst_67 = arith.constant dense<0.000000e+00> : vector<176x16xf32>
    %124 = tpu.matmul %123, %0, %cst_67 {dimension_numbers = #tpu.dot_dimension_numbers<[1], [0], [0], [1], [0, 0, 1, 1], [], []>} : vector<176x256xbf16>, vector<256x16xbf16>, vector<176x16xf32> -> vector<176x16xf32>
    %125 = vector.broadcast %1 : vector<1x16xf32> to vector<176x16xf32>
    %126 = arith.addf %124, %125 : vector<176x16xf32>
    %cst_68 = arith.constant 0.000000e+00 : f32
    %127 = vector.broadcast %cst_68 : f32 to vector<176x16xf32>
    %128 = arith.maximumf %126, %127 : vector<176x16xf32>
    %129 = arith.truncf %128 : vector<176x16xf32> to vector<176x16xbf16>
    %c192 = arith.constant 192 : index
    %c0_69 = arith.constant 0 : index
    %130 = vector.load %arg3[%c192, %c0_69] : memref<256x32xbf16, #tpu.memory_space<vmem>>, vector<16x32xbf16>
    %cst_70 = arith.constant dense<0.000000e+00> : vector<176x32xf32>
    %131 = tpu.matmul %129, %130, %cst_70 {dimension_numbers = #tpu.dot_dimension_numbers<[1], [0], [0], [1], [0, 0, 1, 1], [], []>} : vector<176x16xbf16>, vector<16x32xbf16>, vector<176x32xf32> -> vector<176x32xf32>
    %132 = arith.addf %122, %131 : vector<176x32xf32>
    %c2288 = arith.constant 2288 : index
    %c0_71 = arith.constant 0 : index
    %133 = vector.load %arg0[%c2288, %c0_71] : memref<2816x256xbf16, #tpu.memory_space<vmem>>, vector<176x256xbf16>
    %cst_72 = arith.constant dense<0.000000e+00> : vector<176x16xf32>
    %134 = tpu.matmul %133, %0, %cst_72 {dimension_numbers = #tpu.dot_dimension_numbers<[1], [0], [0], [1], [0, 0, 1, 1], [], []>} : vector<176x256xbf16>, vector<256x16xbf16>, vector<176x16xf32> -> vector<176x16xf32>
    %135 = vector.broadcast %1 : vector<1x16xf32> to vector<176x16xf32>
    %136 = arith.addf %134, %135 : vector<176x16xf32>
    %cst_73 = arith.constant 0.000000e+00 : f32
    %137 = vector.broadcast %cst_73 : f32 to vector<176x16xf32>
    %138 = arith.maximumf %136, %137 : vector<176x16xf32>
    %139 = arith.truncf %138 : vector<176x16xf32> to vector<176x16xbf16>
    %c208 = arith.constant 208 : index
    %c0_74 = arith.constant 0 : index
    %140 = vector.load %arg3[%c208, %c0_74] : memref<256x32xbf16, #tpu.memory_space<vmem>>, vector<16x32xbf16>
    %cst_75 = arith.constant dense<0.000000e+00> : vector<176x32xf32>
    %141 = tpu.matmul %139, %140, %cst_75 {dimension_numbers = #tpu.dot_dimension_numbers<[1], [0], [0], [1], [0, 0, 1, 1], [], []>} : vector<176x16xbf16>, vector<16x32xbf16>, vector<176x32xf32> -> vector<176x32xf32>
    %142 = arith.addf %132, %141 : vector<176x32xf32>
    %c2464 = arith.constant 2464 : index
    %c0_76 = arith.constant 0 : index
    %143 = vector.load %arg0[%c2464, %c0_76] : memref<2816x256xbf16, #tpu.memory_space<vmem>>, vector<176x256xbf16>
    %cst_77 = arith.constant dense<0.000000e+00> : vector<176x16xf32>
    %144 = tpu.matmul %143, %0, %cst_77 {dimension_numbers = #tpu.dot_dimension_numbers<[1], [0], [0], [1], [0, 0, 1, 1], [], []>} : vector<176x256xbf16>, vector<256x16xbf16>, vector<176x16xf32> -> vector<176x16xf32>
    %145 = vector.broadcast %1 : vector<1x16xf32> to vector<176x16xf32>
    %146 = arith.addf %144, %145 : vector<176x16xf32>
    %cst_78 = arith.constant 0.000000e+00 : f32
    %147 = vector.broadcast %cst_78 : f32 to vector<176x16xf32>
    %148 = arith.maximumf %146, %147 : vector<176x16xf32>
    %149 = arith.truncf %148 : vector<176x16xf32> to vector<176x16xbf16>
    %c224 = arith.constant 224 : index
    %c0_79 = arith.constant 0 : index
    %150 = vector.load %arg3[%c224, %c0_79] : memref<256x32xbf16, #tpu.memory_space<vmem>>, vector<16x32xbf16>
    %cst_80 = arith.constant dense<0.000000e+00> : vector<176x32xf32>
    %151 = tpu.matmul %149, %150, %cst_80 {dimension_numbers = #tpu.dot_dimension_numbers<[1], [0], [0], [1], [0, 0, 1, 1], [], []>} : vector<176x16xbf16>, vector<16x32xbf16>, vector<176x32xf32> -> vector<176x32xf32>
    %152 = arith.addf %142, %151 : vector<176x32xf32>
    %c2640 = arith.constant 2640 : index
    %c0_81 = arith.constant 0 : index
    %153 = vector.load %arg0[%c2640, %c0_81] : memref<2816x256xbf16, #tpu.memory_space<vmem>>, vector<176x256xbf16>
    %cst_82 = arith.constant dense<0.000000e+00> : vector<176x16xf32>
    %154 = tpu.matmul %153, %0, %cst_82 {dimension_numbers = #tpu.dot_dimension_numbers<[1], [0], [0], [1], [0, 0, 1, 1], [], []>} : vector<176x256xbf16>, vector<256x16xbf16>, vector<176x16xf32> -> vector<176x16xf32>
    %155 = vector.broadcast %1 : vector<1x16xf32> to vector<176x16xf32>
    %156 = arith.addf %154, %155 : vector<176x16xf32>
    %cst_83 = arith.constant 0.000000e+00 : f32
    %157 = vector.broadcast %cst_83 : f32 to vector<176x16xf32>
    %158 = arith.maximumf %156, %157 : vector<176x16xf32>
    %159 = arith.truncf %158 : vector<176x16xf32> to vector<176x16xbf16>
    %c240 = arith.constant 240 : index
    %c0_84 = arith.constant 0 : index
    %160 = vector.load %arg3[%c240, %c0_84] : memref<256x32xbf16, #tpu.memory_space<vmem>>, vector<16x32xbf16>
    %cst_85 = arith.constant dense<0.000000e+00> : vector<176x32xf32>
    %161 = tpu.matmul %159, %160, %cst_85 {dimension_numbers = #tpu.dot_dimension_numbers<[1], [0], [0], [1], [0, 0, 1, 1], [], []>} : vector<176x16xbf16>, vector<16x32xbf16>, vector<176x32xf32> -> vector<176x32xf32>
    %162 = arith.addf %152, %161 : vector<176x32xf32>
    %c0_86 = arith.constant 0 : index
    %c0_87 = arith.constant 0 : index
    %163 = vector.load %arg4[%c0_86, %c0_87] : memref<1x32xf32, #tpu.memory_space<vmem>>, vector<1x32xf32>
    %164 = vector.broadcast %163 : vector<1x32xf32> to vector<176x32xf32>
    %165 = arith.addf %162, %164 : vector<176x32xf32>
    %cst_88 = arith.constant 0.000000e+00 : f32
    %166 = vector.broadcast %cst_88 : f32 to vector<176x32xf32>
    %167 = arith.maximumf %165, %166 : vector<176x32xf32>
    %168 = vector.extract_strided_slice %167 {offsets = [0, 0], sizes = [162, 32], strides = [1, 1]} : vector<176x32xf32> to vector<162x32xf32>
    %169 = arith.truncf %168 : vector<162x32xf32> to vector<162x32xbf16>
    %c0_89 = arith.constant 0 : index
    %c0_90 = arith.constant 0 : index
    %170 = vector.load %arg5[%c0_89, %c0_90] : memref<162x32xbf16, #tpu.memory_space<vmem>>, vector<162x32xbf16>
    tpu.vector_store %arg5[%c0_89, %c0_90], %169 {strides = array<i32>} : memref<162x32xbf16, #tpu.memory_space<vmem>>, vector<162x32xbf16>,
    return
  }
}

module attributes {stable_mosaic.version = 11 : i64} {
  func.func @_head_kernel(%arg0: memref<2x2592xbf16, #tpu.memory_space<vmem>>, %arg1: memref<2592x256xbf16, #tpu.memory_space<vmem>>, %arg2: memref<1x256xf32, #tpu.memory_space<vmem>>, %arg3: memref<256x5xbf16, #tpu.memory_space<vmem>>, %arg4: memref<1x5xf32, #tpu.memory_space<vmem>>, %arg5: memref<2x4xf32, #tpu.memory_space<vmem>>) attributes {dimension_semantics = [], scalar_prefetch = 0 : i64, scratch_operands = 0 : i64, tpu.core_type = #tpu.core_type<tc>} {
    %c0 = arith.constant 0 : index
    %c0_0 = arith.constant 0 : index
    %0 = vector.load %arg0[%c0, %c0_0] : memref<2x2592xbf16, #tpu.memory_space<vmem>>, vector<2x2592xbf16>
    %c0_1 = arith.constant 0 : index
    %c0_2 = arith.constant 0 : index
    %1 = vector.load %arg1[%c0_1, %c0_2] : memref<2592x256xbf16, #tpu.memory_space<vmem>>, vector<2592x256xbf16>
    %cst = arith.constant dense<0.000000e+00> : vector<2x256xf32>
    %2 = tpu.matmul %0, %1, %cst {dimension_numbers = #tpu.dot_dimension_numbers<[1], [0], [0], [1], [0, 0, 1, 1], [], []>} : vector<2x2592xbf16>, vector<2592x256xbf16>, vector<2x256xf32> -> vector<2x256xf32>
    %c0_3 = arith.constant 0 : index
    %c0_4 = arith.constant 0 : index
    %3 = vector.load %arg2[%c0_3, %c0_4] : memref<1x256xf32, #tpu.memory_space<vmem>>, vector<1x256xf32>
    %4 = vector.broadcast %3 : vector<1x256xf32> to vector<2x256xf32>
    %5 = arith.addf %2, %4 : vector<2x256xf32>
    %cst_5 = arith.constant 0.000000e+00 : f32
    %6 = vector.broadcast %cst_5 : f32 to vector<2x256xf32>
    %7 = arith.maximumf %5, %6 : vector<2x256xf32>
    %8 = arith.truncf %7 : vector<2x256xf32> to vector<2x256xbf16>
    %c0_6 = arith.constant 0 : index
    %c0_7 = arith.constant 0 : index
    %9 = vector.load %arg3[%c0_6, %c0_7] : memref<256x5xbf16, #tpu.memory_space<vmem>>, vector<256x5xbf16>
    %cst_8 = arith.constant dense<0.000000e+00> : vector<2x5xf32>
    %10 = tpu.matmul %8, %9, %cst_8 {dimension_numbers = #tpu.dot_dimension_numbers<[1], [0], [0], [1], [0, 0, 1, 1], [], []>} : vector<2x256xbf16>, vector<256x5xbf16>, vector<2x5xf32> -> vector<2x5xf32>
    %c0_9 = arith.constant 0 : index
    %c0_10 = arith.constant 0 : index
    %11 = vector.load %arg4[%c0_9, %c0_10] : memref<1x5xf32, #tpu.memory_space<vmem>>, vector<1x5xf32>
    %12 = vector.broadcast %11 : vector<1x5xf32> to vector<2x5xf32>
    %13 = arith.addf %10, %12 : vector<2x5xf32>
    %14 = vector.extract_strided_slice %13 {offsets = [0, 0], sizes = [2, 4], strides = [1, 1]} : vector<2x5xf32> to vector<2x4xf32>
    %15 = vector.extract_strided_slice %13 {offsets = [0, 4], sizes = [2, 1], strides = [1, 1]} : vector<2x5xf32> to vector<2x1xf32>
    %cst_11 = arith.constant dense<0.000000e+00> : vector<2xf32>
    %16 = vector.multi_reduction <add>, %14, %cst_11 [1] : vector<2x4xf32> to vector<2xf32>
    %17 = vector.shape_cast %16 : vector<2xf32> to vector<2x1xf32>
    %cst_12 = arith.constant 4.000000e+00 : f32
    %18 = vector.broadcast %cst_12 : f32 to vector<2x1xf32>
    %19 = arith.divf %17, %18 : vector<2x1xf32>
    %20 = vector.broadcast %19 : vector<2x1xf32> to vector<2x4xf32>
    %21 = arith.subf %14, %20 : vector<2x4xf32>
    %22 = vector.broadcast %15 : vector<2x1xf32> to vector<2x4xf32>
    %23 = arith.addf %22, %21 : vector<2x4xf32>
    %c0_13 = arith.constant 0 : index
    %c0_14 = arith.constant 0 : index
    %24 = vector.load %arg5[%c0_13, %c0_14] : memref<2x4xf32, #tpu.memory_space<vmem>>, vector<2x4xf32>
    tpu.vector_store %arg5[%c0_13, %c0_14], %23 {strides = array<i32>} : memref<2x4xf32, #tpu.memory_space<vmem>>, vector<2x4xf32>,
    return
  }
}

</mosaic_0001>

<llo_original>
// kernel: dqn_forward.3
$region0: #{dqn_forward.3}
  #allocation0 [shape = 'u32[]', space=smem, size = 0x4, offset = 0x4, fixed_abs, tag = 'smem constant byte address 0x4 - core index']
  #allocation1 [shape = 'u32[144,128]{1,0:T(1,128)}', space=vmem, size = 0x12000, scoped, tag = 'internal scratch']
  %s0 = inlined_call_operand.vmem [shape: bf16[2,2592], index: 0, kind: input, shape index: {}]
  %s1 = inlined_call_operand.vmem [shape: bf16[2592,256], index: 1, kind: input, shape index: {}]
  %s2 = inlined_call_operand.vmem [shape: f32[1,256], index: 2, kind: input, shape index: {}]
  %s3 = inlined_call_operand.vmem [shape: bf16[256,5], index: 3, kind: input, shape index: {}]
  %s4 = inlined_call_operand.vmem [shape: f32[1,5], index: 4, kind: input, shape index: {}]
  %s5 = inlined_call_operand.hbm [shape: f32[2,4], index: 5, kind: output, shape index: {}]
  %s6 = sld [smem:[#allocation0]]
  $region30: #{dqn_forward.3} parent=0
    _
  %s8 = ssub.s32 1, %s6
  %s9 = scalar_select 0, %s8, %s6
  $region1: #{dqn_forward.3} parent=0
    #allocation2 [shape = 'u8[1024]{0}', space=vmem, size = 0x400, scoped, tag = 'output window, operand 0, single buffered']
    #allocation3 [shape = 's32[1]{0}', space=sflag, size = 0x4, scoped, tag = 'scoped memory for dqn_forward.3']
    %10 = vsyncpa [#allocation3], 0
    // Predicated region
    $region2: #{dqn_forward.3} parent=1 // pred_check
      _
    $region3: #{dqn_forward.3} parent=1 // pred_check_branch
      %12 = sbr.rel (0) target = $region5
    $region4: #{dqn_forward.3} parent=1 // pred_region
      _
    $region5: #{dqn_forward.3} parent=1 // pred_fallthru
      _
    // Predicated region
    $region6: #{dqn_forward.3} parent=1 // pred_check
      _
    $region7: #{dqn_forward.3} parent=1 // pred_check_branch
      %14 = sbr.rel (0) target = $region9
    $region8: #{dqn_forward.3} parent=1 // pred_region
      _
    $region9: #{dqn_forward.3} parent=1 // pred_fallthru
      _
    // Predicated region
    $region10: #{dqn_forward.3} parent=1 // pred_check
      _
    $region11: #{dqn_forward.3} parent=1 // pred_check_branch
      %16 = sbr.rel (0) target = $region13
    $region12: #{dqn_forward.3} parent=1 // pred_region
      _
    $region13: #{dqn_forward.3} parent=1 // pred_fallthru
      _
    // Predicated region
    $region14: #{dqn_forward.3} parent=1 // pred_check
      _
    $region15: #{dqn_forward.3} parent=1 // pred_check_branch
      %18 = sbr.rel (0) target = $region17
    $region16: #{dqn_forward.3} parent=1 // pred_region
      _
    $region17: #{dqn_forward.3} parent=1 // pred_fallthru
      _
    // Predicated region
    $region18: #{dqn_forward.3} parent=1 // pred_check
      _
    $region19: #{dqn_forward.3} parent=1 // pred_check_branch
      %20 = sbr.rel (0) target = $region21
    $region20: #{dqn_forward.3} parent=1 // pred_region
      _
    $region21: #{dqn_forward.3} parent=1 // pred_fallthru
      _
    %v22 = vld [vmem:[%s0] sm:$0xff]
    %v23 = vld [vmem:[%s0 + $0x8] sm:$0xff]
    %v24 = vld [vmem:[%s0 + $0x10] sm:$0x1f]
    %v25 = vld [vmem:[%s1] sm:$0xff]
    %v26 = vld [vmem:[%s1 + $0x8] sm:$0xff]
    %v27 = vld [vmem:[%s1 + $0x10] sm:$0xff]
    %v28 = vld [vmem:[%s1 + $0x18] sm:$0xff]
    %v29 = vld [vmem:[%s1 + $0x20] sm:$0xff]
    %v30 = vld [vmem:[%s1 + $0x28] sm:$0xff]
    %v31 = vld [vmem:[%s1 + $0x30] sm:$0xff]
    %v32 = vld [vmem:[%s1 + $0x38] sm:$0xff]
    %v33 = vld [vmem:[%s1 + $0x40] sm:$0xff]
    %v34 = vld [vmem:[%s1 + $0x48] sm:$0xff]
    %v35 = vld [vmem:[%s1 + $0x50] sm:$0xff]
    %v36 = vld [vmem:[%s1 + $0x58] sm:$0xff]
    %v37 = vld [vmem:[%s1 + $0x60] sm:$0xff]
    %v38 = vld [vmem:[%s1 + $0x68] sm:$0xff]
    %v39 = vld [vmem:[%s1 + $0x70] sm:$0xff]
    %v40 = vld [vmem:[%s1 + $0x78] sm:$0xff]
    %v41 = vld [vmem:[%s1 + $0x80] sm:$0xff]
    %v42 = vld [vmem:[%s1 + $0x88] sm:$0xff]
    %v43 = vld [vmem:[%s1 + $0x90] sm:$0xff]
    %v44 = vld [vmem:[%s1 + $0x98] sm:$0xff]
    %v45 = vld [vmem:[%s1 + $0xa0] sm:$0xff]
    %v46 = vld [vmem:[%s1 + $0xa8] sm:$0xff]
    %v47 = vld [vmem:[%s1 + $0xb0] sm:$0xff]
    %v48 = vld [vmem:[%s1 + $0xb8] sm:$0xff]
    %v49 = vld [vmem:[%s1 + $0xc0] sm:$0xff]
    %v50 = vld [vmem:[%s1 + $0xc8] sm:$0xff]
    %v51 = vld [vmem:[%s1 + $0xd0] sm:$0xff]
    %v52 = vld [vmem:[%s1 + $0xd8] sm:$0xff]
    %v53 = vld [vmem:[%s1 + $0xe0] sm:$0xff]
    %v54 = vld [vmem:[%s1 + $0xe8] sm:$0xff]
    %v55 = vld [vmem:[%s1 + $0xf0] sm:$0xff]
    %v56 = vld [vmem:[%s1 + $0xf8] sm:$0xff]
    %v57 = vld [vmem:[%s1 + $0x100] sm:$0xff]
    %v58 = vld [vmem:[%s1 + $0x108] sm:$0xff]
    %v59 = vld [vmem:[%s1 + $0x110] sm:$0xff]
    %v60 = vld [vmem:[%s1 + $0x118] sm:$0xff]
    %v61 = vld [vmem:[%s1 + $0x120] sm:$0xff]
    %v62 = vld [vmem:[%s1 + $0x128] sm:$0xff]
    %v63 = vld [vmem:[%s1 + $0x130] sm:$0xff]
    %v64 = vld [vmem:[%s1 + $0x138] sm:$0xff]
    %v65 = vld [vmem:[%s1 + $0x140] sm:$0xff]
    %v66 = vld [vmem:[%s1 + $0x148] sm:$0xff]
    %v67 = vld [vmem:[%s1 + $0x150] sm:$0xff]
    %v68 = vld [vmem:[%s1 + $0x158] sm:$0xff]
    %v69 = vld [vmem:[%s1 + $0x160] sm:$0xff]
    %v70 = vld [vmem:[%s1 + $0x168] sm:$0xff]
    %v71 = vld [vmem:[%s1 + $0x170] sm:$0xff]
    %v72 = vld [vmem:[%s1 + $0x178] sm:$0xff]
    %v73 = vld [vmem:[%s1 + $0x180] sm:$0xff]
    %v74 = vld [vmem:[%s1 + $0x188] sm:$0xff]
    %v75 = vld [vmem:[%s1 + $0x190] sm:$0xff]
    %v76 = vld [vmem:[%s1 + $0x198] sm:$0xff]
    %v77 = vld [vmem:[%s1 + $0x1a0] sm:$0xff]
    %v78 = vld [vmem:[%s1 + $0x1a8] sm:$0xff]
    %v79 = vld [vmem:[%s1 + $0x1b0] sm:$0xff]
    %v80 = vld [vmem:[%s1 + $0x1b8] sm:$0xff]
    %v81 = vld [vmem:[%s1 + $0x1c0] sm:$0xff]
    %v82 = vld [vmem:[%s1 + $0x1c8] sm:$0xff]
    %v83 = vld [vmem:[%s1 + $0x1d0] sm:$0xff]
    %v84 = vld [vmem:[%s1 + $0x1d8] sm:$0xff]
    %v85 = vld [vmem:[%s1 + $0x1e0] sm:$0xff]
    %v86 = vld [vmem:[%s1 + $0x1e8] sm:$0xff]
    %v87 = vld [vmem:[%s1 + $0x1f0] sm:$0xff]
    %v88 = vld [vmem:[%s1 + $0x1f8] sm:$0xff]
    %v89 = vld [vmem:[%s1 + $0x200] sm:$0xff]
    %v90 = vld [vmem:[%s1 + $0x208] sm:$0xff]
    %v91 = vld [vmem:[%s1 + $0x210] sm:$0xff]
    %v92 = vld [vmem:[%s1 + $0x218] sm:$0xff]
    %v93 = vld [vmem:[%s1 + $0x220] sm:$0xff]
    %v94 = vld [vmem:[%s1 + $0x228] sm:$0xff]
    %v95 = vld [vmem:[%s1 + $0x230] sm:$0xff]
    %v96 = vld [vmem:[%s1 + $0x238] sm:$0xff]
    %v97 = vld [vmem:[%s1 + $0x240] sm:$0xff]
    %v98 = vld [vmem:[%s1 + $0x248] sm:$0xff]
    %v99 = vld [vmem:[%s1 + $0x250] sm:$0xff]
    %v100 = vld [vmem:[%s1 + $0x258] sm:$0xff]
    %v101 = vld [vmem:[%s1 + $0x260] sm:$0xff]
    %v102 = vld [vmem:[%s1 + $0x268] sm:$0xff]
    %v103 = vld [vmem:[%s1 + $0x270] sm:$0xff]
    %v104 = vld [vmem:[%s1 + $0x278] sm:$0xff]
    %v105 = vld [vmem:[%s1 + $0x280] sm:$0xff]
    %v106 = vld [vmem:[%s1 + $0x288] sm:$0xff]
    %v107 = vld [vmem:[%s1 + $0x290] sm:$0xff]
    %v108 = vld [vmem:[%s1 + $0x298] sm:$0xff]
    %v109 = vld [vmem:[%s1 + $0x2a0] sm:$0xff]
    %v110 = vld [vmem:[%s1 + $0x2a8] sm:$0xff]
    %v111 = vld [vmem:[%s1 + $0x2b0] sm:$0xff]
    %v112 = vld [vmem:[%s1 + $0x2b8] sm:$0xff]
    %v113 = vld [vmem:[%s1 + $0x2c0] sm:$0xff]
    %v114 = vld [vmem:[%s1 + $0x2c8] sm:$0xff]
    %v115 = vld [vmem:[%s1 + $0x2d0] sm:$0xff]
    %v116 = vld [vmem:[%s1 + $0x2d8] sm:$0xff]
    %v117 = vld [vmem:[%s1 + $0x2e0] sm:$0xff]
    %v118 = vld [vmem:[%s1 + $0x2e8] sm:$0xff]
    %v119 = vld [vmem:[%s1 + $0x2f0] sm:$0xff]
    %v120 = vld [vmem:[%s1 + $0x2f8] sm:$0xff]
    %v121 = vld [vmem:[%s1 + $0x300] sm:$0xff]
    %v122 = vld [vmem:[%s1 + $0x308] sm:$0xff]
    %v123 = vld [vmem:[%s1 + $0x310] sm:$0xff]
    %v124 = vld [vmem:[%s1 + $0x318] sm:$0xff]
    %v125 = vld [vmem:[%s1 + $0x320] sm:$0xff]
    %v126 = vld [vmem:[%s1 + $0x328] sm:$0xff]
    %v127 = vld [vmem:[%s1 + $0x330] sm:$0xff]
    %v128 = vld [vmem:[%s1 + $0x338] sm:$0xff]
    %v129 = vld [vmem:[%s1 + $0x340] sm:$0xff]
    %v130 = vld [vmem:[%s1 + $0x348] sm:$0xff]
    %v131 = vld [vmem:[%s1 + $0x350] sm:$0xff]
    %v132 = vld [vmem:[%s1 + $0x358] sm:$0xff]
    %v133 = vld [vmem:[%s1 + $0x360] sm:$0xff]
    %v134 = vld [vmem:[%s1 + $0x368] sm:$0xff]
    %v135 = vld [vmem:[%s1 + $0x370] sm:$0xff]
    %v136 = vld [vmem:[%s1 + $0x378] sm:$0xff]
    %v137 = vld [vmem:[%s1 + $0x380] sm:$0xff]
    %v138 = vld [vmem:[%s1 + $0x388] sm:$0xff]
    %v139 = vld [vmem:[%s1 + $0x390] sm:$0xff]
    %v140 = vld [vmem:[%s1 + $0x398] sm:$0xff]
    %v141 = vld [vmem:[%s1 + $0x3a0] sm:$0xff]
    %v142 = vld [vmem:[%s1 + $0x3a8] sm:$0xff]
    %v143 = vld [vmem:[%s1 + $0x3b0] sm:$0xff]
    %v144 = vld [vmem:[%s1 + $0x3b8] sm:$0xff]
    %v145 = vld [vmem:[%s1 + $0x3c0] sm:$0xff]
    %v146 = vld [vmem:[%s1 + $0x3c8] sm:$0xff]
    %v147 = vld [vmem:[%s1 + $0x3d0] sm:$0xff]
    %v148 = vld [vmem:[%s1 + $0x3d8] sm:$0xff]
    %v149 = vld [vmem:[%s1 + $0x3e0] sm:$0xff]
    %v150 = vld [vmem:[%s1 + $0x3e8] sm:$0xff]
    %v151 = vld [vmem:[%s1 + $0x3f0] sm:$0xff]
    %v152 = vld [vmem:[%s1 + $0x3f8] sm:$0xff]
    %v153 = vld [vmem:[%s1 + $0x400] sm:$0xff]
    %v154 = vld [vmem:[%s1 + $0x408] sm:$0xff]
    %v155 = vld [vmem:[%s1 + $0x410] sm:$0xff]
    %v156 = vld [vmem:[%s1 + $0x418] sm:$0xff]
    %v157 = vld [vmem:[%s1 + $0x420] sm:$0xff]
    %v158 = vld [vmem:[%s1 + $0x428] sm:$0xff]
    %v159 = vld [vmem:[%s1 + $0x430] sm:$0xff]
    %v160 = vld [vmem:[%s1 + $0x438] sm:$0xff]
    %v161 = vld [vmem:[%s1 + $0x440] sm:$0xff]
    %v162 = vld [vmem:[%s1 + $0x448] sm:$0xff]
    %v163 = vld [vmem:[%s1 + $0x450] sm:$0xff]
    %v164 = vld [vmem:[%s1 + $0x458] sm:$0xff]
    %v165 = vld [vmem:[%s1 + $0x460] sm:$0xff]
    %v166 = vld [vmem:[%s1 + $0x468] sm:$0xff]
    %v167 = vld [vmem:[%s1 + $0x470] sm:$0xff]
    %v168 = vld [vmem:[%s1 + $0x478] sm:$0xff]
    %v169 = vld [vmem:[%s1 + $0x480] sm:$0xff]
    %v170 = vld [vmem:[%s1 + $0x488] sm:$0xff]
    %v171 = vld [vmem:[%s1 + $0x490] sm:$0xff]
    %v172 = vld [vmem:[%s1 + $0x498] sm:$0xff]
    %v173 = vld [vmem:[%s1 + $0x4a0] sm:$0xff]
    %v174 = vld [vmem:[%s1 + $0x4a8] sm:$0xff]
    %v175 = vld [vmem:[%s1 + $0x4b0] sm:$0xff]
    %v176 = vld [vmem:[%s1 + $0x4b8] sm:$0xff]
    %v177 = vld [vmem:[%s1 + $0x4c0] sm:$0xff]
    %v178 = vld [vmem:[%s1 + $0x4c8] sm:$0xff]
    %v179 = vld [vmem:[%s1 + $0x4d0] sm:$0xff]
    %v180 = vld [vmem:[%s1 + $0x4d8] sm:$0xff]
    %v181 = vld [vmem:[%s1 + $0x4e0] sm:$0xff]
    %v182 = vld [vmem:[%s1 + $0x4e8] sm:$0xff]
    %v183 = vld [vmem:[%s1 + $0x4f0] sm:$0xff]
    %v184 = vld [vmem:[%s1 + $0x4f8] sm:$0xff]
    %v185 = vld [vmem:[%s1 + $0x500] sm:$0xff]
    %v186 = vld [vmem:[%s1 + $0x508] sm:$0xff]
    %v187 = vld [vmem:[%s1 + $0x510] sm:$0xff]
    %v188 = vld [vmem:[%s1 + $0x518] sm:$0xff]
    %v189 = vld [vmem:[%s1 + $0x520] sm:$0xff]
    %v190 = vld [vmem:[%s1 + $0x528] sm:$0xff]
    %v191 = vld [vmem:[%s1 + $0x530] sm:$0xff]
    %v192 = vld [vmem:[%s1 + $0x538] sm:$0xff]
    %v193 = vld [vmem:[%s1 + $0x540] sm:$0xff]
    %v194 = vld [vmem:[%s1 + $0x548] sm:$0xff]
    %v195 = vld [vmem:[%s1 + $0x550] sm:$0xff]
    %v196 = vld [vmem:[%s1 + $0x558] sm:$0xff]
    %v197 = vld [vmem:[%s1 + $0x560] sm:$0xff]
    %v198 = vld [vmem:[%s1 + $0x568] sm:$0xff]
    %v199 = vld [vmem:[%s1 + $0x570] sm:$0xff]
    %v200 = vld [vmem:[%s1 + $0x578] sm:$0xff]
    %v201 = vld [vmem:[%s1 + $0x580] sm:$0xff]
    %v202 = vld [vmem:[%s1 + $0x588] sm:$0xff]
    %v203 = vld [vmem:[%s1 + $0x590] sm:$0xff]
    %v204 = vld [vmem:[%s1 + $0x598] sm:$0xff]
    %v205 = vld [vmem:[%s1 + $0x5a0] sm:$0xff]
    %v206 = vld [vmem:[%s1 + $0x5a8] sm:$0xff]
    %v207 = vld [vmem:[%s1 + $0x5b0] sm:$0xff]
    %v208 = vld [vmem:[%s1 + $0x5b8] sm:$0xff]
    %v209 = vld [vmem:[%s1 + $0x5c0] sm:$0xff]
    %v210 = vld [vmem:[%s1 + $0x5c8] sm:$0xff]
    %v211 = vld [vmem:[%s1 + $0x5d0] sm:$0xff]
    %v212 = vld [vmem:[%s1 + $0x5d8] sm:$0xff]
    %v213 = vld [vmem:[%s1 + $0x5e0] sm:$0xff]
    %v214 = vld [vmem:[%s1 + $0x5e8] sm:$0xff]
    %v215 = vld [vmem:[%s1 + $0x5f0] sm:$0xff]
    %v216 = vld [vmem:[%s1 + $0x5f8] sm:$0xff]
    %v217 = vld [vmem:[%s1 + $0x600] sm:$0xff]
    %v218 = vld [vmem:[%s1 + $0x608] sm:$0xff]
    %v219 = vld [vmem:[%s1 + $0x610] sm:$0xff]
    %v220 = vld [vmem:[%s1 + $0x618] sm:$0xff]
    %v221 = vld [vmem:[%s1 + $0x620] sm:$0xff]
    %v222 = vld [vmem:[%s1 + $0x628] sm:$0xff]
    %v223 = vld [vmem:[%s1 + $0x630] sm:$0xff]
    %v224 = vld [vmem:[%s1 + $0x638] sm:$0xff]
    %v225 = vld [vmem:[%s1 + $0x640] sm:$0xff]
    %v226 = vld [vmem:[%s1 + $0x648] sm:$0xff]
    %v227 = vld [vmem:[%s1 + $0x650] sm:$0xff]
    %v228 = vld [vmem:[%s1 + $0x658] sm:$0xff]
    %v229 = vld [vmem:[%s1 + $0x660] sm:$0xff]
    %v230 = vld [vmem:[%s1 + $0x668] sm:$0xff]
    %v231 = vld [vmem:[%s1 + $0x670] sm:$0xff]
    %v232 = vld [vmem:[%s1 + $0x678] sm:$0xff]
    %v233 = vld [vmem:[%s1 + $0x680] sm:$0xff]
    %v234 = vld [vmem:[%s1 + $0x688] sm:$0xff]
    %v235 = vld [vmem:[%s1 + $0x690] sm:$0xff]
    %v236 = vld [vmem:[%s1 + $0x698] sm:$0xff]
    %v237 = vld [vmem:[%s1 + $0x6a0] sm:$0xff]
    %v238 = vld [vmem:[%s1 + $0x6a8] sm:$0xff]
    %v239 = vld [vmem:[%s1 + $0x6b0] sm:$0xff]
    %v240 = vld [vmem:[%s1 + $0x6b8] sm:$0xff]
    %v241 = vld [vmem:[%s1 + $0x6c0] sm:$0xff]
    %v242 = vld [vmem:[%s1 + $0x6c8] sm:$0xff]
    %v243 = vld [vmem:[%s1 + $0x6d0] sm:$0xff]
    %v244 = vld [vmem:[%s1 + $0x6d8] sm:$0xff]
    %v245 = vld [vmem:[%s1 + $0x6e0] sm:$0xff]
    %v246 = vld [vmem:[%s1 + $0x6e8] sm:$0xff]
    %v247 = vld [vmem:[%s1 + $0x6f0] sm:$0xff]
    %v248 = vld [vmem:[%s1 + $0x6f8] sm:$0xff]
    %v249 = vld [vmem:[%s1 + $0x700] sm:$0xff]
    %v250 = vld [vmem:[%s1 + $0x708] sm:$0xff]
    %v251 = vld [vmem:[%s1 + $0x710] sm:$0xff]
    %v252 = vld [vmem:[%s1 + $0x718] sm:$0xff]
    %v253 = vld [vmem:[%s1 + $0x720] sm:$0xff]
    %v254 = vld [vmem:[%s1 + $0x728] sm:$0xff]
    %v255 = vld [vmem:[%s1 + $0x730] sm:$0xff]
    %v256 = vld [vmem:[%s1 + $0x738] sm:$0xff]
    %v257 = vld [vmem:[%s1 + $0x740] sm:$0xff]
    %v258 = vld [vmem:[%s1 + $0x748] sm:$0xff]
    %v259 = vld [vmem:[%s1 + $0x750] sm:$0xff]
    %v260 = vld [vmem:[%s1 + $0x758] sm:$0xff]
    %v261 = vld [vmem:[%s1 + $0x760] sm:$0xff]
    %v262 = vld [vmem:[%s1 + $0x768] sm:$0xff]
    %v263 = vld [vmem:[%s1 + $0x770] sm:$0xff]
    %v264 = vld [vmem:[%s1 + $0x778] sm:$0xff]
    %v265 = vld [vmem:[%s1 + $0x780] sm:$0xff]
    %v266 = vld [vmem:[%s1 + $0x788] sm:$0xff]
    %v267 = vld [vmem:[%s1 + $0x790] sm:$0xff]
    %v268 = vld [vmem:[%s1 + $0x798] sm:$0xff]
    %v269 = vld [vmem:[%s1 + $0x7a0] sm:$0xff]
    %v270 = vld [vmem:[%s1 + $0x7a8] sm:$0xff]
    %v271 = vld [vmem:[%s1 + $0x7b0] sm:$0xff]
    %v272 = vld [vmem:[%s1 + $0x7b8] sm:$0xff]
    %v273 = vld [vmem:[%s1 + $0x7c0] sm:$0xff]
    %v274 = vld [vmem:[%s1 + $0x7c8] sm:$0xff]
    %v275 = vld [vmem:[%s1 + $0x7d0] sm:$0xff]
    %v276 = vld [vmem:[%s1 + $0x7d8] sm:$0xff]
    %v277 = vld [vmem:[%s1 + $0x7e0] sm:$0xff]
    %v278 = vld [vmem:[%s1 + $0x7e8] sm:$0xff]
    %v279 = vld [vmem:[%s1 + $0x7f0] sm:$0xff]
    %v280 = vld [vmem:[%s1 + $0x7f8] sm:$0xff]
    %v281 = vld [vmem:[%s1 + $0x800] sm:$0xff]
    %v282 = vld [vmem:[%s1 + $0x808] sm:$0xff]
    %v283 = vld [vmem:[%s1 + $0x810] sm:$0xff]
    %v284 = vld [vmem:[%s1 + $0x818] sm:$0xff]
    %v285 = vld [vmem:[%s1 + $0x820] sm:$0xff]
    %v286 = vld [vmem:[%s1 + $0x828] sm:$0xff]
    %v287 = vld [vmem:[%s1 + $0x830] sm:$0xff]
    %v288 = vld [vmem:[%s1 + $0x838] sm:$0xff]
    %v289 = vld [vmem:[%s1 + $0x840] sm:$0xff]
    %v290 = vld [vmem:[%s1 + $0x848] sm:$0xff]
    %v291 = vld [vmem:[%s1 + $0x850] sm:$0xff]
    %v292 = vld [vmem:[%s1 + $0x858] sm:$0xff]
    %v293 = vld [vmem:[%s1 + $0x860] sm:$0xff]
    %v294 = vld [vmem:[%s1 + $0x868] sm:$0xff]
    %v295 = vld [vmem:[%s1 + $0x870] sm:$0xff]
    %v296 = vld [vmem:[%s1 + $0x878] sm:$0xff]
    %v297 = vld [vmem:[%s1 + $0x880] sm:$0xff]
    %v298 = vld [vmem:[%s1 + $0x888] sm:$0xff]
    %v299 = vld [vmem:[%s1 + $0x890] sm:$0xff]
    %v300 = vld [vmem:[%s1 + $0x898] sm:$0xff]
    %v301 = vld [vmem:[%s1 + $0x8a0] sm:$0xff]
    %v302 = vld [vmem:[%s1 + $0x8a8] sm:$0xff]
    %v303 = vld [vmem:[%s1 + $0x8b0] sm:$0xff]
    %v304 = vld [vmem:[%s1 + $0x8b8] sm:$0xff]
    %v305 = vld [vmem:[%s1 + $0x8c0] sm:$0xff]
    %v306 = vld [vmem:[%s1 + $0x8c8] sm:$0xff]
    %v307 = vld [vmem:[%s1 + $0x8d0] sm:$0xff]
    %v308 = vld [vmem:[%s1 + $0x8d8] sm:$0xff]
    %v309 = vld [vmem:[%s1 + $0x8e0] sm:$0xff]
    %v310 = vld [vmem:[%s1 + $0x8e8] sm:$0xff]
    %v311 = vld [vmem:[%s1 + $0x8f0] sm:$0xff]
    %v312 = vld [vmem:[%s1 + $0x8f8] sm:$0xff]
    %v313 = vld [vmem:[%s1 + $0x900] sm:$0xff]
    %v314 = vld [vmem:[%s1 + $0x908] sm:$0xff]
    %v315 = vld [vmem:[%s1 + $0x910] sm:$0xff]
    %v316 = vld [vmem:[%s1 + $0x918] sm:$0xff]
    %v317 = vld [vmem:[%s1 + $0x920] sm:$0xff]
    %v318 = vld [vmem:[%s1 + $0x928] sm:$0xff]
    %v319 = vld [vmem:[%s1 + $0x930] sm:$0xff]
    %v320 = vld [vmem:[%s1 + $0x938] sm:$0xff]
    %v321 = vld [vmem:[%s1 + $0x940] sm:$0xff]
    %v322 = vld [vmem:[%s1 + $0x948] sm:$0xff]
    %v323 = vld [vmem:[%s1 + $0x950] sm:$0xff]
    %v324 = vld [vmem:[%s1 + $0x958] sm:$0xff]
    %v325 = vld [vmem:[%s1 + $0x960] sm:$0xff]
    %v326 = vld [vmem:[%s1 + $0x968] sm:$0xff]
    %v327 = vld [vmem:[%s1 + $0x970] sm:$0xff]
    %v328 = vld [vmem:[%s1 + $0x978] sm:$0xff]
    %v329 = vld [vmem:[%s1 + $0x980] sm:$0xff]
    %v330 = vld [vmem:[%s1 + $0x988] sm:$0xff]
    %v331 = vld [vmem:[%s1 + $0x990] sm:$0xff]
    %v332 = vld [vmem:[%s1 + $0x998] sm:$0xff]
    %v333 = vld [vmem:[%s1 + $0x9a0] sm:$0xff]
    %v334 = vld [vmem:[%s1 + $0x9a8] sm:$0xff]
    %v335 = vld [vmem:[%s1 + $0x9b0] sm:$0xff]
    %v336 = vld [vmem:[%s1 + $0x9b8] sm:$0xff]
    %v337 = vld [vmem:[%s1 + $0x9c0] sm:$0xff]
    %v338 = vld [vmem:[%s1 + $0x9c8] sm:$0xff]
    %v339 = vld [vmem:[%s1 + $0x9d0] sm:$0xff]
    %v340 = vld [vmem:[%s1 + $0x9d8] sm:$0xff]
    %v341 = vld [vmem:[%s1 + $0x9e0] sm:$0xff]
    %v342 = vld [vmem:[%s1 + $0x9e8] sm:$0xff]
    %v343 = vld [vmem:[%s1 + $0x9f0] sm:$0xff]
    %v344 = vld [vmem:[%s1 + $0x9f8] sm:$0xff]
    %v345 = vld [vmem:[%s1 + $0xa00] sm:$0xff]
    %v346 = vld [vmem:[%s1 + $0xa08] sm:$0xff]
    %v347 = vld [vmem:[%s1 + $0xa10] sm:$0xff]
    %v348 = vld [vmem:[%s1 + $0xa18] sm:$0xff]
    %v349 = vld [vmem:[%s2] sm:$0x3]
    %v351 = vlaneseq
    %v352 = vshrl.u32 %v351, 7
    %v353 = vsub.s32 0, %v352
    %v354 = vrot.slane %v349, %v353
    %v355 = vlaneseq
    %v356 = vshrl.u32 %v355, 7
    %v357 = vsub.s32 1, %v356
    %v358 = vrot.slane %v349, %v357
    %v364 = vcombine.high %v22, %v22
    %v366 = vunpack.c.l.s4 1966171168
    %v367 = vunpack.c.0.s8 %v366
    %v368 = vlaneseq
    %v369 = vshrl.u32 %v368, 7
    %v370 = vsub.s32 %v367, %v369
    %v371 = vrot.slane %v22, %v370
    %v373 = vunpack.c.l.s4 1966171168
    %v374 = vunpack.c.0.s8 %v373
    %v375 = vlaneseq
    %v376 = vshrl.u32 %v375, 7
    %v377 = vsub.s32 %v374, %v376
    %v378 = vrot.slane %v364, %v377
    %v379 = vcombine.high %v371, %v371
    %v380 = vcombine.high %v378, %v378
    %v382 = vunpack.c.l.s4 1966171168
    %v383 = vunpack.c.0.s8 %v382
    %v384 = vlaneseq
    %v385 = vshrl.u32 %v384, 7
    %v386 = vsub.s32 %v383, %v385
    %v387 = vrot.slane %v371, %v386
    %v389 = vunpack.c.l.s4 1966171168
    %v390 = vunpack.c.0.s8 %v389
    %v391 = vlaneseq
    %v392 = vshrl.u32 %v391, 7
    %v393 = vsub.s32 %v390, %v392
    %v394 = vrot.slane %v378, %v393
    %v396 = vunpack.c.l.s4 1966171168
    %v397 = vunpack.c.0.s8 %v396
    %v398 = vlaneseq
    %v399 = vshrl.u32 %v398, 7
    %v400 = vsub.s32 %v397, %v399
    %v401 = vrot.slane %v379, %v400
    %v403 = vunpack.c.l.s4 1966171168
    %v404 = vunpack.c.0.s8 %v403
    %v405 = vlaneseq
    %v406 = vshrl.u32 %v405, 7
    %v407 = vsub.s32 %v404, %v406
    %v408 = vrot.slane %v380, %v407
    %v409 = vcombine.high %v387, %v387
    %v410 = vcombine.high %v394, %v394
    %v411 = vcombine.high %v401, %v401
    %v412 = vcombine.high %v408, %v408
    %v413 = vcombine.high %v23, %v23
    %v415 = vunpack.c.l.s4 1966171168
    %v416 = vunpack.c.0.s8 %v415
    %v417 = vlaneseq
    %v418 = vshrl.u32 %v417, 7
    %v419 = vsub.s32 %v416, %v418
    %v420 = vrot.slane %v23, %v419
    %v422 = vunpack.c.l.s4 1966171168
    %v423 = vunpack.c.0.s8 %v422
    %v424 = vlaneseq
    %v425 = vshrl.u32 %v424, 7
    %v426 = vsub.s32 %v423, %v425
    %v427 = vrot.slane %v413, %v426
    %v428 = vcombine.high %v420, %v420
    %v429 = vcombine.high %v427, %v427
    %v431 = vunpack.c.l.s4 1966171168
    %v432 = vunpack.c.0.s8 %v431
    %v433 = vlaneseq
    %v434 = vshrl.u32 %v433, 7
    %v435 = vsub.s32 %v432, %v434
    %v436 = vrot.slane %v420, %v435
    %v438 = vunpack.c.l.s4 1966171168
    %v439 = vunpack.c.0.s8 %v438
    %v440 = vlaneseq
    %v441 = vshrl.u32 %v440, 7
    %v442 = vsub.s32 %v439, %v441
    %v443 = vrot.slane %v427, %v442
    %v445 = vunpack.c.l.s4 1966171168
    %v446 = vunpack.c.0.s8 %v445
    %v447 = vlaneseq
    %v448 = vshrl.u32 %v447, 7
    %v449 = vsub.s32 %v446, %v448
    %v450 = vrot.slane %v428, %v449
    %v452 = vunpack.c.l.s4 1966171168
    %v453 = vunpack.c.0.s8 %v452
    %v454 = vlaneseq
    %v455 = vshrl.u32 %v454, 7
    %v456 = vsub.s32 %v453, %v455
    %v457 = vrot.slane %v429, %v456
    %v458 = vcombine.high %v436, %v436
    %v459 = vcombine.high %v443, %v443
    %v460 = vcombine.high %v450, %v450
    %v461 = vcombine.high %v457, %v457
    %v462 = vcombine.high %v24, %v24
    %v464 = vunpack.c.l.s4 1966171168
    %v465 = vunpack.c.0.s8 %v464
    %v466 = vlaneseq
    %v467 = vshrl.u32 %v466, 7
    %v468 = vsub.s32 %v465, %v467
    %v469 = vrot.slane %v24, %v468
    %v471 = vunpack.c.l.s4 1966171168
    %v472 = vunpack.c.0.s8 %v471
    %v473 = vlaneseq
    %v474 = vshrl.u32 %v473, 7
    %v475 = vsub.s32 %v472, %v474
    %v476 = vrot.slane %v462, %v475
    %v477 = vcombine.high %v469, %v469
    %v479 = vunpack.c.l.s4 1966171168
    %v480 = vunpack.c.0.s8 %v479
    %v481 = vlaneseq
    %v482 = vshrl.u32 %v481, 7
    %v483 = vsub.s32 %v480, %v482
    %v484 = vrot.slane %v469, %v483
    %v486 = vunpack.c.l.s4 1966171168
    %v487 = vunpack.c.0.s8 %v486
    %v488 = vlaneseq
    %v489 = vshrl.u32 %v488, 7
    %v490 = vsub.s32 %v487, %v489
    %v491 = vrot.slane %v476, %v490
    %v493 = vunpack.c.l.s4 1966171168
    %v494 = vunpack.c.0.s8 %v493
    %v495 = vlaneseq
    %v496 = vshrl.u32 %v495, 7
    %v497 = vsub.s32 %v494, %v496
    %v498 = vrot.slane %v477, %v497
    %v499 = vcombine.high %v484, %v484
    %v500 = vcombine.high %v498, %v498
    %v845 = vunpack.c.l.b16 %v25
    %v846 = vunpack.c.h.b16 %v25
    %v847 = vunpack.c.l.b16 %v26
    %v848 = vunpack.c.h.b16 %v26
    %v849 = vunpack.c.l.b16 %v27
    %v850 = vunpack.c.h.b16 %v27
    %v851 = vunpack.c.l.b16 %v28
    %v852 = vunpack.c.h.b16 %v28
    %v853 = vunpack.c.l.b16 %v29
    %v854 = vunpack.c.h.b16 %v29
    %v855 = vunpack.c.l.b16 %v30
    %v856 = vunpack.c.h.b16 %v30
    %v857 = vunpack.c.l.b16 %v31
    %v858 = vunpack.c.h.b16 %v31
    %v859 = vunpack.c.l.b16 %v32
    %v860 = vunpack.c.h.b16 %v32
    %v861 = vunpack.c.l.b16 %v33
    %v862 = vunpack.c.h.b16 %v33
    %v863 = vunpack.c.l.b16 %v34
    %v864 = vunpack.c.h.b16 %v34
    %v865 = vunpack.c.l.b16 %v35
    %v866 = vunpack.c.h.b16 %v35
    %v867 = vunpack.c.l.b16 %v36
    %v868 = vunpack.c.h.b16 %v36
    %v869 = vunpack.c.l.b16 %v37
    %v870 = vunpack.c.h.b16 %v37
    %v871 = vunpack.c.l.b16 %v38
    %v872 = vunpack.c.h.b16 %v38
    %v873 = vunpack.c.l.b16 %v39
    %v874 = vunpack.c.h.b16 %v39
    %v875 = vunpack.c.l.b16 %v40
    %v876 = vunpack.c.h.b16 %v40
    %v877 = vunpack.c.l.b16 %v41
    %v878 = vunpack.c.h.b16 %v41
    %v879 = vunpack.c.l.b16 %v42
    %v880 = vunpack.c.h.b16 %v42
    %v881 = vunpack.c.l.b16 %v43
    %v882 = vunpack.c.h.b16 %v43
    %v883 = vunpack.c.l.b16 %v44
    %v884 = vunpack.c.h.b16 %v44
    %v885 = vunpack.c.l.b16 %v45
    %v886 = vunpack.c.h.b16 %v45
    %v887 = vunpack.c.l.b16 %v46
    %v888 = vunpack.c.h.b16 %v46
    %v889 = vunpack.c.l.b16 %v47
    %v890 = vunpack.c.h.b16 %v47
    %v891 = vunpack.c.l.b16 %v48
    %v892 = vunpack.c.h.b16 %v48
    %v893 = vunpack.c.l.b16 %v49
    %v894 = vunpack.c.h.b16 %v49
    %v895 = vunpack.c.l.b16 %v50
    %v896 = vunpack.c.h.b16 %v50
    %v897 = vunpack.c.l.b16 %v51
    %v898 = vunpack.c.h.b16 %v51
    %v899 = vunpack.c.l.b16 %v52
    %v900 = vunpack.c.h.b16 %v52
    %v901 = vunpack.c.l.b16 %v53
    %v902 = vunpack.c.h.b16 %v53
    %v903 = vunpack.c.l.b16 %v54
    %v904 = vunpack.c.h.b16 %v54
    %v905 = vunpack.c.l.b16 %v55
    %v906 = vunpack.c.h.b16 %v55
    %v907 = vunpack.c.l.b16 %v56
    %v908 = vunpack.c.h.b16 %v56
    %v909 = vunpack.c.l.b16 %v57
    %v910 = vunpack.c.h.b16 %v57
    %v911 = vunpack.c.l.b16 %v58
    %v912 = vunpack.c.h.b16 %v58
    %v913 = vunpack.c.l.b16 %v59
    %v914 = vunpack.c.h.b16 %v59
    %v915 = vunpack.c.l.b16 %v60
    %v916 = vunpack.c.h.b16 %v60
    %v917 = vunpack.c.l.b16 %v61
    %v918 = vunpack.c.h.b16 %v61
    %v919 = vunpack.c.l.b16 %v62
    %v920 = vunpack.c.h.b16 %v62
    %v921 = vunpack.c.l.b16 %v63
    %v922 = vunpack.c.h.b16 %v63
    %v923 = vunpack.c.l.b16 %v64
    %v924 = vunpack.c.h.b16 %v64
    %v925 = vunpack.c.l.b16 %v65
    %v926 = vunpack.c.h.b16 %v65
    %v927 = vunpack.c.l.b16 %v66
    %v928 = vunpack.c.h.b16 %v66
    %v929 = vunpack.c.l.b16 %v67
    %v930 = vunpack.c.h.b16 %v67
    %v931 = vunpack.c.l.b16 %v68
    %v932 = vunpack.c.h.b16 %v68
    %v933 = vunpack.c.l.b16 %v69
    %v934 = vunpack.c.h.b16 %v69
    %v935 = vunpack.c.l.b16 %v70
    %v936 = vunpack.c.h.b16 %v70
    %v937 = vunpack.c.l.b16 %v71
    %v938 = vunpack.c.h.b16 %v71
    %v939 = vunpack.c.l.b16 %v72
    %v940 = vunpack.c.h.b16 %v72
    %v941 = vunpack.c.l.b16 %v73
    %v942 = vunpack.c.h.b16 %v73
    %v943 = vunpack.c.l.b16 %v74
    %v944 = vunpack.c.h.b16 %v74
    %v945 = vunpack.c.l.b16 %v75
    %v946 = vunpack.c.h.b16 %v75
    %v947 = vunpack.c.l.b16 %v76
    %v948 = vunpack.c.h.b16 %v76
    %v949 = vunpack.c.l.b16 %v77
    %v950 = vunpack.c.h.b16 %v77
    %v951 = vunpack.c.l.b16 %v78
    %v952 = vunpack.c.h.b16 %v78
    %v953 = vunpack.c.l.b16 %v79
    %v954 = vunpack.c.h.b16 %v79
    %v955 = vunpack.c.l.b16 %v80
    %v956 = vunpack.c.h.b16 %v80
    %v957 = vunpack.c.l.b16 %v81
    %v958 = vunpack.c.h.b16 %v81
    %v959 = vunpack.c.l.b16 %v82
    %v960 = vunpack.c.h.b16 %v82
    %v961 = vunpack.c.l.b16 %v83
    %v962 = vunpack.c.h.b16 %v83
    %v963 = vunpack.c.l.b16 %v84
    %v964 = vunpack.c.h.b16 %v84
    %v965 = vunpack.c.l.b16 %v85
    %v966 = vunpack.c.h.b16 %v85
    %v967 = vunpack.c.l.b16 %v86
    %v968 = vunpack.c.h.b16 %v86
    %v969 = vunpack.c.l.b16 %v87
    %v970 = vunpack.c.h.b16 %v87
    %v971 = vunpack.c.l.b16 %v88
    %v972 = vunpack.c.h.b16 %v88
    %v973 = vunpack.c.l.b16 %v89
    %v974 = vunpack.c.h.b16 %v89
    %v975 = vunpack.c.l.b16 %v90
    %v976 = vunpack.c.h.b16 %v90
    %v977 = vunpack.c.l.b16 %v91
    %v978 = vunpack.c.h.b16 %v91
    %v979 = vunpack.c.l.b16 %v92
    %v980 = vunpack.c.h.b16 %v92
    %v981 = vunpack.c.l.b16 %v93
    %v982 = vunpack.c.h.b16 %v93
    %v983 = vunpack.c.l.b16 %v94
    %v984 = vunpack.c.h.b16 %v94
    %v985 = vunpack.c.l.b16 %v95
    %v986 = vunpack.c.h.b16 %v95
    %v987 = vunpack.c.l.b16 %v96
    %v988 = vunpack.c.h.b16 %v96
    %v989 = vunpack.c.l.b16 %v97
    %v990 = vunpack.c.h.b16 %v97
    %v991 = vunpack.c.l.b16 %v98
    %v992 = vunpack.c.h.b16 %v98
    %v993 = vunpack.c.l.b16 %v99
    %v994 = vunpack.c.h.b16 %v99
    %v995 = vunpack.c.l.b16 %v100
    %v996 = vunpack.c.h.b16 %v100
    %v997 = vunpack.c.l.b16 %v101
    %v998 = vunpack.c.h.b16 %v101
    %v999 = vunpack.c.l.b16 %v102
    %v1000 = vunpack.c.h.b16 %v102
    %v1001 = vunpack.c.l.b16 %v103
    %v1002 = vunpack.c.h.b16 %v103
    %v1003 = vunpack.c.l.b16 %v104
    %v1004 = vunpack.c.h.b16 %v104
    %v1005 = vunpack.c.l.b16 %v105
    %v1006 = vunpack.c.h.b16 %v105
    %v1007 = vunpack.c.l.b16 %v106
    %v1008 = vunpack.c.h.b16 %v106
    %v1009 = vunpack.c.l.b16 %v107
    %v1010 = vunpack.c.h.b16 %v107
    %v1011 = vunpack.c.l.b16 %v108
    %v1012 = vunpack.c.h.b16 %v108
    %v1013 = vunpack.c.l.b16 %v109
    %v1014 = vunpack.c.h.b16 %v109
    %v1015 = vunpack.c.l.b16 %v110
    %v1016 = vunpack.c.h.b16 %v110
    %v1017 = vunpack.c.l.b16 %v111
    %v1018 = vunpack.c.h.b16 %v111
    %v1019 = vunpack.c.l.b16 %v112
    %v1020 = vunpack.c.h.b16 %v112
    %v1021 = vunpack.c.l.b16 %v113
    %v1022 = vunpack.c.h.b16 %v113
    %v1023 = vunpack.c.l.b16 %v114
    %v1024 = vunpack.c.h.b16 %v114
    %v1025 = vunpack.c.l.b16 %v115
    %v1026 = vunpack.c.h.b16 %v115
    %v1027 = vunpack.c.l.b16 %v116
    %v1028 = vunpack.c.h.b16 %v116
    %v1029 = vunpack.c.l.b16 %v117
    %v1030 = vunpack.c.h.b16 %v117
    %v1031 = vunpack.c.l.b16 %v118
    %v1032 = vunpack.c.h.b16 %v118
    %v1033 = vunpack.c.l.b16 %v119
    %v1034 = vunpack.c.h.b16 %v119
    %v1035 = vunpack.c.l.b16 %v120
    %v1036 = vunpack.c.h.b16 %v120
    %v1037 = vunpack.c.l.b16 %v121
    %v1038 = vunpack.c.h.b16 %v121
    %v1039 = vunpack.c.l.b16 %v122
    %v1040 = vunpack.c.h.b16 %v122
    %v1041 = vunpack.c.l.b16 %v123
    %v1042 = vunpack.c.h.b16 %v123
    %v1043 = vunpack.c.l.b16 %v124
    %v1044 = vunpack.c.h.b16 %v124
    %v1045 = vunpack.c.l.b16 %v125
    %v1046 = vunpack.c.h.b16 %v125
    %v1047 = vunpack.c.l.b16 %v126
    %v1048 = vunpack.c.h.b16 %v126
    %v1049 = vunpack.c.l.b16 %v127
    %v1050 = vunpack.c.h.b16 %v127
    %v1051 = vunpack.c.l.b16 %v128
    %v1052 = vunpack.c.h.b16 %v128
    %v1053 = vunpack.c.l.b16 %v129
    %v1054 = vunpack.c.h.b16 %v129
    %v1055 = vunpack.c.l.b16 %v130
    %v1056 = vunpack.c.h.b16 %v130
    %v1057 = vunpack.c.l.b16 %v131
    %v1058 = vunpack.c.h.b16 %v131
    %v1059 = vunpack.c.l.b16 %v132
    %v1060 = vunpack.c.h.b16 %v132
    %v1061 = vunpack.c.l.b16 %v133
    %v1062 = vunpack.c.h.b16 %v133
    %v1063 = vunpack.c.l.b16 %v134
    %v1064 = vunpack.c.h.b16 %v134
    %v1065 = vunpack.c.l.b16 %v135
    %v1066 = vunpack.c.h.b16 %v135
    %v1067 = vunpack.c.l.b16 %v136
    %v1068 = vunpack.c.h.b16 %v136
    %v1069 = vunpack.c.l.b16 %v137
    %v1070 = vunpack.c.h.b16 %v137
    %v1071 = vunpack.c.l.b16 %v138
    %v1072 = vunpack.c.h.b16 %v138
    %v1073 = vunpack.c.l.b16 %v139
    %v1074 = vunpack.c.h.b16 %v139
    %v1075 = vunpack.c.l.b16 %v140
    %v1076 = vunpack.c.h.b16 %v140
    %v1077 = vunpack.c.l.b16 %v141
    %v1078 = vunpack.c.h.b16 %v141
    %v1079 = vunpack.c.l.b16 %v142
    %v1080 = vunpack.c.h.b16 %v142
    %v1081 = vunpack.c.l.b16 %v143
    %v1082 = vunpack.c.h.b16 %v143
    %v1083 = vunpack.c.l.b16 %v144
    %v1084 = vunpack.c.h.b16 %v144
    %v1085 = vunpack.c.l.b16 %v145
    %v1086 = vunpack.c.h.b16 %v145
    %v1087 = vunpack.c.l.b16 %v146
    %v1088 = vunpack.c.h.b16 %v146
    %v1089 = vunpack.c.l.b16 %v147
    %v1090 = vunpack.c.h.b16 %v147
    %v1091 = vunpack.c.l.b16 %v148
    %v1092 = vunpack.c.h.b16 %v148
    %v1093 = vunpack.c.l.b16 %v149
    %v1094 = vunpack.c.h.b16 %v149
    %v1095 = vunpack.c.l.b16 %v150
    %v1096 = vunpack.c.h.b16 %v150
    %v1097 = vunpack.c.l.b16 %v151
    %v1098 = vunpack.c.h.b16 %v151
    %v1099 = vunpack.c.l.b16 %v152
    %v1100 = vunpack.c.h.b16 %v152
    %v1101 = vunpack.c.l.b16 %v153
    %v1102 = vunpack.c.h.b16 %v153
    %v1103 = vunpack.c.l.b16 %v154
    %v1104 = vunpack.c.h.b16 %v154
    %v1105 = vunpack.c.l.b16 %v155
    %v1106 = vunpack.c.h.b16 %v155
    %v1107 = vunpack.c.l.b16 %v156
    %v1108 = vunpack.c.h.b16 %v156
    %v1109 = vunpack.c.l.b16 %v157
    %v1110 = vunpack.c.h.b16 %v157
    %v1111 = vunpack.c.l.b16 %v158
    %v1112 = vunpack.c.h.b16 %v158
    %v1113 = vunpack.c.l.b16 %v159
    %v1114 = vunpack.c.h.b16 %v159
    %v1115 = vunpack.c.l.b16 %v160
    %v1116 = vunpack.c.h.b16 %v160
    %v1117 = vunpack.c.l.b16 %v161
    %v1118 = vunpack.c.h.b16 %v161
    %v1119 = vunpack.c.l.b16 %v162
    %v1120 = vunpack.c.h.b16 %v162
    %v1121 = vunpack.c.l.b16 %v163
    %v1122 = vunpack.c.h.b16 %v163
    %v1123 = vunpack.c.l.b16 %v164
    %v1124 = vunpack.c.h.b16 %v164
    %v1125 = vunpack.c.l.b16 %v165
    %v1126 = vunpack.c.h.b16 %v165
    %v1127 = vunpack.c.l.b16 %v166
    %v1128 = vunpack.c.h.b16 %v166
    %v1129 = vunpack.c.l.b16 %v167
    %v1130 = vunpack.c.h.b16 %v167
    %v1131 = vunpack.c.l.b16 %v168
    %v1132 = vunpack.c.h.b16 %v168
    %v1133 = vunpack.c.l.b16 %v169
    %v1134 = vunpack.c.h.b16 %v169
    %v1135 = vunpack.c.l.b16 %v170
    %v1136 = vunpack.c.h.b16 %v170
    %v1137 = vunpack.c.l.b16 %v171
    %v1138 = vunpack.c.h.b16 %v171
    %v1139 = vunpack.c.l.b16 %v172
    %v1140 = vunpack.c.h.b16 %v172
    %v1141 = vunpack.c.l.b16 %v173
    %v1142 = vunpack.c.h.b16 %v173
    %v1143 = vunpack.c.l.b16 %v174
    %v1144 = vunpack.c.h.b16 %v174
    %v1145 = vunpack.c.l.b16 %v175
    %v1146 = vunpack.c.h.b16 %v175
    %v1147 = vunpack.c.l.b16 %v176
    %v1148 = vunpack.c.h.b16 %v176
    %v1149 = vunpack.c.l.b16 %v177
    %v1150 = vunpack.c.h.b16 %v177
    %v1151 = vunpack.c.l.b16 %v178
    %v1152 = vunpack.c.h.b16 %v178
    %v1153 = vunpack.c.l.b16 %v179
    %v1154 = vunpack.c.h.b16 %v179
    %v1155 = vunpack.c.l.b16 %v180
    %v1156 = vunpack.c.h.b16 %v180
    %v1157 = vunpack.c.l.b16 %v181
    %v1158 = vunpack.c.h.b16 %v181
    %v1159 = vunpack.c.l.b16 %v182
    %v1160 = vunpack.c.h.b16 %v182
    %v1161 = vunpack.c.l.b16 %v183
    %v1162 = vunpack.c.h.b16 %v183
    %v1163 = vunpack.c.l.b16 %v184
    %v1164 = vunpack.c.h.b16 %v184
    %v1165 = vunpack.c.l.b16 %v185
    %v1166 = vunpack.c.h.b16 %v185
    %v1167 = vunpack.c.l.b16 %v186
    %v1168 = vunpack.c.h.b16 %v186
    %v1169 = vunpack.c.l.b16 %v187
    %v1170 = vunpack.c.h.b16 %v187
    %v1171 = vunpack.c.l.b16 %v188
    %v1172 = vunpack.c.h.b16 %v188
    %v1173 = vunpack.c.l.b16 %v189
    %v1174 = vunpack.c.h.b16 %v189
    %v1175 = vunpack.c.l.b16 %v190
    %v1176 = vunpack.c.h.b16 %v190
    %v1177 = vunpack.c.l.b16 %v191
    %v1178 = vunpack.c.h.b16 %v191
    %v1179 = vunpack.c.l.b16 %v192
    %v1180 = vunpack.c.h.b16 %v192
    %v1181 = vunpack.c.l.b16 %v193
    %v1182 = vunpack.c.h.b16 %v193
    %v1183 = vunpack.c.l.b16 %v194
    %v1184 = vunpack.c.h.b16 %v194
    %v1185 = vunpack.c.l.b16 %v195
    %v1186 = vunpack.c.h.b16 %v195
    %v1187 = vunpack.c.l.b16 %v196
    %v1188 = vunpack.c.h.b16 %v196
    %v1189 = vunpack.c.l.b16 %v197
    %v1190 = vunpack.c.h.b16 %v197
    %v1191 = vunpack.c.l.b16 %v198
    %v1192 = vunpack.c.h.b16 %v198
    %v1193 = vunpack.c.l.b16 %v199
    %v1194 = vunpack.c.h.b16 %v199
    %v1195 = vunpack.c.l.b16 %v200
    %v1196 = vunpack.c.h.b16 %v200
    %v1197 = vunpack.c.l.b16 %v201
    %v1198 = vunpack.c.h.b16 %v201
    %v1199 = vunpack.c.l.b16 %v202
    %v1200 = vunpack.c.h.b16 %v202
    %v1201 = vunpack.c.l.b16 %v203
    %v1202 = vunpack.c.h.b16 %v203
    %v1203 = vunpack.c.l.b16 %v204
    %v1204 = vunpack.c.h.b16 %v204
    %v1205 = vunpack.c.l.b16 %v205
    %v1206 = vunpack.c.h.b16 %v205
    %v1207 = vunpack.c.l.b16 %v206
    %v1208 = vunpack.c.h.b16 %v206
    %v1209 = vunpack.c.l.b16 %v207
    %v1210 = vunpack.c.h.b16 %v207
    %v1211 = vunpack.c.l.b16 %v208
    %v1212 = vunpack.c.h.b16 %v208
    %v1213 = vunpack.c.l.b16 %v209
    %v1214 = vunpack.c.h.b16 %v209
    %v1215 = vunpack.c.l.b16 %v210
    %v1216 = vunpack.c.h.b16 %v210
    %v1217 = vunpack.c.l.b16 %v211
    %v1218 = vunpack.c.h.b16 %v211
    %v1219 = vunpack.c.l.b16 %v212
    %v1220 = vunpack.c.h.b16 %v212
    %v1221 = vunpack.c.l.b16 %v213
    %v1222 = vunpack.c.h.b16 %v213
    %v1223 = vunpack.c.l.b16 %v214
    %v1224 = vunpack.c.h.b16 %v214
    %v1225 = vunpack.c.l.b16 %v215
    %v1226 = vunpack.c.h.b16 %v215
    %v1227 = vunpack.c.l.b16 %v216
    %v1228 = vunpack.c.h.b16 %v216
    %v1229 = vunpack.c.l.b16 %v217
    %v1230 = vunpack.c.h.b16 %v217
    %v1231 = vunpack.c.l.b16 %v218
    %v1232 = vunpack.c.h.b16 %v218
    %v1233 = vunpack.c.l.b16 %v219
    %v1234 = vunpack.c.h.b16 %v219
    %v1235 = vunpack.c.l.b16 %v220
    %v1236 = vunpack.c.h.b16 %v220
    %v1237 = vunpack.c.l.b16 %v221
    %v1238 = vunpack.c.h.b16 %v221
    %v1239 = vunpack.c.l.b16 %v222
    %v1240 = vunpack.c.h.b16 %v222
    %v1241 = vunpack.c.l.b16 %v223
    %v1242 = vunpack.c.h.b16 %v223
    %v1243 = vunpack.c.l.b16 %v224
    %v1244 = vunpack.c.h.b16 %v224
    %v1245 = vunpack.c.l.b16 %v225
    %v1246 = vunpack.c.h.b16 %v225
    %v1247 = vunpack.c.l.b16 %v226
    %v1248 = vunpack.c.h.b16 %v226
    %v1249 = vunpack.c.l.b16 %v227
    %v1250 = vunpack.c.h.b16 %v227
    %v1251 = vunpack.c.l.b16 %v228
    %v1252 = vunpack.c.h.b16 %v228
    %v1253 = vunpack.c.l.b16 %v229
    %v1254 = vunpack.c.h.b16 %v229
    %v1255 = vunpack.c.l.b16 %v230
    %v1256 = vunpack.c.h.b16 %v230
    %v1257 = vunpack.c.l.b16 %v231
    %v1258 = vunpack.c.h.b16 %v231
    %v1259 = vunpack.c.l.b16 %v232
    %v1260 = vunpack.c.h.b16 %v232
    %v1261 = vunpack.c.l.b16 %v233
    %v1262 = vunpack.c.h.b16 %v233
    %v1263 = vunpack.c.l.b16 %v234
    %v1264 = vunpack.c.h.b16 %v234
    %v1265 = vunpack.c.l.b16 %v235
    %v1266 = vunpack.c.h.b16 %v235
    %v1267 = vunpack.c.l.b16 %v236
    %v1268 = vunpack.c.h.b16 %v236
    %v1269 = vunpack.c.l.b16 %v237
    %v1270 = vunpack.c.h.b16 %v237
    %v1271 = vunpack.c.l.b16 %v238
    %v1272 = vunpack.c.h.b16 %v238
    %v1273 = vunpack.c.l.b16 %v239
    %v1274 = vunpack.c.h.b16 %v239
    %v1275 = vunpack.c.l.b16 %v240
    %v1276 = vunpack.c.h.b16 %v240
    %v1277 = vunpack.c.l.b16 %v241
    %v1278 = vunpack.c.h.b16 %v241
    %v1279 = vunpack.c.l.b16 %v242
    %v1280 = vunpack.c.h.b16 %v242
    %v1281 = vunpack.c.l.b16 %v243
    %v1282 = vunpack.c.h.b16 %v243
    %v1283 = vunpack.c.l.b16 %v244
    %v1284 = vunpack.c.h.b16 %v244
    %v1285 = vunpack.c.l.b16 %v245
    %v1286 = vunpack.c.h.b16 %v245
    %v1287 = vunpack.c.l.b16 %v246
    %v1288 = vunpack.c.h.b16 %v246
    %v1289 = vunpack.c.l.b16 %v247
    %v1290 = vunpack.c.h.b16 %v247
    %v1291 = vunpack.c.l.b16 %v248
    %v1292 = vunpack.c.h.b16 %v248
    %v1293 = vunpack.c.l.b16 %v249
    %v1294 = vunpack.c.h.b16 %v249
    %v1295 = vunpack.c.l.b16 %v250
    %v1296 = vunpack.c.h.b16 %v250
    %v1297 = vunpack.c.l.b16 %v251
    %v1298 = vunpack.c.h.b16 %v251
    %v1299 = vunpack.c.l.b16 %v252
    %v1300 = vunpack.c.h.b16 %v252
    %v1301 = vunpack.c.l.b16 %v253
    %v1302 = vunpack.c.h.b16 %v253
    %v1303 = vunpack.c.l.b16 %v254
    %v1304 = vunpack.c.h.b16 %v254
    %v1305 = vunpack.c.l.b16 %v255
    %v1306 = vunpack.c.h.b16 %v255
    %v1307 = vunpack.c.l.b16 %v256
    %v1308 = vunpack.c.h.b16 %v256
    %v1309 = vunpack.c.l.b16 %v257
    %v1310 = vunpack.c.h.b16 %v257
    %v1311 = vunpack.c.l.b16 %v258
    %v1312 = vunpack.c.h.b16 %v258
    %v1313 = vunpack.c.l.b16 %v259
    %v1314 = vunpack.c.h.b16 %v259
    %v1315 = vunpack.c.l.b16 %v260
    %v1316 = vunpack.c.h.b16 %v260
    %v1317 = vunpack.c.l.b16 %v261
    %v1318 = vunpack.c.h.b16 %v261
    %v1319 = vunpack.c.l.b16 %v262
    %v1320 = vunpack.c.h.b16 %v262
    %v1321 = vunpack.c.l.b16 %v263
    %v1322 = vunpack.c.h.b16 %v263
    %v1323 = vunpack.c.l.b16 %v264
    %v1324 = vunpack.c.h.b16 %v264
    %v1325 = vunpack.c.l.b16 %v265
    %v1326 = vunpack.c.h.b16 %v265
    %v1327 = vunpack.c.l.b16 %v266
    %v1328 = vunpack.c.h.b16 %v266
    %v1329 = vunpack.c.l.b16 %v267
    %v1330 = vunpack.c.h.b16 %v267
    %v1331 = vunpack.c.l.b16 %v268
    %v1332 = vunpack.c.h.b16 %v268
    %v1333 = vunpack.c.l.b16 %v269
    %v1334 = vunpack.c.h.b16 %v269
    %v1335 = vunpack.c.l.b16 %v270
    %v1336 = vunpack.c.h.b16 %v270
    %v1337 = vunpack.c.l.b16 %v271
    %v1338 = vunpack.c.h.b16 %v271
    %v1339 = vunpack.c.l.b16 %v272
    %v1340 = vunpack.c.h.b16 %v272
    %v1341 = vunpack.c.l.b16 %v273
    %v1342 = vunpack.c.h.b16 %v273
    %v1343 = vunpack.c.l.b16 %v274
    %v1344 = vunpack.c.h.b16 %v274
    %v1345 = vunpack.c.l.b16 %v275
    %v1346 = vunpack.c.h.b16 %v275
    %v1347 = vunpack.c.l.b16 %v276
    %v1348 = vunpack.c.h.b16 %v276
    %v1349 = vunpack.c.l.b16 %v277
    %v1350 = vunpack.c.h.b16 %v277
    %v1351 = vunpack.c.l.b16 %v278
    %v1352 = vunpack.c.h.b16 %v278
    %v1353 = vunpack.c.l.b16 %v279
    %v1354 = vunpack.c.h.b16 %v279
    %v1355 = vunpack.c.l.b16 %v280
    %v1356 = vunpack.c.h.b16 %v280
    %v1357 = vunpack.c.l.b16 %v281
    %v1358 = vunpack.c.h.b16 %v281
    %v1359 = vunpack.c.l.b16 %v282
    %v1360 = vunpack.c.h.b16 %v282
    %v1361 = vunpack.c.l.b16 %v283
    %v1362 = vunpack.c.h.b16 %v283
    %v1363 = vunpack.c.l.b16 %v284
    %v1364 = vunpack.c.h.b16 %v284
    %v1365 = vunpack.c.l.b16 %v285
    %v1366 = vunpack.c.h.b16 %v285
    %v1367 = vunpack.c.l.b16 %v286
    %v1368 = vunpack.c.h.b16 %v286
    %v1369 = vunpack.c.l.b16 %v287
    %v1370 = vunpack.c.h.b16 %v287
    %v1371 = vunpack.c.l.b16 %v288
    %v1372 = vunpack.c.h.b16 %v288
    %v1373 = vunpack.c.l.b16 %v289
    %v1374 = vunpack.c.h.b16 %v289
    %v1375 = vunpack.c.l.b16 %v290
    %v1376 = vunpack.c.h.b16 %v290
    %v1377 = vunpack.c.l.b16 %v291
    %v1378 = vunpack.c.h.b16 %v291
    %v1379 = vunpack.c.l.b16 %v292
    %v1380 = vunpack.c.h.b16 %v292
    %v1381 = vunpack.c.l.b16 %v293
    %v1382 = vunpack.c.h.b16 %v293
    %v1383 = vunpack.c.l.b16 %v294
    %v1384 = vunpack.c.h.b16 %v294
    %v1385 = vunpack.c.l.b16 %v295
    %v1386 = vunpack.c.h.b16 %v295
    %v1387 = vunpack.c.l.b16 %v296
    %v1388 = vunpack.c.h.b16 %v296
    %v1389 = vunpack.c.l.b16 %v297
    %v1390 = vunpack.c.h.b16 %v297
    %v1391 = vunpack.c.l.b16 %v298
    %v1392 = vunpack.c.h.b16 %v298
    %v1393 = vunpack.c.l.b16 %v299
    %v1394 = vunpack.c.h.b16 %v299
    %v1395 = vunpack.c.l.b16 %v300
    %v1396 = vunpack.c.h.b16 %v300
    %v1397 = vunpack.c.l.b16 %v301
    %v1398 = vunpack.c.h.b16 %v301
    %v1399 = vunpack.c.l.b16 %v302
    %v1400 = vunpack.c.h.b16 %v302
    %v1401 = vunpack.c.l.b16 %v303
    %v1402 = vunpack.c.h.b16 %v303
    %v1403 = vunpack.c.l.b16 %v304
    %v1404 = vunpack.c.h.b16 %v304
    %v1405 = vunpack.c.l.b16 %v305
    %v1406 = vunpack.c.h.b16 %v305
    %v1407 = vunpack.c.l.b16 %v306
    %v1408 = vunpack.c.h.b16 %v306
    %v1409 = vunpack.c.l.b16 %v307
    %v1410 = vunpack.c.h.b16 %v307
    %v1411 = vunpack.c.l.b16 %v308
    %v1412 = vunpack.c.h.b16 %v308
    %v1413 = vunpack.c.l.b16 %v309
    %v1414 = vunpack.c.h.b16 %v309
    %v1415 = vunpack.c.l.b16 %v310
    %v1416 = vunpack.c.h.b16 %v310
    %v1417 = vunpack.c.l.b16 %v311
    %v1418 = vunpack.c.h.b16 %v311
    %v1419 = vunpack.c.l.b16 %v312
    %v1420 = vunpack.c.h.b16 %v312
    %v1421 = vunpack.c.l.b16 %v313
    %v1422 = vunpack.c.h.b16 %v313
    %v1423 = vunpack.c.l.b16 %v314
    %v1424 = vunpack.c.h.b16 %v314
    %v1425 = vunpack.c.l.b16 %v315
    %v1426 = vunpack.c.h.b16 %v315
    %v1427 = vunpack.c.l.b16 %v316
    %v1428 = vunpack.c.h.b16 %v316
    %v1429 = vunpack.c.l.b16 %v317
    %v1430 = vunpack.c.h.b16 %v317
    %v1431 = vunpack.c.l.b16 %v318
    %v1432 = vunpack.c.h.b16 %v318
    %v1433 = vunpack.c.l.b16 %v319
    %v1434 = vunpack.c.h.b16 %v319
    %v1435 = vunpack.c.l.b16 %v320
    %v1436 = vunpack.c.h.b16 %v320
    %v1437 = vunpack.c.l.b16 %v321
    %v1438 = vunpack.c.h.b16 %v321
    %v1439 = vunpack.c.l.b16 %v322
    %v1440 = vunpack.c.h.b16 %v322
    %v1441 = vunpack.c.l.b16 %v323
    %v1442 = vunpack.c.h.b16 %v323
    %v1443 = vunpack.c.l.b16 %v324
    %v1444 = vunpack.c.h.b16 %v324
    %v1445 = vunpack.c.l.b16 %v325
    %v1446 = vunpack.c.h.b16 %v325
    %v1447 = vunpack.c.l.b16 %v326
    %v1448 = vunpack.c.h.b16 %v326
    %v1449 = vunpack.c.l.b16 %v327
    %v1450 = vunpack.c.h.b16 %v327
    %v1451 = vunpack.c.l.b16 %v328
    %v1452 = vunpack.c.h.b16 %v328
    %v1453 = vunpack.c.l.b16 %v329
    %v1454 = vunpack.c.h.b16 %v329
    %v1455 = vunpack.c.l.b16 %v330
    %v1456 = vunpack.c.h.b16 %v330
    %v1457 = vunpack.c.l.b16 %v331
    %v1458 = vunpack.c.h.b16 %v331
    %v1459 = vunpack.c.l.b16 %v332
    %v1460 = vunpack.c.h.b16 %v332
    %v1461 = vunpack.c.l.b16 %v333
    %v1462 = vunpack.c.h.b16 %v333
    %v1463 = vunpack.c.l.b16 %v334
    %v1464 = vunpack.c.h.b16 %v334
    %v1465 = vunpack.c.l.b16 %v335
    %v1466 = vunpack.c.h.b16 %v335
    %v1467 = vunpack.c.l.b16 %v336
    %v1468 = vunpack.c.h.b16 %v336
    %v1469 = vunpack.c.l.b16 %v337
    %v1470 = vunpack.c.h.b16 %v337
    %v1471 = vunpack.c.l.b16 %v338
    %v1472 = vunpack.c.h.b16 %v338
    %v1473 = vunpack.c.l.b16 %v339
    %v1474 = vunpack.c.h.b16 %v339
    %v1475 = vunpack.c.l.b16 %v340
    %v1476 = vunpack.c.h.b16 %v340
    %v1477 = vunpack.c.l.b16 %v341
    %v1478 = vunpack.c.h.b16 %v341
    %v1479 = vunpack.c.l.b16 %v342
    %v1480 = vunpack.c.h.b16 %v342
    %v1481 = vunpack.c.l.b16 %v343
    %v1482 = vunpack.c.h.b16 %v343
    %v1483 = vunpack.c.l.b16 %v344
    %v1484 = vunpack.c.h.b16 %v344
    %v1485 = vunpack.c.l.b16 %v345
    %v1486 = vunpack.c.h.b16 %v345
    %v1487 = vunpack.c.l.b16 %v346
    %v1488 = vunpack.c.h.b16 %v346
    %v1489 = vunpack.c.l.b16 %v347
    %v1490 = vunpack.c.h.b16 %v347
    %v1491 = vunpack.c.l.b16 %v348
    %v1492 = vunpack.c.h.b16 %v348
    %v1493 = vpack.c.b16 %v847, %v845
    %v1494 = vpack.c.b16 %v848, %v846
    %v1495 = vpack.c.b16 %v851, %v849
    %v1496 = vpack.c.b16 %v852, %v850
    %v1497 = vpack.c.b16 %v855, %v853
    %v1498 = vpack.c.b16 %v856, %v854
    %v1499 = vpack.c.b16 %v859, %v857
    %v1500 = vpack.c.b16 %v860, %v858
    %v1501 = vpack.c.b16 %v863, %v861
    %v1502 = vpack.c.b16 %v864, %v862
    %v1503 = vpack.c.b16 %v867, %v865
    %v1504 = vpack.c.b16 %v868, %v866
    %v1505 = vpack.c.b16 %v871, %v869
    %v1506 = vpack.c.b16 %v872, %v870
    %v1507 = vpack.c.b16 %v875, %v873
    %v1508 = vpack.c.b16 %v876, %v874
    %v1509 = vpack.c.b16 %v879, %v877
    %v1510 = vpack.c.b16 %v880, %v878
    %v1511 = vpack.c.b16 %v883, %v881
    %v1512 = vpack.c.b16 %v884, %v882
    %v1513 = vpack.c.b16 %v887, %v885
    %v1514 = vpack.c.b16 %v888, %v886
    %v1515 = vpack.c.b16 %v891, %v889
    %v1516 = vpack.c.b16 %v892, %v890
    %v1517 = vpack.c.b16 %v895, %v893
    %v1518 = vpack.c.b16 %v896, %v894
    %v1519 = vpack.c.b16 %v899, %v897
    %v1520 = vpack.c.b16 %v900, %v898
    %v1521 = vpack.c.b16 %v903, %v901
    %v1522 = vpack.c.b16 %v904, %v902
    %v1523 = vpack.c.b16 %v907, %v905
    %v1524 = vpack.c.b16 %v908, %v906
    %v1525 = vpack.c.b16 %v911, %v909
    %v1526 = vpack.c.b16 %v912, %v910
    %v1527 = vpack.c.b16 %v915, %v913
    %v1528 = vpack.c.b16 %v916, %v914
    %v1529 = vpack.c.b16 %v919, %v917
    %v1530 = vpack.c.b16 %v920, %v918
    %v1531 = vpack.c.b16 %v923, %v921
    %v1532 = vpack.c.b16 %v924, %v922
    %v1533 = vpack.c.b16 %v927, %v925
    %v1534 = vpack.c.b16 %v928, %v926
    %v1535 = vpack.c.b16 %v931, %v929
    %v1536 = vpack.c.b16 %v932, %v930
    %v1537 = vpack.c.b16 %v935, %v933
    %v1538 = vpack.c.b16 %v936, %v934
    %v1539 = vpack.c.b16 %v939, %v937
    %v1540 = vpack.c.b16 %v940, %v938
    %v1541 = vpack.c.b16 %v943, %v941
    %v1542 = vpack.c.b16 %v944, %v942
    %v1543 = vpack.c.b16 %v947, %v945
    %v1544 = vpack.c.b16 %v948, %v946
    %v1545 = vpack.c.b16 %v951, %v949
    %v1546 = vpack.c.b16 %v952, %v950
    %v1547 = vpack.c.b16 %v955, %v953
    %v1548 = vpack.c.b16 %v956, %v954
    %v1549 = vpack.c.b16 %v959, %v957
    %v1550 = vpack.c.b16 %v960, %v958
    %v1551 = vpack.c.b16 %v963, %v961
    %v1552 = vpack.c.b16 %v964, %v962
    %v1553 = vpack.c.b16 %v967, %v965
    %v1554 = vpack.c.b16 %v968, %v966
    %v1555 = vpack.c.b16 %v971, %v969
    %v1556 = vpack.c.b16 %v972, %v970
    %v1557 = vpack.c.b16 %v975, %v973
    %v1558 = vpack.c.b16 %v976, %v974
    %v1559 = vpack.c.b16 %v979, %v977
    %v1560 = vpack.c.b16 %v980, %v978
    %v1561 = vpack.c.b16 %v983, %v981
    %v1562 = vpack.c.b16 %v984, %v982
    %v1563 = vpack.c.b16 %v987, %v985
    %v1564 = vpack.c.b16 %v988, %v986
    %v1565 = vpack.c.b16 %v991, %v989
    %v1566 = vpack.c.b16 %v992, %v990
    %v1567 = vpack.c.b16 %v995, %v993
    %v1568 = vpack.c.b16 %v996, %v994
    %v1569 = vpack.c.b16 %v999, %v997
    %v1570 = vpack.c.b16 %v1000, %v998
    %v1571 = vpack.c.b16 %v1003, %v1001
    %v1572 = vpack.c.b16 %v1004, %v1002
    %v1573 = vpack.c.b16 %v1007, %v1005
    %v1574 = vpack.c.b16 %v1008, %v1006
    %v1575 = vpack.c.b16 %v1011, %v1009
    %v1576 = vpack.c.b16 %v1012, %v1010
    %v1577 = vpack.c.b16 %v1015, %v1013
    %v1578 = vpack.c.b16 %v1016, %v1014
    %v1579 = vpack.c.b16 %v1019, %v1017
    %v1580 = vpack.c.b16 %v1020, %v1018
    %v1581 = vpack.c.b16 %v1023, %v1021
    %v1582 = vpack.c.b16 %v1024, %v1022
    %v1583 = vpack.c.b16 %v1027, %v1025
    %v1584 = vpack.c.b16 %v1028, %v1026
    %v1585 = vpack.c.b16 %v1031, %v1029
    %v1586 = vpack.c.b16 %v1032, %v1030
    %v1587 = vpack.c.b16 %v1035, %v1033
    %v1588 = vpack.c.b16 %v1036, %v1034
    %v1589 = vpack.c.b16 %v1039, %v1037
    %v1590 = vpack.c.b16 %v1040, %v1038
    %v1591 = vpack.c.b16 %v1043, %v1041
    %v1592 = vpack.c.b16 %v1044, %v1042
    %v1593 = vpack.c.b16 %v1047, %v1045
    %v1594 = vpack.c.b16 %v1048, %v1046
    %v1595 = vpack.c.b16 %v1051, %v1049
    %v1596 = vpack.c.b16 %v1052, %v1050
    %v1597 = vpack.c.b16 %v1055, %v1053
    %v1598 = vpack.c.b16 %v1056, %v1054
    %v1599 = vpack.c.b16 %v1059, %v1057
    %v1600 = vpack.c.b16 %v1060, %v1058
    %v1601 = vpack.c.b16 %v1063, %v1061
    %v1602 = vpack.c.b16 %v1064, %v1062
    %v1603 = vpack.c.b16 %v1067, %v1065
    %v1604 = vpack.c.b16 %v1068, %v1066
    %v1605 = vpack.c.b16 %v1071, %v1069
    %v1606 = vpack.c.b16 %v1072, %v1070
    %v1607 = vpack.c.b16 %v1075, %v1073
    %v1608 = vpack.c.b16 %v1076, %v1074
    %v1609 = vpack.c.b16 %v1079, %v1077
    %v1610 = vpack.c.b16 %v1080, %v1078
    %v1611 = vpack.c.b16 %v1083, %v1081
    %v1612 = vpack.c.b16 %v1084, %v1082
    %v1613 = vpack.c.b16 %v1087, %v1085
    %v1614 = vpack.c.b16 %v1088, %v1086
    %v1615 = vpack.c.b16 %v1091, %v1089
    %v1616 = vpack.c.b16 %v1092, %v1090
    %v1617 = vpack.c.b16 %v1095, %v1093
    %v1618 = vpack.c.b16 %v1096, %v1094
    %v1619 = vpack.c.b16 %v1099, %v1097
    %v1620 = vpack.c.b16 %v1100, %v1098
    %v1621 = vpack.c.b16 %v1103, %v1101
    %v1622 = vpack.c.b16 %v1104, %v1102
    %v1623 = vpack.c.b16 %v1107, %v1105
    %v1624 = vpack.c.b16 %v1108, %v1106
    %v1625 = vpack.c.b16 %v1111, %v1109
    %v1626 = vpack.c.b16 %v1112, %v1110
    %v1627 = vpack.c.b16 %v1115, %v1113
    %v1628 = vpack.c.b16 %v1116, %v1114
    %v1629 = vpack.c.b16 %v1119, %v1117
    %v1630 = vpack.c.b16 %v1120, %v1118
    %v1631 = vpack.c.b16 %v1123, %v1121
    %v1632 = vpack.c.b16 %v1124, %v1122
    %v1633 = vpack.c.b16 %v1127, %v1125
    %v1634 = vpack.c.b16 %v1128, %v1126
    %v1635 = vpack.c.b16 %v1131, %v1129
    %v1636 = vpack.c.b16 %v1132, %v1130
    %v1637 = vpack.c.b16 %v1135, %v1133
    %v1638 = vpack.c.b16 %v1136, %v1134
    %v1639 = vpack.c.b16 %v1139, %v1137
    %v1640 = vpack.c.b16 %v1140, %v1138
    %v1641 = vpack.c.b16 %v1143, %v1141
    %v1642 = vpack.c.b16 %v1144, %v1142
    %v1643 = vpack.c.b16 %v1147, %v1145
    %v1644 = vpack.c.b16 %v1148, %v1146
    %v1645 = vpack.c.b16 %v1151, %v1149
    %v1646 = vpack.c.b16 %v1152, %v1150
    %v1647 = vpack.c.b16 %v1155, %v1153
    %v1648 = vpack.c.b16 %v1156, %v1154
    %v1649 = vpack.c.b16 %v1159, %v1157
    %v1650 = vpack.c.b16 %v1160, %v1158
    %v1651 = vpack.c.b16 %v1163, %v1161
    %v1652 = vpack.c.b16 %v1164, %v1162
    %v1653 = vpack.c.b16 %v1167, %v1165
    %v1654 = vpack.c.b16 %v1168, %v1166
    %v1655 = vpack.c.b16 %v1171, %v1169
    %v1656 = vpack.c.b16 %v1172, %v1170
    %v1657 = vpack.c.b16 %v1175, %v1173
    %v1658 = vpack.c.b16 %v1176, %v1174
    %v1659 = vpack.c.b16 %v1179, %v1177
    %v1660 = vpack.c.b16 %v1180, %v1178
    %v1661 = vpack.c.b16 %v1183, %v1181
    %v1662 = vpack.c.b16 %v1184, %v1182
    %v1663 = vpack.c.b16 %v1187, %v1185
    %v1664 = vpack.c.b16 %v1188, %v1186
    %v1665 = vpack.c.b16 %v1191, %v1189
    %v1666 = vpack.c.b16 %v1192, %v1190
    %v1667 = vpack.c.b16 %v1195, %v1193
    %v1668 = vpack.c.b16 %v1196, %v1194
    %v1669 = vpack.c.b16 %v1199, %v1197
    %v1670 = vpack.c.b16 %v1200, %v1198
    %v1671 = vpack.c.b16 %v1203, %v1201
    %v1672 = vpack.c.b16 %v1204, %v1202
    %v1673 = vpack.c.b16 %v1207, %v1205
    %v1674 = vpack.c.b16 %v1208, %v1206
    %v1675 = vpack.c.b16 %v1211, %v1209
    %v1676 = vpack.c.b16 %v1212, %v1210
    %v1677 = vpack.c.b16 %v1215, %v1213
    %v1678 = vpack.c.b16 %v1216, %v1214
    %v1679 = vpack.c.b16 %v1219, %v1217
    %v1680 = vpack.c.b16 %v1220, %v1218
    %v1681 = vpack.c.b16 %v1223, %v1221
    %v1682 = vpack.c.b16 %v1224, %v1222
    %v1683 = vpack.c.b16 %v1227, %v1225
    %v1684 = vpack.c.b16 %v1228, %v1226
    %v1685 = vpack.c.b16 %v1231, %v1229
    %v1686 = vpack.c.b16 %v1232, %v1230
    %v1687 = vpack.c.b16 %v1235, %v1233
    %v1688 = vpack.c.b16 %v1236, %v1234
    %v1689 = vpack.c.b16 %v1239, %v1237
    %v1690 = vpack.c.b16 %v1240, %v1238
    %v1691 = vpack.c.b16 %v1243, %v1241
    %v1692 = vpack.c.b16 %v1244, %v1242
    %v1693 = vpack.c.b16 %v1247, %v1245
    %v1694 = vpack.c.b16 %v1248, %v1246
    %v1695 = vpack.c.b16 %v1251, %v1249
    %v1696 = vpack.c.b16 %v1252, %v1250
    %v1697 = vpack.c.b16 %v1255, %v1253
    %v1698 = vpack.c.b16 %v1256, %v1254
    %v1699 = vpack.c.b16 %v1259, %v1257
    %v1700 = vpack.c.b16 %v1260, %v1258
    %v1701 = vpack.c.b16 %v1263, %v1261
    %v1702 = vpack.c.b16 %v1264, %v1262
    %v1703 = vpack.c.b16 %v1267, %v1265
    %v1704 = vpack.c.b16 %v1268, %v1266
    %v1705 = vpack.c.b16 %v1271, %v1269
    %v1706 = vpack.c.b16 %v1272, %v1270
    %v1707 = vpack.c.b16 %v1275, %v1273
    %v1708 = vpack.c.b16 %v1276, %v1274
    %v1709 = vpack.c.b16 %v1279, %v1277
    %v1710 = vpack.c.b16 %v1280, %v1278
    %v1711 = vpack.c.b16 %v1283, %v1281
    %v1712 = vpack.c.b16 %v1284, %v1282
    %v1713 = vpack.c.b16 %v1287, %v1285
    %v1714 = vpack.c.b16 %v1288, %v1286
    %v1715 = vpack.c.b16 %v1291, %v1289
    %v1716 = vpack.c.b16 %v1292, %v1290
    %v1717 = vpack.c.b16 %v1295, %v1293
    %v1718 = vpack.c.b16 %v1296, %v1294
    %v1719 = vpack.c.b16 %v1299, %v1297
    %v1720 = vpack.c.b16 %v1300, %v1298
    %v1721 = vpack.c.b16 %v1303, %v1301
    %v1722 = vpack.c.b16 %v1304, %v1302
    %v1723 = vpack.c.b16 %v1307, %v1305
    %v1724 = vpack.c.b16 %v1308, %v1306
    %v1725 = vpack.c.b16 %v1311, %v1309
    %v1726 = vpack.c.b16 %v1312, %v1310
    %v1727 = vpack.c.b16 %v1315, %v1313
    %v1728 = vpack.c.b16 %v1316, %v1314
    %v1729 = vpack.c.b16 %v1319, %v1317
    %v1730 = vpack.c.b16 %v1320, %v1318
    %v1731 = vpack.c.b16 %v1323, %v1321
    %v1732 = vpack.c.b16 %v1324, %v1322
    %v1733 = vpack.c.b16 %v1327, %v1325
    %v1734 = vpack.c.b16 %v1328, %v1326
    %v1735 = vpack.c.b16 %v1331, %v1329
    %v1736 = vpack.c.b16 %v1332, %v1330
    %v1737 = vpack.c.b16 %v1335, %v1333
    %v1738 = vpack.c.b16 %v1336, %v1334
    %v1739 = vpack.c.b16 %v1339, %v1337
    %v1740 = vpack.c.b16 %v1340, %v1338
    %v1741 = vpack.c.b16 %v1343, %v1341
    %v1742 = vpack.c.b16 %v1344, %v1342
    %v1743 = vpack.c.b16 %v1347, %v1345
    %v1744 = vpack.c.b16 %v1348, %v1346
    %v1745 = vpack.c.b16 %v1351, %v1349
    %v1746 = vpack.c.b16 %v1352, %v1350
    %v1747 = vpack.c.b16 %v1355, %v1353
    %v1748 = vpack.c.b16 %v1356, %v1354
    %v1749 = vpack.c.b16 %v1359, %v1357
    %v1750 = vpack.c.b16 %v1360, %v1358
    %v1751 = vpack.c.b16 %v1363, %v1361
    %v1752 = vpack.c.b16 %v1364, %v1362
    %v1753 = vpack.c.b16 %v1367, %v1365
    %v1754 = vpack.c.b16 %v1368, %v1366
    %v1755 = vpack.c.b16 %v1371, %v1369
    %v1756 = vpack.c.b16 %v1372, %v1370
    %v1757 = vpack.c.b16 %v1375, %v1373
    %v1758 = vpack.c.b16 %v1376, %v1374
    %v1759 = vpack.c.b16 %v1379, %v1377
    %v1760 = vpack.c.b16 %v1380, %v1378
    %v1761 = vpack.c.b16 %v1383, %v1381
    %v1762 = vpack.c.b16 %v1384, %v1382
    %v1763 = vpack.c.b16 %v1387, %v1385
    %v1764 = vpack.c.b16 %v1388, %v1386
    %v1765 = vpack.c.b16 %v1391, %v1389
    %v1766 = vpack.c.b16 %v1392, %v1390
    %v1767 = vpack.c.b16 %v1395, %v1393
    %v1768 = vpack.c.b16 %v1396, %v1394
    %v1769 = vpack.c.b16 %v1399, %v1397
    %v1770 = vpack.c.b16 %v1400, %v1398
    %v1771 = vpack.c.b16 %v1403, %v1401
    %v1772 = vpack.c.b16 %v1404, %v1402
    %v1773 = vpack.c.b16 %v1407, %v1405
    %v1774 = vpack.c.b16 %v1408, %v1406
    %v1775 = vpack.c.b16 %v1411, %v1409
    %v1776 = vpack.c.b16 %v1412, %v1410
    %v1777 = vpack.c.b16 %v1415, %v1413
    %v1778 = vpack.c.b16 %v1416, %v1414
    %v1779 = vpack.c.b16 %v1419, %v1417
    %v1780 = vpack.c.b16 %v1420, %v1418
    %v1781 = vpack.c.b16 %v1423, %v1421
    %v1782 = vpack.c.b16 %v1424, %v1422
    %v1783 = vpack.c.b16 %v1427, %v1425
    %v1784 = vpack.c.b16 %v1428, %v1426
    %v1785 = vpack.c.b16 %v1431, %v1429
    %v1786 = vpack.c.b16 %v1432, %v1430
    %v1787 = vpack.c.b16 %v1435, %v1433
    %v1788 = vpack.c.b16 %v1436, %v1434
    %v1789 = vpack.c.b16 %v1439, %v1437
    %v1790 = vpack.c.b16 %v1440, %v1438
    %v1791 = vpack.c.b16 %v1443, %v1441
    %v1792 = vpack.c.b16 %v1444, %v1442
    %v1793 = vpack.c.b16 %v1447, %v1445
    %v1794 = vpack.c.b16 %v1448, %v1446
    %v1795 = vpack.c.b16 %v1451, %v1449
    %v1796 = vpack.c.b16 %v1452, %v1450
    %v1797 = vpack.c.b16 %v1455, %v1453
    %v1798 = vpack.c.b16 %v1456, %v1454
    %v1799 = vpack.c.b16 %v1459, %v1457
    %v1800 = vpack.c.b16 %v1460, %v1458
    %v1801 = vpack.c.b16 %v1463, %v1461
    %v1802 = vpack.c.b16 %v1464, %v1462
    %v1803 = vpack.c.b16 %v1467, %v1465
    %v1804 = vpack.c.b16 %v1468, %v1466
    %v1805 = vpack.c.b16 %v1471, %v1469
    %v1806 = vpack.c.b16 %v1472, %v1470
    %v1807 = vpack.c.b16 %v1475, %v1473
    %v1808 = vpack.c.b16 %v1476, %v1474
    %v1809 = vpack.c.b16 %v1479, %v1477
    %v1810 = vpack.c.b16 %v1480, %v1478
    %v1811 = vpack.c.b16 %v1483, %v1481
    %v1812 = vpack.c.b16 %v1484, %v1482
    %v1813 = vpack.c.b16 %v1487, %v1485
    %v1814 = vpack.c.b16 %v1488, %v1486
    %v1815 = vpack.c.b16 %v1491, %v1489
    %v1816 = vpack.c.b16 %v1492, %v1490
    %vm2141 = vcmask 261120
    %v2143 = vsel %vm2141, %v491, 0
    %2145 = vmatprep.subr.bf16.mxu0 %v1494
    %2146 = vmatpush1.bf16.msra.mxu0 %v1493
    %2147 = vmatprep.subr.bf16.mxu0 %v1496
    %2148 = vmatpush1.bf16.msra.mxu0 %v1495
    %2149 = vmatprep.subr.bf16.mxu0 %v1498
    %2150 = vmatpush1.bf16.msra.mxu0 %v1497
    %2151 = vmatprep.subr.bf16.mxu0 %v1500
    %2152 = vmatpush1.bf16.msra.mxu0 %v1499
    %2153 = vmatprep.subr.bf16.mxu0 %v1502
    %2154 = vmatpush1.bf16.msra.mxu0 %v1501
    %2155 = vmatprep.subr.bf16.mxu0 %v1504
    %2156 = vmatpush1.bf16.msra.mxu0 %v1503
    %2157 = vmatprep.subr.bf16.mxu0 %v1506
    %2158 = vmatpush1.bf16.msra.mxu0 %v1505
    %2159 = vmatprep.subr.bf16.mxu0 %v1508
    %2160 = vmatpush1.bf16.msra.mxu0 %v1507
    %2161 = vmatprep.subr.bf16.mxu0 %v1510
    %2162 = vmatpush1.bf16.msra.mxu0 %v1509
    %2163 = vmatprep.subr.bf16.mxu0 %v1512
    %2164 = vmatpush1.bf16.msra.mxu0 %v1511
    %2165 = vmatprep.subr.bf16.mxu0 %v1514
    %2166 = vmatpush1.bf16.msra.mxu0 %v1513
    %2167 = vmatprep.subr.bf16.mxu0 %v1516
    %2168 = vmatpush1.bf16.msra.mxu0 %v1515
    %2169 = vmatprep.subr.bf16.mxu0 %v1518
    %2170 = vmatpush1.bf16.msra.mxu0 %v1517
    %2171 = vmatprep.subr.bf16.mxu0 %v1520
    %2172 = vmatpush1.bf16.msra.mxu0 %v1519
    %2173 = vmatprep.subr.bf16.mxu0 %v1522
    %2174 = vmatpush1.bf16.msra.mxu0 %v1521
    %2175 = vmatprep.subr.bf16.mxu0 %v1524
    %2176 = vmatpush1.bf16.msra.mxu0 %v1523
    %2177 = vmatprep.mubr.bf16.mxu0 %v401
    %2178 = vmatmul.mubr.bf16.gmra.mrb[0].mxu0 %v387
    %v2179 = vpop.f32.mrb[0].mxu0
    %v2180 = vadd.f32 %v354, %v2179
    %v2181 = vpop.f32.mrb[0].mxu0
    %v2182 = vadd.f32 %v358, %v2181
    %v2183 = vpop.f32.mrb[0].mxu0
    %v2184 = vpop.f32.mrb[0].mxu0
    %2185 = vdwg.mxu0
    %2186 = vmatprep.subr.bf16.mxu0 %v1526
    %2187 = vmatpush1.bf16.msra.mxu0 %v1525
    %2188 = vmatprep.subr.bf16.mxu0 %v1528
    %2189 = vmatpush1.bf16.msra.mxu0 %v1527
    %2190 = vmatprep.subr.bf16.mxu0 %v1530
    %2191 = vmatpush1.bf16.msra.mxu0 %v1529
    %2192 = vmatprep.subr.bf16.mxu0 %v1532
    %2193 = vmatpush1.bf16.msra.mxu0 %v1531
    %2194 = vmatprep.subr.bf16.mxu0 %v1534
    %2195 = vmatpush1.bf16.msra.mxu0 %v1533
    %2196 = vmatprep.subr.bf16.mxu0 %v1536
    %2197 = vmatpush1.bf16.msra.mxu0 %v1535
    %2198 = vmatprep.subr.bf16.mxu0 %v1538
    %2199 = vmatpush1.bf16.msra.mxu0 %v1537
    %2200 = vmatprep.subr.bf16.mxu0 %v1540
    %2201 = vmatpush1.bf16.msra.mxu0 %v1539
    %2202 = vmatprep.subr.bf16.mxu0 %v1542
    %2203 = vmatpush1.bf16.msra.mxu0 %v1541
    %2204 = vmatprep.subr.bf16.mxu0 %v1544
    %2205 = vmatpush1.bf16.msra.mxu0 %v1543
    %2206 = vmatprep.subr.bf16.mxu0 %v1546
    %2207 = vmatpush1.bf16.msra.mxu0 %v1545
    %2208 = vmatprep.subr.bf16.mxu0 %v1548
    %2209 = vmatpush1.bf16.msra.mxu0 %v1547
    %2210 = vmatprep.subr.bf16.mxu0 %v1550
    %2211 = vmatpush1.bf16.msra.mxu0 %v1549
    %2212 = vmatprep.subr.bf16.mxu0 %v1552
    %2213 = vmatpush1.bf16.msra.mxu0 %v1551
    %2214 = vmatprep.subr.bf16.mxu0 %v1554
    %2215 = vmatpush1.bf16.msra.mxu0 %v1553
    %2216 = vmatprep.subr.bf16.mxu0 %v1556
    %2217 = vmatpush1.bf16.msra.mxu0 %v1555
    %2218 = vmatprep.mubr.bf16.mxu0 %v411
    %2219 = vmatmul.mubr.bf16.gmra.mrb[0].mxu0 %v409
    %v2220 = vpop.f32.mrb[0].mxu0
    %v2221 = vadd.f32 %v2180, %v2220
    %v2222 = vpop.f32.mrb[0].mxu0
    %v2223 = vadd.f32 %v2182, %v2222
    %v2224 = vpop.f32.mrb[0].mxu0
    %v2225 = vpop.f32.mrb[0].mxu0
    %2226 = vdwg.mxu0
    %2227 = vmatprep.subr.bf16.mxu0 %v1558
    %2228 = vmatpush1.bf16.msra.mxu0 %v1557
    %2229 = vmatprep.subr.bf16.mxu0 %v1560
    %2230 = vmatpush1.bf16.msra.mxu0 %v1559
    %2231 = vmatprep.subr.bf16.mxu0 %v1562
    %2232 = vmatpush1.bf16.msra.mxu0 %v1561
    %2233 = vmatprep.subr.bf16.mxu0 %v1564
    %2234 = vmatpush1.bf16.msra.mxu0 %v1563
    %2235 = vmatprep.subr.bf16.mxu0 %v1566
    %2236 = vmatpush1.bf16.msra.mxu0 %v1565
    %2237 = vmatprep.subr.bf16.mxu0 %v1568
    %2238 = vmatpush1.bf16.msra.mxu0 %v1567
    %2239 = vmatprep.subr.bf16.mxu0 %v1570
    %2240 = vmatpush1.bf16.msra.mxu0 %v1569
    %2241 = vmatprep.subr.bf16.mxu0 %v1572
    %2242 = vmatpush1.bf16.msra.mxu0 %v1571
    %2243 = vmatprep.subr.bf16.mxu0 %v1574
    %2244 = vmatpush1.bf16.msra.mxu0 %v1573
    %2245 = vmatprep.subr.bf16.mxu0 %v1576
    %2246 = vmatpush1.bf16.msra.mxu0 %v1575
    %2247 = vmatprep.subr.bf16.mxu0 %v1578
    %2248 = vmatpush1.bf16.msra.mxu0 %v1577
    %2249 = vmatprep.subr.bf16.mxu0 %v1580
    %2250 = vmatpush1.bf16.msra.mxu0 %v1579
    %2251 = vmatprep.subr.bf16.mxu0 %v1582
    %2252 = vmatpush1.bf16.msra.mxu0 %v1581
    %2253 = vmatprep.subr.bf16.mxu0 %v1584
    %2254 = vmatpush1.bf16.msra.mxu0 %v1583
    %2255 = vmatprep.subr.bf16.mxu0 %v1586
    %2256 = vmatpush1.bf16.msra.mxu0 %v1585
    %2257 = vmatprep.subr.bf16.mxu0 %v1588
    %2258 = vmatpush1.bf16.msra.mxu0 %v1587
    %2259 = vmatprep.mubr.bf16.mxu0 %v408
    %2260 = vmatmul.mubr.bf16.gmra.mrb[0].mxu0 %v394
    %v2261 = vpop.f32.mrb[0].mxu0
    %v2262 = vadd.f32 %v2221, %v2261
    %v2263 = vpop.f32.mrb[0].mxu0
    %v2264 = vadd.f32 %v2223, %v2263
    %v2265 = vpop.f32.mrb[0].mxu0
    %v2266 = vpop.f32.mrb[0].mxu0
    %2267 = vdwg.mxu0
    %2268 = vmatprep.subr.bf16.mxu0 %v1590
    %2269 = vmatpush1.bf16.msra.mxu0 %v1589
    %2270 = vmatprep.subr.bf16.mxu0 %v1592
    %2271 = vmatpush1.bf16.msra.mxu0 %v1591
    %2272 = vmatprep.subr.bf16.mxu0 %v1594
    %2273 = vmatpush1.bf16.msra.mxu0 %v1593
    %2274 = vmatprep.subr.bf16.mxu0 %v1596
    %2275 = vmatpush1.bf16.msra.mxu0 %v1595
    %2276 = vmatprep.subr.bf16.mxu0 %v1598
    %2277 = vmatpush1.bf16.msra.mxu0 %v1597
    %2278 = vmatprep.subr.bf16.mxu0 %v1600
    %2279 = vmatpush1.bf16.msra.mxu0 %v1599
    %2280 = vmatprep.subr.bf16.mxu0 %v1602
    %2281 = vmatpush1.bf16.msra.mxu0 %v1601
    %2282 = vmatprep.subr.bf16.mxu0 %v1604
    %2283 = vmatpush1.bf16.msra.mxu0 %v1603
    %2284 = vmatprep.subr.bf16.mxu0 %v1606
    %2285 = vmatpush1.bf16.msra.mxu0 %v1605
    %2286 = vmatprep.subr.bf16.mxu0 %v1608
    %2287 = vmatpush1.bf16.msra.mxu0 %v1607
    %2288 = vmatprep.subr.bf16.mxu0 %v1610
    %2289 = vmatpush1.bf16.msra.mxu0 %v1609
    %2290 = vmatprep.subr.bf16.mxu0 %v1612
    %2291 = vmatpush1.bf16.msra.mxu0 %v1611
    %2292 = vmatprep.subr.bf16.mxu0 %v1614
    %2293 = vmatpush1.bf16.msra.mxu0 %v1613
    %2294 = vmatprep.subr.bf16.mxu0 %v1616
    %2295 = vmatpush1.bf16.msra.mxu0 %v1615
    %2296 = vmatprep.subr.bf16.mxu0 %v1618
    %2297 = vmatpush1.bf16.msra.mxu0 %v1617
    %2298 = vmatprep.subr.bf16.mxu0 %v1620
    %2299 = vmatpush1.bf16.msra.mxu0 %v1619
    %2300 = vmatprep.mubr.bf16.mxu0 %v412
    %2301 = vmatmul.mubr.bf16.gmra.mrb[0].mxu0 %v410
    %v2302 = vpop.f32.mrb[0].mxu0
    %v2303 = vadd.f32 %v2262, %v2302
    %v2304 = vpop.f32.mrb[0].mxu0
    %v2305 = vadd.f32 %v2264, %v2304
    %v2306 = vpop.f32.mrb[0].mxu0
    %v2307 = vpop.f32.mrb[0].mxu0
    %2308 = vdwg.mxu0
    %2309 = vmatprep.subr.bf16.mxu0 %v1622
    %2310 = vmatpush1.bf16.msra.mxu0 %v1621
    %2311 = vmatprep.subr.bf16.mxu0 %v1624
    %2312 = vmatpush1.bf16.msra.mxu0 %v1623
    %2313 = vmatprep.subr.bf16.mxu0 %v1626
    %2314 = vmatpush1.bf16.msra.mxu0 %v1625
    %2315 = vmatprep.subr.bf16.mxu0 %v1628
    %2316 = vmatpush1.bf16.msra.mxu0 %v1627
    %2317 = vmatprep.subr.bf16.mxu0 %v1630
    %2318 = vmatpush1.bf16.msra.mxu0 %v1629
    %2319 = vmatprep.subr.bf16.mxu0 %v1632
    %2320 = vmatpush1.bf16.msra.mxu0 %v1631
    %2321 = vmatprep.subr.bf16.mxu0 %v1634
    %2322 = vmatpush1.bf16.msra.mxu0 %v1633
    %2323 = vmatprep.subr.bf16.mxu0 %v1636
    %2324 = vmatpush1.bf16.msra.mxu0 %v1635
    %2325 = vmatprep.subr.bf16.mxu0 %v1638
    %2326 = vmatpush1.bf16.msra.mxu0 %v1637
    %2327 = vmatprep.subr.bf16.mxu0 %v1640
    %2328 = vmatpush1.bf16.msra.mxu0 %v1639
    %2329 = vmatprep.subr.bf16.mxu0 %v1642
    %2330 = vmatpush1.bf16.msra.mxu0 %v1641
    %2331 = vmatprep.subr.bf16.mxu0 %v1644
    %2332 = vmatpush1.bf16.msra.mxu0 %v1643
    %2333 = vmatprep.subr.bf16.mxu0 %v1646
    %2334 = vmatpush1.bf16.msra.mxu0 %v1645
    %2335 = vmatprep.subr.bf16.mxu0 %v1648
    %2336 = vmatpush1.bf16.msra.mxu0 %v1647
    %2337 = vmatprep.subr.bf16.mxu0 %v1650
    %2338 = vmatpush1.bf16.msra.mxu0 %v1649
    %2339 = vmatprep.subr.bf16.mxu0 %v1652
    %2340 = vmatpush1.bf16.msra.mxu0 %v1651
    %2341 = vmatprep.mubr.bf16.mxu0 %v450
    %2342 = vmatmul.mubr.bf16.gmra.mrb[0].mxu0 %v436
    %v2343 = vpop.f32.mrb[0].mxu0
    %v2344 = vadd.f32 %v2303, %v2343
    %v2345 = vpop.f32.mrb[0].mxu0
    %v2346 = vadd.f32 %v2305, %v2345
    %v2347 = vpop.f32.mrb[0].mxu0
    %v2348 = vpop.f32.mrb[0].mxu0
    %2349 = vdwg.mxu0
    %2350 = vmatprep.subr.bf16.mxu0 %v1654
    %2351 = vmatpush1.bf16.msra.mxu0 %v1653
    %2352 = vmatprep.subr.bf16.mxu0 %v1656
    %2353 = vmatpush1.bf16.msra.mxu0 %v1655
    %2354 = vmatprep.subr.bf16.mxu0 %v1658
    %2355 = vmatpush1.bf16.msra.mxu0 %v1657
    %2356 = vmatprep.subr.bf16.mxu0 %v1660
    %2357 = vmatpush1.bf16.msra.mxu0 %v1659
    %2358 = vmatprep.subr.bf16.mxu0 %v1662
    %2359 = vmatpush1.bf16.msra.mxu0 %v1661
    %2360 = vmatprep.subr.bf16.mxu0 %v1664
    %2361 = vmatpush1.bf16.msra.mxu0 %v1663
    %2362 = vmatprep.subr.bf16.mxu0 %v1666
    %2363 = vmatpush1.bf16.msra.mxu0 %v1665
    %2364 = vmatprep.subr.bf16.mxu0 %v1668
    %2365 = vmatpush1.bf16.msra.mxu0 %v1667
    %2366 = vmatprep.subr.bf16.mxu0 %v1670
    %2367 = vmatpush1.bf16.msra.mxu0 %v1669
    %2368 = vmatprep.subr.bf16.mxu0 %v1672
    %2369 = vmatpush1.bf16.msra.mxu0 %v1671
    %2370 = vmatprep.subr.bf16.mxu0 %v1674
    %2371 = vmatpush1.bf16.msra.mxu0 %v1673
    %2372 = vmatprep.subr.bf16.mxu0 %v1676
    %2373 = vmatpush1.bf16.msra.mxu0 %v1675
    %2374 = vmatprep.subr.bf16.mxu0 %v1678
    %2375 = vmatpush1.bf16.msra.mxu0 %v1677
    %2376 = vmatprep.subr.bf16.mxu0 %v1680
    %2377 = vmatpush1.bf16.msra.mxu0 %v1679
    %2378 = vmatprep.subr.bf16.mxu0 %v1682
    %2379 = vmatpush1.bf16.msra.mxu0 %v1681
    %2380 = vmatprep.subr.bf16.mxu0 %v1684
    %2381 = vmatpush1.bf16.msra.mxu0 %v1683
    %2382 = vmatprep.mubr.bf16.mxu0 %v460
    %2383 = vmatmul.mubr.bf16.gmra.mrb[0].mxu0 %v458
    %v2384 = vpop.f32.mrb[0].mxu0
    %v2385 = vadd.f32 %v2344, %v2384
    %v2386 = vpop.f32.mrb[0].mxu0
    %v2387 = vadd.f32 %v2346, %v2386
    %v2388 = vpop.f32.mrb[0].mxu0
    %v2389 = vpop.f32.mrb[0].mxu0
    %2390 = vdwg.mxu0
    %2391 = vmatprep.subr.bf16.mxu0 %v1686
    %2392 = vmatpush1.bf16.msra.mxu0 %v1685
    %2393 = vmatprep.subr.bf16.mxu0 %v1688
    %2394 = vmatpush1.bf16.msra.mxu0 %v1687
    %2395 = vmatprep.subr.bf16.mxu0 %v1690
    %2396 = vmatpush1.bf16.msra.mxu0 %v1689
    %2397 = vmatprep.subr.bf16.mxu0 %v1692
    %2398 = vmatpush1.bf16.msra.mxu0 %v1691
    %2399 = vmatprep.subr.bf16.mxu0 %v1694
    %2400 = vmatpush1.bf16.msra.mxu0 %v1693
    %2401 = vmatprep.subr.bf16.mxu0 %v1696
    %2402 = vmatpush1.bf16.msra.mxu0 %v1695
    %2403 = vmatprep.subr.bf16.mxu0 %v1698
    %2404 = vmatpush1.bf16.msra.mxu0 %v1697
    %2405 = vmatprep.subr.bf16.mxu0 %v1700
    %2406 = vmatpush1.bf16.msra.mxu0 %v1699
    %2407 = vmatprep.subr.bf16.mxu0 %v1702
    %2408 = vmatpush1.bf16.msra.mxu0 %v1701
    %2409 = vmatprep.subr.bf16.mxu0 %v1704
    %2410 = vmatpush1.bf16.msra.mxu0 %v1703
    %2411 = vmatprep.subr.bf16.mxu0 %v1706
    %2412 = vmatpush1.bf16.msra.mxu0 %v1705
    %2413 = vmatprep.subr.bf16.mxu0 %v1708
    %2414 = vmatpush1.bf16.msra.mxu0 %v1707
    %2415 = vmatprep.subr.bf16.mxu0 %v1710
    %2416 = vmatpush1.bf16.msra.mxu0 %v1709
    %2417 = vmatprep.subr.bf16.mxu0 %v1712
    %2418 = vmatpush1.bf16.msra.mxu0 %v1711
    %2419 = vmatprep.subr.bf16.mxu0 %v1714
    %2420 = vmatpush1.bf16.msra.mxu0 %v1713
    %2421 = vmatprep.subr.bf16.mxu0 %v1716
    %2422 = vmatpush1.bf16.msra.mxu0 %v1715
    %2423 = vmatprep.mubr.bf16.mxu0 %v457
    %2424 = vmatmul.mubr.bf16.gmra.mrb[0].mxu0 %v443
    %v2425 = vpop.f32.mrb[0].mxu0
    %v2426 = vadd.f32 %v2385, %v2425
    %v2427 = vpop.f32.mrb[0].mxu0
    %v2428 = vadd.f32 %v2387, %v2427
    %v2429 = vpop.f32.mrb[0].mxu0
    %v2430 = vpop.f32.mrb[0].mxu0
    %2431 = vdwg.mxu0
    %2432 = vmatprep.subr.bf16.mxu0 %v1718
    %2433 = vmatpush1.bf16.msra.mxu0 %v1717
    %2434 = vmatprep.subr.bf16.mxu0 %v1720
    %2435 = vmatpush1.bf16.msra.mxu0 %v1719
    %2436 = vmatprep.subr.bf16.mxu0 %v1722
    %2437 = vmatpush1.bf16.msra.mxu0 %v1721
    %2438 = vmatprep.subr.bf16.mxu0 %v1724
    %2439 = vmatpush1.bf16.msra.mxu0 %v1723
    %2440 = vmatprep.subr.bf16.mxu0 %v1726
    %2441 = vmatpush1.bf16.msra.mxu0 %v1725
    %2442 = vmatprep.subr.bf16.mxu0 %v1728
    %2443 = vmatpush1.bf16.msra.mxu0 %v1727
    %2444 = vmatprep.subr.bf16.mxu0 %v1730
    %2445 = vmatpush1.bf16.msra.mxu0 %v1729
    %2446 = vmatprep.subr.bf16.mxu0 %v1732
    %2447 = vmatpush1.bf16.msra.mxu0 %v1731
    %2448 = vmatprep.subr.bf16.mxu0 %v1734
    %2449 = vmatpush1.bf16.msra.mxu0 %v1733
    %2450 = vmatprep.subr.bf16.mxu0 %v1736
    %2451 = vmatpush1.bf16.msra.mxu0 %v1735
    %2452 = vmatprep.subr.bf16.mxu0 %v1738
    %2453 = vmatpush1.bf16.msra.mxu0 %v1737
    %2454 = vmatprep.subr.bf16.mxu0 %v1740
    %2455 = vmatpush1.bf16.msra.mxu0 %v1739
    %2456 = vmatprep.subr.bf16.mxu0 %v1742
    %2457 = vmatpush1.bf16.msra.mxu0 %v1741
    %2458 = vmatprep.subr.bf16.mxu0 %v1744
    %2459 = vmatpush1.bf16.msra.mxu0 %v1743
    %2460 = vmatprep.subr.bf16.mxu0 %v1746
    %2461 = vmatpush1.bf16.msra.mxu0 %v1745
    %2462 = vmatprep.subr.bf16.mxu0 %v1748
    %2463 = vmatpush1.bf16.msra.mxu0 %v1747
    %2464 = vmatprep.mubr.bf16.mxu0 %v461
    %2465 = vmatmul.mubr.bf16.gmra.mrb[0].mxu0 %v459
    %v2466 = vpop.f32.mrb[0].mxu0
    %v2467 = vadd.f32 %v2426, %v2466
    %v2468 = vpop.f32.mrb[0].mxu0
    %v2469 = vadd.f32 %v2428, %v2468
    %v2470 = vpop.f32.mrb[0].mxu0
    %v2471 = vpop.f32.mrb[0].mxu0
    %2472 = vdwg.mxu0
    %2473 = vmatprep.subr.bf16.mxu0 %v1750
    %2474 = vmatpush1.bf16.msra.mxu0 %v1749
    %2475 = vmatprep.subr.bf16.mxu0 %v1752
    %2476 = vmatpush1.bf16.msra.mxu0 %v1751
    %2477 = vmatprep.subr.bf16.mxu0 %v1754
    %2478 = vmatpush1.bf16.msra.mxu0 %v1753
    %2479 = vmatprep.subr.bf16.mxu0 %v1756
    %2480 = vmatpush1.bf16.msra.mxu0 %v1755
    %2481 = vmatprep.subr.bf16.mxu0 %v1758
    %2482 = vmatpush1.bf16.msra.mxu0 %v1757
    %2483 = vmatprep.subr.bf16.mxu0 %v1760
    %2484 = vmatpush1.bf16.msra.mxu0 %v1759
    %2485 = vmatprep.subr.bf16.mxu0 %v1762
    %2486 = vmatpush1.bf16.msra.mxu0 %v1761
    %2487 = vmatprep.subr.bf16.mxu0 %v1764
    %2488 = vmatpush1.bf16.msra.mxu0 %v1763
    %2489 = vmatprep.subr.bf16.mxu0 %v1766
    %2490 = vmatpush1.bf16.msra.mxu0 %v1765
    %2491 = vmatprep.subr.bf16.mxu0 %v1768
    %2492 = vmatpush1.bf16.msra.mxu0 %v1767
    %2493 = vmatprep.subr.bf16.mxu0 %v1770
    %2494 = vmatpush1.bf16.msra.mxu0 %v1769
    %2495 = vmatprep.subr.bf16.mxu0 %v1772
    %2496 = vmatpush1.bf16.msra.mxu0 %v1771
    %2497 = vmatprep.subr.bf16.mxu0 %v1774
    %2498 = vmatpush1.bf16.msra.mxu0 %v1773
    %2499 = vmatprep.subr.bf16.mxu0 %v1776
    %2500 = vmatpush1.bf16.msra.mxu0 %v1775
    %2501 = vmatprep.subr.bf16.mxu0 %v1778
    %2502 = vmatpush1.bf16.msra.mxu0 %v1777
    %2503 = vmatprep.subr.bf16.mxu0 %v1780
    %2504 = vmatpush1.bf16.msra.mxu0 %v1779
    %2505 = vmatprep.mubr.bf16.mxu0 %v498
    %2506 = vmatmul.mubr.bf16.gmra.mrb[0].mxu0 %v484
    %v2507 = vpop.f32.mrb[0].mxu0
    %v2508 = vadd.f32 %v2467, %v2507
    %v2509 = vpop.f32.mrb[0].mxu0
    %v2510 = vadd.f32 %v2469, %v2509
    %v2511 = vpop.f32.mrb[0].mxu0
    %v2512 = vpop.f32.mrb[0].mxu0
    %2513 = vdwg.mxu0
    %2514 = vmatprep.subr.bf16.mxu0 %v1782
    %2515 = vmatpush1.bf16.msra.mxu0 %v1781
    %2516 = vmatprep.subr.bf16.mxu0 %v1784
    %2517 = vmatpush1.bf16.msra.mxu0 %v1783
    %2518 = vmatprep.subr.bf16.mxu0 %v1786
    %2519 = vmatpush1.bf16.msra.mxu0 %v1785
    %2520 = vmatprep.subr.bf16.mxu0 %v1788
    %2521 = vmatpush1.bf16.msra.mxu0 %v1787
    %2522 = vmatprep.subr.bf16.mxu0 %v1790
    %2523 = vmatpush1.bf16.msra.mxu0 %v1789
    %2524 = vmatprep.subr.bf16.mxu0 %v1792
    %2525 = vmatpush1.bf16.msra.mxu0 %v1791
    %2526 = vmatprep.subr.bf16.mxu0 %v1794
    %2527 = vmatpush1.bf16.msra.mxu0 %v1793
    %2528 = vmatprep.subr.bf16.mxu0 %v1796
    %2529 = vmatpush1.bf16.msra.mxu0 %v1795
    %2530 = vmatprep.subr.bf16.mxu0 %v1798
    %2531 = vmatpush1.bf16.msra.mxu0 %v1797
    %2532 = vmatprep.subr.bf16.mxu0 %v1800
    %2533 = vmatpush1.bf16.msra.mxu0 %v1799
    %2534 = vmatprep.subr.bf16.mxu0 %v1802
    %2535 = vmatpush1.bf16.msra.mxu0 %v1801
    %2536 = vmatprep.subr.bf16.mxu0 %v1804
    %2537 = vmatpush1.bf16.msra.mxu0 %v1803
    %2538 = vmatprep.subr.bf16.mxu0 %v1806
    %2539 = vmatpush1.bf16.msra.mxu0 %v1805
    %2540 = vmatprep.subr.bf16.mxu0 %v1808
    %2541 = vmatpush1.bf16.msra.mxu0 %v1807
    %2542 = vmatprep.subr.bf16.mxu0 %v1810
    %2543 = vmatpush1.bf16.msra.mxu0 %v1809
    %2544 = vmatprep.subr.bf16.mxu0 %v1812
    %2545 = vmatpush1.bf16.msra.mxu0 %v1811
    %2546 = vmatprep.mubr.bf16.mxu0 %v500
    %2547 = vmatmul.mubr.bf16.gmra.mrb[0].mxu0 %v499
    %v2548 = vpop.f32.mrb[0].mxu0
    %v2549 = vadd.f32 %v2508, %v2548
    %v2550 = vpop.f32.mrb[0].mxu0
    %v2551 = vadd.f32 %v2510, %v2550
    %v2552 = vpop.f32.mrb[0].mxu0
    %v2553 = vpop.f32.mrb[0].mxu0
    %2554 = vdwg.mxu0
    %2555 = vmatprep.subr.bf16.mxu0 %v1814
    %2556 = vmatpush1.bf16.msra.mxu0 %v1813
    %2557 = vmatprep.subr.bf16.mxu0 %v1816
    %2558 = vmatpush1.bf16.msra.mxu0 %v1815
    %2559 = vmatprep.subr.bf16.mxu0 0
    %2560 = vmatpush1.bf16.msra.mxu0 0
    %2561 = vmatprep.subr.bf16.mxu0 0
    %2562 = vmatpush1.bf16.msra.mxu0 0
    %2563 = vmatprep.subr.bf16.mxu0 0
    %2564 = vmatpush1.bf16.msra.mxu0 0
    %2565 = vmatprep.subr.bf16.mxu0 0
    %2566 = vmatpush1.bf16.msra.mxu0 0
    %2567 = vmatprep.subr.bf16.mxu0 0
    %2568 = vmatpush1.bf16.msra.mxu0 0
    %2569 = vmatprep.subr.bf16.mxu0 0
    %2570 = vmatpush1.bf16.msra.mxu0 0
    %2571 = vmatprep.subr.bf16.mxu0 0
    %2572 = vmatpush1.bf16.msra.mxu0 0
    %2573 = vmatprep.subr.bf16.mxu0 0
    %2574 = vmatpush1.bf16.msra.mxu0 0
    %2575 = vmatprep.subr.bf16.mxu0 0
    %2576 = vmatpush1.bf16.msra.mxu0 0
    %2577 = vmatprep.subr.bf16.mxu0 0
    %2578 = vmatpush1.bf16.msra.mxu0 0
    %2579 = vmatprep.subr.bf16.mxu0 0
    %2580 = vmatpush1.bf16.msra.mxu0 0
    %2581 = vmatprep.subr.bf16.mxu0 0
    %2582 = vmatpush1.bf16.msra.mxu0 0
    %2583 = vmatprep.subr.bf16.mxu0 0
    %2584 = vmatpush1.bf16.msra.mxu0 0
    %2585 = vmatprep.subr.bf16.mxu0 0
    %2586 = vmatpush1.bf16.msra.mxu0 0
    %2587 = vmatprep.mubr.bf16.mxu0 0
    %2588 = vmatmul.mubr.bf16.gmra.mrb[0].mxu0 %v2143
    %v2589 = vpop.f32.mrb[0].mxu0
    %v2590 = vadd.f32 %v2549, %v2589
    %v2591 = vpop.f32.mrb[0].mxu0
    %v2592 = vadd.f32 %v2551, %v2591
    %v2593 = vpop.f32.mrb[0].mxu0
    %v2594 = vpop.f32.mrb[0].mxu0
    %2595 = vdwg.mxu0
    %v2596 = vmax.f32 %v2590, 0.0
    %v2597 = vmax.f32 %v2592, 0.0
    %v2598 = vpack.c.bf16 %v2596, %v2596
    %v2599 = vpack.c.bf16 %v2597, %v2597
    %v2600 = vld [vmem:[%s3] sm:$0xf]
    %v2601 = vld [vmem:[%s3 + $0x4] sm:$0xf]
    %v2602 = vld [vmem:[%s3 + $0x8] sm:$0xf]
    %v2603 = vld [vmem:[%s3 + $0xc] sm:$0xf]
    %v2604 = vld [vmem:[%s3 + $0x10] sm:$0xf]
    %v2605 = vld [vmem:[%s3 + $0x14] sm:$0xf]
    %v2606 = vld [vmem:[%s3 + $0x18] sm:$0xf]
    %v2607 = vld [vmem:[%s3 + $0x1c] sm:$0xf]
    %v2608 = vld [vmem:[%s3 + $0x20] sm:$0xf]
    %v2609 = vld [vmem:[%s3 + $0x24] sm:$0xf]
    %v2610 = vld [vmem:[%s3 + $0x28] sm:$0xf]
    %v2611 = vld [vmem:[%s3 + $0x2c] sm:$0xf]
    %v2612 = vld [vmem:[%s3 + $0x30] sm:$0xf]
    %v2613 = vld [vmem:[%s3 + $0x34] sm:$0xf]
    %v2614 = vld [vmem:[%s3 + $0x38] sm:$0xf]
    %v2615 = vld [vmem:[%s3 + $0x3c] sm:$0xf]
    %v2616 = vld [vmem:[%s3 + $0x40] sm:$0xf]
    %v2617 = vld [vmem:[%s3 + $0x44] sm:$0xf]
    %v2618 = vld [vmem:[%s3 + $0x48] sm:$0xf]
    %v2619 = vld [vmem:[%s3 + $0x4c] sm:$0xf]
    %v2620 = vld [vmem:[%s3 + $0x50] sm:$0xf]
    %v2621 = vld [vmem:[%s3 + $0x54] sm:$0xf]
    %v2622 = vld [vmem:[%s3 + $0x58] sm:$0xf]
    %v2623 = vld [vmem:[%s3 + $0x5c] sm:$0xf]
    %v2624 = vld [vmem:[%s3 + $0x60] sm:$0xf]
    %v2625 = vld [vmem:[%s3 + $0x64] sm:$0xf]
    %v2626 = vld [vmem:[%s3 + $0x68] sm:$0xf]
    %v2627 = vld [vmem:[%s3 + $0x6c] sm:$0xf]
    %v2628 = vld [vmem:[%s3 + $0x70] sm:$0xf]
    %v2629 = vld [vmem:[%s3 + $0x74] sm:$0xf]
    %v2630 = vld [vmem:[%s3 + $0x78] sm:$0xf]
    %v2631 = vld [vmem:[%s3 + $0x7c] sm:$0xf]
    %v2632 = vld [vmem:[%s4] sm:$0x1]
    %v2634 = vlaneseq
    %v2635 = vshrl.u32 %v2634, 7
    %v2636 = vsub.s32 0, %v2635
    %v2637 = vrot.slane %v2632, %v2636
    %v2671 = vunpack.c.l.b16 %v2600
    %v2672 = vunpack.c.l.b16 %v2601
    %v2673 = vunpack.c.l.b16 %v2602
    %v2674 = vunpack.c.l.b16 %v2603
    %v2675 = vunpack.c.l.b16 %v2604
    %v2676 = vunpack.c.l.b16 %v2605
    %v2677 = vunpack.c.l.b16 %v2606
    %v2678 = vunpack.c.l.b16 %v2607
    %v2679 = vunpack.c.l.b16 %v2608
    %v2680 = vunpack.c.l.b16 %v2609
    %v2681 = vunpack.c.l.b16 %v2610
    %v2682 = vunpack.c.l.b16 %v2611
    %v2683 = vunpack.c.l.b16 %v2612
    %v2684 = vunpack.c.l.b16 %v2613
    %v2685 = vunpack.c.l.b16 %v2614
    %v2686 = vunpack.c.l.b16 %v2615
    %v2687 = vunpack.c.l.b16 %v2616
    %v2688 = vunpack.c.l.b16 %v2617
    %v2689 = vunpack.c.l.b16 %v2618
    %v2690 = vunpack.c.l.b16 %v2619
    %v2691 = vunpack.c.l.b16 %v2620
    %v2692 = vunpack.c.l.b16 %v2621
    %v2693 = vunpack.c.l.b16 %v2622
    %v2694 = vunpack.c.l.b16 %v2623
    %v2695 = vunpack.c.l.b16 %v2624
    %v2696 = vunpack.c.l.b16 %v2625
    %v2697 = vunpack.c.l.b16 %v2626
    %v2698 = vunpack.c.l.b16 %v2627
    %v2699 = vunpack.c.l.b16 %v2628
    %v2700 = vunpack.c.l.b16 %v2629
    %v2701 = vunpack.c.l.b16 %v2630
    %v2702 = vunpack.c.l.b16 %v2631
    %v2703 = vpack.c.b16 %v2672, %v2671
    %v2704 = vpack.c.b16 %v2674, %v2673
    %v2705 = vpack.c.b16 %v2676, %v2675
    %v2706 = vpack.c.b16 %v2678, %v2677
    %v2707 = vpack.c.b16 %v2680, %v2679
    %v2708 = vpack.c.b16 %v2682, %v2681
    %v2709 = vpack.c.b16 %v2684, %v2683
    %v2710 = vpack.c.b16 %v2686, %v2685
    %v2711 = vpack.c.b16 %v2688, %v2687
    %v2712 = vpack.c.b16 %v2690, %v2689
    %v2713 = vpack.c.b16 %v2692, %v2691
    %v2714 = vpack.c.b16 %v2694, %v2693
    %v2715 = vpack.c.b16 %v2696, %v2695
    %v2716 = vpack.c.b16 %v2698, %v2697
    %v2717 = vpack.c.b16 %v2700, %v2699
    %v2718 = vpack.c.b16 %v2702, %v2701
    %2735 = vmatprep.subr.bf16.mxu0 0
    %2736 = vmatpush1.bf16.msra.mxu0 %v2703
    %2737 = vmatprep.subr.bf16.mxu0 0
    %2738 = vmatpush1.bf16.msra.mxu0 %v2704
    %2739 = vmatprep.subr.bf16.mxu0 0
    %2740 = vmatpush1.bf16.msra.mxu0 %v2705
    %2741 = vmatprep.subr.bf16.mxu0 0
    %2742 = vmatpush1.bf16.msra.mxu0 %v2706
    %2743 = vmatprep.subr.bf16.mxu0 0
    %2744 = vmatpush1.bf16.msra.mxu0 %v2707
    %2745 = vmatprep.subr.bf16.mxu0 0
    %2746 = vmatpush1.bf16.msra.mxu0 %v2708
    %2747 = vmatprep.subr.bf16.mxu0 0
    %2748 = vmatpush1.bf16.msra.mxu0 %v2709
    %2749 = vmatprep.subr.bf16.mxu0 0
    %2750 = vmatpush1.bf16.msra.mxu0 %v2710
    %2751 = vmatprep.subr.bf16.mxu0 0
    %2752 = vmatpush1.bf16.msra.mxu0 %v2711
    %2753 = vmatprep.subr.bf16.mxu0 0
    %2754 = vmatpush1.bf16.msra.mxu0 %v2712
    %2755 = vmatprep.subr.bf16.mxu0 0
    %2756 = vmatpush1.bf16.msra.mxu0 %v2713
    %2757 = vmatprep.subr.bf16.mxu0 0
    %2758 = vmatpush1.bf16.msra.mxu0 %v2714
    %2759 = vmatprep.subr.bf16.mxu0 0
    %2760 = vmatpush1.bf16.msra.mxu0 %v2715
    %2761 = vmatprep.subr.bf16.mxu0 0
    %2762 = vmatpush1.bf16.msra.mxu0 %v2716
    %2763 = vmatprep.subr.bf16.mxu0 0
    %2764 = vmatpush1.bf16.msra.mxu0 %v2717
    %2765 = vmatprep.subr.bf16.mxu0 0
    %2766 = vmatpush1.bf16.msra.mxu0 %v2718
    %2767 = vmatprep.mubr.bf16.mxu0 %v2599
    %2768 = vmatmul.mubr.bf16.gmra.mrb[0].mxu0 %v2598
    %v2769 = vpop.f32.mrb[0].mxu0
    %v2770 = vadd.f32 %v2637, %v2769
    %v2771 = vpop.f32.mrb[0].mxu0
    %v2772 = vpop.f32.mrb[0].mxu0
    %v2773 = vpop.f32.mrb[0].mxu0
    %2774 = vdwg.mxu0
    %vm2775 = vcmask 25600
    %v2776 = vsel %vm2775, %v2770, 0.0
    %2777 = vadd.xlane.f32.xlu0 %v2776
    %v2778 = vpop.xlane.xlu0 %2777
    %v2779 = vrcp.pop 4.0
    %v2780 = vmul.f32 %v2778, %v2779
    %v2781 = vsub.f32 %v2770, %v2780
    %2783 = vset.pattern.permute.xlu0 4
    %2784 = vperm.xlu0 %2783, %v2770
    %v2785 = vpop.permute.xlu0 %2784
    %v2787 = vadd.f32 %v2785, %v2781
    %2788 = vst.msk [vmem:[#allocation2] sm:$0x3] %vm2775, %v2787
    // Predicated region
    $region22: #{dqn_forward.3} parent=1 // pred_check
      _
    $region23: #{dqn_forward.3} parent=1 // pred_check_branch
      %2790 = sbr.rel (0) target = $region25
    $region24: #{dqn_forward.3} parent=1 // pred_region
      %s2792 = ssub.s32 32, 32
      %2793 = vsyncadd [#allocation3], %s2792
      %s2795 = sshll.u32 [#allocation2], 4
      %s2796 = int_to_ptr.vmem [resolvable:$true] %s2795
      %2798 = dma.vmem_to_hbm [thread:$0]  %s2796, 32, %s5, [#allocation3]
    $region25: #{dqn_forward.3} parent=1 // pred_fallthru
      _
    // Predicated region
    $region26: #{dqn_forward.3} parent=1 // pred_check
      _
    $region27: #{dqn_forward.3} parent=1 // pred_check_branch
      %2800 = sbr.rel (0) target = $region29
    $region28: #{dqn_forward.3} parent=1 // pred_region
      %2801 = dma.done [#allocation3], 32
    $region29: #{dqn_forward.3} parent=1 // pred_fallthru
      _
    %2802 = vsyncpa [#allocation3], 1

// kernel: dqn_forward.2
$region0: #{dqn_forward.2}
  #allocation0 [shape = 'u32[]', space=smem, size = 0x4, offset = 0x4, fixed_abs, tag = 'smem constant byte address 0x4 - core index']
  #allocation1 [shape = 'u32[144,128]{1,0:T(1,128)}', space=vmem, size = 0x12000, scoped, tag = 'internal scratch']
  %s0 = inlined_call_operand.vmem [shape: bf16[2816,256], index: 0, kind: input, shape index: {}]
  %s1 = inlined_call_operand.vmem [shape: bf16[256,16], index: 1, kind: input, shape index: {}]
  %s2 = inlined_call_operand.vmem [shape: f32[1,16], index: 2, kind: input, shape index: {}]
  %s3 = inlined_call_operand.vmem [shape: bf16[256,32], index: 3, kind: input, shape index: {}]
  %s4 = inlined_call_operand.vmem [shape: f32[1,32], index: 4, kind: input, shape index: {}]
  %s5 = inlined_call_operand.vmem [shape: bf16[162,32], index: 5, kind: output, shape index: {}]
  %s6 = sld [smem:[#allocation0]]
  $region30: #{dqn_forward.2} parent=0
    _
  %s8 = ssub.s32 1, %s6
  %s9 = scalar_select 0, %s8, %s6
  // Predicated region
  $region2: #{dqn_forward.2} parent=0 // pred_check
    _
  $region3: #{dqn_forward.2} parent=0 // pred_check_branch
    %11 = sbr.rel (0) target = $region5
  $region4: #{dqn_forward.2} parent=0 // pred_region
    _
  $region5: #{dqn_forward.2} parent=0 // pred_fallthru
    _
  // Predicated region
  $region6: #{dqn_forward.2} parent=0 // pred_check
    _
  $region7: #{dqn_forward.2} parent=0 // pred_check_branch
    %13 = sbr.rel (0) target = $region9
  $region8: #{dqn_forward.2} parent=0 // pred_region
    _
  $region9: #{dqn_forward.2} parent=0 // pred_fallthru
    _
  // Predicated region
  $region10: #{dqn_forward.2} parent=0 // pred_check
    _
  $region11: #{dqn_forward.2} parent=0 // pred_check_branch
    %15 = sbr.rel (0) target = $region13
  $region12: #{dqn_forward.2} parent=0 // pred_region
    _
  $region13: #{dqn_forward.2} parent=0 // pred_fallthru
    _
  // Predicated region
  $region14: #{dqn_forward.2} parent=0 // pred_check
    _
  $region15: #{dqn_forward.2} parent=0 // pred_check_branch
    %17 = sbr.rel (0) target = $region17
  $region16: #{dqn_forward.2} parent=0 // pred_region
    _
  $region17: #{dqn_forward.2} parent=0 // pred_fallthru
    _
  // Predicated region
  $region18: #{dqn_forward.2} parent=0 // pred_check
    _
  $region19: #{dqn_forward.2} parent=0 // pred_check_branch
    %19 = sbr.rel (0) target = $region21
  $region20: #{dqn_forward.2} parent=0 // pred_region
    _
  $region21: #{dqn_forward.2} parent=0 // pred_fallthru
    _
  %v21 = vld [vmem:[%s1] sm:$0xf]
  %v22 = vld [vmem:[%s1 + $0x4] sm:$0xf]
  %v23 = vld [vmem:[%s1 + $0x8] sm:$0xf]
  %v24 = vld [vmem:[%s1 + $0xc] sm:$0xf]
  %v25 = vld [vmem:[%s1 + $0x10] sm:$0xf]
  %v26 = vld [vmem:[%s1 + $0x14] sm:$0xf]
  %v27 = vld [vmem:[%s1 + $0x18] sm:$0xf]
  %v28 = vld [vmem:[%s1 + $0x1c] sm:$0xf]
  %v29 = vld [vmem:[%s1 + $0x20] sm:$0xf]
  %v30 = vld [vmem:[%s1 + $0x24] sm:$0xf]
  %v31 = vld [vmem:[%s1 + $0x28] sm:$0xf]
  %v32 = vld [vmem:[%s1 + $0x2c] sm:$0xf]
  %v33 = vld [vmem:[%s1 + $0x30] sm:$0xf]
  %v34 = vld [vmem:[%s1 + $0x34] sm:$0xf]
  %v35 = vld [vmem:[%s1 + $0x38] sm:$0xf]
  %v36 = vld [vmem:[%s1 + $0x3c] sm:$0xf]
  %v37 = vld [vmem:[%s1 + $0x40] sm:$0xf]
  %v38 = vld [vmem:[%s1 + $0x44] sm:$0xf]
  %v39 = vld [vmem:[%s1 + $0x48] sm:$0xf]
  %v40 = vld [vmem:[%s1 + $0x4c] sm:$0xf]
  %v41 = vld [vmem:[%s1 + $0x50] sm:$0xf]
  %v42 = vld [vmem:[%s1 + $0x54] sm:$0xf]
  %v43 = vld [vmem:[%s1 + $0x58] sm:$0xf]
  %v44 = vld [vmem:[%s1 + $0x5c] sm:$0xf]
  %v45 = vld [vmem:[%s1 + $0x60] sm:$0xf]
  %v46 = vld [vmem:[%s1 + $0x64] sm:$0xf]
  %v47 = vld [vmem:[%s1 + $0x68] sm:$0xf]
  %v48 = vld [vmem:[%s1 + $0x6c] sm:$0xf]
  %v49 = vld [vmem:[%s1 + $0x70] sm:$0xf]
  %v50 = vld [vmem:[%s1 + $0x74] sm:$0xf]
  %v51 = vld [vmem:[%s1 + $0x78] sm:$0xf]
  %v52 = vld [vmem:[%s1 + $0x7c] sm:$0xf]
  %v53 = vld [vmem:[%s2] sm:$0x1]
  %v54 = vld [vmem:[%s0] sm:$0xff]
  %v55 = vld [vmem:[%s0 + $0x8] sm:$0xff]
  %v56 = vld [vmem:[%s0 + $0x10] sm:$0xff]
  %v57 = vld [vmem:[%s0 + $0x18] sm:$0xff]
  %v58 = vld [vmem:[%s0 + $0x20] sm:$0xff]
  %v59 = vld [vmem:[%s0 + $0x28] sm:$0xff]
  %v60 = vld [vmem:[%s0 + $0x30] sm:$0xff]
  %v61 = vld [vmem:[%s0 + $0x38] sm:$0xff]
  %v62 = vld [vmem:[%s0 + $0x40] sm:$0xff]
  %v63 = vld [vmem:[%s0 + $0x48] sm:$0xff]
  %v64 = vld [vmem:[%s0 + $0x50] sm:$0xff]
  %v65 = vld [vmem:[%s0 + $0x58] sm:$0xff]
  %v66 = vld [vmem:[%s0 + $0x60] sm:$0xff]
  %v67 = vld [vmem:[%s0 + $0x68] sm:$0xff]
  %v68 = vld [vmem:[%s0 + $0x70] sm:$0xff]
  %v69 = vld [vmem:[%s0 + $0x78] sm:$0xff]
  %v70 = vld [vmem:[%s0 + $0x80] sm:$0xff]
  %v71 = vld [vmem:[%s0 + $0x88] sm:$0xff]
  %v72 = vld [vmem:[%s0 + $0x90] sm:$0xff]
  %v73 = vld [vmem:[%s0 + $0x98] sm:$0xff]
  %v74 = vld [vmem:[%s0 + $0xa0] sm:$0xff]
  %v75 = vld [vmem:[%s0 + $0xa8] sm:$0xff]
  %v77 = vlaneseq
  %v78 = vshrl.u32 %v77, 7
  %v79 = vsub.s32 0, %v78
  %v80 = vrot.slane %v53, %v79
  %v104 = vunpack.c.l.b16 %v54
  %v105 = vunpack.c.h.b16 %v54
  %v106 = vunpack.c.l.b16 %v55
  %v107 = vunpack.c.h.b16 %v55
  %v108 = vunpack.c.l.b16 %v56
  %v109 = vunpack.c.h.b16 %v56
  %v110 = vunpack.c.l.b16 %v57
  %v111 = vunpack.c.h.b16 %v57
  %v112 = vunpack.c.l.b16 %v58
  %v113 = vunpack.c.h.b16 %v58
  %v114 = vunpack.c.l.b16 %v59
  %v115 = vunpack.c.h.b16 %v59
  %v116 = vunpack.c.l.b16 %v60
  %v117 = vunpack.c.h.b16 %v60
  %v118 = vunpack.c.l.b16 %v61
  %v119 = vunpack.c.h.b16 %v61
  %v120 = vunpack.c.l.b16 %v62
  %v121 = vunpack.c.h.b16 %v62
  %v122 = vunpack.c.l.b16 %v63
  %v123 = vunpack.c.h.b16 %v63
  %v124 = vunpack.c.l.b16 %v64
  %v125 = vunpack.c.h.b16 %v64
  %v126 = vunpack.c.l.b16 %v65
  %v127 = vunpack.c.h.b16 %v65
  %v128 = vunpack.c.l.b16 %v66
  %v129 = vunpack.c.h.b16 %v66
  %v130 = vunpack.c.l.b16 %v67
  %v131 = vunpack.c.h.b16 %v67
  %v132 = vunpack.c.l.b16 %v68
  %v133 = vunpack.c.h.b16 %v68
  %v134 = vunpack.c.l.b16 %v69
  %v135 = vunpack.c.h.b16 %v69
  %v136 = vunpack.c.l.b16 %v70
  %v137 = vunpack.c.h.b16 %v70
  %v138 = vunpack.c.l.b16 %v71
  %v139 = vunpack.c.h.b16 %v71
  %v140 = vunpack.c.l.b16 %v72
  %v141 = vunpack.c.h.b16 %v72
  %v142 = vunpack.c.l.b16 %v73
  %v143 = vunpack.c.h.b16 %v73
  %v144 = vunpack.c.l.b16 %v74
  %v145 = vunpack.c.h.b16 %v74
  %v146 = vunpack.c.l.b16 %v75
  %v147 = vunpack.c.h.b16 %v75
  %v148 = vpack.c.b16 %v106, %v104
  %v149 = vpack.c.b16 %v107, %v105
  %v150 = vpack.c.b16 %v110, %v108
  %v151 = vpack.c.b16 %v111, %v109
  %v152 = vpack.c.b16 %v114, %v112
  %v153 = vpack.c.b16 %v115, %v113
  %v154 = vpack.c.b16 %v118, %v116
  %v155 = vpack.c.b16 %v119, %v117
  %v156 = vpack.c.b16 %v122, %v120
  %v157 = vpack.c.b16 %v123, %v121
  %v158 = vpack.c.b16 %v126, %v124
  %v159 = vpack.c.b16 %v127, %v125
  %v160 = vpack.c.b16 %v130, %v128
  %v161 = vpack.c.b16 %v131, %v129
  %v162 = vpack.c.b16 %v134, %v132
  %v163 = vpack.c.b16 %v135, %v133
  %v164 = vpack.c.b16 %v138, %v136
  %v165 = vpack.c.b16 %v139, %v137
  %v166 = vpack.c.b16 %v142, %v140
  %v167 = vpack.c.b16 %v143, %v141
  %v168 = vpack.c.b16 %v146, %v144
  %v169 = vpack.c.b16 %v147, %v145
  %v224 = vunpack.c.l.b16 %v21
  %v225 = vunpack.c.l.b16 %v22
  %v226 = vunpack.c.l.b16 %v23
  %v227 = vunpack.c.l.b16 %v24
  %v228 = vunpack.c.l.b16 %v25
  %v229 = vunpack.c.l.b16 %v26
  %v230 = vunpack.c.l.b16 %v27
  %v231 = vunpack.c.l.b16 %v28
  %v232 = vunpack.c.l.b16 %v29
  %v233 = vunpack.c.l.b16 %v30
  %v234 = vunpack.c.l.b16 %v31
  %v235 = vunpack.c.l.b16 %v32
  %v236 = vunpack.c.l.b16 %v33
  %v237 = vunpack.c.l.b16 %v34
  %v238 = vunpack.c.l.b16 %v35
  %v239 = vunpack.c.l.b16 %v36
  %v240 = vunpack.c.l.b16 %v37
  %v241 = vunpack.c.l.b16 %v38
  %v242 = vunpack.c.l.b16 %v39
  %v243 = vunpack.c.l.b16 %v40
  %v244 = vunpack.c.l.b16 %v41
  %v245 = vunpack.c.l.b16 %v42
  %v246 = vunpack.c.l.b16 %v43
  %v247 = vunpack.c.l.b16 %v44
  %v248 = vunpack.c.l.b16 %v45
  %v249 = vunpack.c.l.b16 %v46
  %v250 = vunpack.c.l.b16 %v47
  %v251 = vunpack.c.l.b16 %v48
  %v252 = vunpack.c.l.b16 %v49
  %v253 = vunpack.c.l.b16 %v50
  %v254 = vunpack.c.l.b16 %v51
  %v255 = vunpack.c.l.b16 %v52
  %v256 = vpack.c.b16 %v225, %v224
  %v257 = vpack.c.b16 %v227, %v226
  %v258 = vpack.c.b16 %v229, %v228
  %v259 = vpack.c.b16 %v231, %v230
  %v260 = vpack.c.b16 %v233, %v232
  %v261 = vpack.c.b16 %v235, %v234
  %v262 = vpack.c.b16 %v237, %v236
  %v263 = vpack.c.b16 %v239, %v238
  %v264 = vpack.c.b16 %v241, %v240
  %v265 = vpack.c.b16 %v243, %v242
  %v266 = vpack.c.b16 %v245, %v244
  %v267 = vpack.c.b16 %v247, %v246
  %v268 = vpack.c.b16 %v249, %v248
  %v269 = vpack.c.b16 %v251, %v250
  %v270 = vpack.c.b16 %v253, %v252
  %v271 = vpack.c.b16 %v255, %v254
  %288 = vmatprep.subr.bf16.mxu0 0
  %289 = vmatpush1.bf16.msra.mxu0 %v256
  %290 = vmatprep.subr.bf16.mxu0 0
  %291 = vmatpush1.bf16.msra.mxu0 %v257
  %292 = vmatprep.subr.bf16.mxu0 0
  %293 = vmatpush1.bf16.msra.mxu0 %v258
  %294 = vmatprep.subr.bf16.mxu0 0
  %295 = vmatpush1.bf16.msra.mxu0 %v259
  %296 = vmatprep.subr.bf16.mxu0 0
  %297 = vmatpush1.bf16.msra.mxu0 %v260
  %298 = vmatprep.subr.bf16.mxu0 0
  %299 = vmatpush1.bf16.msra.mxu0 %v261
  %300 = vmatprep.subr.bf16.mxu0 0
  %301 = vmatpush1.bf16.msra.mxu0 %v262
  %302 = vmatprep.subr.bf16.mxu0 0
  %303 = vmatpush1.bf16.msra.mxu0 %v263
  %304 = vmatprep.subr.bf16.mxu0 0
  %305 = vmatpush1.bf16.msra.mxu0 %v264
  %306 = vmatprep.subr.bf16.mxu0 0
  %307 = vmatpush1.bf16.msra.mxu0 %v265
  %308 = vmatprep.subr.bf16.mxu0 0
  %309 = vmatpush1.bf16.msra.mxu0 %v266
  %310 = vmatprep.subr.bf16.mxu0 0
  %311 = vmatpush1.bf16.msra.mxu0 %v267
  %312 = vmatprep.subr.bf16.mxu0 0
  %313 = vmatpush1.bf16.msra.mxu0 %v268
  %314 = vmatprep.subr.bf16.mxu0 0
  %315 = vmatpush1.bf16.msra.mxu0 %v269
  %316 = vmatprep.subr.bf16.mxu0 0
  %317 = vmatpush1.bf16.msra.mxu0 %v270
  %318 = vmatprep.subr.bf16.mxu0 0
  %319 = vmatpush1.bf16.msra.mxu0 %v271
  %320 = vmatprep.mubr.bf16.mxu0 %v149
  %321 = vmatmul.mubr.bf16.gmra.mrb[0].mxu0 %v148
  %v322 = vpop.f32.mrb[0].mxu0
  %v323 = vadd.f32 %v80, %v322
  %v324 = vpop.f32.mrb[0].mxu0
  %v325 = vpop.f32.mrb[0].mxu0
  %v326 = vadd.f32 %v80, %v325
  %v327 = vpop.f32.mrb[0].mxu0
  %328 = vmatprep.mubr.bf16.mxu0 %v151
  %329 = vmatmul.mubr.bf16.gmra.mrb[0].mxu0 %v150
  %v330 = vpop.f32.mrb[0].mxu0
  %v331 = vadd.f32 %v80, %v330
  %v332 = vpop.f32.mrb[0].mxu0
  %v333 = vpop.f32.mrb[0].mxu0
  %v334 = vadd.f32 %v80, %v333
  %v335 = vpop.f32.mrb[0].mxu0
  %336 = vmatprep.mubr.bf16.mxu0 %v153
  %337 = vmatmul.mubr.bf16.gmra.mrb[0].mxu0 %v152
  %v338 = vpop.f32.mrb[0].mxu0
  %v339 = vadd.f32 %v80, %v338
  %v340 = vpop.f32.mrb[0].mxu0
  %v341 = vpop.f32.mrb[0].mxu0
  %v342 = vadd.f32 %v80, %v341
  %v343 = vpop.f32.mrb[0].mxu0
  %344 = vmatprep.mubr.bf16.mxu0 %v155
  %345 = vmatmul.mubr.bf16.gmra.mrb[0].mxu0 %v154
  %v346 = vpop.f32.mrb[0].mxu0
  %v347 = vadd.f32 %v80, %v346
  %v348 = vpop.f32.mrb[0].mxu0
  %v349 = vpop.f32.mrb[0].mxu0
  %v350 = vadd.f32 %v80, %v349
  %v351 = vpop.f32.mrb[0].mxu0
  %352 = vmatprep.mubr.bf16.mxu0 %v157
  %353 = vmatmul.mubr.bf16.gmra.mrb[0].mxu0 %v156
  %v354 = vpop.f32.mrb[0].mxu0
  %v355 = vadd.f32 %v80, %v354
  %v356 = vpop.f32.mrb[0].mxu0
  %v357 = vpop.f32.mrb[0].mxu0
  %v358 = vadd.f32 %v80, %v357
  %v359 = vpop.f32.mrb[0].mxu0
  %360 = vmatprep.mubr.bf16.mxu0 %v159
  %361 = vmatmul.mubr.bf16.gmra.mrb[0].mxu0 %v158
  %v362 = vpop.f32.mrb[0].mxu0
  %v363 = vadd.f32 %v80, %v362
  %v364 = vpop.f32.mrb[0].mxu0
  %v365 = vpop.f32.mrb[0].mxu0
  %v366 = vadd.f32 %v80, %v365
  %v367 = vpop.f32.mrb[0].mxu0
  %368 = vmatprep.mubr.bf16.mxu0 %v161
  %369 = vmatmul.mubr.bf16.gmra.mrb[0].mxu0 %v160
  %v370 = vpop.f32.mrb[0].mxu0
  %v371 = vadd.f32 %v80, %v370
  %v372 = vpop.f32.mrb[0].mxu0
  %v373 = vpop.f32.mrb[0].mxu0
  %v374 = vadd.f32 %v80, %v373
  %v375 = vpop.f32.mrb[0].mxu0
  %376 = vmatprep.mubr.bf16.mxu0 %v163
  %377 = vmatmul.mubr.bf16.gmra.mrb[0].mxu0 %v162
  %v378 = vpop.f32.mrb[0].mxu0
  %v379 = vadd.f32 %v80, %v378
  %v380 = vpop.f32.mrb[0].mxu0
  %v381 = vpop.f32.mrb[0].mxu0
  %v382 = vadd.f32 %v80, %v381
  %v383 = vpop.f32.mrb[0].mxu0
  %384 = vmatprep.mubr.bf16.mxu0 %v165
  %385 = vmatmul.mubr.bf16.gmra.mrb[0].mxu0 %v164
  %v386 = vpop.f32.mrb[0].mxu0
  %v387 = vadd.f32 %v80, %v386
  %v388 = vpop.f32.mrb[0].mxu0
  %v389 = vpop.f32.mrb[0].mxu0
  %v390 = vadd.f32 %v80, %v389
  %v391 = vpop.f32.mrb[0].mxu0
  %392 = vmatprep.mubr.bf16.mxu0 %v167
  %393 = vmatmul.mubr.bf16.gmra.mrb[0].mxu0 %v166
  %v394 = vpop.f32.mrb[0].mxu0
  %v395 = vadd.f32 %v80, %v394
  %v396 = vpop.f32.mrb[0].mxu0
  %v397 = vpop.f32.mrb[0].mxu0
  %v398 = vadd.f32 %v80, %v397
  %v399 = vpop.f32.mrb[0].mxu0
  %400 = vmatprep.mubr.bf16.mxu0 %v169
  %401 = vmatmul.mubr.bf16.gmra.mrb[0].mxu0 %v168
  %v402 = vpop.f32.mrb[0].mxu0
  %v403 = vadd.f32 %v80, %v402
  %v404 = vpop.f32.mrb[0].mxu0
  %v405 = vpop.f32.mrb[0].mxu0
  %v406 = vadd.f32 %v80, %v405
  %v407 = vpop.f32.mrb[0].mxu0
  %408 = vdwg.mxu0
  %v409 = vmax.f32 %v323, 0.0
  %v410 = vmax.f32 %v326, 0.0
  %v411 = vmax.f32 %v331, 0.0
  %v412 = vmax.f32 %v334, 0.0
  %v413 = vmax.f32 %v339, 0.0
  %v414 = vmax.f32 %v342, 0.0
  %v415 = vmax.f32 %v347, 0.0
  %v416 = vmax.f32 %v350, 0.0
  %v417 = vmax.f32 %v355, 0.0
  %v418 = vmax.f32 %v358, 0.0
  %v419 = vmax.f32 %v363, 0.0
  %v420 = vmax.f32 %v366, 0.0
  %v421 = vmax.f32 %v371, 0.0
  %v422 = vmax.f32 %v374, 0.0
  %v423 = vmax.f32 %v379, 0.0
  %v424 = vmax.f32 %v382, 0.0
  %v425 = vmax.f32 %v387, 0.0
  %v426 = vmax.f32 %v390, 0.0
  %v427 = vmax.f32 %v395, 0.0
  %v428 = vmax.f32 %v398, 0.0
  %v429 = vmax.f32 %v403, 0.0
  %v430 = vmax.f32 %v406, 0.0
  %v431 = vpack.c.bf16 %v410, %v409
  %v432 = vpack.c.bf16 %v412, %v411
  %v433 = vpack.c.bf16 %v414, %v413
  %v434 = vpack.c.bf16 %v416, %v415
  %v435 = vpack.c.bf16 %v418, %v417
  %v436 = vpack.c.bf16 %v420, %v419
  %v437 = vpack.c.bf16 %v422, %v421
  %v438 = vpack.c.bf16 %v424, %v423
  %v439 = vpack.c.bf16 %v426, %v425
  %v440 = vpack.c.bf16 %v428, %v427
  %v441 = vpack.c.bf16 %v430, %v429
  %v442 = vld [vmem:[%s3] sm:$0xf]
  %v443 = vld [vmem:[%s3 + $0x4] sm:$0xf]
  %v444 = vld [vmem:[%s0 + $0xb0] sm:$0xff]
  %v445 = vld [vmem:[%s0 + $0xb8] sm:$0xff]
  %v446 = vld [vmem:[%s0 + $0xc0] sm:$0xff]
  %v447 = vld [vmem:[%s0 + $0xc8] sm:$0xff]
  %v448 = vld [vmem:[%s0 + $0xd0] sm:$0xff]
  %v449 = vld [vmem:[%s0 + $0xd8] sm:$0xff]
  %v450 = vld [vmem:[%s0 + $0xe0] sm:$0xff]
  %v451 = vld [vmem:[%s0 + $0xe8] sm:$0xff]
  %v452 = vld [vmem:[%s0 + $0xf0] sm:$0xff]
  %v453 = vld [vmem:[%s0 + $0xf8] sm:$0xff]
  %v454 = vld [vmem:[%s0 + $0x100] sm:$0xff]
  %v455 = vld [vmem:[%s0 + $0x108] sm:$0xff]
  %v456 = vld [vmem:[%s0 + $0x110] sm:$0xff]
  %v457 = vld [vmem:[%s0 + $0x118] sm:$0xff]
  %v458 = vld [vmem:[%s0 + $0x120] sm:$0xff]
  %v459 = vld [vmem:[%s0 + $0x128] sm:$0xff]
  %v460 = vld [vmem:[%s0 + $0x130] sm:$0xff]
  %v461 = vld [vmem:[%s0 + $0x138] sm:$0xff]
  %v462 = vld [vmem:[%s0 + $0x140] sm:$0xff]
  %v463 = vld [vmem:[%s0 + $0x148] sm:$0xff]
  %v464 = vld [vmem:[%s0 + $0x150] sm:$0xff]
  %v465 = vld [vmem:[%s0 + $0x158] sm:$0xff]
  %v488 = vunpack.c.l.b16 %v444
  %v489 = vunpack.c.h.b16 %v444
  %v490 = vunpack.c.l.b16 %v445
  %v491 = vunpack.c.h.b16 %v445
  %v492 = vunpack.c.l.b16 %v446
  %v493 = vunpack.c.h.b16 %v446
  %v494 = vunpack.c.l.b16 %v447
  %v495 = vunpack.c.h.b16 %v447
  %v496 = vunpack.c.l.b16 %v448
  %v497 = vunpack.c.h.b16 %v448
  %v498 = vunpack.c.l.b16 %v449
  %v499 = vunpack.c.h.b16 %v449
  %v500 = vunpack.c.l.b16 %v450
  %v501 = vunpack.c.h.b16 %v450
  %v502 = vunpack.c.l.b16 %v451
  %v503 = vunpack.c.h.b16 %v451
  %v504 = vunpack.c.l.b16 %v452
  %v505 = vunpack.c.h.b16 %v452
  %v506 = vunpack.c.l.b16 %v453
  %v507 = vunpack.c.h.b16 %v453
  %v508 = vunpack.c.l.b16 %v454
  %v509 = vunpack.c.h.b16 %v454
  %v510 = vunpack.c.l.b16 %v455
  %v511 = vunpack.c.h.b16 %v455
  %v512 = vunpack.c.l.b16 %v456
  %v513 = vunpack.c.h.b16 %v456
  %v514 = vunpack.c.l.b16 %v457
  %v515 = vunpack.c.h.b16 %v457
  %v516 = vunpack.c.l.b16 %v458
  %v517 = vunpack.c.h.b16 %v458
  %v518 = vunpack.c.l.b16 %v459
  %v519 = vunpack.c.h.b16 %v459
  %v520 = vunpack.c.l.b16 %v460
  %v521 = vunpack.c.h.b16 %v460
  %v522 = vunpack.c.l.b16 %v461
  %v523 = vunpack.c.h.b16 %v461
  %v524 = vunpack.c.l.b16 %v462
  %v525 = vunpack.c.h.b16 %v462
  %v526 = vunpack.c.l.b16 %v463
  %v527 = vunpack.c.h.b16 %v463
  %v528 = vunpack.c.l.b16 %v464
  %v529 = vunpack.c.h.b16 %v464
  %v530 = vunpack.c.l.b16 %v465
  %v531 = vunpack.c.h.b16 %v465
  %v532 = vpack.c.b16 %v490, %v488
  %v533 = vpack.c.b16 %v491, %v489
  %v534 = vpack.c.b16 %v494, %v492
  %v535 = vpack.c.b16 %v495, %v493
  %v536 = vpack.c.b16 %v498, %v496
  %v537 = vpack.c.b16 %v499, %v497
  %v538 = vpack.c.b16 %v502, %v500
  %v539 = vpack.c.b16 %v503, %v501
  %v540 = vpack.c.b16 %v506, %v504
  %v541 = vpack.c.b16 %v507, %v505
  %v542 = vpack.c.b16 %v510, %v508
  %v543 = vpack.c.b16 %v511, %v509
  %v544 = vpack.c.b16 %v514, %v512
  %v545 = vpack.c.b16 %v515, %v513
  %v546 = vpack.c.b16 %v518, %v516
  %v547 = vpack.c.b16 %v519, %v517
  %v548 = vpack.c.b16 %v522, %v520
  %v549 = vpack.c.b16 %v523, %v521
  %v550 = vpack.c.b16 %v526, %v524
  %v551 = vpack.c.b16 %v527, %v525
  %v552 = vpack.c.b16 %v530, %v528
  %v553 = vpack.c.b16 %v531, %v529
  %576 = vmatprep.subr.bf16.mxu0 0
  %577 = vmatpush1.bf16.msra.mxu0 %v256
  %578 = vmatprep.subr.bf16.mxu0 0
  %579 = vmatpush1.bf16.msra.mxu0 %v257
  %580 = vmatprep.subr.bf16.mxu0 0
  %581 = vmatpush1.bf16.msra.mxu0 %v258
  %582 = vmatprep.subr.bf16.mxu0 0
  %583 = vmatpush1.bf16.msra.mxu0 %v259
  %584 = vmatprep.subr.bf16.mxu0 0
  %585 = vmatpush1.bf16.msra.mxu0 %v260
  %586 = vmatprep.subr.bf16.mxu0 0
  %587 = vmatpush1.bf16.msra.mxu0 %v261
  %588 = vmatprep.subr.bf16.mxu0 0
  %589 = vmatpush1.bf16.msra.mxu0 %v262
  %590 = vmatprep.subr.bf16.mxu0 0
  %591 = vmatpush1.bf16.msra.mxu0 %v263
  %592 = vmatprep.subr.bf16.mxu0 0
  %593 = vmatpush1.bf16.msra.mxu0 %v264
  %594 = vmatprep.subr.bf16.mxu0 0
  %595 = vmatpush1.bf16.msra.mxu0 %v265
  %596 = vmatprep.subr.bf16.mxu0 0
  %597 = vmatpush1.bf16.msra.mxu0 %v266
  %598 = vmatprep.subr.bf16.mxu0 0
  %599 = vmatpush1.bf16.msra.mxu0 %v267
  %600 = vmatprep.subr.bf16.mxu0 0
  %601 = vmatpush1.bf16.msra.mxu0 %v268
  %602 = vmatprep.subr.bf16.mxu0 0
  %603 = vmatpush1.bf16.msra.mxu0 %v269
  %604 = vmatprep.subr.bf16.mxu0 0
  %605 = vmatpush1.bf16.msra.mxu0 %v270
  %606 = vmatprep.subr.bf16.mxu0 0
  %607 = vmatpush1.bf16.msra.mxu0 %v271
  %608 = vmatprep.mubr.bf16.mxu0 %v533
  %609 = vmatmul.mubr.bf16.gmra.mrb[0].mxu0 %v532
  %v610 = vpop.f32.mrb[0].mxu0
  %v611 = vadd.f32 %v80, %v610
  %v612 = vpop.f32.mrb[0].mxu0
  %v613 = vpop.f32.mrb[0].mxu0
  %v614 = vadd.f32 %v80, %v613
  %v615 = vpop.f32.mrb[0].mxu0
  %616 = vmatprep.mubr.bf16.mxu0 %v535
  %617 = vmatmul.mubr.bf16.gmra.mrb[0].mxu0 %v534
  %v618 = vpop.f32.mrb[0].mxu0
  %v619 = vadd.f32 %v80, %v618
  %v620 = vpop.f32.mrb[0].mxu0
  %v621 = vpop.f32.mrb[0].mxu0
  %v622 = vadd.f32 %v80, %v621
  %v623 = vpop.f32.mrb[0].mxu0
  %624 = vmatprep.mubr.bf16.mxu0 %v537
  %625 = vmatmul.mubr.bf16.gmra.mrb[0].mxu0 %v536
  %v626 = vpop.f32.mrb[0].mxu0
  %v627 = vadd.f32 %v80, %v626
  %v628 = vpop.f32.mrb[0].mxu0
  %v629 = vpop.f32.mrb[0].mxu0
  %v630 = vadd.f32 %v80, %v629
  %v631 = vpop.f32.mrb[0].mxu0
  %632 = vmatprep.mubr.bf16.mxu0 %v539
  %633 = vmatmul.mubr.bf16.gmra.mrb[0].mxu0 %v538
  %v634 = vpop.f32.mrb[0].mxu0
  %v635 = vadd.f32 %v80, %v634
  %v636 = vpop.f32.mrb[0].mxu0
  %v637 = vpop.f32.mrb[0].mxu0
  %v638 = vadd.f32 %v80, %v637
  %v639 = vpop.f32.mrb[0].mxu0
  %640 = vmatprep.mubr.bf16.mxu0 %v541
  %641 = vmatmul.mubr.bf16.gmra.mrb[0].mxu0 %v540
  %v642 = vpop.f32.mrb[0].mxu0
  %v643 = vadd.f32 %v80, %v642
  %v644 = vpop.f32.mrb[0].mxu0
  %v645 = vpop.f32.mrb[0].mxu0
  %v646 = vadd.f32 %v80, %v645
  %v647 = vpop.f32.mrb[0].mxu0
  %648 = vmatprep.mubr.bf16.mxu0 %v543
  %649 = vmatmul.mubr.bf16.gmra.mrb[0].mxu0 %v542
  %v650 = vpop.f32.mrb[0].mxu0
  %v651 = vadd.f32 %v80, %v650
  %v652 = vpop.f32.mrb[0].mxu0
  %v653 = vpop.f32.mrb[0].mxu0
  %v654 = vadd.f32 %v80, %v653
  %v655 = vpop.f32.mrb[0].mxu0
  %656 = vmatprep.mubr.bf16.mxu0 %v545
  %657 = vmatmul.mubr.bf16.gmra.mrb[0].mxu0 %v544
  %v658 = vpop.f32.mrb[0].mxu0
  %v659 = vadd.f32 %v80, %v658
  %v660 = vpop.f32.mrb[0].mxu0
  %v661 = vpop.f32.mrb[0].mxu0
  %v662 = vadd.f32 %v80, %v661
  %v663 = vpop.f32.mrb[0].mxu0
  %664 = vmatprep.mubr.bf16.mxu0 %v547
  %665 = vmatmul.mubr.bf16.gmra.mrb[0].mxu0 %v546
  %v666 = vpop.f32.mrb[0].mxu0
  %v667 = vadd.f32 %v80, %v666
  %v668 = vpop.f32.mrb[0].mxu0
  %v669 = vpop.f32.mrb[0].mxu0
  %v670 = vadd.f32 %v80, %v669
  %v671 = vpop.f32.mrb[0].mxu0
  %672 = vmatprep.mubr.bf16.mxu0 %v549
  %673 = vmatmul.mubr.bf16.gmra.mrb[0].mxu0 %v548
  %v674 = vpop.f32.mrb[0].mxu0
  %v675 = vadd.f32 %v80, %v674
  %v676 = vpop.f32.mrb[0].mxu0
  %v677 = vpop.f32.mrb[0].mxu0
  %v678 = vadd.f32 %v80, %v677
  %v679 = vpop.f32.mrb[0].mxu0
  %680 = vmatprep.mubr.bf16.mxu0 %v551
  %681 = vmatmul.mubr.bf16.gmra.mrb[0].mxu0 %v550
  %v682 = vpop.f32.mrb[0].mxu0
  %v683 = vadd.f32 %v80, %v682
  %v684 = vpop.f32.mrb[0].mxu0
  %v685 = vpop.f32.mrb[0].mxu0
  %v686 = vadd.f32 %v80, %v685
  %v687 = vpop.f32.mrb[0].mxu0
  %688 = vmatprep.mubr.bf16.mxu0 %v553
  %689 = vmatmul.mubr.bf16.gmra.mrb[0].mxu0 %v552
  %v690 = vpop.f32.mrb[0].mxu0
  %v691 = vadd.f32 %v80, %v690
  %v692 = vpop.f32.mrb[0].mxu0
  %v693 = vpop.f32.mrb[0].mxu0
  %v694 = vadd.f32 %v80, %v693
  %v695 = vpop.f32.mrb[0].mxu0
  %696 = vdwg.mxu0
  %v697 = vmax.f32 %v611, 0.0
  %v698 = vmax.f32 %v614, 0.0
  %v699 = vmax.f32 %v619, 0.0
  %v700 = vmax.f32 %v622, 0.0
  %v701 = vmax.f32 %v627, 0.0
  %v702 = vmax.f32 %v630, 0.0
  %v703 = vmax.f32 %v635, 0.0
  %v704 = vmax.f32 %v638, 0.0
  %v705 = vmax.f32 %v643, 0.0
  %v706 = vmax.f32 %v646, 0.0
  %v707 = vmax.f32 %v651, 0.0
  %v708 = vmax.f32 %v654, 0.0
  %v709 = vmax.f32 %v659, 0.0
  %v710 = vmax.f32 %v662, 0.0
  %v711 = vmax.f32 %v667, 0.0
  %v712 = vmax.f32 %v670, 0.0
  %v713 = vmax.f32 %v675, 0.0
  %v714 = vmax.f32 %v678, 0.0
  %v715 = vmax.f32 %v683, 0.0
  %v716 = vmax.f32 %v686, 0.0
  %v717 = vmax.f32 %v691, 0.0
  %v718 = vmax.f32 %v694, 0.0
  %v719 = vpack.c.bf16 %v698, %v697
  %v720 = vpack.c.bf16 %v700, %v699
  %v721 = vpack.c.bf16 %v702, %v701
  %v722 = vpack.c.bf16 %v704, %v703
  %v723 = vpack.c.bf16 %v706, %v705
  %v724 = vpack.c.bf16 %v708, %v707
  %v725 = vpack.c.bf16 %v710, %v709
  %v726 = vpack.c.bf16 %v712, %v711
  %v727 = vpack.c.bf16 %v714, %v713
  %v728 = vpack.c.bf16 %v716, %v715
  %v729 = vpack.c.bf16 %v718, %v717
  %v730 = vld [vmem:[%s3 + $0x8] sm:$0xf]
  %v731 = vld [vmem:[%s3 + $0xc] sm:$0xf]
  %v734 = vunpack.c.l.b16 %v730
  %v735 = vunpack.c.l.b16 %v731
  %v736 = vpack.c.b16 %v735, %v734
  %vm738 = vcmask 130048
  %v740 = vsel %vm738, %v719, 0
  %v743 = vsel %vm738, %v720, 0
  %v746 = vsel %vm738, %v721, 0
  %v749 = vsel %vm738, %v722, 0
  %v752 = vsel %vm738, %v723, 0
  %v755 = vsel %vm738, %v724, 0
  %v758 = vsel %vm738, %v725, 0
  %v761 = vsel %vm738, %v726, 0
  %v764 = vsel %vm738, %v727, 0
  %v767 = vsel %vm738, %v728, 0
  %v770 = vsel %vm738, %v729, 0
  %772 = vmatprep.subr.bf16.mxu0 0
  %773 = vmatpush1.bf16.msra.mxu0 %v736
  %774 = vmatprep.subr.bf16.mxu0 0
  %775 = vmatpush1.bf16.msra.mxu0 0
  %776 = vmatprep.subr.bf16.mxu0 0
  %777 = vmatpush1.bf16.msra.mxu0 0
  %778 = vmatprep.subr.bf16.mxu0 0
  %779 = vmatpush1.bf16.msra.mxu0 0
  %780 = vmatprep.subr.bf16.mxu0 0
  %781 = vmatpush1.bf16.msra.mxu0 0
  %782 = vmatprep.subr.bf16.mxu0 0
  %783 = vmatpush1.bf16.msra.mxu0 0
  %784 = vmatprep.subr.bf16.mxu0 0
  %785 = vmatpush1.bf16.msra.mxu0 0
  %786 = vmatprep.subr.bf16.mxu0 0
  %787 = vmatpush1.bf16.msra.mxu0 0
  %788 = vmatprep.subr.bf16.mxu0 0
  %789 = vmatpush1.bf16.msra.mxu0 0
  %790 = vmatprep.subr.bf16.mxu0 0
  %791 = vmatpush1.bf16.msra.mxu0 0
  %792 = vmatprep.subr.bf16.mxu0 0
  %793 = vmatpush1.bf16.msra.mxu0 0
  %794 = vmatprep.subr.bf16.mxu0 0
  %795 = vmatpush1.bf16.msra.mxu0 0
  %796 = vmatprep.subr.bf16.mxu0 0
  %797 = vmatpush1.bf16.msra.mxu0 0
  %798 = vmatprep.subr.bf16.mxu0 0
  %799 = vmatpush1.bf16.msra.mxu0 0
  %800 = vmatprep.subr.bf16.mxu0 0
  %801 = vmatpush1.bf16.msra.mxu0 0
  %802 = vmatprep.subr.bf16.mxu0 0
  %803 = vmatpush1.bf16.msra.mxu0 0
  %804 = vmatprep.mubr.bf16.mxu0 0
  %805 = vmatmul.mubr.bf16.gmra.mrb[0].mxu0 %v740
  %v806 = vpop.f32.mrb[0].mxu0
  %v807 = vadd.f32 0.0, %v806
  %v808 = vpop.f32.mrb[0].mxu0
  %v809 = vpop.f32.mrb[0].mxu0
  %v810 = vadd.f32 0.0, %v809
  %v811 = vpop.f32.mrb[0].mxu0
  %812 = vmatprep.mubr.bf16.mxu0 0
  %813 = vmatmul.mubr.bf16.gmra.mrb[0].mxu0 %v743
  %v814 = vpop.f32.mrb[0].mxu0
  %v815 = vadd.f32 0.0, %v814
  %v816 = vpop.f32.mrb[0].mxu0
  %v817 = vpop.f32.mrb[0].mxu0
  %v818 = vadd.f32 0.0, %v817
  %v819 = vpop.f32.mrb[0].mxu0
  %820 = vmatprep.mubr.bf16.mxu0 0
  %821 = vmatmul.mubr.bf16.gmra.mrb[0].mxu0 %v746
  %v822 = vpop.f32.mrb[0].mxu0
  %v823 = vadd.f32 0.0, %v822
  %v824 = vpop.f32.mrb[0].mxu0
  %v825 = vpop.f32.mrb[0].mxu0
  %v826 = vadd.f32 0.0, %v825
  %v827 = vpop.f32.mrb[0].mxu0
  %828 = vmatprep.mubr.bf16.mxu0 0
  %829 = vmatmul.mubr.bf16.gmra.mrb[0].mxu0 %v749
  %v830 = vpop.f32.mrb[0].mxu0
  %v831 = vadd.f32 0.0, %v830
  %v832 = vpop.f32.mrb[0].mxu0
  %v833 = vpop.f32.mrb[0].mxu0
  %v834 = vadd.f32 0.0, %v833
  %v835 = vpop.f32.mrb[0].mxu0
  %836 = vmatprep.mubr.bf16.mxu0 0
  %837 = vmatmul.mubr.bf16.gmra.mrb[0].mxu0 %v752
  %v838 = vpop.f32.mrb[0].mxu0
  %v839 = vadd.f32 0.0, %v838
  %v840 = vpop.f32.mrb[0].mxu0
  %v841 = vpop.f32.mrb[0].mxu0
  %v842 = vadd.f32 0.0, %v841
  %v843 = vpop.f32.mrb[0].mxu0
  %844 = vmatprep.mubr.bf16.mxu0 0
  %845 = vmatmul.mubr.bf16.gmra.mrb[0].mxu0 %v755
  %v846 = vpop.f32.mrb[0].mxu0
  %v847 = vadd.f32 0.0, %v846
  %v848 = vpop.f32.mrb[0].mxu0
  %v849 = vpop.f32.mrb[0].mxu0
  %v850 = vadd.f32 0.0, %v849
  %v851 = vpop.f32.mrb[0].mxu0
  %852 = vmatprep.mubr.bf16.mxu0 0
  %853 = vmatmul.mubr.bf16.gmra.mrb[0].mxu0 %v758
  %v854 = vpop.f32.mrb[0].mxu0
  %v855 = vadd.f32 0.0, %v854
  %v856 = vpop.f32.mrb[0].mxu0
  %v857 = vpop.f32.mrb[0].mxu0
  %v858 = vadd.f32 0.0, %v857
  %v859 = vpop.f32.mrb[0].mxu0
  %860 = vmatprep.mubr.bf16.mxu0 0
  %861 = vmatmul.mubr.bf16.gmra.mrb[0].mxu0 %v761
  %v862 = vpop.f32.mrb[0].mxu0
  %v863 = vadd.f32 0.0, %v862
  %v864 = vpop.f32.mrb[0].mxu0
  %v865 = vpop.f32.mrb[0].mxu0
  %v866 = vadd.f32 0.0, %v865
  %v867 = vpop.f32.mrb[0].mxu0
  %868 = vmatprep.mubr.bf16.mxu0 0
  %869 = vmatmul.mubr.bf16.gmra.mrb[0].mxu0 %v764
  %v870 = vpop.f32.mrb[0].mxu0
  %v871 = vadd.f32 0.0, %v870
  %v872 = vpop.f32.mrb[0].mxu0
  %v873 = vpop.f32.mrb[0].mxu0
  %v874 = vadd.f32 0.0, %v873
  %v875 = vpop.f32.mrb[0].mxu0
  %876 = vmatprep.mubr.bf16.mxu0 0
  %877 = vmatmul.mubr.bf16.gmra.mrb[0].mxu0 %v767
  %v878 = vpop.f32.mrb[0].mxu0
  %v879 = vadd.f32 0.0, %v878
  %v880 = vpop.f32.mrb[0].mxu0
  %v881 = vpop.f32.mrb[0].mxu0
  %v882 = vadd.f32 0.0, %v881
  %v883 = vpop.f32.mrb[0].mxu0
  %884 = vmatprep.mubr.bf16.mxu0 0
  %885 = vmatmul.mubr.bf16.gmra.mrb[0].mxu0 %v770
  %v886 = vpop.f32.mrb[0].mxu0
  %v887 = vadd.f32 0.0, %v886
  %v888 = vpop.f32.mrb[0].mxu0
  %v889 = vpop.f32.mrb[0].mxu0
  %v890 = vpop.f32.mrb[0].mxu0
  %891 = vdwg.mxu0
  %v894 = vunpack.c.l.b16 %v442
  %v895 = vunpack.c.l.b16 %v443
  %v896 = vpack.c.b16 %v895, %v894
  %v899 = vsel %vm738, %v431, 0
  %v902 = vsel %vm738, %v432, 0
  %v905 = vsel %vm738, %v433, 0
  %v908 = vsel %vm738, %v434, 0
  %v911 = vsel %vm738, %v435, 0
  %v914 = vsel %vm738, %v436, 0
  %v917 = vsel %vm738, %v437, 0
  %v920 = vsel %vm738, %v438, 0
  %v923 = vsel %vm738, %v439, 0
  %v926 = vsel %vm738, %v440, 0
  %v929 = vsel %vm738, %v441, 0
  %931 = vmatprep.subr.bf16.mxu0 0
  %932 = vmatpush1.bf16.msra.mxu0 %v896
  %933 = vmatprep.subr.bf16.mxu0 0
  %934 = vmatpush1.bf16.msra.mxu0 0
  %935 = vmatprep.subr.bf16.mxu0 0
  %936 = vmatpush1.bf16.msra.mxu0 0
  %937 = vmatprep.subr.bf16.mxu0 0
  %938 = vmatpush1.bf16.msra.mxu0 0
  %939 = vmatprep.subr.bf16.mxu0 0
  %940 = vmatpush1.bf16.msra.mxu0 0
  %941 = vmatprep.subr.bf16.mxu0 0
  %942 = vmatpush1.bf16.msra.mxu0 0
  %943 = vmatprep.subr.bf16.mxu0 0
  %944 = vmatpush1.bf16.msra.mxu0 0
  %945 = vmatprep.subr.bf16.mxu0 0
  %946 = vmatpush1.bf16.msra.mxu0 0
  %947 = vmatprep.subr.bf16.mxu0 0
  %948 = vmatpush1.bf16.msra.mxu0 0
  %949 = vmatprep.subr.bf16.mxu0 0
  %950 = vmatpush1.bf16.msra.mxu0 0
  %951 = vmatprep.subr.bf16.mxu0 0
  %952 = vmatpush1.bf16.msra.mxu0 0
  %953 = vmatprep.subr.bf16.mxu0 0
  %954 = vmatpush1.bf16.msra.mxu0 0
  %955 = vmatprep.subr.bf16.mxu0 0
  %956 = vmatpush1.bf16.msra.mxu0 0
  %957 = vmatprep.subr.bf16.mxu0 0
  %958 = vmatpush1.bf16.msra.mxu0 0
  %959 = vmatprep.subr.bf16.mxu0 0
  %960 = vmatpush1.bf16.msra.mxu0 0
  %961 = vmatprep.subr.bf16.mxu0 0
  %962 = vmatpush1.bf16.msra.mxu0 0
  %963 = vmatprep.mubr.bf16.mxu0 0
  %964 = vmatmul.mubr.bf16.gmra.mrb[0].mxu0 %v899
  %v965 = vpop.f32.mrb[0].mxu0
  %v966 = vadd.f32 %v807, %v965
  %v967 = vpop.f32.mrb[0].mxu0
  %v968 = vpop.f32.mrb[0].mxu0
  %v969 = vadd.f32 %v810, %v968
  %v970 = vpop.f32.mrb[0].mxu0
  %971 = vmatprep.mubr.bf16.mxu0 0
  %972 = vmatmul.mubr.bf16.gmra.mrb[0].mxu0 %v902
  %v973 = vpop.f32.mrb[0].mxu0
  %v974 = vadd.f32 %v815, %v973
  %v975 = vpop.f32.mrb[0].mxu0
  %v976 = vpop.f32.mrb[0].mxu0
  %v977 = vadd.f32 %v818, %v976
  %v978 = vpop.f32.mrb[0].mxu0
  %979 = vmatprep.mubr.bf16.mxu0 0
  %980 = vmatmul.mubr.bf16.gmra.mrb[0].mxu0 %v905
  %v981 = vpop.f32.mrb[0].mxu0
  %v982 = vadd.f32 %v823, %v981
  %v983 = vpop.f32.mrb[0].mxu0
  %v984 = vpop.f32.mrb[0].mxu0
  %v985 = vadd.f32 %v826, %v984
  %v986 = vpop.f32.mrb[0].mxu0
  %987 = vmatprep.mubr.bf16.mxu0 0
  %988 = vmatmul.mubr.bf16.gmra.mrb[0].mxu0 %v908
  %v989 = vpop.f32.mrb[0].mxu0
  %v990 = vadd.f32 %v831, %v989
  %v991 = vpop.f32.mrb[0].mxu0
  %v992 = vpop.f32.mrb[0].mxu0
  %v993 = vadd.f32 %v834, %v992
  %v994 = vpop.f32.mrb[0].mxu0
  %995 = vmatprep.mubr.bf16.mxu0 0
  %996 = vmatmul.mubr.bf16.gmra.mrb[0].mxu0 %v911
  %v997 = vpop.f32.mrb[0].mxu0
  %v998 = vadd.f32 %v839, %v997
  %v999 = vpop.f32.mrb[0].mxu0
  %v1000 = vpop.f32.mrb[0].mxu0
  %v1001 = vadd.f32 %v842, %v1000
  %v1002 = vpop.f32.mrb[0].mxu0
  %1003 = vmatprep.mubr.bf16.mxu0 0
  %1004 = vmatmul.mubr.bf16.gmra.mrb[0].mxu0 %v914
  %v1005 = vpop.f32.mrb[0].mxu0
  %v1006 = vadd.f32 %v847, %v1005
  %v1007 = vpop.f32.mrb[0].mxu0
  %v1008 = vpop.f32.mrb[0].mxu0
  %v1009 = vadd.f32 %v850, %v1008
  %v1010 = vpop.f32.mrb[0].mxu0
  %1011 = vmatprep.mubr.bf16.mxu0 0
  %1012 = vmatmul.mubr.bf16.gmra.mrb[0].mxu0 %v917
  %v1013 = vpop.f32.mrb[0].mxu0
  %v1014 = vadd.f32 %v855, %v1013
  %v1015 = vpop.f32.mrb[0].mxu0
  %v1016 = vpop.f32.mrb[0].mxu0
  %v1017 = vadd.f32 %v858, %v1016
  %v1018 = vpop.f32.mrb[0].mxu0
  %1019 = vmatprep.mubr.bf16.mxu0 0
  %1020 = vmatmul.mubr.bf16.gmra.mrb[0].mxu0 %v920
  %v1021 = vpop.f32.mrb[0].mxu0
  %v1022 = vadd.f32 %v863, %v1021
  %v1023 = vpop.f32.mrb[0].mxu0
  %v1024 = vpop.f32.mrb[0].mxu0
  %v1025 = vadd.f32 %v866, %v1024
  %v1026 = vpop.f32.mrb[0].mxu0
  %1027 = vmatprep.mubr.bf16.mxu0 0
  %1028 = vmatmul.mubr.bf16.gmra.mrb[0].mxu0 %v923
  %v1029 = vpop.f32.mrb[0].mxu0
  %v1030 = vadd.f32 %v871, %v1029
  %v1031 = vpop.f32.mrb[0].mxu0
  %v1032 = vpop.f32.mrb[0].mxu0
  %v1033 = vadd.f32 %v874, %v1032
  %v1034 = vpop.f32.mrb[0].mxu0
  %1035 = vmatprep.mubr.bf16.mxu0 0
  %1036 = vmatmul.mubr.bf16.gmra.mrb[0].mxu0 %v926
  %v1037 = vpop.f32.mrb[0].mxu0
  %v1038 = vadd.f32 %v879, %v1037
  %v1039 = vpop.f32.mrb[0].mxu0
  %v1040 = vpop.f32.mrb[0].mxu0
  %v1041 = vadd.f32 %v882, %v1040
  %v1042 = vpop.f32.mrb[0].mxu0
  %1043 = vmatprep.mubr.bf16.mxu0 0
  %1044 = vmatmul.mubr.bf16.gmra.mrb[0].mxu0 %v929
  %v1045 = vpop.f32.mrb[0].mxu0
  %v1046 = vadd.f32 %v887, %v1045
  %v1047 = vpop.f32.mrb[0].mxu0
  %v1048 = vpop.f32.mrb[0].mxu0
  %v1049 = vpop.f32.mrb[0].mxu0
  %1050 = vdwg.mxu0
  %v1051 = vld [vmem:[%s0 + $0x160] sm:$0xff]
  %v1052 = vld [vmem:[%s0 + $0x168] sm:$0xff]
  %v1053 = vld [vmem:[%s0 + $0x170] sm:$0xff]
  %v1054 = vld [vmem:[%s0 + $0x178] sm:$0xff]
  %v1055 = vld [vmem:[%s0 + $0x180] sm:$0xff]
  %v1056 = vld [vmem:[%s0 + $0x188] sm:$0xff]
  %v1057 = vld [vmem:[%s0 + $0x190] sm:$0xff]
  %v1058 = vld [vmem:[%s0 + $0x198] sm:$0xff]
  %v1059 = vld [vmem:[%s0 + $0x1a0] sm:$0xff]
  %v1060 = vld [vmem:[%s0 + $0x1a8] sm:$0xff]
  %v1061 = vld [vmem:[%s0 + $0x1b0] sm:$0xff]
  %v1062 = vld [vmem:[%s0 + $0x1b8] sm:$0xff]
  %v1063 = vld [vmem:[%s0 + $0x1c0] sm:$0xff]
  %v1064 = vld [vmem:[%s0 + $0x1c8] sm:$0xff]
  %v1065 = vld [vmem:[%s0 + $0x1d0] sm:$0xff]
  %v1066 = vld [vmem:[%s0 + $0x1d8] sm:$0xff]
  %v1067 = vld [vmem:[%s0 + $0x1e0] sm:$0xff]
  %v1068 = vld [vmem:[%s0 + $0x1e8] sm:$0xff]
  %v1069 = vld [vmem:[%s0 + $0x1f0] sm:$0xff]
  %v1070 = vld [vmem:[%s0 + $0x1f8] sm:$0xff]
  %v1071 = vld [vmem:[%s0 + $0x200] sm:$0xff]
  %v1072 = vld [vmem:[%s0 + $0x208] sm:$0xff]
  %v1095 = vunpack.c.l.b16 %v1051
  %v1096 = vunpack.c.h.b16 %v1051
  %v1097 = vunpack.c.l.b16 %v1052
  %v1098 = vunpack.c.h.b16 %v1052
  %v1099 = vunpack.c.l.b16 %v1053
  %v1100 = vunpack.c.h.b16 %v1053
  %v1101 = vunpack.c.l.b16 %v1054
  %v1102 = vunpack.c.h.b16 %v1054
  %v1103 = vunpack.c.l.b16 %v1055
  %v1104 = vunpack.c.h.b16 %v1055
  %v1105 = vunpack.c.l.b16 %v1056
  %v1106 = vunpack.c.h.b16 %v1056
  %v1107 = vunpack.c.l.b16 %v1057
  %v1108 = vunpack.c.h.b16 %v1057
  %v1109 = vunpack.c.l.b16 %v1058
  %v1110 = vunpack.c.h.b16 %v1058
  %v1111 = vunpack.c.l.b16 %v1059
  %v1112 = vunpack.c.h.b16 %v1059
  %v1113 = vunpack.c.l.b16 %v1060
  %v1114 = vunpack.c.h.b16 %v1060
  %v1115 = vunpack.c.l.b16 %v1061
  %v1116 = vunpack.c.h.b16 %v1061
  %v1117 = vunpack.c.l.b16 %v1062
  %v1118 = vunpack.c.h.b16 %v1062
  %v1119 = vunpack.c.l.b16 %v1063
  %v1120 = vunpack.c.h.b16 %v1063
  %v1121 = vunpack.c.l.b16 %v1064
  %v1122 = vunpack.c.h.b16 %v1064
  %v1123 = vunpack.c.l.b16 %v1065
  %v1124 = vunpack.c.h.b16 %v1065
  %v1125 = vunpack.c.l.b16 %v1066
  %v1126 = vunpack.c.h.b16 %v1066
  %v1127 = vunpack.c.l.b16 %v1067
  %v1128 = vunpack.c.h.b16 %v1067
  %v1129 = vunpack.c.l.b16 %v1068
  %v1130 = vunpack.c.h.b16 %v1068
  %v1131 = vunpack.c.l.b16 %v1069
  %v1132 = vunpack.c.h.b16 %v1069
  %v1133 = vunpack.c.l.b16 %v1070
  %v1134 = vunpack.c.h.b16 %v1070
  %v1135 = vunpack.c.l.b16 %v1071
  %v1136 = vunpack.c.h.b16 %v1071
  %v1137 = vunpack.c.l.b16 %v1072
  %v1138 = vunpack.c.h.b16 %v1072
  %v1139 = vpack.c.b16 %v1097, %v1095
  %v1140 = vpack.c.b16 %v1098, %v1096
  %v1141 = vpack.c.b16 %v1101, %v1099
  %v1142 = vpack.c.b16 %v1102, %v1100
  %v1143 = vpack.c.b16 %v1105, %v1103
  %v1144 = vpack.c.b16 %v1106, %v1104
  %v1145 = vpack.c.b16 %v1109, %v1107
  %v1146 = vpack.c.b16 %v1110, %v1108
  %v1147 = vpack.c.b16 %v1113, %v1111
  %v1148 = vpack.c.b16 %v1114, %v1112
  %v1149 = vpack.c.b16 %v1117, %v1115
  %v1150 = vpack.c.b16 %v1118, %v1116
  %v1151 = vpack.c.b16 %v1121, %v1119
  %v1152 = vpack.c.b16 %v1122, %v1120
  %v1153 = vpack.c.b16 %v1125, %v1123
  %v1154 = vpack.c.b16 %v1126, %v1124
  %v1155 = vpack.c.b16 %v1129, %v1127
  %v1156 = vpack.c.b16 %v1130, %v1128
  %v1157 = vpack.c.b16 %v1133, %v1131
  %v1158 = vpack.c.b16 %v1134, %v1132
  %v1159 = vpack.c.b16 %v1137, %v1135
  %v1160 = vpack.c.b16 %v1138, %v1136
  %1183 = vmatprep.subr.bf16.mxu0 0
  %1184 = vmatpush1.bf16.msra.mxu0 %v256
  %1185 = vmatprep.subr.bf16.mxu0 0
  %1186 = vmatpush1.bf16.msra.mxu0 %v257
  %1187 = vmatprep.subr.bf16.mxu0 0
  %1188 = vmatpush1.bf16.msra.mxu0 %v258
  %1189 = vmatprep.subr.bf16.mxu0 0
  %1190 = vmatpush1.bf16.msra.mxu0 %v259
  %1191 = vmatprep.subr.bf16.mxu0 0
  %1192 = vmatpush1.bf16.msra.mxu0 %v260
  %1193 = vmatprep.subr.bf16.mxu0 0
  %1194 = vmatpush1.bf16.msra.mxu0 %v261
  %1195 = vmatprep.subr.bf16.mxu0 0
  %1196 = vmatpush1.bf16.msra.mxu0 %v262
  %1197 = vmatprep.subr.bf16.mxu0 0
  %1198 = vmatpush1.bf16.msra.mxu0 %v263
  %1199 = vmatprep.subr.bf16.mxu0 0
  %1200 = vmatpush1.bf16.msra.mxu0 %v264
  %1201 = vmatprep.subr.bf16.mxu0 0
  %1202 = vmatpush1.bf16.msra.mxu0 %v265
  %1203 = vmatprep.subr.bf16.mxu0 0
  %1204 = vmatpush1.bf16.msra.mxu0 %v266
  %1205 = vmatprep.subr.bf16.mxu0 0
  %1206 = vmatpush1.bf16.msra.mxu0 %v267
  %1207 = vmatprep.subr.bf16.mxu0 0
  %1208 = vmatpush1.bf16.msra.mxu0 %v268
  %1209 = vmatprep.subr.bf16.mxu0 0
  %1210 = vmatpush1.bf16.msra.mxu0 %v269
  %1211 = vmatprep.subr.bf16.mxu0 0
  %1212 = vmatpush1.bf16.msra.mxu0 %v270
  %1213 = vmatprep.subr.bf16.mxu0 0
  %1214 = vmatpush1.bf16.msra.mxu0 %v271
  %1215 = vmatprep.mubr.bf16.mxu0 %v1140
  %1216 = vmatmul.mubr.bf16.gmra.mrb[0].mxu0 %v1139
  %v1217 = vpop.f32.mrb[0].mxu0
  %v1218 = vadd.f32 %v80, %v1217
  %v1219 = vpop.f32.mrb[0].mxu0
  %v1220 = vpop.f32.mrb[0].mxu0
  %v1221 = vadd.f32 %v80, %v1220
  %v1222 = vpop.f32.mrb[0].mxu0
  %1223 = vmatprep.mubr.bf16.mxu0 %v1142
  %1224 = vmatmul.mubr.bf16.gmra.mrb[0].mxu0 %v1141
  %v1225 = vpop.f32.mrb[0].mxu0
  %v1226 = vadd.f32 %v80, %v1225
  %v1227 = vpop.f32.mrb[0].mxu0
  %v1228 = vpop.f32.mrb[0].mxu0
  %v1229 = vadd.f32 %v80, %v1228
  %v1230 = vpop.f32.mrb[0].mxu0
  %1231 = vmatprep.mubr.bf16.mxu0 %v1144
  %1232 = vmatmul.mubr.bf16.gmra.mrb[0].mxu0 %v1143
  %v1233 = vpop.f32.mrb[0].mxu0
  %v1234 = vadd.f32 %v80, %v1233
  %v1235 = vpop.f32.mrb[0].mxu0
  %v1236 = vpop.f32.mrb[0].mxu0
  %v1237 = vadd.f32 %v80, %v1236
  %v1238 = vpop.f32.mrb[0].mxu0
  %1239 = vmatprep.mubr.bf16.mxu0 %v1146
  %1240 = vmatmul.mubr.bf16.gmra.mrb[0].mxu0 %v1145
  %v1241 = vpop.f32.mrb[0].mxu0
  %v1242 = vadd.f32 %v80, %v1241
  %v1243 = vpop.f32.mrb[0].mxu0
  %v1244 = vpop.f32.mrb[0].mxu0
  %v1245 = vadd.f32 %v80, %v1244
  %v1246 = vpop.f32.mrb[0].mxu0
  %1247 = vmatprep.mubr.bf16.mxu0 %v1148
  %1248 = vmatmul.mubr.bf16.gmra.mrb[0].mxu0 %v1147
  %v1249 = vpop.f32.mrb[0].mxu0
  %v1250 = vadd.f32 %v80, %v1249
  %v1251 = vpop.f32.mrb[0].mxu0
  %v1252 = vpop.f32.mrb[0].mxu0
  %v1253 = vadd.f32 %v80, %v1252
  %v1254 = vpop.f32.mrb[0].mxu0
  %1255 = vmatprep.mubr.bf16.mxu0 %v1150
  %1256 = vmatmul.mubr.bf16.gmra.mrb[0].mxu0 %v1149
  %v1257 = vpop.f32.mrb[0].mxu0
  %v1258 = vadd.f32 %v80, %v1257
  %v1259 = vpop.f32.mrb[0].mxu0
  %v1260 = vpop.f32.mrb[0].mxu0
  %v1261 = vadd.f32 %v80, %v1260
  %v1262 = vpop.f32.mrb[0].mxu0
  %1263 = vmatprep.mubr.bf16.mxu0 %v1152
  %1264 = vmatmul.mubr.bf16.gmra.mrb[0].mxu0 %v1151
  %v1265 = vpop.f32.mrb[0].mxu0
  %v1266 = vadd.f32 %v80, %v1265
  %v1267 = vpop.f32.mrb[0].mxu0
  %v1268 = vpop.f32.mrb[0].mxu0
  %v1269 = vadd.f32 %v80, %v1268
  %v1270 = vpop.f32.mrb[0].mxu0
  %1271 = vmatprep.mubr.bf16.mxu0 %v1154
  %1272 = vmatmul.mubr.bf16.gmra.mrb[0].mxu0 %v1153
  %v1273 = vpop.f32.mrb[0].mxu0
  %v1274 = vadd.f32 %v80, %v1273
  %v1275 = vpop.f32.mrb[0].mxu0
  %v1276 = vpop.f32.mrb[0].mxu0
  %v1277 = vadd.f32 %v80, %v1276
  %v1278 = vpop.f32.mrb[0].mxu0
  %1279 = vmatprep.mubr.bf16.mxu0 %v1156
  %1280 = vmatmul.mubr.bf16.gmra.mrb[0].mxu0 %v1155
  %v1281 = vpop.f32.mrb[0].mxu0
  %v1282 = vadd.f32 %v80, %v1281
  %v1283 = vpop.f32.mrb[0].mxu0
  %v1284 = vpop.f32.mrb[0].mxu0
  %v1285 = vadd.f32 %v80, %v1284
  %v1286 = vpop.f32.mrb[0].mxu0
  %1287 = vmatprep.mubr.bf16.mxu0 %v1158
  %1288 = vmatmul.mubr.bf16.gmra.mrb[0].mxu0 %v1157
  %v1289 = vpop.f32.mrb[0].mxu0
  %v1290 = vadd.f32 %v80, %v1289
  %v1291 = vpop.f32.mrb[0].mxu0
  %v1292 = vpop.f32.mrb[0].mxu0
  %v1293 = vadd.f32 %v80, %v1292
  %v1294 = vpop.f32.mrb[0].mxu0
  %1295 = vmatprep.mubr.bf16.mxu0 %v1160
  %1296 = vmatmul.mubr.bf16.gmra.mrb[0].mxu0 %v1159
  %v1297 = vpop.f32.mrb[0].mxu0
  %v1298 = vadd.f32 %v80, %v1297
  %v1299 = vpop.f32.mrb[0].mxu0
  %v1300 = vpop.f32.mrb[0].mxu0
  %v1301 = vadd.f32 %v80, %v1300
  %v1302 = vpop.f32.mrb[0].mxu0
  %1303 = vdwg.mxu0
  %v1304 = vmax.f32 %v1218, 0.0
  %v1305 = vmax.f32 %v1221, 0.0
  %v1306 = vmax.f32 %v1226, 0.0
  %v1307 = vmax.f32 %v1229, 0.0
  %v1308 = vmax.f32 %v1234, 0.0
  %v1309 = vmax.f32 %v1237, 0.0
  %v1310 = vmax.f32 %v1242, 0.0
  %v1311 = vmax.f32 %v1245, 0.0
  %v1312 = vmax.f32 %v1250, 0.0
  %v1313 = vmax.f32 %v1253, 0.0
  %v1314 = vmax.f32 %v1258, 0.0
  %v1315 = vmax.f32 %v1261, 0.0
  %v1316 = vmax.f32 %v1266, 0.0
  %v1317 = vmax.f32 %v1269, 0.0
  %v1318 = vmax.f32 %v1274, 0.0
  %v1319 = vmax.f32 %v1277, 0.0
  %v1320 = vmax.f32 %v1282, 0.0
  %v1321 = vmax.f32 %v1285, 0.0
  %v1322 = vmax.f32 %v1290, 0.0
  %v1323 = vmax.f32 %v1293, 0.0
  %v1324 = vmax.f32 %v1298, 0.0
  %v1325 = vmax.f32 %v1301, 0.0
  %v1326 = vpack.c.bf16 %v1305, %v1304
  %v1327 = vpack.c.bf16 %v1307, %v1306
  %v1328 = vpack.c.bf16 %v1309, %v1308
  %v1329 = vpack.c.bf16 %v1311, %v1310
  %v1330 = vpack.c.bf16 %v1313, %v1312
  %v1331 = vpack.c.bf16 %v1315, %v1314
  %v1332 = vpack.c.bf16 %v1317, %v1316
  %v1333 = vpack.c.bf16 %v1319, %v1318
  %v1334 = vpack.c.bf16 %v1321, %v1320
  %v1335 = vpack.c.bf16 %v1323, %v1322
  %v1336 = vpack.c.bf16 %v1325, %v1324
  %v1337 = vld [vmem:[%s3 + $0x10] sm:$0xf]
  %v1338 = vld [vmem:[%s3 + $0x14] sm:$0xf]
  %v1341 = vunpack.c.l.b16 %v1337
  %v1342 = vunpack.c.l.b16 %v1338
  %v1343 = vpack.c.b16 %v1342, %v1341
  %v1346 = vsel %vm738, %v1326, 0
  %v1349 = vsel %vm738, %v1327, 0
  %v1352 = vsel %vm738, %v1328, 0
  %v1355 = vsel %vm738, %v1329, 0
  %v1358 = vsel %vm738, %v1330, 0
  %v1361 = vsel %vm738, %v1331, 0
  %v1364 = vsel %vm738, %v1332, 0
  %v1367 = vsel %vm738, %v1333, 0
  %v1370 = vsel %vm738, %v1334, 0
  %v1373 = vsel %vm738, %v1335, 0
  %v1376 = vsel %vm738, %v1336, 0
  %1378 = vmatprep.subr.bf16.mxu0 0
  %1379 = vmatpush1.bf16.msra.mxu0 %v1343
  %1380 = vmatprep.subr.bf16.mxu0 0
  %1381 = vmatpush1.bf16.msra.mxu0 0
  %1382 = vmatprep.subr.bf16.mxu0 0
  %1383 = vmatpush1.bf16.msra.mxu0 0
  %1384 = vmatprep.subr.bf16.mxu0 0
  %1385 = vmatpush1.bf16.msra.mxu0 0
  %1386 = vmatprep.subr.bf16.mxu0 0
  %1387 = vmatpush1.bf16.msra.mxu0 0
  %1388 = vmatprep.subr.bf16.mxu0 0
  %1389 = vmatpush1.bf16.msra.mxu0 0
  %1390 = vmatprep.subr.bf16.mxu0 0
  %1391 = vmatpush1.bf16.msra.mxu0 0
  %1392 = vmatprep.subr.bf16.mxu0 0
  %1393 = vmatpush1.bf16.msra.mxu0 0
  %1394 = vmatprep.subr.bf16.mxu0 0
  %1395 = vmatpush1.bf16.msra.mxu0 0
  %1396 = vmatprep.subr.bf16.mxu0 0
  %1397 = vmatpush1.bf16.msra.mxu0 0
  %1398 = vmatprep.subr.bf16.mxu0 0
  %1399 = vmatpush1.bf16.msra.mxu0 0
  %1400 = vmatprep.subr.bf16.mxu0 0
  %1401 = vmatpush1.bf16.msra.mxu0 0
  %1402 = vmatprep.subr.bf16.mxu0 0
  %1403 = vmatpush1.bf16.msra.mxu0 0
  %1404 = vmatprep.subr.bf16.mxu0 0
  %1405 = vmatpush1.bf16.msra.mxu0 0
  %1406 = vmatprep.subr.bf16.mxu0 0
  %1407 = vmatpush1.bf16.msra.mxu0 0
  %1408 = vmatprep.subr.bf16.mxu0 0
  %1409 = vmatpush1.bf16.msra.mxu0 0
  %1410 = vmatprep.mubr.bf16.mxu0 0
  %1411 = vmatmul.mubr.bf16.gmra.mrb[0].mxu0 %v1346
  %v1412 = vpop.f32.mrb[0].mxu0
  %v1413 = vadd.f32 0.0, %v1412
  %v1414 = vpop.f32.mrb[0].mxu0
  %v1415 = vpop.f32.mrb[0].mxu0
  %v1416 = vadd.f32 0.0, %v1415
  %v1417 = vpop.f32.mrb[0].mxu0
  %1418 = vmatprep.mubr.bf16.mxu0 0
  %1419 = vmatmul.mubr.bf16.gmra.mrb[0].mxu0 %v1349
  %v1420 = vpop.f32.mrb[0].mxu0
  %v1421 = vadd.f32 0.0, %v1420
  %v1422 = vpop.f32.mrb[0].mxu0
  %v1423 = vpop.f32.mrb[0].mxu0
  %v1424 = vadd.f32 0.0, %v1423
  %v1425 = vpop.f32.mrb[0].mxu0
  %1426 = vmatprep.mubr.bf16.mxu0 0
  %1427 = vmatmul.mubr.bf16.gmra.mrb[0].mxu0 %v1352
  %v1428 = vpop.f32.mrb[0].mxu0
  %v1429 = vadd.f32 0.0, %v1428
  %v1430 = vpop.f32.mrb[0].mxu0
  %v1431 = vpop.f32.mrb[0].mxu0
  %v1432 = vadd.f32 0.0, %v1431
  %v1433 = vpop.f32.mrb[0].mxu0
  %1434 = vmatprep.mubr.bf16.mxu0 0
  %1435 = vmatmul.mubr.bf16.gmra.mrb[0].mxu0 %v1355
  %v1436 = vpop.f32.mrb[0].mxu0
  %v1437 = vadd.f32 0.0, %v1436
  %v1438 = vpop.f32.mrb[0].mxu0
  %v1439 = vpop.f32.mrb[0].mxu0
  %v1440 = vadd.f32 0.0, %v1439
  %v1441 = vpop.f32.mrb[0].mxu0
  %1442 = vmatprep.mubr.bf16.mxu0 0
  %1443 = vmatmul.mubr.bf16.gmra.mrb[0].mxu0 %v1358
  %v1444 = vpop.f32.mrb[0].mxu0
  %v1445 = vadd.f32 0.0, %v1444
  %v1446 = vpop.f32.mrb[0].mxu0
  %v1447 = vpop.f32.mrb[0].mxu0
  %v1448 = vadd.f32 0.0, %v1447
  %v1449 = vpop.f32.mrb[0].mxu0
  %1450 = vmatprep.mubr.bf16.mxu0 0
  %1451 = vmatmul.mubr.bf16.gmra.mrb[0].mxu0 %v1361
  %v1452 = vpop.f32.mrb[0].mxu0
  %v1453 = vadd.f32 0.0, %v1452
  %v1454 = vpop.f32.mrb[0].mxu0
  %v1455 = vpop.f32.mrb[0].mxu0
  %v1456 = vadd.f32 0.0, %v1455
  %v1457 = vpop.f32.mrb[0].mxu0
  %1458 = vmatprep.mubr.bf16.mxu0 0
  %1459 = vmatmul.mubr.bf16.gmra.mrb[0].mxu0 %v1364
  %v1460 = vpop.f32.mrb[0].mxu0
  %v1461 = vadd.f32 0.0, %v1460
  %v1462 = vpop.f32.mrb[0].mxu0
  %v1463 = vpop.f32.mrb[0].mxu0
  %v1464 = vadd.f32 0.0, %v1463
  %v1465 = vpop.f32.mrb[0].mxu0
  %1466 = vmatprep.mubr.bf16.mxu0 0
  %1467 = vmatmul.mubr.bf16.gmra.mrb[0].mxu0 %v1367
  %v1468 = vpop.f32.mrb[0].mxu0
  %v1469 = vadd.f32 0.0, %v1468
  %v1470 = vpop.f32.mrb[0].mxu0
  %v1471 = vpop.f32.mrb[0].mxu0
  %v1472 = vadd.f32 0.0, %v1471
  %v1473 = vpop.f32.mrb[0].mxu0
  %1474 = vmatprep.mubr.bf16.mxu0 0
  %1475 = vmatmul.mubr.bf16.gmra.mrb[0].mxu0 %v1370
  %v1476 = vpop.f32.mrb[0].mxu0
  %v1477 = vadd.f32 0.0, %v1476
  %v1478 = vpop.f32.mrb[0].mxu0
  %v1479 = vpop.f32.mrb[0].mxu0
  %v1480 = vadd.f32 0.0, %v1479
  %v1481 = vpop.f32.mrb[0].mxu0
  %1482 = vmatprep.mubr.bf16.mxu0 0
  %1483 = vmatmul.mubr.bf16.gmra.mrb[0].mxu0 %v1373
  %v1484 = vpop.f32.mrb[0].mxu0
  %v1485 = vadd.f32 0.0, %v1484
  %v1486 = vpop.f32.mrb[0].mxu0
  %v1487 = vpop.f32.mrb[0].mxu0
  %v1488 = vadd.f32 0.0, %v1487
  %v1489 = vpop.f32.mrb[0].mxu0
  %1490 = vmatprep.mubr.bf16.mxu0 0
  %1491 = vmatmul.mubr.bf16.gmra.mrb[0].mxu0 %v1376
  %v1492 = vpop.f32.mrb[0].mxu0
  %v1493 = vadd.f32 0.0, %v1492
  %v1494 = vpop.f32.mrb[0].mxu0
  %v1495 = vpop.f32.mrb[0].mxu0
  %v1496 = vpop.f32.mrb[0].mxu0
  %1497 = vdwg.mxu0
  %v1498 = vadd.f32 %v966, %v1413
  %v1499 = vadd.f32 %v969, %v1416
  %v1500 = vadd.f32 %v974, %v1421
  %v1501 = vadd.f32 %v977, %v1424
  %v1502 = vadd.f32 %v982, %v1429
  %v1503 = vadd.f32 %v985, %v1432
  %v1504 = vadd.f32 %v990, %v1437
  %v1505 = vadd.f32 %v993, %v1440
  %v1506 = vadd.f32 %v998, %v1445
  %v1507 = vadd.f32 %v1001, %v1448
  %v1508 = vadd.f32 %v1006, %v1453
  %v1509 = vadd.f32 %v1009, %v1456
  %v1510 = vadd.f32 %v1014, %v1461
  %v1511 = vadd.f32 %v1017, %v1464
  %v1512 = vadd.f32 %v1022, %v1469
  %v1513 = vadd.f32 %v1025, %v1472
  %v1514 = vadd.f32 %v1030, %v1477
  %v1515 = vadd.f32 %v1033, %v1480
  %v1516 = vadd.f32 %v1038, %v1485
  %v1517 = vadd.f32 %v1041, %v1488
  %v1518 = vadd.f32 %v1046, %v1493
  %v1519 = vld [vmem:[%s0 + $0x210] sm:$0xff]
  %v1520 = vld [vmem:[%s0 + $0x218] sm:$0xff]
  %v1521 = vld [vmem:[%s0 + $0x220] sm:$0xff]
  %v1522 = vld [vmem:[%s0 + $0x228] sm:$0xff]
  %v1523 = vld [vmem:[%s0 + $0x230] sm:$0xff]
  %v1524 = vld [vmem:[%s0 + $0x238] sm:$0xff]
  %v1525 = vld [vmem:[%s0 + $0x240] sm:$0xff]
  %v1526 = vld [vmem:[%s0 + $0x248] sm:$0xff]
  %v1527 = vld [vmem:[%s0 + $0x250] sm:$0xff]
  %v1528 = vld [vmem:[%s0 + $0x258] sm:$0xff]
  %v1529 = vld [vmem:[%s0 + $0x260] sm:$0xff]
  %v1530 = vld [vmem:[%s0 + $0x268] sm:$0xff]
  %v1531 = vld [vmem:[%s0 + $0x270] sm:$0xff]
  %v1532 = vld [vmem:[%s0 + $0x278] sm:$0xff]
  %v1533 = vld [vmem:[%s0 + $0x280] sm:$0xff]
  %v1534 = vld [vmem:[%s0 + $0x288] sm:$0xff]
  %v1535 = vld [vmem:[%s0 + $0x290] sm:$0xff]
  %v1536 = vld [vmem:[%s0 + $0x298] sm:$0xff]
  %v1537 = vld [vmem:[%s0 + $0x2a0] sm:$0xff]
  %v1538 = vld [vmem:[%s0 + $0x2a8] sm:$0xff]
  %v1539 = vld [vmem:[%s0 + $0x2b0] sm:$0xff]
  %v1540 = vld [vmem:[%s0 + $0x2b8] sm:$0xff]
  %v1563 = vunpack.c.l.b16 %v1519
  %v1564 = vunpack.c.h.b16 %v1519
  %v1565 = vunpack.c.l.b16 %v1520
  %v1566 = vunpack.c.h.b16 %v1520
  %v1567 = vunpack.c.l.b16 %v1521
  %v1568 = vunpack.c.h.b16 %v1521
  %v1569 = vunpack.c.l.b16 %v1522
  %v1570 = vunpack.c.h.b16 %v1522
  %v1571 = vunpack.c.l.b16 %v1523
  %v1572 = vunpack.c.h.b16 %v1523
  %v1573 = vunpack.c.l.b16 %v1524
  %v1574 = vunpack.c.h.b16 %v1524
  %v1575 = vunpack.c.l.b16 %v1525
  %v1576 = vunpack.c.h.b16 %v1525
  %v1577 = vunpack.c.l.b16 %v1526
  %v1578 = vunpack.c.h.b16 %v1526
  %v1579 = vunpack.c.l.b16 %v1527
  %v1580 = vunpack.c.h.b16 %v1527
  %v1581 = vunpack.c.l.b16 %v1528
  %v1582 = vunpack.c.h.b16 %v1528
  %v1583 = vunpack.c.l.b16 %v1529
  %v1584 = vunpack.c.h.b16 %v1529
  %v1585 = vunpack.c.l.b16 %v1530
  %v1586 = vunpack.c.h.b16 %v1530
  %v1587 = vunpack.c.l.b16 %v1531
  %v1588 = vunpack.c.h.b16 %v1531
  %v1589 = vunpack.c.l.b16 %v1532
  %v1590 = vunpack.c.h.b16 %v1532
  %v1591 = vunpack.c.l.b16 %v1533
  %v1592 = vunpack.c.h.b16 %v1533
  %v1593 = vunpack.c.l.b16 %v1534
  %v1594 = vunpack.c.h.b16 %v1534
  %v1595 = vunpack.c.l.b16 %v1535
  %v1596 = vunpack.c.h.b16 %v1535
  %v1597 = vunpack.c.l.b16 %v1536
  %v1598 = vunpack.c.h.b16 %v1536
  %v1599 = vunpack.c.l.b16 %v1537
  %v1600 = vunpack.c.h.b16 %v1537
  %v1601 = vunpack.c.l.b16 %v1538
  %v1602 = vunpack.c.h.b16 %v1538
  %v1603 = vunpack.c.l.b16 %v1539
  %v1604 = vunpack.c.h.b16 %v1539
  %v1605 = vunpack.c.l.b16 %v1540
  %v1606 = vunpack.c.h.b16 %v1540
  %v1607 = vpack.c.b16 %v1565, %v1563
  %v1608 = vpack.c.b16 %v1566, %v1564
  %v1609 = vpack.c.b16 %v1569, %v1567
  %v1610 = vpack.c.b16 %v1570, %v1568
  %v1611 = vpack.c.b16 %v1573, %v1571
  %v1612 = vpack.c.b16 %v1574, %v1572
  %v1613 = vpack.c.b16 %v1577, %v1575
  %v1614 = vpack.c.b16 %v1578, %v1576
  %v1615 = vpack.c.b16 %v1581, %v1579
  %v1616 = vpack.c.b16 %v1582, %v1580
  %v1617 = vpack.c.b16 %v1585, %v1583
  %v1618 = vpack.c.b16 %v1586, %v1584
  %v1619 = vpack.c.b16 %v1589, %v1587
  %v1620 = vpack.c.b16 %v1590, %v1588
  %v1621 = vpack.c.b16 %v1593, %v1591
  %v1622 = vpack.c.b16 %v1594, %v1592
  %v1623 = vpack.c.b16 %v1597, %v1595
  %v1624 = vpack.c.b16 %v1598, %v1596
  %v1625 = vpack.c.b16 %v1601, %v1599
  %v1626 = vpack.c.b16 %v1602, %v1600
  %v1627 = vpack.c.b16 %v1605, %v1603
  %v1628 = vpack.c.b16 %v1606, %v1604
  %1651 = vmatprep.subr.bf16.mxu0 0
  %1652 = vmatpush1.bf16.msra.mxu0 %v256
  %1653 = vmatprep.subr.bf16.mxu0 0
  %1654 = vmatpush1.bf16.msra.mxu0 %v257
  %1655 = vmatprep.subr.bf16.mxu0 0
  %1656 = vmatpush1.bf16.msra.mxu0 %v258
  %1657 = vmatprep.subr.bf16.mxu0 0
  %1658 = vmatpush1.bf16.msra.mxu0 %v259
  %1659 = vmatprep.subr.bf16.mxu0 0
  %1660 = vmatpush1.bf16.msra.mxu0 %v260
  %1661 = vmatprep.subr.bf16.mxu0 0
  %1662 = vmatpush1.bf16.msra.mxu0 %v261
  %1663 = vmatprep.subr.bf16.mxu0 0
  %1664 = vmatpush1.bf16.msra.mxu0 %v262
  %1665 = vmatprep.subr.bf16.mxu0 0
  %1666 = vmatpush1.bf16.msra.mxu0 %v263
  %1667 = vmatprep.subr.bf16.mxu0 0
  %1668 = vmatpush1.bf16.msra.mxu0 %v264
  %1669 = vmatprep.subr.bf16.mxu0 0
  %1670 = vmatpush1.bf16.msra.mxu0 %v265
  %1671 = vmatprep.subr.bf16.mxu0 0
  %1672 = vmatpush1.bf16.msra.mxu0 %v266
  %1673 = vmatprep.subr.bf16.mxu0 0
  %1674 = vmatpush1.bf16.msra.mxu0 %v267
  %1675 = vmatprep.subr.bf16.mxu0 0
  %1676 = vmatpush1.bf16.msra.mxu0 %v268
  %1677 = vmatprep.subr.bf16.mxu0 0
  %1678 = vmatpush1.bf16.msra.mxu0 %v269
  %1679 = vmatprep.subr.bf16.mxu0 0
  %1680 = vmatpush1.bf16.msra.mxu0 %v270
  %1681 = vmatprep.subr.bf16.mxu0 0
  %1682 = vmatpush1.bf16.msra.mxu0 %v271
  %1683 = vmatprep.mubr.bf16.mxu0 %v1608
  %1684 = vmatmul.mubr.bf16.gmra.mrb[0].mxu0 %v1607
  %v1685 = vpop.f32.mrb[0].mxu0
  %v1686 = vadd.f32 %v80, %v1685
  %v1687 = vpop.f32.mrb[0].mxu0
  %v1688 = vpop.f32.mrb[0].mxu0
  %v1689 = vadd.f32 %v80, %v1688
  %v1690 = vpop.f32.mrb[0].mxu0
  %1691 = vmatprep.mubr.bf16.mxu0 %v1610
  %1692 = vmatmul.mubr.bf16.gmra.mrb[0].mxu0 %v1609
  %v1693 = vpop.f32.mrb[0].mxu0
  %v1694 = vadd.f32 %v80, %v1693
  %v1695 = vpop.f32.mrb[0].mxu0
  %v1696 = vpop.f32.mrb[0].mxu0
  %v1697 = vadd.f32 %v80, %v1696
  %v1698 = vpop.f32.mrb[0].mxu0
  %1699 = vmatprep.mubr.bf16.mxu0 %v1612
  %1700 = vmatmul.mubr.bf16.gmra.mrb[0].mxu0 %v1611
  %v1701 = vpop.f32.mrb[0].mxu0
  %v1702 = vadd.f32 %v80, %v1701
  %v1703 = vpop.f32.mrb[0].mxu0
  %v1704 = vpop.f32.mrb[0].mxu0
  %v1705 = vadd.f32 %v80, %v1704
  %v1706 = vpop.f32.mrb[0].mxu0
  %1707 = vmatprep.mubr.bf16.mxu0 %v1614
  %1708 = vmatmul.mubr.bf16.gmra.mrb[0].mxu0 %v1613
  %v1709 = vpop.f32.mrb[0].mxu0
  %v1710 = vadd.f32 %v80, %v1709
  %v1711 = vpop.f32.mrb[0].mxu0
  %v1712 = vpop.f32.mrb[0].mxu0
  %v1713 = vadd.f32 %v80, %v1712
  %v1714 = vpop.f32.mrb[0].mxu0
  %1715 = vmatprep.mubr.bf16.mxu0 %v1616
  %1716 = vmatmul.mubr.bf16.gmra.mrb[0].mxu0 %v1615
  %v1717 = vpop.f32.mrb[0].mxu0
  %v1718 = vadd.f32 %v80, %v1717
  %v1719 = vpop.f32.mrb[0].mxu0
  %v1720 = vpop.f32.mrb[0].mxu0
  %v1721 = vadd.f32 %v80, %v1720
  %v1722 = vpop.f32.mrb[0].mxu0
  %1723 = vmatprep.mubr.bf16.mxu0 %v1618
  %1724 = vmatmul.mubr.bf16.gmra.mrb[0].mxu0 %v1617
  %v1725 = vpop.f32.mrb[0].mxu0
  %v1726 = vadd.f32 %v80, %v1725
  %v1727 = vpop.f32.mrb[0].mxu0
  %v1728 = vpop.f32.mrb[0].mxu0
  %v1729 = vadd.f32 %v80, %v1728
  %v1730 = vpop.f32.mrb[0].mxu0
  %1731 = vmatprep.mubr.bf16.mxu0 %v1620
  %1732 = vmatmul.mubr.bf16.gmra.mrb[0].mxu0 %v1619
  %v1733 = vpop.f32.mrb[0].mxu0
  %v1734 = vadd.f32 %v80, %v1733
  %v1735 = vpop.f32.mrb[0].mxu0
  %v1736 = vpop.f32.mrb[0].mxu0
  %v1737 = vadd.f32 %v80, %v1736
  %v1738 = vpop.f32.mrb[0].mxu0
  %1739 = vmatprep.mubr.bf16.mxu0 %v1622
  %1740 = vmatmul.mubr.bf16.gmra.mrb[0].mxu0 %v1621
  %v1741 = vpop.f32.mrb[0].mxu0
  %v1742 = vadd.f32 %v80, %v1741
  %v1743 = vpop.f32.mrb[0].mxu0
  %v1744 = vpop.f32.mrb[0].mxu0
  %v1745 = vadd.f32 %v80, %v1744
  %v1746 = vpop.f32.mrb[0].mxu0
  %1747 = vmatprep.mubr.bf16.mxu0 %v1624
  %1748 = vmatmul.mubr.bf16.gmra.mrb[0].mxu0 %v1623
  %v1749 = vpop.f32.mrb[0].mxu0
  %v1750 = vadd.f32 %v80, %v1749
  %v1751 = vpop.f32.mrb[0].mxu0
  %v1752 = vpop.f32.mrb[0].mxu0
  %v1753 = vadd.f32 %v80, %v1752
  %v1754 = vpop.f32.mrb[0].mxu0
  %1755 = vmatprep.mubr.bf16.mxu0 %v1626
  %1756 = vmatmul.mubr.bf16.gmra.mrb[0].mxu0 %v1625
  %v1757 = vpop.f32.mrb[0].mxu0
  %v1758 = vadd.f32 %v80, %v1757
  %v1759 = vpop.f32.mrb[0].mxu0
  %v1760 = vpop.f32.mrb[0].mxu0
  %v1761 = vadd.f32 %v80, %v1760
  %v1762 = vpop.f32.mrb[0].mxu0
  %1763 = vmatprep.mubr.bf16.mxu0 %v1628
  %1764 = vmatmul.mubr.bf16.gmra.mrb[0].mxu0 %v1627
  %v1765 = vpop.f32.mrb[0].mxu0
  %v1766 = vadd.f32 %v80, %v1765
  %v1767 = vpop.f32.mrb[0].mxu0
  %v1768 = vpop.f32.mrb[0].mxu0
  %v1769 = vadd.f32 %v80, %v1768
  %v1770 = vpop.f32.mrb[0].mxu0
  %1771 = vdwg.mxu0
  %v1772 = vmax.f32 %v1686, 0.0
  %v1773 = vmax.f32 %v1689, 0.0
  %v1774 = vmax.f32 %v1694, 0.0
  %v1775 = vmax.f32 %v1697, 0.0
  %v1776 = vmax.f32 %v1702, 0.0
  %v1777 = vmax.f32 %v1705, 0.0
  %v1778 = vmax.f32 %v1710, 0.0
  %v1779 = vmax.f32 %v1713, 0.0
  %v1780 = vmax.f32 %v1718, 0.0
  %v1781 = vmax.f32 %v1721, 0.0
  %v1782 = vmax.f32 %v1726, 0.0
  %v1783 = vmax.f32 %v1729, 0.0
  %v1784 = vmax.f32 %v1734, 0.0
  %v1785 = vmax.f32 %v1737, 0.0
  %v1786 = vmax.f32 %v1742, 0.0
  %v1787 = vmax.f32 %v1745, 0.0
  %v1788 = vmax.f32 %v1750, 0.0
  %v1789 = vmax.f32 %v1753, 0.0
  %v1790 = vmax.f32 %v1758, 0.0
  %v1791 = vmax.f32 %v1761, 0.0
  %v1792 = vmax.f32 %v1766, 0.0
  %v1793 = vmax.f32 %v1769, 0.0
  %v1794 = vpack.c.bf16 %v1773, %v1772
  %v1795 = vpack.c.bf16 %v1775, %v1774
  %v1796 = vpack.c.bf16 %v1777, %v1776
  %v1797 = vpack.c.bf16 %v1779, %v1778
  %v1798 = vpack.c.bf16 %v1781, %v1780
  %v1799 = vpack.c.bf16 %v1783, %v1782
  %v1800 = vpack.c.bf16 %v1785, %v1784
  %v1801 = vpack.c.bf16 %v1787, %v1786
  %v1802 = vpack.c.bf16 %v1789, %v1788
  %v1803 = vpack.c.bf16 %v1791, %v1790
  %v1804 = vpack.c.bf16 %v1793, %v1792
  %v1805 = vld [vmem:[%s3 + $0x18] sm:$0xf]
  %v1806 = vld [vmem:[%s3 + $0x1c] sm:$0xf]
  %v1809 = vunpack.c.l.b16 %v1805
  %v1810 = vunpack.c.l.b16 %v1806
  %v1811 = vpack.c.b16 %v1810, %v1809
  %v1814 = vsel %vm738, %v1794, 0
  %v1817 = vsel %vm738, %v1795, 0
  %v1820 = vsel %vm738, %v1796, 0
  %v1823 = vsel %vm738, %v1797, 0
  %v1826 = vsel %vm738, %v1798, 0
  %v1829 = vsel %vm738, %v1799, 0
  %v1832 = vsel %vm738, %v1800, 0
  %v1835 = vsel %vm738, %v1801, 0
  %v1838 = vsel %vm738, %v1802, 0
  %v1841 = vsel %vm738, %v1803, 0
  %v1844 = vsel %vm738, %v1804, 0
  %1846 = vmatprep.subr.bf16.mxu0 0
  %1847 = vmatpush1.bf16.msra.mxu0 %v1811
  %1848 = vmatprep.subr.bf16.mxu0 0
  %1849 = vmatpush1.bf16.msra.mxu0 0
  %1850 = vmatprep.subr.bf16.mxu0 0
  %1851 = vmatpush1.bf16.msra.mxu0 0
  %1852 = vmatprep.subr.bf16.mxu0 0
  %1853 = vmatpush1.bf16.msra.mxu0 0
  %1854 = vmatprep.subr.bf16.mxu0 0
  %1855 = vmatpush1.bf16.msra.mxu0 0
  %1856 = vmatprep.subr.bf16.mxu0 0
  %1857 = vmatpush1.bf16.msra.mxu0 0
  %1858 = vmatprep.subr.bf16.mxu0 0
  %1859 = vmatpush1.bf16.msra.mxu0 0
  %1860 = vmatprep.subr.bf16.mxu0 0
  %1861 = vmatpush1.bf16.msra.mxu0 0
  %1862 = vmatprep.subr.bf16.mxu0 0
  %1863 = vmatpush1.bf16.msra.mxu0 0
  %1864 = vmatprep.subr.bf16.mxu0 0
  %1865 = vmatpush1.bf16.msra.mxu0 0
  %1866 = vmatprep.subr.bf16.mxu0 0
  %1867 = vmatpush1.bf16.msra.mxu0 0
  %1868 = vmatprep.subr.bf16.mxu0 0
  %1869 = vmatpush1.bf16.msra.mxu0 0
  %1870 = vmatprep.subr.bf16.mxu0 0
  %1871 = vmatpush1.bf16.msra.mxu0 0
  %1872 = vmatprep.subr.bf16.mxu0 0
  %1873 = vmatpush1.bf16.msra.mxu0 0
  %1874 = vmatprep.subr.bf16.mxu0 0
  %1875 = vmatpush1.bf16.msra.mxu0 0
  %1876 = vmatprep.subr.bf16.mxu0 0
  %1877 = vmatpush1.bf16.msra.mxu0 0
  %1878 = vmatprep.mubr.bf16.mxu0 0
  %1879 = vmatmul.mubr.bf16.gmra.mrb[0].mxu0 %v1814
  %v1880 = vpop.f32.mrb[0].mxu0
  %v1881 = vadd.f32 0.0, %v1880
  %v1882 = vpop.f32.mrb[0].mxu0
  %v1883 = vpop.f32.mrb[0].mxu0
  %v1884 = vadd.f32 0.0, %v1883
  %v1885 = vpop.f32.mrb[0].mxu0
  %1886 = vmatprep.mubr.bf16.mxu0 0
  %1887 = vmatmul.mubr.bf16.gmra.mrb[0].mxu0 %v1817
  %v1888 = vpop.f32.mrb[0].mxu0
  %v1889 = vadd.f32 0.0, %v1888
  %v1890 = vpop.f32.mrb[0].mxu0
  %v1891 = vpop.f32.mrb[0].mxu0
  %v1892 = vadd.f32 0.0, %v1891
  %v1893 = vpop.f32.mrb[0].mxu0
  %1894 = vmatprep.mubr.bf16.mxu0 0
  %1895 = vmatmul.mubr.bf16.gmra.mrb[0].mxu0 %v1820
  %v1896 = vpop.f32.mrb[0].mxu0
  %v1897 = vadd.f32 0.0, %v1896
  %v1898 = vpop.f32.mrb[0].mxu0
  %v1899 = vpop.f32.mrb[0].mxu0
  %v1900 = vadd.f32 0.0, %v1899
  %v1901 = vpop.f32.mrb[0].mxu0
  %1902 = vmatprep.mubr.bf16.mxu0 0
  %1903 = vmatmul.mubr.bf16.gmra.mrb[0].mxu0 %v1823
  %v1904 = vpop.f32.mrb[0].mxu0
  %v1905 = vadd.f32 0.0, %v1904
  %v1906 = vpop.f32.mrb[0].mxu0
  %v1907 = vpop.f32.mrb[0].mxu0
  %v1908 = vadd.f32 0.0, %v1907
  %v1909 = vpop.f32.mrb[0].mxu0
  %1910 = vmatprep.mubr.bf16.mxu0 0
  %1911 = vmatmul.mubr.bf16.gmra.mrb[0].mxu0 %v1826
  %v1912 = vpop.f32.mrb[0].mxu0
  %v1913 = vadd.f32 0.0, %v1912
  %v1914 = vpop.f32.mrb[0].mxu0
  %v1915 = vpop.f32.mrb[0].mxu0
  %v1916 = vadd.f32 0.0, %v1915
  %v1917 = vpop.f32.mrb[0].mxu0
  %1918 = vmatprep.mubr.bf16.mxu0 0
  %1919 = vmatmul.mubr.bf16.gmra.mrb[0].mxu0 %v1829
  %v1920 = vpop.f32.mrb[0].mxu0
  %v1921 = vadd.f32 0.0, %v1920
  %v1922 = vpop.f32.mrb[0].mxu0
  %v1923 = vpop.f32.mrb[0].mxu0
  %v1924 = vadd.f32 0.0, %v1923
  %v1925 = vpop.f32.mrb[0].mxu0
  %1926 = vmatprep.mubr.bf16.mxu0 0
  %1927 = vmatmul.mubr.bf16.gmra.mrb[0].mxu0 %v1832
  %v1928 = vpop.f32.mrb[0].mxu0
  %v1929 = vadd.f32 0.0, %v1928
  %v1930 = vpop.f32.mrb[0].mxu0
  %v1931 = vpop.f32.mrb[0].mxu0
  %v1932 = vadd.f32 0.0, %v1931
  %v1933 = vpop.f32.mrb[0].mxu0
  %1934 = vmatprep.mubr.bf16.mxu0 0
  %1935 = vmatmul.mubr.bf16.gmra.mrb[0].mxu0 %v1835
  %v1936 = vpop.f32.mrb[0].mxu0
  %v1937 = vadd.f32 0.0, %v1936
  %v1938 = vpop.f32.mrb[0].mxu0
  %v1939 = vpop.f32.mrb[0].mxu0
  %v1940 = vadd.f32 0.0, %v1939
  %v1941 = vpop.f32.mrb[0].mxu0
  %1942 = vmatprep.mubr.bf16.mxu0 0
  %1943 = vmatmul.mubr.bf16.gmra.mrb[0].mxu0 %v1838
  %v1944 = vpop.f32.mrb[0].mxu0
  %v1945 = vadd.f32 0.0, %v1944
  %v1946 = vpop.f32.mrb[0].mxu0
  %v1947 = vpop.f32.mrb[0].mxu0
  %v1948 = vadd.f32 0.0, %v1947
  %v1949 = vpop.f32.mrb[0].mxu0
  %1950 = vmatprep.mubr.bf16.mxu0 0
  %1951 = vmatmul.mubr.bf16.gmra.mrb[0].mxu0 %v1841
  %v1952 = vpop.f32.mrb[0].mxu0
  %v1953 = vadd.f32 0.0, %v1952
  %v1954 = vpop.f32.mrb[0].mxu0
  %v1955 = vpop.f32.mrb[0].mxu0
  %v1956 = vadd.f32 0.0, %v1955
  %v1957 = vpop.f32.mrb[0].mxu0
  %1958 = vmatprep.mubr.bf16.mxu0 0
  %1959 = vmatmul.mubr.bf16.gmra.mrb[0].mxu0 %v1844
  %v1960 = vpop.f32.mrb[0].mxu0
  %v1961 = vadd.f32 0.0, %v1960
  %v1962 = vpop.f32.mrb[0].mxu0
  %v1963 = vpop.f32.mrb[0].mxu0
  %v1964 = vpop.f32.mrb[0].mxu0
  %1965 = vdwg.mxu0
  %v1966 = vadd.f32 %v1498, %v1881
  %v1967 = vadd.f32 %v1499, %v1884
  %v1968 = vadd.f32 %v1500, %v1889
  %v1969 = vadd.f32 %v1501, %v1892
  %v1970 = vadd.f32 %v1502, %v1897
  %v1971 = vadd.f32 %v1503, %v1900
  %v1972 = vadd.f32 %v1504, %v1905
  %v1973 = vadd.f32 %v1505, %v1908
  %v1974 = vadd.f32 %v1506, %v1913
  %v1975 = vadd.f32 %v1507, %v1916
  %v1976 = vadd.f32 %v1508, %v1921
  %v1977 = vadd.f32 %v1509, %v1924
  %v1978 = vadd.f32 %v1510, %v1929
  %v1979 = vadd.f32 %v1511, %v1932
  %v1980 = vadd.f32 %v1512, %v1937
  %v1981 = vadd.f32 %v1513, %v1940
  %v1982 = vadd.f32 %v1514, %v1945
  %v1983 = vadd.f32 %v1515, %v1948
  %v1984 = vadd.f32 %v1516, %v1953
  %v1985 = vadd.f32 %v1517, %v1956
  %v1986 = vadd.f32 %v1518, %v1961
  %v1987 = vld [vmem:[%s0 + $0x2c0] sm:$0xff]
  %v1988 = vld [vmem:[%s0 + $0x2c8] sm:$0xff]
  %v1989 = vld [vmem:[%s0 + $0x2d0] sm:$0xff]
  %v1990 = vld [vmem:[%s0 + $0x2d8] sm:$0xff]
  %v1991 = vld [vmem:[%s0 + $0x2e0] sm:$0xff]
  %v1992 = vld [vmem:[%s0 + $0x2e8] sm:$0xff]
  %v1993 = vld [vmem:[%s0 + $0x2f0] sm:$0xff]
  %v1994 = vld [vmem:[%s0 + $0x2f8] sm:$0xff]
  %v1995 = vld [vmem:[%s0 + $0x300] sm:$0xff]
  %v1996 = vld [vmem:[%s0 + $0x308] sm:$0xff]
  %v1997 = vld [vmem:[%s0 + $0x310] sm:$0xff]
  %v1998 = vld [vmem:[%s0 + $0x318] sm:$0xff]
  %v1999 = vld [vmem:[%s0 + $0x320] sm:$0xff]
  %v2000 = vld [vmem:[%s0 + $0x328] sm:$0xff]
  %v2001 = vld [vmem:[%s0 + $0x330] sm:$0xff]
  %v2002 = vld [vmem:[%s0 + $0x338] sm:$0xff]
  %v2003 = vld [vmem:[%s0 + $0x340] sm:$0xff]
  %v2004 = vld [vmem:[%s0 + $0x348] sm:$0xff]
  %v2005 = vld [vmem:[%s0 + $0x350] sm:$0xff]
  %v2006 = vld [vmem:[%s0 + $0x358] sm:$0xff]
  %v2007 = vld [vmem:[%s0 + $0x360] sm:$0xff]
  %v2008 = vld [vmem:[%s0 + $0x368] sm:$0xff]
  %v2031 = vunpack.c.l.b16 %v1987
  %v2032 = vunpack.c.h.b16 %v1987
  %v2033 = vunpack.c.l.b16 %v1988
  %v2034 = vunpack.c.h.b16 %v1988
  %v2035 = vunpack.c.l.b16 %v1989
  %v2036 = vunpack.c.h.b16 %v1989
  %v2037 = vunpack.c.l.b16 %v1990
  %v2038 = vunpack.c.h.b16 %v1990
  %v2039 = vunpack.c.l.b16 %v1991
  %v2040 = vunpack.c.h.b16 %v1991
  %v2041 = vunpack.c.l.b16 %v1992
  %v2042 = vunpack.c.h.b16 %v1992
  %v2043 = vunpack.c.l.b16 %v1993
  %v2044 = vunpack.c.h.b16 %v1993
  %v2045 = vunpack.c.l.b16 %v1994
  %v2046 = vunpack.c.h.b16 %v1994
  %v2047 = vunpack.c.l.b16 %v1995
  %v2048 = vunpack.c.h.b16 %v1995
  %v2049 = vunpack.c.l.b16 %v1996
  %v2050 = vunpack.c.h.b16 %v1996
  %v2051 = vunpack.c.l.b16 %v1997
  %v2052 = vunpack.c.h.b16 %v1997
  %v2053 = vunpack.c.l.b16 %v1998
  %v2054 = vunpack.c.h.b16 %v1998
  %v2055 = vunpack.c.l.b16 %v1999
  %v2056 = vunpack.c.h.b16 %v1999
  %v2057 = vunpack.c.l.b16 %v2000
  %v2058 = vunpack.c.h.b16 %v2000
  %v2059 = vunpack.c.l.b16 %v2001
  %v2060 = vunpack.c.h.b16 %v2001
  %v2061 = vunpack.c.l.b16 %v2002
  %v2062 = vunpack.c.h.b16 %v2002
  %v2063 = vunpack.c.l.b16 %v2003
  %v2064 = vunpack.c.h.b16 %v2003
  %v2065 = vunpack.c.l.b16 %v2004
  %v2066 = vunpack.c.h.b16 %v2004
  %v2067 = vunpack.c.l.b16 %v2005
  %v2068 = vunpack.c.h.b16 %v2005
  %v2069 = vunpack.c.l.b16 %v2006
  %v2070 = vunpack.c.h.b16 %v2006
  %v2071 = vunpack.c.l.b16 %v2007
  %v2072 = vunpack.c.h.b16 %v2007
  %v2073 = vunpack.c.l.b16 %v2008
  %v2074 = vunpack.c.h.b16 %v2008
  %v2075 = vpack.c.b16 %v2033, %v2031
  %v2076 = vpack.c.b16 %v2034, %v2032
  %v2077 = vpack.c.b16 %v2037, %v2035
  %v2078 = vpack.c.b16 %v2038, %v2036
  %v2079 = vpack.c.b16 %v2041, %v2039
  %v2080 = vpack.c.b16 %v2042, %v2040
  %v2081 = vpack.c.b16 %v2045, %v2043
  %v2082 = vpack.c.b16 %v2046, %v2044
  %v2083 = vpack.c.b16 %v2049, %v2047
  %v2084 = vpack.c.b16 %v2050, %v2048
  %v2085 = vpack.c.b16 %v2053, %v2051
  %v2086 = vpack.c.b16 %v2054, %v2052
  %v2087 = vpack.c.b16 %v2057, %v2055
  %v2088 = vpack.c.b16 %v2058, %v2056
  %v2089 = vpack.c.b16 %v2061, %v2059
  %v2090 = vpack.c.b16 %v2062, %v2060
  %v2091 = vpack.c.b16 %v2065, %v2063
  %v2092 = vpack.c.b16 %v2066, %v2064
  %v2093 = vpack.c.b16 %v2069, %v2067
  %v2094 = vpack.c.b16 %v2070, %v2068
  %v2095 = vpack.c.b16 %v2073, %v2071
  %v2096 = vpack.c.b16 %v2074, %v2072
  %2119 = vmatprep.subr.bf16.mxu0 0
  %2120 = vmatpush1.bf16.msra.mxu0 %v256
  %2121 = vmatprep.subr.bf16.mxu0 0
  %2122 = vmatpush1.bf16.msra.mxu0 %v257
  %2123 = vmatprep.subr.bf16.mxu0 0
  %2124 = vmatpush1.bf16.msra.mxu0 %v258
  %2125 = vmatprep.subr.bf16.mxu0 0
  %2126 = vmatpush1.bf16.msra.mxu0 %v259
  %2127 = vmatprep.subr.bf16.mxu0 0
  %2128 = vmatpush1.bf16.msra.mxu0 %v260
  %2129 = vmatprep.subr.bf16.mxu0 0
  %2130 = vmatpush1.bf16.msra.mxu0 %v261
  %2131 = vmatprep.subr.bf16.mxu0 0
  %2132 = vmatpush1.bf16.msra.mxu0 %v262
  %2133 = vmatprep.subr.bf16.mxu0 0
  %2134 = vmatpush1.bf16.msra.mxu0 %v263
  %2135 = vmatprep.subr.bf16.mxu0 0
  %2136 = vmatpush1.bf16.msra.mxu0 %v264
  %2137 = vmatprep.subr.bf16.mxu0 0
  %2138 = vmatpush1.bf16.msra.mxu0 %v265
  %2139 = vmatprep.subr.bf16.mxu0 0
  %2140 = vmatpush1.bf16.msra.mxu0 %v266
  %2141 = vmatprep.subr.bf16.mxu0 0
  %2142 = vmatpush1.bf16.msra.mxu0 %v267
  %2143 = vmatprep.subr.bf16.mxu0 0
  %2144 = vmatpush1.bf16.msra.mxu0 %v268
  %2145 = vmatprep.subr.bf16.mxu0 0
  %2146 = vmatpush1.bf16.msra.mxu0 %v269
  %2147 = vmatprep.subr.bf16.mxu0 0
  %2148 = vmatpush1.bf16.msra.mxu0 %v270
  %2149 = vmatprep.subr.bf16.mxu0 0
  %2150 = vmatpush1.bf16.msra.mxu0 %v271
  %2151 = vmatprep.mubr.bf16.mxu0 %v2076
  %2152 = vmatmul.mubr.bf16.gmra.mrb[0].mxu0 %v2075
  %v2153 = vpop.f32.mrb[0].mxu0
  %v2154 = vadd.f32 %v80, %v2153
  %v2155 = vpop.f32.mrb[0].mxu0
  %v2156 = vpop.f32.mrb[0].mxu0
  %v2157 = vadd.f32 %v80, %v2156
  %v2158 = vpop.f32.mrb[0].mxu0
  %2159 = vmatprep.mubr.bf16.mxu0 %v2078
  %2160 = vmatmul.mubr.bf16.gmra.mrb[0].mxu0 %v2077
  %v2161 = vpop.f32.mrb[0].mxu0
  %v2162 = vadd.f32 %v80, %v2161
  %v2163 = vpop.f32.mrb[0].mxu0
  %v2164 = vpop.f32.mrb[0].mxu0
  %v2165 = vadd.f32 %v80, %v2164
  %v2166 = vpop.f32.mrb[0].mxu0
  %2167 = vmatprep.mubr.bf16.mxu0 %v2080
  %2168 = vmatmul.mubr.bf16.gmra.mrb[0].mxu0 %v2079
  %v2169 = vpop.f32.mrb[0].mxu0
  %v2170 = vadd.f32 %v80, %v2169
  %v2171 = vpop.f32.mrb[0].mxu0
  %v2172 = vpop.f32.mrb[0].mxu0
  %v2173 = vadd.f32 %v80, %v2172
  %v2174 = vpop.f32.mrb[0].mxu0
  %2175 = vmatprep.mubr.bf16.mxu0 %v2082
  %2176 = vmatmul.mubr.bf16.gmra.mrb[0].mxu0 %v2081
  %v2177 = vpop.f32.mrb[0].mxu0
  %v2178 = vadd.f32 %v80, %v2177
  %v2179 = vpop.f32.mrb[0].mxu0
  %v2180 = vpop.f32.mrb[0].mxu0
  %v2181 = vadd.f32 %v80, %v2180
  %v2182 = vpop.f32.mrb[0].mxu0
  %2183 = vmatprep.mubr.bf16.mxu0 %v2084
  %2184 = vmatmul.mubr.bf16.gmra.mrb[0].mxu0 %v2083
  %v2185 = vpop.f32.mrb[0].mxu0
  %v2186 = vadd.f32 %v80, %v2185
  %v2187 = vpop.f32.mrb[0].mxu0
  %v2188 = vpop.f32.mrb[0].mxu0
  %v2189 = vadd.f32 %v80, %v2188
  %v2190 = vpop.f32.mrb[0].mxu0
  %2191 = vmatprep.mubr.bf16.mxu0 %v2086
  %2192 = vmatmul.mubr.bf16.gmra.mrb[0].mxu0 %v2085
  %v2193 = vpop.f32.mrb[0].mxu0
  %v2194 = vadd.f32 %v80, %v2193
  %v2195 = vpop.f32.mrb[0].mxu0
  %v2196 = vpop.f32.mrb[0].mxu0
  %v2197 = vadd.f32 %v80, %v2196
  %v2198 = vpop.f32.mrb[0].mxu0
  %2199 = vmatprep.mubr.bf16.mxu0 %v2088
  %2200 = vmatmul.mubr.bf16.gmra.mrb[0].mxu0 %v2087
  %v2201 = vpop.f32.mrb[0].mxu0
  %v2202 = vadd.f32 %v80, %v2201
  %v2203 = vpop.f32.mrb[0].mxu0
  %v2204 = vpop.f32.mrb[0].mxu0
  %v2205 = vadd.f32 %v80, %v2204
  %v2206 = vpop.f32.mrb[0].mxu0
  %2207 = vmatprep.mubr.bf16.mxu0 %v2090
  %2208 = vmatmul.mubr.bf16.gmra.mrb[0].mxu0 %v2089
  %v2209 = vpop.f32.mrb[0].mxu0
  %v2210 = vadd.f32 %v80, %v2209
  %v2211 = vpop.f32.mrb[0].mxu0
  %v2212 = vpop.f32.mrb[0].mxu0
  %v2213 = vadd.f32 %v80, %v2212
  %v2214 = vpop.f32.mrb[0].mxu0
  %2215 = vmatprep.mubr.bf16.mxu0 %v2092
  %2216 = vmatmul.mubr.bf16.gmra.mrb[0].mxu0 %v2091
  %v2217 = vpop.f32.mrb[0].mxu0
  %v2218 = vadd.f32 %v80, %v2217
  %v2219 = vpop.f32.mrb[0].mxu0
  %v2220 = vpop.f32.mrb[0].mxu0
  %v2221 = vadd.f32 %v80, %v2220
  %v2222 = vpop.f32.mrb[0].mxu0
  %2223 = vmatprep.mubr.bf16.mxu0 %v2094
  %2224 = vmatmul.mubr.bf16.gmra.mrb[0].mxu0 %v2093
  %v2225 = vpop.f32.mrb[0].mxu0
  %v2226 = vadd.f32 %v80, %v2225
  %v2227 = vpop.f32.mrb[0].mxu0
  %v2228 = vpop.f32.mrb[0].mxu0
  %v2229 = vadd.f32 %v80, %v2228
  %v2230 = vpop.f32.mrb[0].mxu0
  %2231 = vmatprep.mubr.bf16.mxu0 %v2096
  %2232 = vmatmul.mubr.bf16.gmra.mrb[0].mxu0 %v2095
  %v2233 = vpop.f32.mrb[0].mxu0
  %v2234 = vadd.f32 %v80, %v2233
  %v2235 = vpop.f32.mrb[0].mxu0
  %v2236 = vpop.f32.mrb[0].mxu0
  %v2237 = vadd.f32 %v80, %v2236
  %v2238 = vpop.f32.mrb[0].mxu0
  %2239 = vdwg.mxu0
  %v2240 = vmax.f32 %v2154, 0.0
  %v2241 = vmax.f32 %v2157, 0.0
  %v2242 = vmax.f32 %v2162, 0.0
  %v2243 = vmax.f32 %v2165, 0.0
  %v2244 = vmax.f32 %v2170, 0.0
  %v2245 = vmax.f32 %v2173, 0.0
  %v2246 = vmax.f32 %v2178, 0.0
  %v2247 = vmax.f32 %v2181, 0.0
  %v2248 = vmax.f32 %v2186, 0.0
  %v2249 = vmax.f32 %v2189, 0.0
  %v2250 = vmax.f32 %v2194, 0.0
  %v2251 = vmax.f32 %v2197, 0.0
  %v2252 = vmax.f32 %v2202, 0.0
  %v2253 = vmax.f32 %v2205, 0.0
  %v2254 = vmax.f32 %v2210, 0.0
  %v2255 = vmax.f32 %v2213, 0.0
  %v2256 = vmax.f32 %v2218, 0.0
  %v2257 = vmax.f32 %v2221, 0.0
  %v2258 = vmax.f32 %v2226, 0.0
  %v2259 = vmax.f32 %v2229, 0.0
  %v2260 = vmax.f32 %v2234, 0.0
  %v2261 = vmax.f32 %v2237, 0.0
  %v2262 = vpack.c.bf16 %v2241, %v2240
  %v2263 = vpack.c.bf16 %v2243, %v2242
  %v2264 = vpack.c.bf16 %v2245, %v2244
  %v2265 = vpack.c.bf16 %v2247, %v2246
  %v2266 = vpack.c.bf16 %v2249, %v2248
  %v2267 = vpack.c.bf16 %v2251, %v2250
  %v2268 = vpack.c.bf16 %v2253, %v2252
  %v2269 = vpack.c.bf16 %v2255, %v2254
  %v2270 = vpack.c.bf16 %v2257, %v2256
  %v2271 = vpack.c.bf16 %v2259, %v2258
  %v2272 = vpack.c.bf16 %v2261, %v2260
  %v2273 = vld [vmem:[%s3 + $0x20] sm:$0xf]
  %v2274 = vld [vmem:[%s3 + $0x24] sm:$0xf]
  %v2277 = vunpack.c.l.b16 %v2273
  %v2278 = vunpack.c.l.b16 %v2274
  %v2279 = vpack.c.b16 %v2278, %v2277
  %v2282 = vsel %vm738, %v2262, 0
  %v2285 = vsel %vm738, %v2263, 0
  %v2288 = vsel %vm738, %v2264, 0
  %v2291 = vsel %vm738, %v2265, 0
  %v2294 = vsel %vm738, %v2266, 0
  %v2297 = vsel %vm738, %v2267, 0
  %v2300 = vsel %vm738, %v2268, 0
  %v2303 = vsel %vm738, %v2269, 0
  %v2306 = vsel %vm738, %v2270, 0
  %v2309 = vsel %vm738, %v2271, 0
  %v2312 = vsel %vm738, %v2272, 0
  %2314 = vmatprep.subr.bf16.mxu0 0
  %2315 = vmatpush1.bf16.msra.mxu0 %v2279
  %2316 = vmatprep.subr.bf16.mxu0 0
  %2317 = vmatpush1.bf16.msra.mxu0 0
  %2318 = vmatprep.subr.bf16.mxu0 0
  %2319 = vmatpush1.bf16.msra.mxu0 0
  %2320 = vmatprep.subr.bf16.mxu0 0
  %2321 = vmatpush1.bf16.msra.mxu0 0
  %2322 = vmatprep.subr.bf16.mxu0 0
  %2323 = vmatpush1.bf16.msra.mxu0 0
  %2324 = vmatprep.subr.bf16.mxu0 0
  %2325 = vmatpush1.bf16.msra.mxu0 0
  %2326 = vmatprep.subr.bf16.mxu0 0
  %2327 = vmatpush1.bf16.msra.mxu0 0
  %2328 = vmatprep.subr.bf16.mxu0 0
  %2329 = vmatpush1.bf16.msra.mxu0 0
  %2330 = vmatprep.subr.bf16.mxu0 0
  %2331 = vmatpush1.bf16.msra.mxu0 0
  %2332 = vmatprep.subr.bf16.mxu0 0
  %2333 = vmatpush1.bf16.msra.mxu0 0
  %2334 = vmatprep.subr.bf16.mxu0 0
  %2335 = vmatpush1.bf16.msra.mxu0 0
  %2336 = vmatprep.subr.bf16.mxu0 0
  %2337 = vmatpush1.bf16.msra.mxu0 0
  %2338 = vmatprep.subr.bf16.mxu0 0
  %2339 = vmatpush1.bf16.msra.mxu0 0
  %2340 = vmatprep.subr.bf16.mxu0 0
  %2341 = vmatpush1.bf16.msra.mxu0 0
  %2342 = vmatprep.subr.bf16.mxu0 0
  %2343 = vmatpush1.bf16.msra.mxu0 0
  %2344 = vmatprep.subr.bf16.mxu0 0
  %2345 = vmatpush1.bf16.msra.mxu0 0
  %2346 = vmatprep.mubr.bf16.mxu0 0
  %2347 = vmatmul.mubr.bf16.gmra.mrb[0].mxu0 %v2282
  %v2348 = vpop.f32.mrb[0].mxu0
  %v2349 = vadd.f32 0.0, %v2348
  %v2350 = vpop.f32.mrb[0].mxu0
  %v2351 = vpop.f32.mrb[0].mxu0
  %v2352 = vadd.f32 0.0, %v2351
  %v2353 = vpop.f32.mrb[0].mxu0
  %2354 = vmatprep.mubr.bf16.mxu0 0
  %2355 = vmatmul.mubr.bf16.gmra.mrb[0].mxu0 %v2285
  %v2356 = vpop.f32.mrb[0].mxu0
  %v2357 = vadd.f32 0.0, %v2356
  %v2358 = vpop.f32.mrb[0].mxu0
  %v2359 = vpop.f32.mrb[0].mxu0
  %v2360 = vadd.f32 0.0, %v2359
  %v2361 = vpop.f32.mrb[0].mxu0
  %2362 = vmatprep.mubr.bf16.mxu0 0
  %2363 = vmatmul.mubr.bf16.gmra.mrb[0].mxu0 %v2288
  %v2364 = vpop.f32.mrb[0].mxu0
  %v2365 = vadd.f32 0.0, %v2364
  %v2366 = vpop.f32.mrb[0].mxu0
  %v2367 = vpop.f32.mrb[0].mxu0
  %v2368 = vadd.f32 0.0, %v2367
  %v2369 = vpop.f32.mrb[0].mxu0
  %2370 = vmatprep.mubr.bf16.mxu0 0
  %2371 = vmatmul.mubr.bf16.gmra.mrb[0].mxu0 %v2291
  %v2372 = vpop.f32.mrb[0].mxu0
  %v2373 = vadd.f32 0.0, %v2372
  %v2374 = vpop.f32.mrb[0].mxu0
  %v2375 = vpop.f32.mrb[0].mxu0
  %v2376 = vadd.f32 0.0, %v2375
  %v2377 = vpop.f32.mrb[0].mxu0
  %2378 = vmatprep.mubr.bf16.mxu0 0
  %2379 = vmatmul.mubr.bf16.gmra.mrb[0].mxu0 %v2294
  %v2380 = vpop.f32.mrb[0].mxu0
  %v2381 = vadd.f32 0.0, %v2380
  %v2382 = vpop.f32.mrb[0].mxu0
  %v2383 = vpop.f32.mrb[0].mxu0
  %v2384 = vadd.f32 0.0, %v2383
  %v2385 = vpop.f32.mrb[0].mxu0
  %2386 = vmatprep.mubr.bf16.mxu0 0
  %2387 = vmatmul.mubr.bf16.gmra.mrb[0].mxu0 %v2297
  %v2388 = vpop.f32.mrb[0].mxu0
  %v2389 = vadd.f32 0.0, %v2388
  %v2390 = vpop.f32.mrb[0].mxu0
  %v2391 = vpop.f32.mrb[0].mxu0
  %v2392 = vadd.f32 0.0, %v2391
  %v2393 = vpop.f32.mrb[0].mxu0
  %2394 = vmatprep.mubr.bf16.mxu0 0
  %2395 = vmatmul.mubr.bf16.gmra.mrb[0].mxu0 %v2300
  %v2396 = vpop.f32.mrb[0].mxu0
  %v2397 = vadd.f32 0.0, %v2396
  %v2398 = vpop.f32.mrb[0].mxu0
  %v2399 = vpop.f32.mrb[0].mxu0
  %v2400 = vadd.f32 0.0, %v2399
  %v2401 = vpop.f32.mrb[0].mxu0
  %2402 = vmatprep.mubr.bf16.mxu0 0
  %2403 = vmatmul.mubr.bf16.gmra.mrb[0].mxu0 %v2303
  %v2404 = vpop.f32.mrb[0].mxu0
  %v2405 = vadd.f32 0.0, %v2404
  %v2406 = vpop.f32.mrb[0].mxu0
  %v2407 = vpop.f32.mrb[0].mxu0
  %v2408 = vadd.f32 0.0, %v2407
  %v2409 = vpop.f32.mrb[0].mxu0
  %2410 = vmatprep.mubr.bf16.mxu0 0
  %2411 = vmatmul.mubr.bf16.gmra.mrb[0].mxu0 %v2306
  %v2412 = vpop.f32.mrb[0].mxu0
  %v2413 = vadd.f32 0.0, %v2412
  %v2414 = vpop.f32.mrb[0].mxu0
  %v2415 = vpop.f32.mrb[0].mxu0
  %v2416 = vadd.f32 0.0, %v2415
  %v2417 = vpop.f32.mrb[0].mxu0
  %2418 = vmatprep.mubr.bf16.mxu0 0
  %2419 = vmatmul.mubr.bf16.gmra.mrb[0].mxu0 %v2309
  %v2420 = vpop.f32.mrb[0].mxu0
  %v2421 = vadd.f32 0.0, %v2420
  %v2422 = vpop.f32.mrb[0].mxu0
  %v2423 = vpop.f32.mrb[0].mxu0
  %v2424 = vadd.f32 0.0, %v2423
  %v2425 = vpop.f32.mrb[0].mxu0
  %2426 = vmatprep.mubr.bf16.mxu0 0
  %2427 = vmatmul.mubr.bf16.gmra.mrb[0].mxu0 %v2312
  %v2428 = vpop.f32.mrb[0].mxu0
  %v2429 = vadd.f32 0.0, %v2428
  %v2430 = vpop.f32.mrb[0].mxu0
  %v2431 = vpop.f32.mrb[0].mxu0
  %v2432 = vpop.f32.mrb[0].mxu0
  %2433 = vdwg.mxu0
  %v2434 = vadd.f32 %v1966, %v2349
  %v2435 = vadd.f32 %v1967, %v2352
  %v2436 = vadd.f32 %v1968, %v2357
  %v2437 = vadd.f32 %v1969, %v2360
  %v2438 = vadd.f32 %v1970, %v2365
  %v2439 = vadd.f32 %v1971, %v2368
  %v2440 = vadd.f32 %v1972, %v2373
  %v2441 = vadd.f32 %v1973, %v2376
  %v2442 = vadd.f32 %v1974, %v2381
  %v2443 = vadd.f32 %v1975, %v2384
  %v2444 = vadd.f32 %v1976, %v2389
  %v2445 = vadd.f32 %v1977, %v2392
  %v2446 = vadd.f32 %v1978, %v2397
  %v2447 = vadd.f32 %v1979, %v2400
  %v2448 = vadd.f32 %v1980, %v2405
  %v2449 = vadd.f32 %v1981, %v2408
  %v2450 = vadd.f32 %v1982, %v2413
  %v2451 = vadd.f32 %v1983, %v2416
  %v2452 = vadd.f32 %v1984, %v2421
  %v2453 = vadd.f32 %v1985, %v2424
  %v2454 = vadd.f32 %v1986, %v2429
  %v2455 = vld [vmem:[%s0 + $0x370] sm:$0xff]
  %v2456 = vld [vmem:[%s0 + $0x378] sm:$0xff]
  %v2457 = vld [vmem:[%s0 + $0x380] sm:$0xff]
  %v2458 = vld [vmem:[%s0 + $0x388] sm:$0xff]
  %v2459 = vld [vmem:[%s0 + $0x390] sm:$0xff]
  %v2460 = vld [vmem:[%s0 + $0x398] sm:$0xff]
  %v2461 = vld [vmem:[%s0 + $0x3a0] sm:$0xff]
  %v2462 = vld [vmem:[%s0 + $0x3a8] sm:$0xff]
  %v2463 = vld [vmem:[%s0 + $0x3b0] sm:$0xff]
  %v2464 = vld [vmem:[%s0 + $0x3b8] sm:$0xff]
  %v2465 = vld [vmem:[%s0 + $0x3c0] sm:$0xff]
  %v2466 = vld [vmem:[%s0 + $0x3c8] sm:$0xff]
  %v2467 = vld [vmem:[%s0 + $0x3d0] sm:$0xff]
  %v2468 = vld [vmem:[%s0 + $0x3d8] sm:$0xff]
  %v2469 = vld [vmem:[%s0 + $0x3e0] sm:$0xff]
  %v2470 = vld [vmem:[%s0 + $0x3e8] sm:$0xff]
  %v2471 = vld [vmem:[%s0 + $0x3f0] sm:$0xff]
  %v2472 = vld [vmem:[%s0 + $0x3f8] sm:$0xff]
  %v2473 = vld [vmem:[%s0 + $0x400] sm:$0xff]
  %v2474 = vld [vmem:[%s0 + $0x408] sm:$0xff]
  %v2475 = vld [vmem:[%s0 + $0x410] sm:$0xff]
  %v2476 = vld [vmem:[%s0 + $0x418] sm:$0xff]
  %v2499 = vunpack.c.l.b16 %v2455
  %v2500 = vunpack.c.h.b16 %v2455
  %v2501 = vunpack.c.l.b16 %v2456
  %v2502 = vunpack.c.h.b16 %v2456
  %v2503 = vunpack.c.l.b16 %v2457
  %v2504 = vunpack.c.h.b16 %v2457
  %v2505 = vunpack.c.l.b16 %v2458
  %v2506 = vunpack.c.h.b16 %v2458
  %v2507 = vunpack.c.l.b16 %v2459
  %v2508 = vunpack.c.h.b16 %v2459
  %v2509 = vunpack.c.l.b16 %v2460
  %v2510 = vunpack.c.h.b16 %v2460
  %v2511 = vunpack.c.l.b16 %v2461
  %v2512 = vunpack.c.h.b16 %v2461
  %v2513 = vunpack.c.l.b16 %v2462
  %v2514 = vunpack.c.h.b16 %v2462
  %v2515 = vunpack.c.l.b16 %v2463
  %v2516 = vunpack.c.h.b16 %v2463
  %v2517 = vunpack.c.l.b16 %v2464
  %v2518 = vunpack.c.h.b16 %v2464
  %v2519 = vunpack.c.l.b16 %v2465
  %v2520 = vunpack.c.h.b16 %v2465
  %v2521 = vunpack.c.l.b16 %v2466
  %v2522 = vunpack.c.h.b16 %v2466
  %v2523 = vunpack.c.l.b16 %v2467
  %v2524 = vunpack.c.h.b16 %v2467
  %v2525 = vunpack.c.l.b16 %v2468
  %v2526 = vunpack.c.h.b16 %v2468
  %v2527 = vunpack.c.l.b16 %v2469
  %v2528 = vunpack.c.h.b16 %v2469
  %v2529 = vunpack.c.l.b16 %v2470
  %v2530 = vunpack.c.h.b16 %v2470
  %v2531 = vunpack.c.l.b16 %v2471
  %v2532 = vunpack.c.h.b16 %v2471
  %v2533 = vunpack.c.l.b16 %v2472
  %v2534 = vunpack.c.h.b16 %v2472
  %v2535 = vunpack.c.l.b16 %v2473
  %v2536 = vunpack.c.h.b16 %v2473
  %v2537 = vunpack.c.l.b16 %v2474
  %v2538 = vunpack.c.h.b16 %v2474
  %v2539 = vunpack.c.l.b16 %v2475
  %v2540 = vunpack.c.h.b16 %v2475
  %v2541 = vunpack.c.l.b16 %v2476
  %v2542 = vunpack.c.h.b16 %v2476
  %v2543 = vpack.c.b16 %v2501, %v2499
  %v2544 = vpack.c.b16 %v2502, %v2500
  %v2545 = vpack.c.b16 %v2505, %v2503
  %v2546 = vpack.c.b16 %v2506, %v2504
  %v2547 = vpack.c.b16 %v2509, %v2507
  %v2548 = vpack.c.b16 %v2510, %v2508
  %v2549 = vpack.c.b16 %v2513, %v2511
  %v2550 = vpack.c.b16 %v2514, %v2512
  %v2551 = vpack.c.b16 %v2517, %v2515
  %v2552 = vpack.c.b16 %v2518, %v2516
  %v2553 = vpack.c.b16 %v2521, %v2519
  %v2554 = vpack.c.b16 %v2522, %v2520
  %v2555 = vpack.c.b16 %v2525, %v2523
  %v2556 = vpack.c.b16 %v2526, %v2524
  %v2557 = vpack.c.b16 %v2529, %v2527
  %v2558 = vpack.c.b16 %v2530, %v2528
  %v2559 = vpack.c.b16 %v2533, %v2531
  %v2560 = vpack.c.b16 %v2534, %v2532
  %v2561 = vpack.c.b16 %v2537, %v2535
  %v2562 = vpack.c.b16 %v2538, %v2536
  %v2563 = vpack.c.b16 %v2541, %v2539
  %v2564 = vpack.c.b16 %v2542, %v2540
  %2587 = vmatprep.subr.bf16.mxu0 0
  %2588 = vmatpush1.bf16.msra.mxu0 %v256
  %2589 = vmatprep.subr.bf16.mxu0 0
  %2590 = vmatpush1.bf16.msra.mxu0 %v257
  %2591 = vmatprep.subr.bf16.mxu0 0
  %2592 = vmatpush1.bf16.msra.mxu0 %v258
  %2593 = vmatprep.subr.bf16.mxu0 0
  %2594 = vmatpush1.bf16.msra.mxu0 %v259
  %2595 = vmatprep.subr.bf16.mxu0 0
  %2596 = vmatpush1.bf16.msra.mxu0 %v260
  %2597 = vmatprep.subr.bf16.mxu0 0
  %2598 = vmatpush1.bf16.msra.mxu0 %v261
  %2599 = vmatprep.subr.bf16.mxu0 0
  %2600 = vmatpush1.bf16.msra.mxu0 %v262
  %2601 = vmatprep.subr.bf16.mxu0 0
  %2602 = vmatpush1.bf16.msra.mxu0 %v263
  %2603 = vmatprep.subr.bf16.mxu0 0
  %2604 = vmatpush1.bf16.msra.mxu0 %v264
  %2605 = vmatprep.subr.bf16.mxu0 0
  %2606 = vmatpush1.bf16.msra.mxu0 %v265
  %2607 = vmatprep.subr.bf16.mxu0 0
  %2608 = vmatpush1.bf16.msra.mxu0 %v266
  %2609 = vmatprep.subr.bf16.mxu0 0
  %2610 = vmatpush1.bf16.msra.mxu0 %v267
  %2611 = vmatprep.subr.bf16.mxu0 0
  %2612 = vmatpush1.bf16.msra.mxu0 %v268
  %2613 = vmatprep.subr.bf16.mxu0 0
  %2614 = vmatpush1.bf16.msra.mxu0 %v269
  %2615 = vmatprep.subr.bf16.mxu0 0
  %2616 = vmatpush1.bf16.msra.mxu0 %v270
  %2617 = vmatprep.subr.bf16.mxu0 0
  %2618 = vmatpush1.bf16.msra.mxu0 %v271
  %2619 = vmatprep.mubr.bf16.mxu0 %v2544
  %2620 = vmatmul.mubr.bf16.gmra.mrb[0].mxu0 %v2543
  %v2621 = vpop.f32.mrb[0].mxu0
  %v2622 = vadd.f32 %v80, %v2621
  %v2623 = vpop.f32.mrb[0].mxu0
  %v2624 = vpop.f32.mrb[0].mxu0
  %v2625 = vadd.f32 %v80, %v2624
  %v2626 = vpop.f32.mrb[0].mxu0
  %2627 = vmatprep.mubr.bf16.mxu0 %v2546
  %2628 = vmatmul.mubr.bf16.gmra.mrb[0].mxu0 %v2545
  %v2629 = vpop.f32.mrb[0].mxu0
  %v2630 = vadd.f32 %v80, %v2629
  %v2631 = vpop.f32.mrb[0].mxu0
  %v2632 = vpop.f32.mrb[0].mxu0
  %v2633 = vadd.f32 %v80, %v2632
  %v2634 = vpop.f32.mrb[0].mxu0
  %2635 = vmatprep.mubr.bf16.mxu0 %v2548
  %2636 = vmatmul.mubr.bf16.gmra.mrb[0].mxu0 %v2547
  %v2637 = vpop.f32.mrb[0].mxu0
  %v2638 = vadd.f32 %v80, %v2637
  %v2639 = vpop.f32.mrb[0].mxu0
  %v2640 = vpop.f32.mrb[0].mxu0
  %v2641 = vadd.f32 %v80, %v2640
  %v2642 = vpop.f32.mrb[0].mxu0
  %2643 = vmatprep.mubr.bf16.mxu0 %v2550
  %2644 = vmatmul.mubr.bf16.gmra.mrb[0].mxu0 %v2549
  %v2645 = vpop.f32.mrb[0].mxu0
  %v2646 = vadd.f32 %v80, %v2645
  %v2647 = vpop.f32.mrb[0].mxu0
  %v2648 = vpop.f32.mrb[0].mxu0
  %v2649 = vadd.f32 %v80, %v2648
  %v2650 = vpop.f32.mrb[0].mxu0
  %2651 = vmatprep.mubr.bf16.mxu0 %v2552
  %2652 = vmatmul.mubr.bf16.gmra.mrb[0].mxu0 %v2551
  %v2653 = vpop.f32.mrb[0].mxu0
  %v2654 = vadd.f32 %v80, %v2653
  %v2655 = vpop.f32.mrb[0].mxu0
  %v2656 = vpop.f32.mrb[0].mxu0
  %v2657 = vadd.f32 %v80, %v2656
  %v2658 = vpop.f32.mrb[0].mxu0
  %2659 = vmatprep.mubr.bf16.mxu0 %v2554
  %2660 = vmatmul.mubr.bf16.gmra.mrb[0].mxu0 %v2553
  %v2661 = vpop.f32.mrb[0].mxu0
  %v2662 = vadd.f32 %v80, %v2661
  %v2663 = vpop.f32.mrb[0].mxu0
  %v2664 = vpop.f32.mrb[0].mxu0
  %v2665 = vadd.f32 %v80, %v2664
  %v2666 = vpop.f32.mrb[0].mxu0
  %2667 = vmatprep.mubr.bf16.mxu0 %v2556
  %2668 = vmatmul.mubr.bf16.gmra.mrb[0].mxu0 %v2555
  %v2669 = vpop.f32.mrb[0].mxu0
  %v2670 = vadd.f32 %v80, %v2669
  %v2671 = vpop.f32.mrb[0].mxu0
  %v2672 = vpop.f32.mrb[0].mxu0
  %v2673 = vadd.f32 %v80, %v2672
  %v2674 = vpop.f32.mrb[0].mxu0
  %2675 = vmatprep.mubr.bf16.mxu0 %v2558
  %2676 = vmatmul.mubr.bf16.gmra.mrb[0].mxu0 %v2557
  %v2677 = vpop.f32.mrb[0].mxu0
  %v2678 = vadd.f32 %v80, %v2677
  %v2679 = vpop.f32.mrb[0].mxu0
  %v2680 = vpop.f32.mrb[0].mxu0
  %v2681 = vadd.f32 %v80, %v2680
  %v2682 = vpop.f32.mrb[0].mxu0
  %2683 = vmatprep.mubr.bf16.mxu0 %v2560
  %2684 = vmatmul.mubr.bf16.gmra.mrb[0].mxu0 %v2559
  %v2685 = vpop.f32.mrb[0].mxu0
  %v2686 = vadd.f32 %v80, %v2685
  %v2687 = vpop.f32.mrb[0].mxu0
  %v2688 = vpop.f32.mrb[0].mxu0
  %v2689 = vadd.f32 %v80, %v2688
  %v2690 = vpop.f32.mrb[0].mxu0
  %2691 = vmatprep.mubr.bf16.mxu0 %v2562
  %2692 = vmatmul.mubr.bf16.gmra.mrb[0].mxu0 %v2561
  %v2693 = vpop.f32.mrb[0].mxu0
  %v2694 = vadd.f32 %v80, %v2693
  %v2695 = vpop.f32.mrb[0].mxu0
  %v2696 = vpop.f32.mrb[0].mxu0
  %v2697 = vadd.f32 %v80, %v2696
  %v2698 = vpop.f32.mrb[0].mxu0
  %2699 = vmatprep.mubr.bf16.mxu0 %v2564
  %2700 = vmatmul.mubr.bf16.gmra.mrb[0].mxu0 %v2563
  %v2701 = vpop.f32.mrb[0].mxu0
  %v2702 = vadd.f32 %v80, %v2701
  %v2703 = vpop.f32.mrb[0].mxu0
  %v2704 = vpop.f32.mrb[0].mxu0
  %v2705 = vadd.f32 %v80, %v2704
  %v2706 = vpop.f32.mrb[0].mxu0
  %2707 = vdwg.mxu0
  %v2708 = vmax.f32 %v2622, 0.0
  %v2709 = vmax.f32 %v2625, 0.0
  %v2710 = vmax.f32 %v2630, 0.0
  %v2711 = vmax.f32 %v2633, 0.0
  %v2712 = vmax.f32 %v2638, 0.0
  %v2713 = vmax.f32 %v2641, 0.0
  %v2714 = vmax.f32 %v2646, 0.0
  %v2715 = vmax.f32 %v2649, 0.0
  %v2716 = vmax.f32 %v2654, 0.0
  %v2717 = vmax.f32 %v2657, 0.0
  %v2718 = vmax.f32 %v2662, 0.0
  %v2719 = vmax.f32 %v2665, 0.0
  %v2720 = vmax.f32 %v2670, 0.0
  %v2721 = vmax.f32 %v2673, 0.0
  %v2722 = vmax.f32 %v2678, 0.0
  %v2723 = vmax.f32 %v2681, 0.0
  %v2724 = vmax.f32 %v2686, 0.0
  %v2725 = vmax.f32 %v2689, 0.0
  %v2726 = vmax.f32 %v2694, 0.0
  %v2727 = vmax.f32 %v2697, 0.0
  %v2728 = vmax.f32 %v2702, 0.0
  %v2729 = vmax.f32 %v2705, 0.0
  %v2730 = vpack.c.bf16 %v2709, %v2708
  %v2731 = vpack.c.bf16 %v2711, %v2710
  %v2732 = vpack.c.bf16 %v2713, %v2712
  %v2733 = vpack.c.bf16 %v2715, %v2714
  %v2734 = vpack.c.bf16 %v2717, %v2716
  %v2735 = vpack.c.bf16 %v2719, %v2718
  %v2736 = vpack.c.bf16 %v2721, %v2720
  %v2737 = vpack.c.bf16 %v2723, %v2722
  %v2738 = vpack.c.bf16 %v2725, %v2724
  %v2739 = vpack.c.bf16 %v2727, %v2726
  %v2740 = vpack.c.bf16 %v2729, %v2728
  %v2741 = vld [vmem:[%s3 + $0x28] sm:$0xf]
  %v2742 = vld [vmem:[%s3 + $0x2c] sm:$0xf]
  %v2745 = vunpack.c.l.b16 %v2741
  %v2746 = vunpack.c.l.b16 %v2742
  %v2747 = vpack.c.b16 %v2746, %v2745
  %v2750 = vsel %vm738, %v2730, 0
  %v2753 = vsel %vm738, %v2731, 0
  %v2756 = vsel %vm738, %v2732, 0
  %v2759 = vsel %vm738, %v2733, 0
  %v2762 = vsel %vm738, %v2734, 0
  %v2765 = vsel %vm738, %v2735, 0
  %v2768 = vsel %vm738, %v2736, 0
  %v2771 = vsel %vm738, %v2737, 0
  %v2774 = vsel %vm738, %v2738, 0
  %v2777 = vsel %vm738, %v2739, 0
  %v2780 = vsel %vm738, %v2740, 0
  %2782 = vmatprep.subr.bf16.mxu0 0
  %2783 = vmatpush1.bf16.msra.mxu0 %v2747
  %2784 = vmatprep.subr.bf16.mxu0 0
  %2785 = vmatpush1.bf16.msra.mxu0 0
  %2786 = vmatprep.subr.bf16.mxu0 0
  %2787 = vmatpush1.bf16.msra.mxu0 0
  %2788 = vmatprep.subr.bf16.mxu0 0
  %2789 = vmatpush1.bf16.msra.mxu0 0
  %2790 = vmatprep.subr.bf16.mxu0 0
  %2791 = vmatpush1.bf16.msra.mxu0 0
  %2792 = vmatprep.subr.bf16.mxu0 0
  %2793 = vmatpush1.bf16.msra.mxu0 0
  %2794 = vmatprep.subr.bf16.mxu0 0
  %2795 = vmatpush1.bf16.msra.mxu0 0
  %2796 = vmatprep.subr.bf16.mxu0 0
  %2797 = vmatpush1.bf16.msra.mxu0 0
  %2798 = vmatprep.subr.bf16.mxu0 0
  %2799 = vmatpush1.bf16.msra.mxu0 0
  %2800 = vmatprep.subr.bf16.mxu0 0
  %2801 = vmatpush1.bf16.msra.mxu0 0
  %2802 = vmatprep.subr.bf16.mxu0 0
  %2803 = vmatpush1.bf16.msra.mxu0 0
  %2804 = vmatprep.subr.bf16.mxu0 0
  %2805 = vmatpush1.bf16.msra.mxu0 0
  %2806 = vmatprep.subr.bf16.mxu0 0
  %2807 = vmatpush1.bf16.msra.mxu0 0
  %2808 = vmatprep.subr.bf16.mxu0 0
  %2809 = vmatpush1.bf16.msra.mxu0 0
  %2810 = vmatprep.subr.bf16.mxu0 0
  %2811 = vmatpush1.bf16.msra.mxu0 0
  %2812 = vmatprep.subr.bf16.mxu0 0
  %2813 = vmatpush1.bf16.msra.mxu0 0
  %2814 = vmatprep.mubr.bf16.mxu0 0
  %2815 = vmatmul.mubr.bf16.gmra.mrb[0].mxu0 %v2750
  %v2816 = vpop.f32.mrb[0].mxu0
  %v2817 = vadd.f32 0.0, %v2816
  %v2818 = vpop.f32.mrb[0].mxu0
  %v2819 = vpop.f32.mrb[0].mxu0
  %v2820 = vadd.f32 0.0, %v2819
  %v2821 = vpop.f32.mrb[0].mxu0
  %2822 = vmatprep.mubr.bf16.mxu0 0
  %2823 = vmatmul.mubr.bf16.gmra.mrb[0].mxu0 %v2753
  %v2824 = vpop.f32.mrb[0].mxu0
  %v2825 = vadd.f32 0.0, %v2824
  %v2826 = vpop.f32.mrb[0].mxu0
  %v2827 = vpop.f32.mrb[0].mxu0
  %v2828 = vadd.f32 0.0, %v2827
  %v2829 = vpop.f32.mrb[0].mxu0
  %2830 = vmatprep.mubr.bf16.mxu0 0
  %2831 = vmatmul.mubr.bf16.gmra.mrb[0].mxu0 %v2756
  %v2832 = vpop.f32.mrb[0].mxu0
  %v2833 = vadd.f32 0.0, %v2832
  %v2834 = vpop.f32.mrb[0].mxu0
  %v2835 = vpop.f32.mrb[0].mxu0
  %v2836 = vadd.f32 0.0, %v2835
  %v2837 = vpop.f32.mrb[0].mxu0
  %2838 = vmatprep.mubr.bf16.mxu0 0
  %2839 = vmatmul.mubr.bf16.gmra.mrb[0].mxu0 %v2759
  %v2840 = vpop.f32.mrb[0].mxu0
  %v2841 = vadd.f32 0.0, %v2840
  %v2842 = vpop.f32.mrb[0].mxu0
  %v2843 = vpop.f32.mrb[0].mxu0
  %v2844 = vadd.f32 0.0, %v2843
  %v2845 = vpop.f32.mrb[0].mxu0
  %2846 = vmatprep.mubr.bf16.mxu0 0
  %2847 = vmatmul.mubr.bf16.gmra.mrb[0].mxu0 %v2762
  %v2848 = vpop.f32.mrb[0].mxu0
  %v2849 = vadd.f32 0.0, %v2848
  %v2850 = vpop.f32.mrb[0].mxu0
  %v2851 = vpop.f32.mrb[0].mxu0
  %v2852 = vadd.f32 0.0, %v2851
  %v2853 = vpop.f32.mrb[0].mxu0
  %2854 = vmatprep.mubr.bf16.mxu0 0
  %2855 = vmatmul.mubr.bf16.gmra.mrb[0].mxu0 %v2765
  %v2856 = vpop.f32.mrb[0].mxu0
  %v2857 = vadd.f32 0.0, %v2856
  %v2858 = vpop.f32.mrb[0].mxu0
  %v2859 = vpop.f32.mrb[0].mxu0
  %v2860 = vadd.f32 0.0, %v2859
  %v2861 = vpop.f32.mrb[0].mxu0
  %2862 = vmatprep.mubr.bf16.mxu0 0
  %2863 = vmatmul.mubr.bf16.gmra.mrb[0].mxu0 %v2768
  %v2864 = vpop.f32.mrb[0].mxu0
  %v2865 = vadd.f32 0.0, %v2864
  %v2866 = vpop.f32.mrb[0].mxu0
  %v2867 = vpop.f32.mrb[0].mxu0
  %v2868 = vadd.f32 0.0, %v2867
  %v2869 = vpop.f32.mrb[0].mxu0
  %2870 = vmatprep.mubr.bf16.mxu0 0
  %2871 = vmatmul.mubr.bf16.gmra.mrb[0].mxu0 %v2771
  %v2872 = vpop.f32.mrb[0].mxu0
  %v2873 = vadd.f32 0.0, %v2872
  %v2874 = vpop.f32.mrb[0].mxu0
  %v2875 = vpop.f32.mrb[0].mxu0
  %v2876 = vadd.f32 0.0, %v2875
  %v2877 = vpop.f32.mrb[0].mxu0
  %2878 = vmatprep.mubr.bf16.mxu0 0
  %2879 = vmatmul.mubr.bf16.gmra.mrb[0].mxu0 %v2774
  %v2880 = vpop.f32.mrb[0].mxu0
  %v2881 = vadd.f32 0.0, %v2880
  %v2882 = vpop.f32.mrb[0].mxu0
  %v2883 = vpop.f32.mrb[0].mxu0
  %v2884 = vadd.f32 0.0, %v2883
  %v2885 = vpop.f32.mrb[0].mxu0
  %2886 = vmatprep.mubr.bf16.mxu0 0
  %2887 = vmatmul.mubr.bf16.gmra.mrb[0].mxu0 %v2777
  %v2888 = vpop.f32.mrb[0].mxu0
  %v2889 = vadd.f32 0.0, %v2888
  %v2890 = vpop.f32.mrb[0].mxu0
  %v2891 = vpop.f32.mrb[0].mxu0
  %v2892 = vadd.f32 0.0, %v2891
  %v2893 = vpop.f32.mrb[0].mxu0
  %2894 = vmatprep.mubr.bf16.mxu0 0
  %2895 = vmatmul.mubr.bf16.gmra.mrb[0].mxu0 %v2780
  %v2896 = vpop.f32.mrb[0].mxu0
  %v2897 = vadd.f32 0.0, %v2896
  %v2898 = vpop.f32.mrb[0].mxu0
  %v2899 = vpop.f32.mrb[0].mxu0
  %v2900 = vpop.f32.mrb[0].mxu0
  %2901 = vdwg.mxu0
  %v2902 = vadd.f32 %v2434, %v2817
  %v2903 = vadd.f32 %v2435, %v2820
  %v2904 = vadd.f32 %v2436, %v2825
  %v2905 = vadd.f32 %v2437, %v2828
  %v2906 = vadd.f32 %v2438, %v2833
  %v2907 = vadd.f32 %v2439, %v2836
  %v2908 = vadd.f32 %v2440, %v2841
  %v2909 = vadd.f32 %v2441, %v2844
  %v2910 = vadd.f32 %v2442, %v2849
  %v2911 = vadd.f32 %v2443, %v2852
  %v2912 = vadd.f32 %v2444, %v2857
  %v2913 = vadd.f32 %v2445, %v2860
  %v2914 = vadd.f32 %v2446, %v2865
  %v2915 = vadd.f32 %v2447, %v2868
  %v2916 = vadd.f32 %v2448, %v2873
  %v2917 = vadd.f32 %v2449, %v2876
  %v2918 = vadd.f32 %v2450, %v2881
  %v2919 = vadd.f32 %v2451, %v2884
  %v2920 = vadd.f32 %v2452, %v2889
  %v2921 = vadd.f32 %v2453, %v2892
  %v2922 = vadd.f32 %v2454, %v2897
  %v2923 = vld [vmem:[%s0 + $0x420] sm:$0xff]
  %v2924 = vld [vmem:[%s0 + $0x428] sm:$0xff]
  %v2925 = vld [vmem:[%s0 + $0x430] sm:$0xff]
  %v2926 = vld [vmem:[%s0 + $0x438] sm:$0xff]
  %v2927 = vld [vmem:[%s0 + $0x440] sm:$0xff]
  %v2928 = vld [vmem:[%s0 + $0x448] sm:$0xff]
  %v2929 = vld [vmem:[%s0 + $0x450] sm:$0xff]
  %v2930 = vld [vmem:[%s0 + $0x458] sm:$0xff]
  %v2931 = vld [vmem:[%s0 + $0x460] sm:$0xff]
  %v2932 = vld [vmem:[%s0 + $0x468] sm:$0xff]
  %v2933 = vld [vmem:[%s0 + $0x470] sm:$0xff]
  %v2934 = vld [vmem:[%s0 + $0x478] sm:$0xff]
  %v2935 = vld [vmem:[%s0 + $0x480] sm:$0xff]
  %v2936 = vld [vmem:[%s0 + $0x488] sm:$0xff]
  %v2937 = vld [vmem:[%s0 + $0x490] sm:$0xff]
  %v2938 = vld [vmem:[%s0 + $0x498] sm:$0xff]
  %v2939 = vld [vmem:[%s0 + $0x4a0] sm:$0xff]
  %v2940 = vld [vmem:[%s0 + $0x4a8] sm:$0xff]
  %v2941 = vld [vmem:[%s0 + $0x4b0] sm:$0xff]
  %v2942 = vld [vmem:[%s0 + $0x4b8] sm:$0xff]
  %v2943 = vld [vmem:[%s0 + $0x4c0] sm:$0xff]
  %v2944 = vld [vmem:[%s0 + $0x4c8] sm:$0xff]
  %v2967 = vunpack.c.l.b16 %v2923
  %v2968 = vunpack.c.h.b16 %v2923
  %v2969 = vunpack.c.l.b16 %v2924
  %v2970 = vunpack.c.h.b16 %v2924
  %v2971 = vunpack.c.l.b16 %v2925
  %v2972 = vunpack.c.h.b16 %v2925
  %v2973 = vunpack.c.l.b16 %v2926
  %v2974 = vunpack.c.h.b16 %v2926
  %v2975 = vunpack.c.l.b16 %v2927
  %v2976 = vunpack.c.h.b16 %v2927
  %v2977 = vunpack.c.l.b16 %v2928
  %v2978 = vunpack.c.h.b16 %v2928
  %v2979 = vunpack.c.l.b16 %v2929
  %v2980 = vunpack.c.h.b16 %v2929
  %v2981 = vunpack.c.l.b16 %v2930
  %v2982 = vunpack.c.h.b16 %v2930
  %v2983 = vunpack.c.l.b16 %v2931
  %v2984 = vunpack.c.h.b16 %v2931
  %v2985 = vunpack.c.l.b16 %v2932
  %v2986 = vunpack.c.h.b16 %v2932
  %v2987 = vunpack.c.l.b16 %v2933
  %v2988 = vunpack.c.h.b16 %v2933
  %v2989 = vunpack.c.l.b16 %v2934
  %v2990 = vunpack.c.h.b16 %v2934
  %v2991 = vunpack.c.l.b16 %v2935
  %v2992 = vunpack.c.h.b16 %v2935
  %v2993 = vunpack.c.l.b16 %v2936
  %v2994 = vunpack.c.h.b16 %v2936
  %v2995 = vunpack.c.l.b16 %v2937
  %v2996 = vunpack.c.h.b16 %v2937
  %v2997 = vunpack.c.l.b16 %v2938
  %v2998 = vunpack.c.h.b16 %v2938
  %v2999 = vunpack.c.l.b16 %v2939
  %v3000 = vunpack.c.h.b16 %v2939
  %v3001 = vunpack.c.l.b16 %v2940
  %v3002 = vunpack.c.h.b16 %v2940
  %v3003 = vunpack.c.l.b16 %v2941
  %v3004 = vunpack.c.h.b16 %v2941
  %v3005 = vunpack.c.l.b16 %v2942
  %v3006 = vunpack.c.h.b16 %v2942
  %v3007 = vunpack.c.l.b16 %v2943
  %v3008 = vunpack.c.h.b16 %v2943
  %v3009 = vunpack.c.l.b16 %v2944
  %v3010 = vunpack.c.h.b16 %v2944
  %v3011 = vpack.c.b16 %v2969, %v2967
  %v3012 = vpack.c.b16 %v2970, %v2968
  %v3013 = vpack.c.b16 %v2973, %v2971
  %v3014 = vpack.c.b16 %v2974, %v2972
  %v3015 = vpack.c.b16 %v2977, %v2975
  %v3016 = vpack.c.b16 %v2978, %v2976
  %v3017 = vpack.c.b16 %v2981, %v2979
  %v3018 = vpack.c.b16 %v2982, %v2980
  %v3019 = vpack.c.b16 %v2985, %v2983
  %v3020 = vpack.c.b16 %v2986, %v2984
  %v3021 = vpack.c.b16 %v2989, %v2987
  %v3022 = vpack.c.b16 %v2990, %v2988
  %v3023 = vpack.c.b16 %v2993, %v2991
  %v3024 = vpack.c.b16 %v2994, %v2992
  %v3025 = vpack.c.b16 %v2997, %v2995
  %v3026 = vpack.c.b16 %v2998, %v2996
  %v3027 = vpack.c.b16 %v3001, %v2999
  %v3028 = vpack.c.b16 %v3002, %v3000
  %v3029 = vpack.c.b16 %v3005, %v3003
  %v3030 = vpack.c.b16 %v3006, %v3004
  %v3031 = vpack.c.b16 %v3009, %v3007
  %v3032 = vpack.c.b16 %v3010, %v3008
  %3055 = vmatprep.subr.bf16.mxu0 0
  %3056 = vmatpush1.bf16.msra.mxu0 %v256
  %3057 = vmatprep.subr.bf16.mxu0 0
  %3058 = vmatpush1.bf16.msra.mxu0 %v257
  %3059 = vmatprep.subr.bf16.mxu0 0
  %3060 = vmatpush1.bf16.msra.mxu0 %v258
  %3061 = vmatprep.subr.bf16.mxu0 0
  %3062 = vmatpush1.bf16.msra.mxu0 %v259
  %3063 = vmatprep.subr.bf16.mxu0 0
  %3064 = vmatpush1.bf16.msra.mxu0 %v260
  %3065 = vmatprep.subr.bf16.mxu0 0
  %3066 = vmatpush1.bf16.msra.mxu0 %v261
  %3067 = vmatprep.subr.bf16.mxu0 0
  %3068 = vmatpush1.bf16.msra.mxu0 %v262
  %3069 = vmatprep.subr.bf16.mxu0 0
  %3070 = vmatpush1.bf16.msra.mxu0 %v263
  %3071 = vmatprep.subr.bf16.mxu0 0
  %3072 = vmatpush1.bf16.msra.mxu0 %v264
  %3073 = vmatprep.subr.bf16.mxu0 0
  %3074 = vmatpush1.bf16.msra.mxu0 %v265
  %3075 = vmatprep.subr.bf16.mxu0 0
  %3076 = vmatpush1.bf16.msra.mxu0 %v266
  %3077 = vmatprep.subr.bf16.mxu0 0
  %3078 = vmatpush1.bf16.msra.mxu0 %v267
  %3079 = vmatprep.subr.bf16.mxu0 0
  %3080 = vmatpush1.bf16.msra.mxu0 %v268
  %3081 = vmatprep.subr.bf16.mxu0 0
  %3082 = vmatpush1.bf16.msra.mxu0 %v269
  %3083 = vmatprep.subr.bf16.mxu0 0
  %3084 = vmatpush1.bf16.msra.mxu0 %v270
  %3085 = vmatprep.subr.bf16.mxu0 0
  %3086 = vmatpush1.bf16.msra.mxu0 %v271
  %3087 = vmatprep.mubr.bf16.mxu0 %v3012
  %3088 = vmatmul.mubr.bf16.gmra.mrb[0].mxu0 %v3011
  %v3089 = vpop.f32.mrb[0].mxu0
  %v3090 = vadd.f32 %v80, %v3089
  %v3091 = vpop.f32.mrb[0].mxu0
  %v3092 = vpop.f32.mrb[0].mxu0
  %v3093 = vadd.f32 %v80, %v3092
  %v3094 = vpop.f32.mrb[0].mxu0
  %3095 = vmatprep.mubr.bf16.mxu0 %v3014
  %3096 = vmatmul.mubr.bf16.gmra.mrb[0].mxu0 %v3013
  %v3097 = vpop.f32.mrb[0].mxu0
  %v3098 = vadd.f32 %v80, %v3097
  %v3099 = vpop.f32.mrb[0].mxu0
  %v3100 = vpop.f32.mrb[0].mxu0
  %v3101 = vadd.f32 %v80, %v3100
  %v3102 = vpop.f32.mrb[0].mxu0
  %3103 = vmatprep.mubr.bf16.mxu0 %v3016
  %3104 = vmatmul.mubr.bf16.gmra.mrb[0].mxu0 %v3015
  %v3105 = vpop.f32.mrb[0].mxu0
  %v3106 = vadd.f32 %v80, %v3105
  %v3107 = vpop.f32.mrb[0].mxu0
  %v3108 = vpop.f32.mrb[0].mxu0
  %v3109 = vadd.f32 %v80, %v3108
  %v3110 = vpop.f32.mrb[0].mxu0
  %3111 = vmatprep.mubr.bf16.mxu0 %v3018
  %3112 = vmatmul.mubr.bf16.gmra.mrb[0].mxu0 %v3017
  %v3113 = vpop.f32.mrb[0].mxu0
  %v3114 = vadd.f32 %v80, %v3113
  %v3115 = vpop.f32.mrb[0].mxu0
  %v3116 = vpop.f32.mrb[0].mxu0
  %v3117 = vadd.f32 %v80, %v3116
  %v3118 = vpop.f32.mrb[0].mxu0
  %3119 = vmatprep.mubr.bf16.mxu0 %v3020
  %3120 = vmatmul.mubr.bf16.gmra.mrb[0].mxu0 %v3019
  %v3121 = vpop.f32.mrb[0].mxu0
  %v3122 = vadd.f32 %v80, %v3121
  %v3123 = vpop.f32.mrb[0].mxu0
  %v3124 = vpop.f32.mrb[0].mxu0
  %v3125 = vadd.f32 %v80, %v3124
  %v3126 = vpop.f32.mrb[0].mxu0
  %3127 = vmatprep.mubr.bf16.mxu0 %v3022
  %3128 = vmatmul.mubr.bf16.gmra.mrb[0].mxu0 %v3021
  %v3129 = vpop.f32.mrb[0].mxu0
  %v3130 = vadd.f32 %v80, %v3129
  %v3131 = vpop.f32.mrb[0].mxu0
  %v3132 = vpop.f32.mrb[0].mxu0
  %v3133 = vadd.f32 %v80, %v3132
  %v3134 = vpop.f32.mrb[0].mxu0
  %3135 = vmatprep.mubr.bf16.mxu0 %v3024
  %3136 = vmatmul.mubr.bf16.gmra.mrb[0].mxu0 %v3023
  %v3137 = vpop.f32.mrb[0].mxu0
  %v3138 = vadd.f32 %v80, %v3137
  %v3139 = vpop.f32.mrb[0].mxu0
  %v3140 = vpop.f32.mrb[0].mxu0
  %v3141 = vadd.f32 %v80, %v3140
  %v3142 = vpop.f32.mrb[0].mxu0
  %3143 = vmatprep.mubr.bf16.mxu0 %v3026
  %3144 = vmatmul.mubr.bf16.gmra.mrb[0].mxu0 %v3025
  %v3145 = vpop.f32.mrb[0].mxu0
  %v3146 = vadd.f32 %v80, %v3145
  %v3147 = vpop.f32.mrb[0].mxu0
  %v3148 = vpop.f32.mrb[0].mxu0
  %v3149 = vadd.f32 %v80, %v3148
  %v3150 = vpop.f32.mrb[0].mxu0
  %3151 = vmatprep.mubr.bf16.mxu0 %v3028
  %3152 = vmatmul.mubr.bf16.gmra.mrb[0].mxu0 %v3027
  %v3153 = vpop.f32.mrb[0].mxu0
  %v3154 = vadd.f32 %v80, %v3153
  %v3155 = vpop.f32.mrb[0].mxu0
  %v3156 = vpop.f32.mrb[0].mxu0
  %v3157 = vadd.f32 %v80, %v3156
  %v3158 = vpop.f32.mrb[0].mxu0
  %3159 = vmatprep.mubr.bf16.mxu0 %v3030
  %3160 = vmatmul.mubr.bf16.gmra.mrb[0].mxu0 %v3029
  %v3161 = vpop.f32.mrb[0].mxu0
  %v3162 = vadd.f32 %v80, %v3161
  %v3163 = vpop.f32.mrb[0].mxu0
  %v3164 = vpop.f32.mrb[0].mxu0
  %v3165 = vadd.f32 %v80, %v3164
  %v3166 = vpop.f32.mrb[0].mxu0
  %3167 = vmatprep.mubr.bf16.mxu0 %v3032
  %3168 = vmatmul.mubr.bf16.gmra.mrb[0].mxu0 %v3031
  %v3169 = vpop.f32.mrb[0].mxu0
  %v3170 = vadd.f32 %v80, %v3169
  %v3171 = vpop.f32.mrb[0].mxu0
  %v3172 = vpop.f32.mrb[0].mxu0
  %v3173 = vadd.f32 %v80, %v3172
  %v3174 = vpop.f32.mrb[0].mxu0
  %3175 = vdwg.mxu0
  %v3176 = vmax.f32 %v3090, 0.0
  %v3177 = vmax.f32 %v3093, 0.0
  %v3178 = vmax.f32 %v3098, 0.0
  %v3179 = vmax.f32 %v3101, 0.0
  %v3180 = vmax.f32 %v3106, 0.0
  %v3181 = vmax.f32 %v3109, 0.0
  %v3182 = vmax.f32 %v3114, 0.0
  %v3183 = vmax.f32 %v3117, 0.0
  %v3184 = vmax.f32 %v3122, 0.0
  %v3185 = vmax.f32 %v3125, 0.0
  %v3186 = vmax.f32 %v3130, 0.0
  %v3187 = vmax.f32 %v3133, 0.0
  %v3188 = vmax.f32 %v3138, 0.0
  %v3189 = vmax.f32 %v3141, 0.0
  %v3190 = vmax.f32 %v3146, 0.0
  %v3191 = vmax.f32 %v3149, 0.0
  %v3192 = vmax.f32 %v3154, 0.0
  %v3193 = vmax.f32 %v3157, 0.0
  %v3194 = vmax.f32 %v3162, 0.0
  %v3195 = vmax.f32 %v3165, 0.0
  %v3196 = vmax.f32 %v3170, 0.0
  %v3197 = vmax.f32 %v3173, 0.0
  %v3198 = vpack.c.bf16 %v3177, %v3176
  %v3199 = vpack.c.bf16 %v3179, %v3178
  %v3200 = vpack.c.bf16 %v3181, %v3180
  %v3201 = vpack.c.bf16 %v3183, %v3182
  %v3202 = vpack.c.bf16 %v3185, %v3184
  %v3203 = vpack.c.bf16 %v3187, %v3186
  %v3204 = vpack.c.bf16 %v3189, %v3188
  %v3205 = vpack.c.bf16 %v3191, %v3190
  %v3206 = vpack.c.bf16 %v3193, %v3192
  %v3207 = vpack.c.bf16 %v3195, %v3194
  %v3208 = vpack.c.bf16 %v3197, %v3196
  %v3209 = vld [vmem:[%s3 + $0x30] sm:$0xf]
  %v3210 = vld [vmem:[%s3 + $0x34] sm:$0xf]
  %v3213 = vunpack.c.l.b16 %v3209
  %v3214 = vunpack.c.l.b16 %v3210
  %v3215 = vpack.c.b16 %v3214, %v3213
  %v3218 = vsel %vm738, %v3198, 0
  %v3221 = vsel %vm738, %v3199, 0
  %v3224 = vsel %vm738, %v3200, 0
  %v3227 = vsel %vm738, %v3201, 0
  %v3230 = vsel %vm738, %v3202, 0
  %v3233 = vsel %vm738, %v3203, 0
  %v3236 = vsel %vm738, %v3204, 0
  %v3239 = vsel %vm738, %v3205, 0
  %v3242 = vsel %vm738, %v3206, 0
  %v3245 = vsel %vm738, %v3207, 0
  %v3248 = vsel %vm738, %v3208, 0
  %3250 = vmatprep.subr.bf16.mxu0 0
  %3251 = vmatpush1.bf16.msra.mxu0 %v3215
  %3252 = vmatprep.subr.bf16.mxu0 0
  %3253 = vmatpush1.bf16.msra.mxu0 0
  %3254 = vmatprep.subr.bf16.mxu0 0
  %3255 = vmatpush1.bf16.msra.mxu0 0
  %3256 = vmatprep.subr.bf16.mxu0 0
  %3257 = vmatpush1.bf16.msra.mxu0 0
  %3258 = vmatprep.subr.bf16.mxu0 0
  %3259 = vmatpush1.bf16.msra.mxu0 0
  %3260 = vmatprep.subr.bf16.mxu0 0
  %3261 = vmatpush1.bf16.msra.mxu0 0
  %3262 = vmatprep.subr.bf16.mxu0 0
  %3263 = vmatpush1.bf16.msra.mxu0 0
  %3264 = vmatprep.subr.bf16.mxu0 0
  %3265 = vmatpush1.bf16.msra.mxu0 0
  %3266 = vmatprep.subr.bf16.mxu0 0
  %3267 = vmatpush1.bf16.msra.mxu0 0
  %3268 = vmatprep.subr.bf16.mxu0 0
  %3269 = vmatpush1.bf16.msra.mxu0 0
  %3270 = vmatprep.subr.bf16.mxu0 0
  %3271 = vmatpush1.bf16.msra.mxu0 0
  %3272 = vmatprep.subr.bf16.mxu0 0
  %3273 = vmatpush1.bf16.msra.mxu0 0
  %3274 = vmatprep.subr.bf16.mxu0 0
  %3275 = vmatpush1.bf16.msra.mxu0 0
  %3276 = vmatprep.subr.bf16.mxu0 0
  %3277 = vmatpush1.bf16.msra.mxu0 0
  %3278 = vmatprep.subr.bf16.mxu0 0
  %3279 = vmatpush1.bf16.msra.mxu0 0
  %3280 = vmatprep.subr.bf16.mxu0 0
  %3281 = vmatpush1.bf16.msra.mxu0 0
  %3282 = vmatprep.mubr.bf16.mxu0 0
  %3283 = vmatmul.mubr.bf16.gmra.mrb[0].mxu0 %v3218
  %v3284 = vpop.f32.mrb[0].mxu0
  %v3285 = vadd.f32 0.0, %v3284
  %v3286 = vpop.f32.mrb[0].mxu0
  %v3287 = vpop.f32.mrb[0].mxu0
  %v3288 = vadd.f32 0.0, %v3287
  %v3289 = vpop.f32.mrb[0].mxu0
  %3290 = vmatprep.mubr.bf16.mxu0 0
  %3291 = vmatmul.mubr.bf16.gmra.mrb[0].mxu0 %v3221
  %v3292 = vpop.f32.mrb[0].mxu0
  %v3293 = vadd.f32 0.0, %v3292
  %v3294 = vpop.f32.mrb[0].mxu0
  %v3295 = vpop.f32.mrb[0].mxu0
  %v3296 = vadd.f32 0.0, %v3295
  %v3297 = vpop.f32.mrb[0].mxu0
  %3298 = vmatprep.mubr.bf16.mxu0 0
  %3299 = vmatmul.mubr.bf16.gmra.mrb[0].mxu0 %v3224
  %v3300 = vpop.f32.mrb[0].mxu0
  %v3301 = vadd.f32 0.0, %v3300
  %v3302 = vpop.f32.mrb[0].mxu0
  %v3303 = vpop.f32.mrb[0].mxu0
  %v3304 = vadd.f32 0.0, %v3303
  %v3305 = vpop.f32.mrb[0].mxu0
  %3306 = vmatprep.mubr.bf16.mxu0 0
  %3307 = vmatmul.mubr.bf16.gmra.mrb[0].mxu0 %v3227
  %v3308 = vpop.f32.mrb[0].mxu0
  %v3309 = vadd.f32 0.0, %v3308
  %v3310 = vpop.f32.mrb[0].mxu0
  %v3311 = vpop.f32.mrb[0].mxu0
  %v3312 = vadd.f32 0.0, %v3311
  %v3313 = vpop.f32.mrb[0].mxu0
  %3314 = vmatprep.mubr.bf16.mxu0 0
  %3315 = vmatmul.mubr.bf16.gmra.mrb[0].mxu0 %v3230
  %v3316 = vpop.f32.mrb[0].mxu0
  %v3317 = vadd.f32 0.0, %v3316
  %v3318 = vpop.f32.mrb[0].mxu0
  %v3319 = vpop.f32.mrb[0].mxu0
  %v3320 = vadd.f32 0.0, %v3319
  %v3321 = vpop.f32.mrb[0].mxu0
  %3322 = vmatprep.mubr.bf16.mxu0 0
  %3323 = vmatmul.mubr.bf16.gmra.mrb[0].mxu0 %v3233
  %v3324 = vpop.f32.mrb[0].mxu0
  %v3325 = vadd.f32 0.0, %v3324
  %v3326 = vpop.f32.mrb[0].mxu0
  %v3327 = vpop.f32.mrb[0].mxu0
  %v3328 = vadd.f32 0.0, %v3327
  %v3329 = vpop.f32.mrb[0].mxu0
  %3330 = vmatprep.mubr.bf16.mxu0 0
  %3331 = vmatmul.mubr.bf16.gmra.mrb[0].mxu0 %v3236
  %v3332 = vpop.f32.mrb[0].mxu0
  %v3333 = vadd.f32 0.0, %v3332
  %v3334 = vpop.f32.mrb[0].mxu0
  %v3335 = vpop.f32.mrb[0].mxu0
  %v3336 = vadd.f32 0.0, %v3335
  %v3337 = vpop.f32.mrb[0].mxu0
  %3338 = vmatprep.mubr.bf16.mxu0 0
  %3339 = vmatmul.mubr.bf16.gmra.mrb[0].mxu0 %v3239
  %v3340 = vpop.f32.mrb[0].mxu0
  %v3341 = vadd.f32 0.0, %v3340
  %v3342 = vpop.f32.mrb[0].mxu0
  %v3343 = vpop.f32.mrb[0].mxu0
  %v3344 = vadd.f32 0.0, %v3343
  %v3345 = vpop.f32.mrb[0].mxu0
  %3346 = vmatprep.mubr.bf16.mxu0 0
  %3347 = vmatmul.mubr.bf16.gmra.mrb[0].mxu0 %v3242
  %v3348 = vpop.f32.mrb[0].mxu0
  %v3349 = vadd.f32 0.0, %v3348
  %v3350 = vpop.f32.mrb[0].mxu0
  %v3351 = vpop.f32.mrb[0].mxu0
  %v3352 = vadd.f32 0.0, %v3351
  %v3353 = vpop.f32.mrb[0].mxu0
  %3354 = vmatprep.mubr.bf16.mxu0 0
  %3355 = vmatmul.mubr.bf16.gmra.mrb[0].mxu0 %v3245
  %v3356 = vpop.f32.mrb[0].mxu0
  %v3357 = vadd.f32 0.0, %v3356
  %v3358 = vpop.f32.mrb[0].mxu0
  %v3359 = vpop.f32.mrb[0].mxu0
  %v3360 = vadd.f32 0.0, %v3359
  %v3361 = vpop.f32.mrb[0].mxu0
  %3362 = vmatprep.mubr.bf16.mxu0 0
  %3363 = vmatmul.mubr.bf16.gmra.mrb[0].mxu0 %v3248
  %v3364 = vpop.f32.mrb[0].mxu0
  %v3365 = vadd.f32 0.0, %v3364
  %v3366 = vpop.f32.mrb[0].mxu0
  %v3367 = vpop.f32.mrb[0].mxu0
  %v3368 = vpop.f32.mrb[0].mxu0
  %3369 = vdwg.mxu0
  %v3370 = vadd.f32 %v2902, %v3285
  %v3371 = vadd.f32 %v2903, %v3288
  %v3372 = vadd.f32 %v2904, %v3293
  %v3373 = vadd.f32 %v2905, %v3296
  %v3374 = vadd.f32 %v2906, %v3301
  %v3375 = vadd.f32 %v2907, %v3304
  %v3376 = vadd.f32 %v2908, %v3309
  %v3377 = vadd.f32 %v2909, %v3312
  %v3378 = vadd.f32 %v2910, %v3317
  %v3379 = vadd.f32 %v2911, %v3320
  %v3380 = vadd.f32 %v2912, %v3325
  %v3381 = vadd.f32 %v2913, %v3328
  %v3382 = vadd.f32 %v2914, %v3333
  %v3383 = vadd.f32 %v2915, %v3336
  %v3384 = vadd.f32 %v2916, %v3341
  %v3385 = vadd.f32 %v2917, %v3344
  %v3386 = vadd.f32 %v2918, %v3349
  %v3387 = vadd.f32 %v2919, %v3352
  %v3388 = vadd.f32 %v2920, %v3357
  %v3389 = vadd.f32 %v2921, %v3360
  %v3390 = vadd.f32 %v2922, %v3365
  %v3391 = vld [vmem:[%s0 + $0x4d0] sm:$0xff]
  %v3392 = vld [vmem:[%s0 + $0x4d8] sm:$0xff]
  %v3393 = vld [vmem:[%s0 + $0x4e0] sm:$0xff]
  %v3394 = vld [vmem:[%s0 + $0x4e8] sm:$0xff]
  %v3395 = vld [vmem:[%s0 + $0x4f0] sm:$0xff]
  %v3396 = vld [vmem:[%s0 + $0x4f8] sm:$0xff]
  %v3397 = vld [vmem:[%s0 + $0x500] sm:$0xff]
  %v3398 = vld [vmem:[%s0 + $0x508] sm:$0xff]
  %v3399 = vld [vmem:[%s0 + $0x510] sm:$0xff]
  %v3400 = vld [vmem:[%s0 + $0x518] sm:$0xff]
  %v3401 = vld [vmem:[%s0 + $0x520] sm:$0xff]
  %v3402 = vld [vmem:[%s0 + $0x528] sm:$0xff]
  %v3403 = vld [vmem:[%s0 + $0x530] sm:$0xff]
  %v3404 = vld [vmem:[%s0 + $0x538] sm:$0xff]
  %v3405 = vld [vmem:[%s0 + $0x540] sm:$0xff]
  %v3406 = vld [vmem:[%s0 + $0x548] sm:$0xff]
  %v3407 = vld [vmem:[%s0 + $0x550] sm:$0xff]
  %v3408 = vld [vmem:[%s0 + $0x558] sm:$0xff]
  %v3409 = vld [vmem:[%s0 + $0x560] sm:$0xff]
  %v3410 = vld [vmem:[%s0 + $0x568] sm:$0xff]
  %v3411 = vld [vmem:[%s0 + $0x570] sm:$0xff]
  %v3412 = vld [vmem:[%s0 + $0x578] sm:$0xff]
  %v3435 = vunpack.c.l.b16 %v3391
  %v3436 = vunpack.c.h.b16 %v3391
  %v3437 = vunpack.c.l.b16 %v3392
  %v3438 = vunpack.c.h.b16 %v3392
  %v3439 = vunpack.c.l.b16 %v3393
  %v3440 = vunpack.c.h.b16 %v3393
  %v3441 = vunpack.c.l.b16 %v3394
  %v3442 = vunpack.c.h.b16 %v3394
  %v3443 = vunpack.c.l.b16 %v3395
  %v3444 = vunpack.c.h.b16 %v3395
  %v3445 = vunpack.c.l.b16 %v3396
  %v3446 = vunpack.c.h.b16 %v3396
  %v3447 = vunpack.c.l.b16 %v3397
  %v3448 = vunpack.c.h.b16 %v3397
  %v3449 = vunpack.c.l.b16 %v3398
  %v3450 = vunpack.c.h.b16 %v3398
  %v3451 = vunpack.c.l.b16 %v3399
  %v3452 = vunpack.c.h.b16 %v3399
  %v3453 = vunpack.c.l.b16 %v3400
  %v3454 = vunpack.c.h.b16 %v3400
  %v3455 = vunpack.c.l.b16 %v3401
  %v3456 = vunpack.c.h.b16 %v3401
  %v3457 = vunpack.c.l.b16 %v3402
  %v3458 = vunpack.c.h.b16 %v3402
  %v3459 = vunpack.c.l.b16 %v3403
  %v3460 = vunpack.c.h.b16 %v3403
  %v3461 = vunpack.c.l.b16 %v3404
  %v3462 = vunpack.c.h.b16 %v3404
  %v3463 = vunpack.c.l.b16 %v3405
  %v3464 = vunpack.c.h.b16 %v3405
  %v3465 = vunpack.c.l.b16 %v3406
  %v3466 = vunpack.c.h.b16 %v3406
  %v3467 = vunpack.c.l.b16 %v3407
  %v3468 = vunpack.c.h.b16 %v3407
  %v3469 = vunpack.c.l.b16 %v3408
  %v3470 = vunpack.c.h.b16 %v3408
  %v3471 = vunpack.c.l.b16 %v3409
  %v3472 = vunpack.c.h.b16 %v3409
  %v3473 = vunpack.c.l.b16 %v3410
  %v3474 = vunpack.c.h.b16 %v3410
  %v3475 = vunpack.c.l.b16 %v3411
  %v3476 = vunpack.c.h.b16 %v3411
  %v3477 = vunpack.c.l.b16 %v3412
  %v3478 = vunpack.c.h.b16 %v3412
  %v3479 = vpack.c.b16 %v3437, %v3435
  %v3480 = vpack.c.b16 %v3438, %v3436
  %v3481 = vpack.c.b16 %v3441, %v3439
  %v3482 = vpack.c.b16 %v3442, %v3440
  %v3483 = vpack.c.b16 %v3445, %v3443
  %v3484 = vpack.c.b16 %v3446, %v3444
  %v3485 = vpack.c.b16 %v3449, %v3447
  %v3486 = vpack.c.b16 %v3450, %v3448
  %v3487 = vpack.c.b16 %v3453, %v3451
  %v3488 = vpack.c.b16 %v3454, %v3452
  %v3489 = vpack.c.b16 %v3457, %v3455
  %v3490 = vpack.c.b16 %v3458, %v3456
  %v3491 = vpack.c.b16 %v3461, %v3459
  %v3492 = vpack.c.b16 %v3462, %v3460
  %v3493 = vpack.c.b16 %v3465, %v3463
  %v3494 = vpack.c.b16 %v3466, %v3464
  %v3495 = vpack.c.b16 %v3469, %v3467
  %v3496 = vpack.c.b16 %v3470, %v3468
  %v3497 = vpack.c.b16 %v3473, %v3471
  %v3498 = vpack.c.b16 %v3474, %v3472
  %v3499 = vpack.c.b16 %v3477, %v3475
  %v3500 = vpack.c.b16 %v3478, %v3476
  %3523 = vmatprep.subr.bf16.mxu0 0
  %3524 = vmatpush1.bf16.msra.mxu0 %v256
  %3525 = vmatprep.subr.bf16.mxu0 0
  %3526 = vmatpush1.bf16.msra.mxu0 %v257
  %3527 = vmatprep.subr.bf16.mxu0 0
  %3528 = vmatpush1.bf16.msra.mxu0 %v258
  %3529 = vmatprep.subr.bf16.mxu0 0
  %3530 = vmatpush1.bf16.msra.mxu0 %v259
  %3531 = vmatprep.subr.bf16.mxu0 0
  %3532 = vmatpush1.bf16.msra.mxu0 %v260
  %3533 = vmatprep.subr.bf16.mxu0 0
  %3534 = vmatpush1.bf16.msra.mxu0 %v261
  %3535 = vmatprep.subr.bf16.mxu0 0
  %3536 = vmatpush1.bf16.msra.mxu0 %v262
  %3537 = vmatprep.subr.bf16.mxu0 0
  %3538 = vmatpush1.bf16.msra.mxu0 %v263
  %3539 = vmatprep.subr.bf16.mxu0 0
  %3540 = vmatpush1.bf16.msra.mxu0 %v264
  %3541 = vmatprep.subr.bf16.mxu0 0
  %3542 = vmatpush1.bf16.msra.mxu0 %v265
  %3543 = vmatprep.subr.bf16.mxu0 0
  %3544 = vmatpush1.bf16.msra.mxu0 %v266
  %3545 = vmatprep.subr.bf16.mxu0 0
  %3546 = vmatpush1.bf16.msra.mxu0 %v267
  %3547 = vmatprep.subr.bf16.mxu0 0
  %3548 = vmatpush1.bf16.msra.mxu0 %v268
  %3549 = vmatprep.subr.bf16.mxu0 0
  %3550 = vmatpush1.bf16.msra.mxu0 %v269
  %3551 = vmatprep.subr.bf16.mxu0 0
  %3552 = vmatpush1.bf16.msra.mxu0 %v270
  %3553 = vmatprep.subr.bf16.mxu0 0
  %3554 = vmatpush1.bf16.msra.mxu0 %v271
  %3555 = vmatprep.mubr.bf16.mxu0 %v3480
  %3556 = vmatmul.mubr.bf16.gmra.mrb[0].mxu0 %v3479
  %v3557 = vpop.f32.mrb[0].mxu0
  %v3558 = vadd.f32 %v80, %v3557
  %v3559 = vpop.f32.mrb[0].mxu0
  %v3560 = vpop.f32.mrb[0].mxu0
  %v3561 = vadd.f32 %v80, %v3560
  %v3562 = vpop.f32.mrb[0].mxu0
  %3563 = vmatprep.mubr.bf16.mxu0 %v3482
  %3564 = vmatmul.mubr.bf16.gmra.mrb[0].mxu0 %v3481
  %v3565 = vpop.f32.mrb[0].mxu0
  %v3566 = vadd.f32 %v80, %v3565
  %v3567 = vpop.f32.mrb[0].mxu0
  %v3568 = vpop.f32.mrb[0].mxu0
  %v3569 = vadd.f32 %v80, %v3568
  %v3570 = vpop.f32.mrb[0].mxu0
  %3571 = vmatprep.mubr.bf16.mxu0 %v3484
  %3572 = vmatmul.mubr.bf16.gmra.mrb[0].mxu0 %v3483
  %v3573 = vpop.f32.mrb[0].mxu0
  %v3574 = vadd.f32 %v80, %v3573
  %v3575 = vpop.f32.mrb[0].mxu0
  %v3576 = vpop.f32.mrb[0].mxu0
  %v3577 = vadd.f32 %v80, %v3576
  %v3578 = vpop.f32.mrb[0].mxu0
  %3579 = vmatprep.mubr.bf16.mxu0 %v3486
  %3580 = vmatmul.mubr.bf16.gmra.mrb[0].mxu0 %v3485
  %v3581 = vpop.f32.mrb[0].mxu0
  %v3582 = vadd.f32 %v80, %v3581
  %v3583 = vpop.f32.mrb[0].mxu0
  %v3584 = vpop.f32.mrb[0].mxu0
  %v3585 = vadd.f32 %v80, %v3584
  %v3586 = vpop.f32.mrb[0].mxu0
  %3587 = vmatprep.mubr.bf16.mxu0 %v3488
  %3588 = vmatmul.mubr.bf16.gmra.mrb[0].mxu0 %v3487
  %v3589 = vpop.f32.mrb[0].mxu0
  %v3590 = vadd.f32 %v80, %v3589
  %v3591 = vpop.f32.mrb[0].mxu0
  %v3592 = vpop.f32.mrb[0].mxu0
  %v3593 = vadd.f32 %v80, %v3592
  %v3594 = vpop.f32.mrb[0].mxu0
  %3595 = vmatprep.mubr.bf16.mxu0 %v3490
  %3596 = vmatmul.mubr.bf16.gmra.mrb[0].mxu0 %v3489
  %v3597 = vpop.f32.mrb[0].mxu0
  %v3598 = vadd.f32 %v80, %v3597
  %v3599 = vpop.f32.mrb[0].mxu0
  %v3600 = vpop.f32.mrb[0].mxu0
  %v3601 = vadd.f32 %v80, %v3600
  %v3602 = vpop.f32.mrb[0].mxu0
  %3603 = vmatprep.mubr.bf16.mxu0 %v3492
  %3604 = vmatmul.mubr.bf16.gmra.mrb[0].mxu0 %v3491
  %v3605 = vpop.f32.mrb[0].mxu0
  %v3606 = vadd.f32 %v80, %v3605
  %v3607 = vpop.f32.mrb[0].mxu0
  %v3608 = vpop.f32.mrb[0].mxu0
  %v3609 = vadd.f32 %v80, %v3608
  %v3610 = vpop.f32.mrb[0].mxu0
  %3611 = vmatprep.mubr.bf16.mxu0 %v3494
  %3612 = vmatmul.mubr.bf16.gmra.mrb[0].mxu0 %v3493
  %v3613 = vpop.f32.mrb[0].mxu0
  %v3614 = vadd.f32 %v80, %v3613
  %v3615 = vpop.f32.mrb[0].mxu0
  %v3616 = vpop.f32.mrb[0].mxu0
  %v3617 = vadd.f32 %v80, %v3616
  %v3618 = vpop.f32.mrb[0].mxu0
  %3619 = vmatprep.mubr.bf16.mxu0 %v3496
  %3620 = vmatmul.mubr.bf16.gmra.mrb[0].mxu0 %v3495
  %v3621 = vpop.f32.mrb[0].mxu0
  %v3622 = vadd.f32 %v80, %v3621
  %v3623 = vpop.f32.mrb[0].mxu0
  %v3624 = vpop.f32.mrb[0].mxu0
  %v3625 = vadd.f32 %v80, %v3624
  %v3626 = vpop.f32.mrb[0].mxu0
  %3627 = vmatprep.mubr.bf16.mxu0 %v3498
  %3628 = vmatmul.mubr.bf16.gmra.mrb[0].mxu0 %v3497
  %v3629 = vpop.f32.mrb[0].mxu0
  %v3630 = vadd.f32 %v80, %v3629
  %v3631 = vpop.f32.mrb[0].mxu0
  %v3632 = vpop.f32.mrb[0].mxu0
  %v3633 = vadd.f32 %v80, %v3632
  %v3634 = vpop.f32.mrb[0].mxu0
  %3635 = vmatprep.mubr.bf16.mxu0 %v3500
  %3636 = vmatmul.mubr.bf16.gmra.mrb[0].mxu0 %v3499
  %v3637 = vpop.f32.mrb[0].mxu0
  %v3638 = vadd.f32 %v80, %v3637
  %v3639 = vpop.f32.mrb[0].mxu0
  %v3640 = vpop.f32.mrb[0].mxu0
  %v3641 = vadd.f32 %v80, %v3640
  %v3642 = vpop.f32.mrb[0].mxu0
  %3643 = vdwg.mxu0
  %v3644 = vmax.f32 %v3558, 0.0
  %v3645 = vmax.f32 %v3561, 0.0
  %v3646 = vmax.f32 %v3566, 0.0
  %v3647 = vmax.f32 %v3569, 0.0
  %v3648 = vmax.f32 %v3574, 0.0
  %v3649 = vmax.f32 %v3577, 0.0
  %v3650 = vmax.f32 %v3582, 0.0
  %v3651 = vmax.f32 %v3585, 0.0
  %v3652 = vmax.f32 %v3590, 0.0
  %v3653 = vmax.f32 %v3593, 0.0
  %v3654 = vmax.f32 %v3598, 0.0
  %v3655 = vmax.f32 %v3601, 0.0
  %v3656 = vmax.f32 %v3606, 0.0
  %v3657 = vmax.f32 %v3609, 0.0
  %v3658 = vmax.f32 %v3614, 0.0
  %v3659 = vmax.f32 %v3617, 0.0
  %v3660 = vmax.f32 %v3622, 0.0
  %v3661 = vmax.f32 %v3625, 0.0
  %v3662 = vmax.f32 %v3630, 0.0
  %v3663 = vmax.f32 %v3633, 0.0
  %v3664 = vmax.f32 %v3638, 0.0
  %v3665 = vmax.f32 %v3641, 0.0
  %v3666 = vpack.c.bf16 %v3645, %v3644
  %v3667 = vpack.c.bf16 %v3647, %v3646
  %v3668 = vpack.c.bf16 %v3649, %v3648
  %v3669 = vpack.c.bf16 %v3651, %v3650
  %v3670 = vpack.c.bf16 %v3653, %v3652
  %v3671 = vpack.c.bf16 %v3655, %v3654
  %v3672 = vpack.c.bf16 %v3657, %v3656
  %v3673 = vpack.c.bf16 %v3659, %v3658
  %v3674 = vpack.c.bf16 %v3661, %v3660
  %v3675 = vpack.c.bf16 %v3663, %v3662
  %v3676 = vpack.c.bf16 %v3665, %v3664
  %v3677 = vld [vmem:[%s3 + $0x38] sm:$0xf]
  %v3678 = vld [vmem:[%s3 + $0x3c] sm:$0xf]
  %v3681 = vunpack.c.l.b16 %v3677
  %v3682 = vunpack.c.l.b16 %v3678
  %v3683 = vpack.c.b16 %v3682, %v3681
  %v3686 = vsel %vm738, %v3666, 0
  %v3689 = vsel %vm738, %v3667, 0
  %v3692 = vsel %vm738, %v3668, 0
  %v3695 = vsel %vm738, %v3669, 0
  %v3698 = vsel %vm738, %v3670, 0
  %v3701 = vsel %vm738, %v3671, 0
  %v3704 = vsel %vm738, %v3672, 0
  %v3707 = vsel %vm738, %v3673, 0
  %v3710 = vsel %vm738, %v3674, 0
  %v3713 = vsel %vm738, %v3675, 0
  %v3716 = vsel %vm738, %v3676, 0
  %3718 = vmatprep.subr.bf16.mxu0 0
  %3719 = vmatpush1.bf16.msra.mxu0 %v3683
  %3720 = vmatprep.subr.bf16.mxu0 0
  %3721 = vmatpush1.bf16.msra.mxu0 0
  %3722 = vmatprep.subr.bf16.mxu0 0
  %3723 = vmatpush1.bf16.msra.mxu0 0
  %3724 = vmatprep.subr.bf16.mxu0 0
  %3725 = vmatpush1.bf16.msra.mxu0 0
  %3726 = vmatprep.subr.bf16.mxu0 0
  %3727 = vmatpush1.bf16.msra.mxu0 0
  %3728 = vmatprep.subr.bf16.mxu0 0
  %3729 = vmatpush1.bf16.msra.mxu0 0
  %3730 = vmatprep.subr.bf16.mxu0 0
  %3731 = vmatpush1.bf16.msra.mxu0 0
  %3732 = vmatprep.subr.bf16.mxu0 0
  %3733 = vmatpush1.bf16.msra.mxu0 0
  %3734 = vmatprep.subr.bf16.mxu0 0
  %3735 = vmatpush1.bf16.msra.mxu0 0
  %3736 = vmatprep.subr.bf16.mxu0 0
  %3737 = vmatpush1.bf16.msra.mxu0 0
  %3738 = vmatprep.subr.bf16.mxu0 0
  %3739 = vmatpush1.bf16.msra.mxu0 0
  %3740 = vmatprep.subr.bf16.mxu0 0
  %3741 = vmatpush1.bf16.msra.mxu0 0
  %3742 = vmatprep.subr.bf16.mxu0 0
  %3743 = vmatpush1.bf16.msra.mxu0 0
  %3744 = vmatprep.subr.bf16.mxu0 0
  %3745 = vmatpush1.bf16.msra.mxu0 0
  %3746 = vmatprep.subr.bf16.mxu0 0
  %3747 = vmatpush1.bf16.msra.mxu0 0
  %3748 = vmatprep.subr.bf16.mxu0 0
  %3749 = vmatpush1.bf16.msra.mxu0 0
  %3750 = vmatprep.mubr.bf16.mxu0 0
  %3751 = vmatmul.mubr.bf16.gmra.mrb[0].mxu0 %v3686
  %v3752 = vpop.f32.mrb[0].mxu0
  %v3753 = vadd.f32 0.0, %v3752
  %v3754 = vpop.f32.mrb[0].mxu0
  %v3755 = vpop.f32.mrb[0].mxu0
  %v3756 = vadd.f32 0.0, %v3755
  %v3757 = vpop.f32.mrb[0].mxu0
  %3758 = vmatprep.mubr.bf16.mxu0 0
  %3759 = vmatmul.mubr.bf16.gmra.mrb[0].mxu0 %v3689
  %v3760 = vpop.f32.mrb[0].mxu0
  %v3761 = vadd.f32 0.0, %v3760
  %v3762 = vpop.f32.mrb[0].mxu0
  %v3763 = vpop.f32.mrb[0].mxu0
  %v3764 = vadd.f32 0.0, %v3763
  %v3765 = vpop.f32.mrb[0].mxu0
  %3766 = vmatprep.mubr.bf16.mxu0 0
  %3767 = vmatmul.mubr.bf16.gmra.mrb[0].mxu0 %v3692
  %v3768 = vpop.f32.mrb[0].mxu0
  %v3769 = vadd.f32 0.0, %v3768
  %v3770 = vpop.f32.mrb[0].mxu0
  %v3771 = vpop.f32.mrb[0].mxu0
  %v3772 = vadd.f32 0.0, %v3771
  %v3773 = vpop.f32.mrb[0].mxu0
  %3774 = vmatprep.mubr.bf16.mxu0 0
  %3775 = vmatmul.mubr.bf16.gmra.mrb[0].mxu0 %v3695
  %v3776 = vpop.f32.mrb[0].mxu0
  %v3777 = vadd.f32 0.0, %v3776
  %v3778 = vpop.f32.mrb[0].mxu0
  %v3779 = vpop.f32.mrb[0].mxu0
  %v3780 = vadd.f32 0.0, %v3779
  %v3781 = vpop.f32.mrb[0].mxu0
  %3782 = vmatprep.mubr.bf16.mxu0 0
  %3783 = vmatmul.mubr.bf16.gmra.mrb[0].mxu0 %v3698
  %v3784 = vpop.f32.mrb[0].mxu0
  %v3785 = vadd.f32 0.0, %v3784
  %v3786 = vpop.f32.mrb[0].mxu0
  %v3787 = vpop.f32.mrb[0].mxu0
  %v3788 = vadd.f32 0.0, %v3787
  %v3789 = vpop.f32.mrb[0].mxu0
  %3790 = vmatprep.mubr.bf16.mxu0 0
  %3791 = vmatmul.mubr.bf16.gmra.mrb[0].mxu0 %v3701
  %v3792 = vpop.f32.mrb[0].mxu0
  %v3793 = vadd.f32 0.0, %v3792
  %v3794 = vpop.f32.mrb[0].mxu0
  %v3795 = vpop.f32.mrb[0].mxu0
  %v3796 = vadd.f32 0.0, %v3795
  %v3797 = vpop.f32.mrb[0].mxu0
  %3798 = vmatprep.mubr.bf16.mxu0 0
  %3799 = vmatmul.mubr.bf16.gmra.mrb[0].mxu0 %v3704
  %v3800 = vpop.f32.mrb[0].mxu0
  %v3801 = vadd.f32 0.0, %v3800
  %v3802 = vpop.f32.mrb[0].mxu0
  %v3803 = vpop.f32.mrb[0].mxu0
  %v3804 = vadd.f32 0.0, %v3803
  %v3805 = vpop.f32.mrb[0].mxu0
  %3806 = vmatprep.mubr.bf16.mxu0 0
  %3807 = vmatmul.mubr.bf16.gmra.mrb[0].mxu0 %v3707
  %v3808 = vpop.f32.mrb[0].mxu0
  %v3809 = vadd.f32 0.0, %v3808
  %v3810 = vpop.f32.mrb[0].mxu0
  %v3811 = vpop.f32.mrb[0].mxu0
  %v3812 = vadd.f32 0.0, %v3811
  %v3813 = vpop.f32.mrb[0].mxu0
  %3814 = vmatprep.mubr.bf16.mxu0 0
  %3815 = vmatmul.mubr.bf16.gmra.mrb[0].mxu0 %v3710
  %v3816 = vpop.f32.mrb[0].mxu0
  %v3817 = vadd.f32 0.0, %v3816
  %v3818 = vpop.f32.mrb[0].mxu0
  %v3819 = vpop.f32.mrb[0].mxu0
  %v3820 = vadd.f32 0.0, %v3819
  %v3821 = vpop.f32.mrb[0].mxu0
  %3822 = vmatprep.mubr.bf16.mxu0 0
  %3823 = vmatmul.mubr.bf16.gmra.mrb[0].mxu0 %v3713
  %v3824 = vpop.f32.mrb[0].mxu0
  %v3825 = vadd.f32 0.0, %v3824
  %v3826 = vpop.f32.mrb[0].mxu0
  %v3827 = vpop.f32.mrb[0].mxu0
  %v3828 = vadd.f32 0.0, %v3827
  %v3829 = vpop.f32.mrb[0].mxu0
  %3830 = vmatprep.mubr.bf16.mxu0 0
  %3831 = vmatmul.mubr.bf16.gmra.mrb[0].mxu0 %v3716
  %v3832 = vpop.f32.mrb[0].mxu0
  %v3833 = vadd.f32 0.0, %v3832
  %v3834 = vpop.f32.mrb[0].mxu0
  %v3835 = vpop.f32.mrb[0].mxu0
  %v3836 = vpop.f32.mrb[0].mxu0
  %3837 = vdwg.mxu0
  %v3838 = vadd.f32 %v3370, %v3753
  %v3839 = vadd.f32 %v3371, %v3756
  %v3840 = vadd.f32 %v3372, %v3761
  %v3841 = vadd.f32 %v3373, %v3764
  %v3842 = vadd.f32 %v3374, %v3769
  %v3843 = vadd.f32 %v3375, %v3772
  %v3844 = vadd.f32 %v3376, %v3777
  %v3845 = vadd.f32 %v3377, %v3780
  %v3846 = vadd.f32 %v3378, %v3785
  %v3847 = vadd.f32 %v3379, %v3788
  %v3848 = vadd.f32 %v3380, %v3793
  %v3849 = vadd.f32 %v3381, %v3796
  %v3850 = vadd.f32 %v3382, %v3801
  %v3851 = vadd.f32 %v3383, %v3804
  %v3852 = vadd.f32 %v3384, %v3809
  %v3853 = vadd.f32 %v3385, %v3812
  %v3854 = vadd.f32 %v3386, %v3817
  %v3855 = vadd.f32 %v3387, %v3820
  %v3856 = vadd.f32 %v3388, %v3825
  %v3857 = vadd.f32 %v3389, %v3828
  %v3858 = vadd.f32 %v3390, %v3833
  %v3859 = vld [vmem:[%s0 + $0x580] sm:$0xff]
  %v3860 = vld [vmem:[%s0 + $0x588] sm:$0xff]
  %v3861 = vld [vmem:[%s0 + $0x590] sm:$0xff]
  %v3862 = vld [vmem:[%s0 + $0x598] sm:$0xff]
  %v3863 = vld [vmem:[%s0 + $0x5a0] sm:$0xff]
  %v3864 = vld [vmem:[%s0 + $0x5a8] sm:$0xff]
  %v3865 = vld [vmem:[%s0 + $0x5b0] sm:$0xff]
  %v3866 = vld [vmem:[%s0 + $0x5b8] sm:$0xff]
  %v3867 = vld [vmem:[%s0 + $0x5c0] sm:$0xff]
  %v3868 = vld [vmem:[%s0 + $0x5c8] sm:$0xff]
  %v3869 = vld [vmem:[%s0 + $0x5d0] sm:$0xff]
  %v3870 = vld [vmem:[%s0 + $0x5d8] sm:$0xff]
  %v3871 = vld [vmem:[%s0 + $0x5e0] sm:$0xff]
  %v3872 = vld [vmem:[%s0 + $0x5e8] sm:$0xff]
  %v3873 = vld [vmem:[%s0 + $0x5f0] sm:$0xff]
  %v3874 = vld [vmem:[%s0 + $0x5f8] sm:$0xff]
  %v3875 = vld [vmem:[%s0 + $0x600] sm:$0xff]
  %v3876 = vld [vmem:[%s0 + $0x608] sm:$0xff]
  %v3877 = vld [vmem:[%s0 + $0x610] sm:$0xff]
  %v3878 = vld [vmem:[%s0 + $0x618] sm:$0xff]
  %v3879 = vld [vmem:[%s0 + $0x620] sm:$0xff]
  %v3880 = vld [vmem:[%s0 + $0x628] sm:$0xff]
  %v3903 = vunpack.c.l.b16 %v3859
  %v3904 = vunpack.c.h.b16 %v3859
  %v3905 = vunpack.c.l.b16 %v3860
  %v3906 = vunpack.c.h.b16 %v3860
  %v3907 = vunpack.c.l.b16 %v3861
  %v3908 = vunpack.c.h.b16 %v3861
  %v3909 = vunpack.c.l.b16 %v3862
  %v3910 = vunpack.c.h.b16 %v3862
  %v3911 = vunpack.c.l.b16 %v3863
  %v3912 = vunpack.c.h.b16 %v3863
  %v3913 = vunpack.c.l.b16 %v3864
  %v3914 = vunpack.c.h.b16 %v3864
  %v3915 = vunpack.c.l.b16 %v3865
  %v3916 = vunpack.c.h.b16 %v3865
  %v3917 = vunpack.c.l.b16 %v3866
  %v3918 = vunpack.c.h.b16 %v3866
  %v3919 = vunpack.c.l.b16 %v3867
  %v3920 = vunpack.c.h.b16 %v3867
  %v3921 = vunpack.c.l.b16 %v3868
  %v3922 = vunpack.c.h.b16 %v3868
  %v3923 = vunpack.c.l.b16 %v3869
  %v3924 = vunpack.c.h.b16 %v3869
  %v3925 = vunpack.c.l.b16 %v3870
  %v3926 = vunpack.c.h.b16 %v3870
  %v3927 = vunpack.c.l.b16 %v3871
  %v3928 = vunpack.c.h.b16 %v3871
  %v3929 = vunpack.c.l.b16 %v3872
  %v3930 = vunpack.c.h.b16 %v3872
  %v3931 = vunpack.c.l.b16 %v3873
  %v3932 = vunpack.c.h.b16 %v3873
  %v3933 = vunpack.c.l.b16 %v3874
  %v3934 = vunpack.c.h.b16 %v3874
  %v3935 = vunpack.c.l.b16 %v3875
  %v3936 = vunpack.c.h.b16 %v3875
  %v3937 = vunpack.c.l.b16 %v3876
  %v3938 = vunpack.c.h.b16 %v3876
  %v3939 = vunpack.c.l.b16 %v3877
  %v3940 = vunpack.c.h.b16 %v3877
  %v3941 = vunpack.c.l.b16 %v3878
  %v3942 = vunpack.c.h.b16 %v3878
  %v3943 = vunpack.c.l.b16 %v3879
  %v3944 = vunpack.c.h.b16 %v3879
  %v3945 = vunpack.c.l.b16 %v3880
  %v3946 = vunpack.c.h.b16 %v3880
  %v3947 = vpack.c.b16 %v3905, %v3903
  %v3948 = vpack.c.b16 %v3906, %v3904
  %v3949 = vpack.c.b16 %v3909, %v3907
  %v3950 = vpack.c.b16 %v3910, %v3908
  %v3951 = vpack.c.b16 %v3913, %v3911
  %v3952 = vpack.c.b16 %v3914, %v3912
  %v3953 = vpack.c.b16 %v3917, %v3915
  %v3954 = vpack.c.b16 %v3918, %v3916
  %v3955 = vpack.c.b16 %v3921, %v3919
  %v3956 = vpack.c.b16 %v3922, %v3920
  %v3957 = vpack.c.b16 %v3925, %v3923
  %v3958 = vpack.c.b16 %v3926, %v3924
  %v3959 = vpack.c.b16 %v3929, %v3927
  %v3960 = vpack.c.b16 %v3930, %v3928
  %v3961 = vpack.c.b16 %v3933, %v3931
  %v3962 = vpack.c.b16 %v3934, %v3932
  %v3963 = vpack.c.b16 %v3937, %v3935
  %v3964 = vpack.c.b16 %v3938, %v3936
  %v3965 = vpack.c.b16 %v3941, %v3939
  %v3966 = vpack.c.b16 %v3942, %v3940
  %v3967 = vpack.c.b16 %v3945, %v3943
  %v3968 = vpack.c.b16 %v3946, %v3944
  %3991 = vmatprep.subr.bf16.mxu0 0
  %3992 = vmatpush1.bf16.msra.mxu0 %v256
  %3993 = vmatprep.subr.bf16.mxu0 0
  %3994 = vmatpush1.bf16.msra.mxu0 %v257
  %3995 = vmatprep.subr.bf16.mxu0 0
  %3996 = vmatpush1.bf16.msra.mxu0 %v258
  %3997 = vmatprep.subr.bf16.mxu0 0
  %3998 = vmatpush1.bf16.msra.mxu0 %v259
  %3999 = vmatprep.subr.bf16.mxu0 0
  %4000 = vmatpush1.bf16.msra.mxu0 %v260
  %4001 = vmatprep.subr.bf16.mxu0 0
  %4002 = vmatpush1.bf16.msra.mxu0 %v261
  %4003 = vmatprep.subr.bf16.mxu0 0
  %4004 = vmatpush1.bf16.msra.mxu0 %v262
  %4005 = vmatprep.subr.bf16.mxu0 0
  %4006 = vmatpush1.bf16.msra.mxu0 %v263
  %4007 = vmatprep.subr.bf16.mxu0 0
  %4008 = vmatpush1.bf16.msra.mxu0 %v264
  %4009 = vmatprep.subr.bf16.mxu0 0
  %4010 = vmatpush1.bf16.msra.mxu0 %v265
  %4011 = vmatprep.subr.bf16.mxu0 0
  %4012 = vmatpush1.bf16.msra.mxu0 %v266
  %4013 = vmatprep.subr.bf16.mxu0 0
  %4014 = vmatpush1.bf16.msra.mxu0 %v267
  %4015 = vmatprep.subr.bf16.mxu0 0
  %4016 = vmatpush1.bf16.msra.mxu0 %v268
  %4017 = vmatprep.subr.bf16.mxu0 0
  %4018 = vmatpush1.bf16.msra.mxu0 %v269
  %4019 = vmatprep.subr.bf16.mxu0 0
  %4020 = vmatpush1.bf16.msra.mxu0 %v270
  %4021 = vmatprep.subr.bf16.mxu0 0
  %4022 = vmatpush1.bf16.msra.mxu0 %v271
  %4023 = vmatprep.mubr.bf16.mxu0 %v3948
  %4024 = vmatmul.mubr.bf16.gmra.mrb[0].mxu0 %v3947
  %v4025 = vpop.f32.mrb[0].mxu0
  %v4026 = vadd.f32 %v80, %v4025
  %v4027 = vpop.f32.mrb[0].mxu0
  %v4028 = vpop.f32.mrb[0].mxu0
  %v4029 = vadd.f32 %v80, %v4028
  %v4030 = vpop.f32.mrb[0].mxu0
  %4031 = vmatprep.mubr.bf16.mxu0 %v3950
  %4032 = vmatmul.mubr.bf16.gmra.mrb[0].mxu0 %v3949
  %v4033 = vpop.f32.mrb[0].mxu0
  %v4034 = vadd.f32 %v80, %v4033
  %v4035 = vpop.f32.mrb[0].mxu0
  %v4036 = vpop.f32.mrb[0].mxu0
  %v4037 = vadd.f32 %v80, %v4036
  %v4038 = vpop.f32.mrb[0].mxu0
  %4039 = vmatprep.mubr.bf16.mxu0 %v3952
  %4040 = vmatmul.mubr.bf16.gmra.mrb[0].mxu0 %v3951
  %v4041 = vpop.f32.mrb[0].mxu0
  %v4042 = vadd.f32 %v80, %v4041
  %v4043 = vpop.f32.mrb[0].mxu0
  %v4044 = vpop.f32.mrb[0].mxu0
  %v4045 = vadd.f32 %v80, %v4044
  %v4046 = vpop.f32.mrb[0].mxu0
  %4047 = vmatprep.mubr.bf16.mxu0 %v3954
  %4048 = vmatmul.mubr.bf16.gmra.mrb[0].mxu0 %v3953
  %v4049 = vpop.f32.mrb[0].mxu0
  %v4050 = vadd.f32 %v80, %v4049
  %v4051 = vpop.f32.mrb[0].mxu0
  %v4052 = vpop.f32.mrb[0].mxu0
  %v4053 = vadd.f32 %v80, %v4052
  %v4054 = vpop.f32.mrb[0].mxu0
  %4055 = vmatprep.mubr.bf16.mxu0 %v3956
  %4056 = vmatmul.mubr.bf16.gmra.mrb[0].mxu0 %v3955
  %v4057 = vpop.f32.mrb[0].mxu0
  %v4058 = vadd.f32 %v80, %v4057
  %v4059 = vpop.f32.mrb[0].mxu0
  %v4060 = vpop.f32.mrb[0].mxu0
  %v4061 = vadd.f32 %v80, %v4060
  %v4062 = vpop.f32.mrb[0].mxu0
  %4063 = vmatprep.mubr.bf16.mxu0 %v3958
  %4064 = vmatmul.mubr.bf16.gmra.mrb[0].mxu0 %v3957
  %v4065 = vpop.f32.mrb[0].mxu0
  %v4066 = vadd.f32 %v80, %v4065
  %v4067 = vpop.f32.mrb[0].mxu0
  %v4068 = vpop.f32.mrb[0].mxu0
  %v4069 = vadd.f32 %v80, %v4068
  %v4070 = vpop.f32.mrb[0].mxu0
  %4071 = vmatprep.mubr.bf16.mxu0 %v3960
  %4072 = vmatmul.mubr.bf16.gmra.mrb[0].mxu0 %v3959
  %v4073 = vpop.f32.mrb[0].mxu0
  %v4074 = vadd.f32 %v80, %v4073
  %v4075 = vpop.f32.mrb[0].mxu0
  %v4076 = vpop.f32.mrb[0].mxu0
  %v4077 = vadd.f32 %v80, %v4076
  %v4078 = vpop.f32.mrb[0].mxu0
  %4079 = vmatprep.mubr.bf16.mxu0 %v3962
  %4080 = vmatmul.mubr.bf16.gmra.mrb[0].mxu0 %v3961
  %v4081 = vpop.f32.mrb[0].mxu0
  %v4082 = vadd.f32 %v80, %v4081
  %v4083 = vpop.f32.mrb[0].mxu0
  %v4084 = vpop.f32.mrb[0].mxu0
  %v4085 = vadd.f32 %v80, %v4084
  %v4086 = vpop.f32.mrb[0].mxu0
  %4087 = vmatprep.mubr.bf16.mxu0 %v3964
  %4088 = vmatmul.mubr.bf16.gmra.mrb[0].mxu0 %v3963
  %v4089 = vpop.f32.mrb[0].mxu0
  %v4090 = vadd.f32 %v80, %v4089
  %v4091 = vpop.f32.mrb[0].mxu0
  %v4092 = vpop.f32.mrb[0].mxu0
  %v4093 = vadd.f32 %v80, %v4092
  %v4094 = vpop.f32.mrb[0].mxu0
  %4095 = vmatprep.mubr.bf16.mxu0 %v3966
  %4096 = vmatmul.mubr.bf16.gmra.mrb[0].mxu0 %v3965
  %v4097 = vpop.f32.mrb[0].mxu0
  %v4098 = vadd.f32 %v80, %v4097
  %v4099 = vpop.f32.mrb[0].mxu0
  %v4100 = vpop.f32.mrb[0].mxu0
  %v4101 = vadd.f32 %v80, %v4100
  %v4102 = vpop.f32.mrb[0].mxu0
  %4103 = vmatprep.mubr.bf16.mxu0 %v3968
  %4104 = vmatmul.mubr.bf16.gmra.mrb[0].mxu0 %v3967
  %v4105 = vpop.f32.mrb[0].mxu0
  %v4106 = vadd.f32 %v80, %v4105
  %v4107 = vpop.f32.mrb[0].mxu0
  %v4108 = vpop.f32.mrb[0].mxu0
  %v4109 = vadd.f32 %v80, %v4108
  %v4110 = vpop.f32.mrb[0].mxu0
  %4111 = vdwg.mxu0
  %v4112 = vmax.f32 %v4026, 0.0
  %v4113 = vmax.f32 %v4029, 0.0
  %v4114 = vmax.f32 %v4034, 0.0
  %v4115 = vmax.f32 %v4037, 0.0
  %v4116 = vmax.f32 %v4042, 0.0
  %v4117 = vmax.f32 %v4045, 0.0
  %v4118 = vmax.f32 %v4050, 0.0
  %v4119 = vmax.f32 %v4053, 0.0
  %v4120 = vmax.f32 %v4058, 0.0
  %v4121 = vmax.f32 %v4061, 0.0
  %v4122 = vmax.f32 %v4066, 0.0
  %v4123 = vmax.f32 %v4069, 0.0
  %v4124 = vmax.f32 %v4074, 0.0
  %v4125 = vmax.f32 %v4077, 0.0
  %v4126 = vmax.f32 %v4082, 0.0
  %v4127 = vmax.f32 %v4085, 0.0
  %v4128 = vmax.f32 %v4090, 0.0
  %v4129 = vmax.f32 %v4093, 0.0
  %v4130 = vmax.f32 %v4098, 0.0
  %v4131 = vmax.f32 %v4101, 0.0
  %v4132 = vmax.f32 %v4106, 0.0
  %v4133 = vmax.f32 %v4109, 0.0
  %v4134 = vpack.c.bf16 %v4113, %v4112
  %v4135 = vpack.c.bf16 %v4115, %v4114
  %v4136 = vpack.c.bf16 %v4117, %v4116
  %v4137 = vpack.c.bf16 %v4119, %v4118
  %v4138 = vpack.c.bf16 %v4121, %v4120
  %v4139 = vpack.c.bf16 %v4123, %v4122
  %v4140 = vpack.c.bf16 %v4125, %v4124
  %v4141 = vpack.c.bf16 %v4127, %v4126
  %v4142 = vpack.c.bf16 %v4129, %v4128
  %v4143 = vpack.c.bf16 %v4131, %v4130
  %v4144 = vpack.c.bf16 %v4133, %v4132
  %v4145 = vld [vmem:[%s3 + $0x40] sm:$0xf]
  %v4146 = vld [vmem:[%s3 + $0x44] sm:$0xf]
  %v4149 = vunpack.c.l.b16 %v4145
  %v4150 = vunpack.c.l.b16 %v4146
  %v4151 = vpack.c.b16 %v4150, %v4149
  %v4154 = vsel %vm738, %v4134, 0
  %v4157 = vsel %vm738, %v4135, 0
  %v4160 = vsel %vm738, %v4136, 0
  %v4163 = vsel %vm738, %v4137, 0
  %v4166 = vsel %vm738, %v4138, 0
  %v4169 = vsel %vm738, %v4139, 0
  %v4172 = vsel %vm738, %v4140, 0
  %v4175 = vsel %vm738, %v4141, 0
  %v4178 = vsel %vm738, %v4142, 0
  %v4181 = vsel %vm738, %v4143, 0
  %v4184 = vsel %vm738, %v4144, 0
  %4186 = vmatprep.subr.bf16.mxu0 0
  %4187 = vmatpush1.bf16.msra.mxu0 %v4151
  %4188 = vmatprep.subr.bf16.mxu0 0
  %4189 = vmatpush1.bf16.msra.mxu0 0
  %4190 = vmatprep.subr.bf16.mxu0 0
  %4191 = vmatpush1.bf16.msra.mxu0 0
  %4192 = vmatprep.subr.bf16.mxu0 0
  %4193 = vmatpush1.bf16.msra.mxu0 0
  %4194 = vmatprep.subr.bf16.mxu0 0
  %4195 = vmatpush1.bf16.msra.mxu0 0
  %4196 = vmatprep.subr.bf16.mxu0 0
  %4197 = vmatpush1.bf16.msra.mxu0 0
  %4198 = vmatprep.subr.bf16.mxu0 0
  %4199 = vmatpush1.bf16.msra.mxu0 0
  %4200 = vmatprep.subr.bf16.mxu0 0
  %4201 = vmatpush1.bf16.msra.mxu0 0
  %4202 = vmatprep.subr.bf16.mxu0 0
  %4203 = vmatpush1.bf16.msra.mxu0 0
  %4204 = vmatprep.subr.bf16.mxu0 0
  %4205 = vmatpush1.bf16.msra.mxu0 0
  %4206 = vmatprep.subr.bf16.mxu0 0
  %4207 = vmatpush1.bf16.msra.mxu0 0
  %4208 = vmatprep.subr.bf16.mxu0 0
  %4209 = vmatpush1.bf16.msra.mxu0 0
  %4210 = vmatprep.subr.bf16.mxu0 0
  %4211 = vmatpush1.bf16.msra.mxu0 0
  %4212 = vmatprep.subr.bf16.mxu0 0
  %4213 = vmatpush1.bf16.msra.mxu0 0
  %4214 = vmatprep.subr.bf16.mxu0 0
  %4215 = vmatpush1.bf16.msra.mxu0 0
  %4216 = vmatprep.subr.bf16.mxu0 0
  %4217 = vmatpush1.bf16.msra.mxu0 0
  %4218 = vmatprep.mubr.bf16.mxu0 0
  %4219 = vmatmul.mubr.bf16.gmra.mrb[0].mxu0 %v4154
  %v4220 = vpop.f32.mrb[0].mxu0
  %v4221 = vadd.f32 0.0, %v4220
  %v4222 = vpop.f32.mrb[0].mxu0
  %v4223 = vpop.f32.mrb[0].mxu0
  %v4224 = vadd.f32 0.0, %v4223
  %v4225 = vpop.f32.mrb[0].mxu0
  %4226 = vmatprep.mubr.bf16.mxu0 0
  %4227 = vmatmul.mubr.bf16.gmra.mrb[0].mxu0 %v4157
  %v4228 = vpop.f32.mrb[0].mxu0
  %v4229 = vadd.f32 0.0, %v4228
  %v4230 = vpop.f32.mrb[0].mxu0
  %v4231 = vpop.f32.mrb[0].mxu0
  %v4232 = vadd.f32 0.0, %v4231
  %v4233 = vpop.f32.mrb[0].mxu0
  %4234 = vmatprep.mubr.bf16.mxu0 0
  %4235 = vmatmul.mubr.bf16.gmra.mrb[0].mxu0 %v4160
  %v4236 = vpop.f32.mrb[0].mxu0
  %v4237 = vadd.f32 0.0, %v4236
  %v4238 = vpop.f32.mrb[0].mxu0
  %v4239 = vpop.f32.mrb[0].mxu0
  %v4240 = vadd.f32 0.0, %v4239
  %v4241 = vpop.f32.mrb[0].mxu0
  %4242 = vmatprep.mubr.bf16.mxu0 0
  %4243 = vmatmul.mubr.bf16.gmra.mrb[0].mxu0 %v4163
  %v4244 = vpop.f32.mrb[0].mxu0
  %v4245 = vadd.f32 0.0, %v4244
  %v4246 = vpop.f32.mrb[0].mxu0
  %v4247 = vpop.f32.mrb[0].mxu0
  %v4248 = vadd.f32 0.0, %v4247
  %v4249 = vpop.f32.mrb[0].mxu0
  %4250 = vmatprep.mubr.bf16.mxu0 0
  %4251 = vmatmul.mubr.bf16.gmra.mrb[0].mxu0 %v4166
  %v4252 = vpop.f32.mrb[0].mxu0
  %v4253 = vadd.f32 0.0, %v4252
  %v4254 = vpop.f32.mrb[0].mxu0
  %v4255 = vpop.f32.mrb[0].mxu0
  %v4256 = vadd.f32 0.0, %v4255
  %v4257 = vpop.f32.mrb[0].mxu0
  %4258 = vmatprep.mubr.bf16.mxu0 0
  %4259 = vmatmul.mubr.bf16.gmra.mrb[0].mxu0 %v4169
  %v4260 = vpop.f32.mrb[0].mxu0
  %v4261 = vadd.f32 0.0, %v4260
  %v4262 = vpop.f32.mrb[0].mxu0
  %v4263 = vpop.f32.mrb[0].mxu0
  %v4264 = vadd.f32 0.0, %v4263
  %v4265 = vpop.f32.mrb[0].mxu0
  %4266 = vmatprep.mubr.bf16.mxu0 0
  %4267 = vmatmul.mubr.bf16.gmra.mrb[0].mxu0 %v4172
  %v4268 = vpop.f32.mrb[0].mxu0
  %v4269 = vadd.f32 0.0, %v4268
  %v4270 = vpop.f32.mrb[0].mxu0
  %v4271 = vpop.f32.mrb[0].mxu0
  %v4272 = vadd.f32 0.0, %v4271
  %v4273 = vpop.f32.mrb[0].mxu0
  %4274 = vmatprep.mubr.bf16.mxu0 0
  %4275 = vmatmul.mubr.bf16.gmra.mrb[0].mxu0 %v4175
  %v4276 = vpop.f32.mrb[0].mxu0
  %v4277 = vadd.f32 0.0, %v4276
  %v4278 = vpop.f32.mrb[0].mxu0
  %v4279 = vpop.f32.mrb[0].mxu0
  %v4280 = vadd.f32 0.0, %v4279
  %v4281 = vpop.f32.mrb[0].mxu0
  %4282 = vmatprep.mubr.bf16.mxu0 0
  %4283 = vmatmul.mubr.bf16.gmra.mrb[0].mxu0 %v4178
  %v4284 = vpop.f32.mrb[0].mxu0
  %v4285 = vadd.f32 0.0, %v4284
  %v4286 = vpop.f32.mrb[0].mxu0
  %v4287 = vpop.f32.mrb[0].mxu0
  %v4288 = vadd.f32 0.0, %v4287
  %v4289 = vpop.f32.mrb[0].mxu0
  %4290 = vmatprep.mubr.bf16.mxu0 0
  %4291 = vmatmul.mubr.bf16.gmra.mrb[0].mxu0 %v4181
  %v4292 = vpop.f32.mrb[0].mxu0
  %v4293 = vadd.f32 0.0, %v4292
  %v4294 = vpop.f32.mrb[0].mxu0
  %v4295 = vpop.f32.mrb[0].mxu0
  %v4296 = vadd.f32 0.0, %v4295
  %v4297 = vpop.f32.mrb[0].mxu0
  %4298 = vmatprep.mubr.bf16.mxu0 0
  %4299 = vmatmul.mubr.bf16.gmra.mrb[0].mxu0 %v4184
  %v4300 = vpop.f32.mrb[0].mxu0
  %v4301 = vadd.f32 0.0, %v4300
  %v4302 = vpop.f32.mrb[0].mxu0
  %v4303 = vpop.f32.mrb[0].mxu0
  %v4304 = vpop.f32.mrb[0].mxu0
  %4305 = vdwg.mxu0
  %v4306 = vadd.f32 %v3838, %v4221
  %v4307 = vadd.f32 %v3839, %v4224
  %v4308 = vadd.f32 %v3840, %v4229
  %v4309 = vadd.f32 %v3841, %v4232
  %v4310 = vadd.f32 %v3842, %v4237
  %v4311 = vadd.f32 %v3843, %v4240
  %v4312 = vadd.f32 %v3844, %v4245
  %v4313 = vadd.f32 %v3845, %v4248
  %v4314 = vadd.f32 %v3846, %v4253
  %v4315 = vadd.f32 %v3847, %v4256
  %v4316 = vadd.f32 %v3848, %v4261
  %v4317 = vadd.f32 %v3849, %v4264
  %v4318 = vadd.f32 %v3850, %v4269
  %v4319 = vadd.f32 %v3851, %v4272
  %v4320 = vadd.f32 %v3852, %v4277
  %v4321 = vadd.f32 %v3853, %v4280
  %v4322 = vadd.f32 %v3854, %v4285
  %v4323 = vadd.f32 %v3855, %v4288
  %v4324 = vadd.f32 %v3856, %v4293
  %v4325 = vadd.f32 %v3857, %v4296
  %v4326 = vadd.f32 %v3858, %v4301
  %v4327 = vld [vmem:[%s0 + $0x630] sm:$0xff]
  %v4328 = vld [vmem:[%s0 + $0x638] sm:$0xff]
  %v4329 = vld [vmem:[%s0 + $0x640] sm:$0xff]
  %v4330 = vld [vmem:[%s0 + $0x648] sm:$0xff]
  %v4331 = vld [vmem:[%s0 + $0x650] sm:$0xff]
  %v4332 = vld [vmem:[%s0 + $0x658] sm:$0xff]
  %v4333 = vld [vmem:[%s0 + $0x660] sm:$0xff]
  %v4334 = vld [vmem:[%s0 + $0x668] sm:$0xff]
  %v4335 = vld [vmem:[%s0 + $0x670] sm:$0xff]
  %v4336 = vld [vmem:[%s0 + $0x678] sm:$0xff]
  %v4337 = vld [vmem:[%s0 + $0x680] sm:$0xff]
  %v4338 = vld [vmem:[%s0 + $0x688] sm:$0xff]
  %v4339 = vld [vmem:[%s0 + $0x690] sm:$0xff]
  %v4340 = vld [vmem:[%s0 + $0x698] sm:$0xff]
  %v4341 = vld [vmem:[%s0 + $0x6a0] sm:$0xff]
  %v4342 = vld [vmem:[%s0 + $0x6a8] sm:$0xff]
  %v4343 = vld [vmem:[%s0 + $0x6b0] sm:$0xff]
  %v4344 = vld [vmem:[%s0 + $0x6b8] sm:$0xff]
  %v4345 = vld [vmem:[%s0 + $0x6c0] sm:$0xff]
  %v4346 = vld [vmem:[%s0 + $0x6c8] sm:$0xff]
  %v4347 = vld [vmem:[%s0 + $0x6d0] sm:$0xff]
  %v4348 = vld [vmem:[%s0 + $0x6d8] sm:$0xff]
  %v4371 = vunpack.c.l.b16 %v4327
  %v4372 = vunpack.c.h.b16 %v4327
  %v4373 = vunpack.c.l.b16 %v4328
  %v4374 = vunpack.c.h.b16 %v4328
  %v4375 = vunpack.c.l.b16 %v4329
  %v4376 = vunpack.c.h.b16 %v4329
  %v4377 = vunpack.c.l.b16 %v4330
  %v4378 = vunpack.c.h.b16 %v4330
  %v4379 = vunpack.c.l.b16 %v4331
  %v4380 = vunpack.c.h.b16 %v4331
  %v4381 = vunpack.c.l.b16 %v4332
  %v4382 = vunpack.c.h.b16 %v4332
  %v4383 = vunpack.c.l.b16 %v4333
  %v4384 = vunpack.c.h.b16 %v4333
  %v4385 = vunpack.c.l.b16 %v4334
  %v4386 = vunpack.c.h.b16 %v4334
  %v4387 = vunpack.c.l.b16 %v4335
  %v4388 = vunpack.c.h.b16 %v4335
  %v4389 = vunpack.c.l.b16 %v4336
  %v4390 = vunpack.c.h.b16 %v4336
  %v4391 = vunpack.c.l.b16 %v4337
  %v4392 = vunpack.c.h.b16 %v4337
  %v4393 = vunpack.c.l.b16 %v4338
  %v4394 = vunpack.c.h.b16 %v4338
  %v4395 = vunpack.c.l.b16 %v4339
  %v4396 = vunpack.c.h.b16 %v4339
  %v4397 = vunpack.c.l.b16 %v4340
  %v4398 = vunpack.c.h.b16 %v4340
  %v4399 = vunpack.c.l.b16 %v4341
  %v4400 = vunpack.c.h.b16 %v4341
  %v4401 = vunpack.c.l.b16 %v4342
  %v4402 = vunpack.c.h.b16 %v4342
  %v4403 = vunpack.c.l.b16 %v4343
  %v4404 = vunpack.c.h.b16 %v4343
  %v4405 = vunpack.c.l.b16 %v4344
  %v4406 = vunpack.c.h.b16 %v4344
  %v4407 = vunpack.c.l.b16 %v4345
  %v4408 = vunpack.c.h.b16 %v4345
  %v4409 = vunpack.c.l.b16 %v4346
  %v4410 = vunpack.c.h.b16 %v4346
  %v4411 = vunpack.c.l.b16 %v4347
  %v4412 = vunpack.c.h.b16 %v4347
  %v4413 = vunpack.c.l.b16 %v4348
  %v4414 = vunpack.c.h.b16 %v4348
  %v4415 = vpack.c.b16 %v4373, %v4371
  %v4416 = vpack.c.b16 %v4374, %v4372
  %v4417 = vpack.c.b16 %v4377, %v4375
  %v4418 = vpack.c.b16 %v4378, %v4376
  %v4419 = vpack.c.b16 %v4381, %v4379
  %v4420 = vpack.c.b16 %v4382, %v4380
  %v4421 = vpack.c.b16 %v4385, %v4383
  %v4422 = vpack.c.b16 %v4386, %v4384
  %v4423 = vpack.c.b16 %v4389, %v4387
  %v4424 = vpack.c.b16 %v4390, %v4388
  %v4425 = vpack.c.b16 %v4393, %v4391
  %v4426 = vpack.c.b16 %v4394, %v4392
  %v4427 = vpack.c.b16 %v4397, %v4395
  %v4428 = vpack.c.b16 %v4398, %v4396
  %v4429 = vpack.c.b16 %v4401, %v4399
  %v4430 = vpack.c.b16 %v4402, %v4400
  %v4431 = vpack.c.b16 %v4405, %v4403
  %v4432 = vpack.c.b16 %v4406, %v4404
  %v4433 = vpack.c.b16 %v4409, %v4407
  %v4434 = vpack.c.b16 %v4410, %v4408
  %v4435 = vpack.c.b16 %v4413, %v4411
  %v4436 = vpack.c.b16 %v4414, %v4412
  %4459 = vmatprep.subr.bf16.mxu0 0
  %4460 = vmatpush1.bf16.msra.mxu0 %v256
  %4461 = vmatprep.subr.bf16.mxu0 0
  %4462 = vmatpush1.bf16.msra.mxu0 %v257
  %4463 = vmatprep.subr.bf16.mxu0 0
  %4464 = vmatpush1.bf16.msra.mxu0 %v258
  %4465 = vmatprep.subr.bf16.mxu0 0
  %4466 = vmatpush1.bf16.msra.mxu0 %v259
  %4467 = vmatprep.subr.bf16.mxu0 0
  %4468 = vmatpush1.bf16.msra.mxu0 %v260
  %4469 = vmatprep.subr.bf16.mxu0 0
  %4470 = vmatpush1.bf16.msra.mxu0 %v261
  %4471 = vmatprep.subr.bf16.mxu0 0
  %4472 = vmatpush1.bf16.msra.mxu0 %v262
  %4473 = vmatprep.subr.bf16.mxu0 0
  %4474 = vmatpush1.bf16.msra.mxu0 %v263
  %4475 = vmatprep.subr.bf16.mxu0 0
  %4476 = vmatpush1.bf16.msra.mxu0 %v264
  %4477 = vmatprep.subr.bf16.mxu0 0
  %4478 = vmatpush1.bf16.msra.mxu0 %v265
  %4479 = vmatprep.subr.bf16.mxu0 0
  %4480 = vmatpush1.bf16.msra.mxu0 %v266
  %4481 = vmatprep.subr.bf16.mxu0 0
  %4482 = vmatpush1.bf16.msra.mxu0 %v267
  %4483 = vmatprep.subr.bf16.mxu0 0
  %4484 = vmatpush1.bf16.msra.mxu0 %v268
  %4485 = vmatprep.subr.bf16.mxu0 0
  %4486 = vmatpush1.bf16.msra.mxu0 %v269
  %4487 = vmatprep.subr.bf16.mxu0 0
  %4488 = vmatpush1.bf16.msra.mxu0 %v270
  %4489 = vmatprep.subr.bf16.mxu0 0
  %4490 = vmatpush1.bf16.msra.mxu0 %v271
  %4491 = vmatprep.mubr.bf16.mxu0 %v4416
  %4492 = vmatmul.mubr.bf16.gmra.mrb[0].mxu0 %v4415
  %v4493 = vpop.f32.mrb[0].mxu0
  %v4494 = vadd.f32 %v80, %v4493
  %v4495 = vpop.f32.mrb[0].mxu0
  %v4496 = vpop.f32.mrb[0].mxu0
  %v4497 = vadd.f32 %v80, %v4496
  %v4498 = vpop.f32.mrb[0].mxu0
  %4499 = vmatprep.mubr.bf16.mxu0 %v4418
  %4500 = vmatmul.mubr.bf16.gmra.mrb[0].mxu0 %v4417
  %v4501 = vpop.f32.mrb[0].mxu0
  %v4502 = vadd.f32 %v80, %v4501
  %v4503 = vpop.f32.mrb[0].mxu0
  %v4504 = vpop.f32.mrb[0].mxu0
  %v4505 = vadd.f32 %v80, %v4504
  %v4506 = vpop.f32.mrb[0].mxu0
  %4507 = vmatprep.mubr.bf16.mxu0 %v4420
  %4508 = vmatmul.mubr.bf16.gmra.mrb[0].mxu0 %v4419
  %v4509 = vpop.f32.mrb[0].mxu0
  %v4510 = vadd.f32 %v80, %v4509
  %v4511 = vpop.f32.mrb[0].mxu0
  %v4512 = vpop.f32.mrb[0].mxu0
  %v4513 = vadd.f32 %v80, %v4512
  %v4514 = vpop.f32.mrb[0].mxu0
  %4515 = vmatprep.mubr.bf16.mxu0 %v4422
  %4516 = vmatmul.mubr.bf16.gmra.mrb[0].mxu0 %v4421
  %v4517 = vpop.f32.mrb[0].mxu0
  %v4518 = vadd.f32 %v80, %v4517
  %v4519 = vpop.f32.mrb[0].mxu0
  %v4520 = vpop.f32.mrb[0].mxu0
  %v4521 = vadd.f32 %v80, %v4520
  %v4522 = vpop.f32.mrb[0].mxu0
  %4523 = vmatprep.mubr.bf16.mxu0 %v4424
  %4524 = vmatmul.mubr.bf16.gmra.mrb[0].mxu0 %v4423
  %v4525 = vpop.f32.mrb[0].mxu0
  %v4526 = vadd.f32 %v80, %v4525
  %v4527 = vpop.f32.mrb[0].mxu0
  %v4528 = vpop.f32.mrb[0].mxu0
  %v4529 = vadd.f32 %v80, %v4528
  %v4530 = vpop.f32.mrb[0].mxu0
  %4531 = vmatprep.mubr.bf16.mxu0 %v4426
  %4532 = vmatmul.mubr.bf16.gmra.mrb[0].mxu0 %v4425
  %v4533 = vpop.f32.mrb[0].mxu0
  %v4534 = vadd.f32 %v80, %v4533
  %v4535 = vpop.f32.mrb[0].mxu0
  %v4536 = vpop.f32.mrb[0].mxu0
  %v4537 = vadd.f32 %v80, %v4536
  %v4538 = vpop.f32.mrb[0].mxu0
  %4539 = vmatprep.mubr.bf16.mxu0 %v4428
  %4540 = vmatmul.mubr.bf16.gmra.mrb[0].mxu0 %v4427
  %v4541 = vpop.f32.mrb[0].mxu0
  %v4542 = vadd.f32 %v80, %v4541
  %v4543 = vpop.f32.mrb[0].mxu0
  %v4544 = vpop.f32.mrb[0].mxu0
  %v4545 = vadd.f32 %v80, %v4544
  %v4546 = vpop.f32.mrb[0].mxu0
  %4547 = vmatprep.mubr.bf16.mxu0 %v4430
  %4548 = vmatmul.mubr.bf16.gmra.mrb[0].mxu0 %v4429
  %v4549 = vpop.f32.mrb[0].mxu0
  %v4550 = vadd.f32 %v80, %v4549
  %v4551 = vpop.f32.mrb[0].mxu0
  %v4552 = vpop.f32.mrb[0].mxu0
  %v4553 = vadd.f32 %v80, %v4552
  %v4554 = vpop.f32.mrb[0].mxu0
  %4555 = vmatprep.mubr.bf16.mxu0 %v4432
  %4556 = vmatmul.mubr.bf16.gmra.mrb[0].mxu0 %v4431
  %v4557 = vpop.f32.mrb[0].mxu0
  %v4558 = vadd.f32 %v80, %v4557
  %v4559 = vpop.f32.mrb[0].mxu0
  %v4560 = vpop.f32.mrb[0].mxu0
  %v4561 = vadd.f32 %v80, %v4560
  %v4562 = vpop.f32.mrb[0].mxu0
  %4563 = vmatprep.mubr.bf16.mxu0 %v4434
  %4564 = vmatmul.mubr.bf16.gmra.mrb[0].mxu0 %v4433
  %v4565 = vpop.f32.mrb[0].mxu0
  %v4566 = vadd.f32 %v80, %v4565
  %v4567 = vpop.f32.mrb[0].mxu0
  %v4568 = vpop.f32.mrb[0].mxu0
  %v4569 = vadd.f32 %v80, %v4568
  %v4570 = vpop.f32.mrb[0].mxu0
  %4571 = vmatprep.mubr.bf16.mxu0 %v4436
  %4572 = vmatmul.mubr.bf16.gmra.mrb[0].mxu0 %v4435
  %v4573 = vpop.f32.mrb[0].mxu0
  %v4574 = vadd.f32 %v80, %v4573
  %v4575 = vpop.f32.mrb[0].mxu0
  %v4576 = vpop.f32.mrb[0].mxu0
  %v4577 = vadd.f32 %v80, %v4576
  %v4578 = vpop.f32.mrb[0].mxu0
  %4579 = vdwg.mxu0
  %v4580 = vmax.f32 %v4494, 0.0
  %v4581 = vmax.f32 %v4497, 0.0
  %v4582 = vmax.f32 %v4502, 0.0
  %v4583 = vmax.f32 %v4505, 0.0
  %v4584 = vmax.f32 %v4510, 0.0
  %v4585 = vmax.f32 %v4513, 0.0
  %v4586 = vmax.f32 %v4518, 0.0
  %v4587 = vmax.f32 %v4521, 0.0
  %v4588 = vmax.f32 %v4526, 0.0
  %v4589 = vmax.f32 %v4529, 0.0
  %v4590 = vmax.f32 %v4534, 0.0
  %v4591 = vmax.f32 %v4537, 0.0
  %v4592 = vmax.f32 %v4542, 0.0
  %v4593 = vmax.f32 %v4545, 0.0
  %v4594 = vmax.f32 %v4550, 0.0
  %v4595 = vmax.f32 %v4553, 0.0
  %v4596 = vmax.f32 %v4558, 0.0
  %v4597 = vmax.f32 %v4561, 0.0
  %v4598 = vmax.f32 %v4566, 0.0
  %v4599 = vmax.f32 %v4569, 0.0
  %v4600 = vmax.f32 %v4574, 0.0
  %v4601 = vmax.f32 %v4577, 0.0
  %v4602 = vpack.c.bf16 %v4581, %v4580
  %v4603 = vpack.c.bf16 %v4583, %v4582
  %v4604 = vpack.c.bf16 %v4585, %v4584
  %v4605 = vpack.c.bf16 %v4587, %v4586
  %v4606 = vpack.c.bf16 %v4589, %v4588
  %v4607 = vpack.c.bf16 %v4591, %v4590
  %v4608 = vpack.c.bf16 %v4593, %v4592
  %v4609 = vpack.c.bf16 %v4595, %v4594
  %v4610 = vpack.c.bf16 %v4597, %v4596
  %v4611 = vpack.c.bf16 %v4599, %v4598
  %v4612 = vpack.c.bf16 %v4601, %v4600
  %v4613 = vld [vmem:[%s3 + $0x48] sm:$0xf]
  %v4614 = vld [vmem:[%s3 + $0x4c] sm:$0xf]
  %v4617 = vunpack.c.l.b16 %v4613
  %v4618 = vunpack.c.l.b16 %v4614
  %v4619 = vpack.c.b16 %v4618, %v4617
  %v4622 = vsel %vm738, %v4602, 0
  %v4625 = vsel %vm738, %v4603, 0
  %v4628 = vsel %vm738, %v4604, 0
  %v4631 = vsel %vm738, %v4605, 0
  %v4634 = vsel %vm738, %v4606, 0
  %v4637 = vsel %vm738, %v4607, 0
  %v4640 = vsel %vm738, %v4608, 0
  %v4643 = vsel %vm738, %v4609, 0
  %v4646 = vsel %vm738, %v4610, 0
  %v4649 = vsel %vm738, %v4611, 0
  %v4652 = vsel %vm738, %v4612, 0
  %4654 = vmatprep.subr.bf16.mxu0 0
  %4655 = vmatpush1.bf16.msra.mxu0 %v4619
  %4656 = vmatprep.subr.bf16.mxu0 0
  %4657 = vmatpush1.bf16.msra.mxu0 0
  %4658 = vmatprep.subr.bf16.mxu0 0
  %4659 = vmatpush1.bf16.msra.mxu0 0
  %4660 = vmatprep.subr.bf16.mxu0 0
  %4661 = vmatpush1.bf16.msra.mxu0 0
  %4662 = vmatprep.subr.bf16.mxu0 0
  %4663 = vmatpush1.bf16.msra.mxu0 0
  %4664 = vmatprep.subr.bf16.mxu0 0
  %4665 = vmatpush1.bf16.msra.mxu0 0
  %4666 = vmatprep.subr.bf16.mxu0 0
  %4667 = vmatpush1.bf16.msra.mxu0 0
  %4668 = vmatprep.subr.bf16.mxu0 0
  %4669 = vmatpush1.bf16.msra.mxu0 0
  %4670 = vmatprep.subr.bf16.mxu0 0
  %4671 = vmatpush1.bf16.msra.mxu0 0
  %4672 = vmatprep.subr.bf16.mxu0 0
  %4673 = vmatpush1.bf16.msra.mxu0 0
  %4674 = vmatprep.subr.bf16.mxu0 0
  %4675 = vmatpush1.bf16.msra.mxu0 0
  %4676 = vmatprep.subr.bf16.mxu0 0
  %4677 = vmatpush1.bf16.msra.mxu0 0
  %4678 = vmatprep.subr.bf16.mxu0 0
  %4679 = vmatpush1.bf16.msra.mxu0 0
  %4680 = vmatprep.subr.bf16.mxu0 0
  %4681 = vmatpush1.bf16.msra.mxu0 0
  %4682 = vmatprep.subr.bf16.mxu0 0
  %4683 = vmatpush1.bf16.msra.mxu0 0
  %4684 = vmatprep.subr.bf16.mxu0 0
  %4685 = vmatpush1.bf16.msra.mxu0 0
  %4686 = vmatprep.mubr.bf16.mxu0 0
  %4687 = vmatmul.mubr.bf16.gmra.mrb[0].mxu0 %v4622
  %v4688 = vpop.f32.mrb[0].mxu0
  %v4689 = vadd.f32 0.0, %v4688
  %v4690 = vpop.f32.mrb[0].mxu0
  %v4691 = vpop.f32.mrb[0].mxu0
  %v4692 = vadd.f32 0.0, %v4691
  %v4693 = vpop.f32.mrb[0].mxu0
  %4694 = vmatprep.mubr.bf16.mxu0 0
  %4695 = vmatmul.mubr.bf16.gmra.mrb[0].mxu0 %v4625
  %v4696 = vpop.f32.mrb[0].mxu0
  %v4697 = vadd.f32 0.0, %v4696
  %v4698 = vpop.f32.mrb[0].mxu0
  %v4699 = vpop.f32.mrb[0].mxu0
  %v4700 = vadd.f32 0.0, %v4699
  %v4701 = vpop.f32.mrb[0].mxu0
  %4702 = vmatprep.mubr.bf16.mxu0 0
  %4703 = vmatmul.mubr.bf16.gmra.mrb[0].mxu0 %v4628
  %v4704 = vpop.f32.mrb[0].mxu0
  %v4705 = vadd.f32 0.0, %v4704
  %v4706 = vpop.f32.mrb[0].mxu0
  %v4707 = vpop.f32.mrb[0].mxu0
  %v4708 = vadd.f32 0.0, %v4707
  %v4709 = vpop.f32.mrb[0].mxu0
  %4710 = vmatprep.mubr.bf16.mxu0 0
  %4711 = vmatmul.mubr.bf16.gmra.mrb[0].mxu0 %v4631
  %v4712 = vpop.f32.mrb[0].mxu0
  %v4713 = vadd.f32 0.0, %v4712
  %v4714 = vpop.f32.mrb[0].mxu0
  %v4715 = vpop.f32.mrb[0].mxu0
  %v4716 = vadd.f32 0.0, %v4715
  %v4717 = vpop.f32.mrb[0].mxu0
  %4718 = vmatprep.mubr.bf16.mxu0 0
  %4719 = vmatmul.mubr.bf16.gmra.mrb[0].mxu0 %v4634
  %v4720 = vpop.f32.mrb[0].mxu0
  %v4721 = vadd.f32 0.0, %v4720
  %v4722 = vpop.f32.mrb[0].mxu0
  %v4723 = vpop.f32.mrb[0].mxu0
  %v4724 = vadd.f32 0.0, %v4723
  %v4725 = vpop.f32.mrb[0].mxu0
  %4726 = vmatprep.mubr.bf16.mxu0 0
  %4727 = vmatmul.mubr.bf16.gmra.mrb[0].mxu0 %v4637
  %v4728 = vpop.f32.mrb[0].mxu0
  %v4729 = vadd.f32 0.0, %v4728
  %v4730 = vpop.f32.mrb[0].mxu0
  %v4731 = vpop.f32.mrb[0].mxu0
  %v4732 = vadd.f32 0.0, %v4731
  %v4733 = vpop.f32.mrb[0].mxu0
  %4734 = vmatprep.mubr.bf16.mxu0 0
  %4735 = vmatmul.mubr.bf16.gmra.mrb[0].mxu0 %v4640
  %v4736 = vpop.f32.mrb[0].mxu0
  %v4737 = vadd.f32 0.0, %v4736
  %v4738 = vpop.f32.mrb[0].mxu0
  %v4739 = vpop.f32.mrb[0].mxu0
  %v4740 = vadd.f32 0.0, %v4739
  %v4741 = vpop.f32.mrb[0].mxu0
  %4742 = vmatprep.mubr.bf16.mxu0 0
  %4743 = vmatmul.mubr.bf16.gmra.mrb[0].mxu0 %v4643
  %v4744 = vpop.f32.mrb[0].mxu0
  %v4745 = vadd.f32 0.0, %v4744
  %v4746 = vpop.f32.mrb[0].mxu0
  %v4747 = vpop.f32.mrb[0].mxu0
  %v4748 = vadd.f32 0.0, %v4747
  %v4749 = vpop.f32.mrb[0].mxu0
  %4750 = vmatprep.mubr.bf16.mxu0 0
  %4751 = vmatmul.mubr.bf16.gmra.mrb[0].mxu0 %v4646
  %v4752 = vpop.f32.mrb[0].mxu0
  %v4753 = vadd.f32 0.0, %v4752
  %v4754 = vpop.f32.mrb[0].mxu0
  %v4755 = vpop.f32.mrb[0].mxu0
  %v4756 = vadd.f32 0.0, %v4755
  %v4757 = vpop.f32.mrb[0].mxu0
  %4758 = vmatprep.mubr.bf16.mxu0 0
  %4759 = vmatmul.mubr.bf16.gmra.mrb[0].mxu0 %v4649
  %v4760 = vpop.f32.mrb[0].mxu0
  %v4761 = vadd.f32 0.0, %v4760
  %v4762 = vpop.f32.mrb[0].mxu0
  %v4763 = vpop.f32.mrb[0].mxu0
  %v4764 = vadd.f32 0.0, %v4763
  %v4765 = vpop.f32.mrb[0].mxu0
  %4766 = vmatprep.mubr.bf16.mxu0 0
  %4767 = vmatmul.mubr.bf16.gmra.mrb[0].mxu0 %v4652
  %v4768 = vpop.f32.mrb[0].mxu0
  %v4769 = vadd.f32 0.0, %v4768
  %v4770 = vpop.f32.mrb[0].mxu0
  %v4771 = vpop.f32.mrb[0].mxu0
  %v4772 = vpop.f32.mrb[0].mxu0
  %4773 = vdwg.mxu0
  %v4774 = vadd.f32 %v4306, %v4689
  %v4775 = vadd.f32 %v4307, %v4692
  %v4776 = vadd.f32 %v4308, %v4697
  %v4777 = vadd.f32 %v4309, %v4700
  %v4778 = vadd.f32 %v4310, %v4705
  %v4779 = vadd.f32 %v4311, %v4708
  %v4780 = vadd.f32 %v4312, %v4713
  %v4781 = vadd.f32 %v4313, %v4716
  %v4782 = vadd.f32 %v4314, %v4721
  %v4783 = vadd.f32 %v4315, %v4724
  %v4784 = vadd.f32 %v4316, %v4729
  %v4785 = vadd.f32 %v4317, %v4732
  %v4786 = vadd.f32 %v4318, %v4737
  %v4787 = vadd.f32 %v4319, %v4740
  %v4788 = vadd.f32 %v4320, %v4745
  %v4789 = vadd.f32 %v4321, %v4748
  %v4790 = vadd.f32 %v4322, %v4753
  %v4791 = vadd.f32 %v4323, %v4756
  %v4792 = vadd.f32 %v4324, %v4761
  %v4793 = vadd.f32 %v4325, %v4764
  %v4794 = vadd.f32 %v4326, %v4769
  %v4795 = vld [vmem:[%s0 + $0x6e0] sm:$0xff]
  %v4796 = vld [vmem:[%s0 + $0x6e8] sm:$0xff]
  %v4797 = vld [vmem:[%s0 + $0x6f0] sm:$0xff]
  %v4798 = vld [vmem:[%s0 + $0x6f8] sm:$0xff]
  %v4799 = vld [vmem:[%s0 + $0x700] sm:$0xff]
  %v4800 = vld [vmem:[%s0 + $0x708] sm:$0xff]
  %v4801 = vld [vmem:[%s0 + $0x710] sm:$0xff]
  %v4802 = vld [vmem:[%s0 + $0x718] sm:$0xff]
  %v4803 = vld [vmem:[%s0 + $0x720] sm:$0xff]
  %v4804 = vld [vmem:[%s0 + $0x728] sm:$0xff]
  %v4805 = vld [vmem:[%s0 + $0x730] sm:$0xff]
  %v4806 = vld [vmem:[%s0 + $0x738] sm:$0xff]
  %v4807 = vld [vmem:[%s0 + $0x740] sm:$0xff]
  %v4808 = vld [vmem:[%s0 + $0x748] sm:$0xff]
  %v4809 = vld [vmem:[%s0 + $0x750] sm:$0xff]
  %v4810 = vld [vmem:[%s0 + $0x758] sm:$0xff]
  %v4811 = vld [vmem:[%s0 + $0x760] sm:$0xff]
  %v4812 = vld [vmem:[%s0 + $0x768] sm:$0xff]
  %v4813 = vld [vmem:[%s0 + $0x770] sm:$0xff]
  %v4814 = vld [vmem:[%s0 + $0x778] sm:$0xff]
  %v4815 = vld [vmem:[%s0 + $0x780] sm:$0xff]
  %v4816 = vld [vmem:[%s0 + $0x788] sm:$0xff]
  %v4839 = vunpack.c.l.b16 %v4795
  %v4840 = vunpack.c.h.b16 %v4795
  %v4841 = vunpack.c.l.b16 %v4796
  %v4842 = vunpack.c.h.b16 %v4796
  %v4843 = vunpack.c.l.b16 %v4797
  %v4844 = vunpack.c.h.b16 %v4797
  %v4845 = vunpack.c.l.b16 %v4798
  %v4846 = vunpack.c.h.b16 %v4798
  %v4847 = vunpack.c.l.b16 %v4799
  %v4848 = vunpack.c.h.b16 %v4799
  %v4849 = vunpack.c.l.b16 %v4800
  %v4850 = vunpack.c.h.b16 %v4800
  %v4851 = vunpack.c.l.b16 %v4801
  %v4852 = vunpack.c.h.b16 %v4801
  %v4853 = vunpack.c.l.b16 %v4802
  %v4854 = vunpack.c.h.b16 %v4802
  %v4855 = vunpack.c.l.b16 %v4803
  %v4856 = vunpack.c.h.b16 %v4803
  %v4857 = vunpack.c.l.b16 %v4804
  %v4858 = vunpack.c.h.b16 %v4804
  %v4859 = vunpack.c.l.b16 %v4805
  %v4860 = vunpack.c.h.b16 %v4805
  %v4861 = vunpack.c.l.b16 %v4806
  %v4862 = vunpack.c.h.b16 %v4806
  %v4863 = vunpack.c.l.b16 %v4807
  %v4864 = vunpack.c.h.b16 %v4807
  %v4865 = vunpack.c.l.b16 %v4808
  %v4866 = vunpack.c.h.b16 %v4808
  %v4867 = vunpack.c.l.b16 %v4809
  %v4868 = vunpack.c.h.b16 %v4809
  %v4869 = vunpack.c.l.b16 %v4810
  %v4870 = vunpack.c.h.b16 %v4810
  %v4871 = vunpack.c.l.b16 %v4811
  %v4872 = vunpack.c.h.b16 %v4811
  %v4873 = vunpack.c.l.b16 %v4812
  %v4874 = vunpack.c.h.b16 %v4812
  %v4875 = vunpack.c.l.b16 %v4813
  %v4876 = vunpack.c.h.b16 %v4813
  %v4877 = vunpack.c.l.b16 %v4814
  %v4878 = vunpack.c.h.b16 %v4814
  %v4879 = vunpack.c.l.b16 %v4815
  %v4880 = vunpack.c.h.b16 %v4815
  %v4881 = vunpack.c.l.b16 %v4816
  %v4882 = vunpack.c.h.b16 %v4816
  %v4883 = vpack.c.b16 %v4841, %v4839
  %v4884 = vpack.c.b16 %v4842, %v4840
  %v4885 = vpack.c.b16 %v4845, %v4843
  %v4886 = vpack.c.b16 %v4846, %v4844
  %v4887 = vpack.c.b16 %v4849, %v4847
  %v4888 = vpack.c.b16 %v4850, %v4848
  %v4889 = vpack.c.b16 %v4853, %v4851
  %v4890 = vpack.c.b16 %v4854, %v4852
  %v4891 = vpack.c.b16 %v4857, %v4855
  %v4892 = vpack.c.b16 %v4858, %v4856
  %v4893 = vpack.c.b16 %v4861, %v4859
  %v4894 = vpack.c.b16 %v4862, %v4860
  %v4895 = vpack.c.b16 %v4865, %v4863
  %v4896 = vpack.c.b16 %v4866, %v4864
  %v4897 = vpack.c.b16 %v4869, %v4867
  %v4898 = vpack.c.b16 %v4870, %v4868
  %v4899 = vpack.c.b16 %v4873, %v4871
  %v4900 = vpack.c.b16 %v4874, %v4872
  %v4901 = vpack.c.b16 %v4877, %v4875
  %v4902 = vpack.c.b16 %v4878, %v4876
  %v4903 = vpack.c.b16 %v4881, %v4879
  %v4904 = vpack.c.b16 %v4882, %v4880
  %4927 = vmatprep.subr.bf16.mxu0 0
  %4928 = vmatpush1.bf16.msra.mxu0 %v256
  %4929 = vmatprep.subr.bf16.mxu0 0
  %4930 = vmatpush1.bf16.msra.mxu0 %v257
  %4931 = vmatprep.subr.bf16.mxu0 0
  %4932 = vmatpush1.bf16.msra.mxu0 %v258
  %4933 = vmatprep.subr.bf16.mxu0 0
  %4934 = vmatpush1.bf16.msra.mxu0 %v259
  %4935 = vmatprep.subr.bf16.mxu0 0
  %4936 = vmatpush1.bf16.msra.mxu0 %v260
  %4937 = vmatprep.subr.bf16.mxu0 0
  %4938 = vmatpush1.bf16.msra.mxu0 %v261
  %4939 = vmatprep.subr.bf16.mxu0 0
  %4940 = vmatpush1.bf16.msra.mxu0 %v262
  %4941 = vmatprep.subr.bf16.mxu0 0
  %4942 = vmatpush1.bf16.msra.mxu0 %v263
  %4943 = vmatprep.subr.bf16.mxu0 0
  %4944 = vmatpush1.bf16.msra.mxu0 %v264
  %4945 = vmatprep.subr.bf16.mxu0 0
  %4946 = vmatpush1.bf16.msra.mxu0 %v265
  %4947 = vmatprep.subr.bf16.mxu0 0
  %4948 = vmatpush1.bf16.msra.mxu0 %v266
  %4949 = vmatprep.subr.bf16.mxu0 0
  %4950 = vmatpush1.bf16.msra.mxu0 %v267
  %4951 = vmatprep.subr.bf16.mxu0 0
  %4952 = vmatpush1.bf16.msra.mxu0 %v268
  %4953 = vmatprep.subr.bf16.mxu0 0
  %4954 = vmatpush1.bf16.msra.mxu0 %v269
  %4955 = vmatprep.subr.bf16.mxu0 0
  %4956 = vmatpush1.bf16.msra.mxu0 %v270
  %4957 = vmatprep.subr.bf16.mxu0 0
  %4958 = vmatpush1.bf16.msra.mxu0 %v271
  %4959 = vmatprep.mubr.bf16.mxu0 %v4884
  %4960 = vmatmul.mubr.bf16.gmra.mrb[0].mxu0 %v4883
  %v4961 = vpop.f32.mrb[0].mxu0
  %v4962 = vadd.f32 %v80, %v4961
  %v4963 = vpop.f32.mrb[0].mxu0
  %v4964 = vpop.f32.mrb[0].mxu0
  %v4965 = vadd.f32 %v80, %v4964
  %v4966 = vpop.f32.mrb[0].mxu0
  %4967 = vmatprep.mubr.bf16.mxu0 %v4886
  %4968 = vmatmul.mubr.bf16.gmra.mrb[0].mxu0 %v4885
  %v4969 = vpop.f32.mrb[0].mxu0
  %v4970 = vadd.f32 %v80, %v4969
  %v4971 = vpop.f32.mrb[0].mxu0
  %v4972 = vpop.f32.mrb[0].mxu0
  %v4973 = vadd.f32 %v80, %v4972
  %v4974 = vpop.f32.mrb[0].mxu0
  %4975 = vmatprep.mubr.bf16.mxu0 %v4888
  %4976 = vmatmul.mubr.bf16.gmra.mrb[0].mxu0 %v4887
  %v4977 = vpop.f32.mrb[0].mxu0
  %v4978 = vadd.f32 %v80, %v4977
  %v4979 = vpop.f32.mrb[0].mxu0
  %v4980 = vpop.f32.mrb[0].mxu0
  %v4981 = vadd.f32 %v80, %v4980
  %v4982 = vpop.f32.mrb[0].mxu0
  %4983 = vmatprep.mubr.bf16.mxu0 %v4890
  %4984 = vmatmul.mubr.bf16.gmra.mrb[0].mxu0 %v4889
  %v4985 = vpop.f32.mrb[0].mxu0
  %v4986 = vadd.f32 %v80, %v4985
  %v4987 = vpop.f32.mrb[0].mxu0
  %v4988 = vpop.f32.mrb[0].mxu0
  %v4989 = vadd.f32 %v80, %v4988
  %v4990 = vpop.f32.mrb[0].mxu0
  %4991 = vmatprep.mubr.bf16.mxu0 %v4892
  %4992 = vmatmul.mubr.bf16.gmra.mrb[0].mxu0 %v4891
  %v4993 = vpop.f32.mrb[0].mxu0
  %v4994 = vadd.f32 %v80, %v4993
  %v4995 = vpop.f32.mrb[0].mxu0
  %v4996 = vpop.f32.mrb[0].mxu0
  %v4997 = vadd.f32 %v80, %v4996
  %v4998 = vpop.f32.mrb[0].mxu0
  %4999 = vmatprep.mubr.bf16.mxu0 %v4894
  %5000 = vmatmul.mubr.bf16.gmra.mrb[0].mxu0 %v4893
  %v5001 = vpop.f32.mrb[0].mxu0
  %v5002 = vadd.f32 %v80, %v5001
  %v5003 = vpop.f32.mrb[0].mxu0
  %v5004 = vpop.f32.mrb[0].mxu0
  %v5005 = vadd.f32 %v80, %v5004
  %v5006 = vpop.f32.mrb[0].mxu0
  %5007 = vmatprep.mubr.bf16.mxu0 %v4896
  %5008 = vmatmul.mubr.bf16.gmra.mrb[0].mxu0 %v4895
  %v5009 = vpop.f32.mrb[0].mxu0
  %v5010 = vadd.f32 %v80, %v5009
  %v5011 = vpop.f32.mrb[0].mxu0
  %v5012 = vpop.f32.mrb[0].mxu0
  %v5013 = vadd.f32 %v80, %v5012
  %v5014 = vpop.f32.mrb[0].mxu0
  %5015 = vmatprep.mubr.bf16.mxu0 %v4898
  %5016 = vmatmul.mubr.bf16.gmra.mrb[0].mxu0 %v4897
  %v5017 = vpop.f32.mrb[0].mxu0
  %v5018 = vadd.f32 %v80, %v5017
  %v5019 = vpop.f32.mrb[0].mxu0
  %v5020 = vpop.f32.mrb[0].mxu0
  %v5021 = vadd.f32 %v80, %v5020
  %v5022 = vpop.f32.mrb[0].mxu0
  %5023 = vmatprep.mubr.bf16.mxu0 %v4900
  %5024 = vmatmul.mubr.bf16.gmra.mrb[0].mxu0 %v4899
  %v5025 = vpop.f32.mrb[0].mxu0
  %v5026 = vadd.f32 %v80, %v5025
  %v5027 = vpop.f32.mrb[0].mxu0
  %v5028 = vpop.f32.mrb[0].mxu0
  %v5029 = vadd.f32 %v80, %v5028
  %v5030 = vpop.f32.mrb[0].mxu0
  %5031 = vmatprep.mubr.bf16.mxu0 %v4902
  %5032 = vmatmul.mubr.bf16.gmra.mrb[0].mxu0 %v4901
  %v5033 = vpop.f32.mrb[0].mxu0
  %v5034 = vadd.f32 %v80, %v5033
  %v5035 = vpop.f32.mrb[0].mxu0
  %v5036 = vpop.f32.mrb[0].mxu0
  %v5037 = vadd.f32 %v80, %v5036
  %v5038 = vpop.f32.mrb[0].mxu0
  %5039 = vmatprep.mubr.bf16.mxu0 %v4904
  %5040 = vmatmul.mubr.bf16.gmra.mrb[0].mxu0 %v4903
  %v5041 = vpop.f32.mrb[0].mxu0
  %v5042 = vadd.f32 %v80, %v5041
  %v5043 = vpop.f32.mrb[0].mxu0
  %v5044 = vpop.f32.mrb[0].mxu0
  %v5045 = vadd.f32 %v80, %v5044
  %v5046 = vpop.f32.mrb[0].mxu0
  %5047 = vdwg.mxu0
  %v5048 = vmax.f32 %v4962, 0.0
  %v5049 = vmax.f32 %v4965, 0.0
  %v5050 = vmax.f32 %v4970, 0.0
  %v5051 = vmax.f32 %v4973, 0.0
  %v5052 = vmax.f32 %v4978, 0.0
  %v5053 = vmax.f32 %v4981, 0.0
  %v5054 = vmax.f32 %v4986, 0.0
  %v5055 = vmax.f32 %v4989, 0.0
  %v5056 = vmax.f32 %v4994, 0.0
  %v5057 = vmax.f32 %v4997, 0.0
  %v5058 = vmax.f32 %v5002, 0.0
  %v5059 = vmax.f32 %v5005, 0.0
  %v5060 = vmax.f32 %v5010, 0.0
  %v5061 = vmax.f32 %v5013, 0.0
  %v5062 = vmax.f32 %v5018, 0.0
  %v5063 = vmax.f32 %v5021, 0.0
  %v5064 = vmax.f32 %v5026, 0.0
  %v5065 = vmax.f32 %v5029, 0.0
  %v5066 = vmax.f32 %v5034, 0.0
  %v5067 = vmax.f32 %v5037, 0.0
  %v5068 = vmax.f32 %v5042, 0.0
  %v5069 = vmax.f32 %v5045, 0.0
  %v5070 = vpack.c.bf16 %v5049, %v5048
  %v5071 = vpack.c.bf16 %v5051, %v5050
  %v5072 = vpack.c.bf16 %v5053, %v5052
  %v5073 = vpack.c.bf16 %v5055, %v5054
  %v5074 = vpack.c.bf16 %v5057, %v5056
  %v5075 = vpack.c.bf16 %v5059, %v5058
  %v5076 = vpack.c.bf16 %v5061, %v5060
  %v5077 = vpack.c.bf16 %v5063, %v5062
  %v5078 = vpack.c.bf16 %v5065, %v5064
  %v5079 = vpack.c.bf16 %v5067, %v5066
  %v5080 = vpack.c.bf16 %v5069, %v5068
  %v5081 = vld [vmem:[%s3 + $0x50] sm:$0xf]
  %v5082 = vld [vmem:[%s3 + $0x54] sm:$0xf]
  %v5085 = vunpack.c.l.b16 %v5081
  %v5086 = vunpack.c.l.b16 %v5082
  %v5087 = vpack.c.b16 %v5086, %v5085
  %v5090 = vsel %vm738, %v5070, 0
  %v5093 = vsel %vm738, %v5071, 0
  %v5096 = vsel %vm738, %v5072, 0
  %v5099 = vsel %vm738, %v5073, 0
  %v5102 = vsel %vm738, %v5074, 0
  %v5105 = vsel %vm738, %v5075, 0
  %v5108 = vsel %vm738, %v5076, 0
  %v5111 = vsel %vm738, %v5077, 0
  %v5114 = vsel %vm738, %v5078, 0
  %v5117 = vsel %vm738, %v5079, 0
  %v5120 = vsel %vm738, %v5080, 0
  %5122 = vmatprep.subr.bf16.mxu0 0
  %5123 = vmatpush1.bf16.msra.mxu0 %v5087
  %5124 = vmatprep.subr.bf16.mxu0 0
  %5125 = vmatpush1.bf16.msra.mxu0 0
  %5126 = vmatprep.subr.bf16.mxu0 0
  %5127 = vmatpush1.bf16.msra.mxu0 0
  %5128 = vmatprep.subr.bf16.mxu0 0
  %5129 = vmatpush1.bf16.msra.mxu0 0
  %5130 = vmatprep.subr.bf16.mxu0 0
  %5131 = vmatpush1.bf16.msra.mxu0 0
  %5132 = vmatprep.subr.bf16.mxu0 0
  %5133 = vmatpush1.bf16.msra.mxu0 0
  %5134 = vmatprep.subr.bf16.mxu0 0
  %5135 = vmatpush1.bf16.msra.mxu0 0
  %5136 = vmatprep.subr.bf16.mxu0 0
  %5137 = vmatpush1.bf16.msra.mxu0 0
  %5138 = vmatprep.subr.bf16.mxu0 0
  %5139 = vmatpush1.bf16.msra.mxu0 0
  %5140 = vmatprep.subr.bf16.mxu0 0
  %5141 = vmatpush1.bf16.msra.mxu0 0
  %5142 = vmatprep.subr.bf16.mxu0 0
  %5143 = vmatpush1.bf16.msra.mxu0 0
  %5144 = vmatprep.subr.bf16.mxu0 0
  %5145 = vmatpush1.bf16.msra.mxu0 0
  %5146 = vmatprep.subr.bf16.mxu0 0
  %5147 = vmatpush1.bf16.msra.mxu0 0
  %5148 = vmatprep.subr.bf16.mxu0 0
  %5149 = vmatpush1.bf16.msra.mxu0 0
  %5150 = vmatprep.subr.bf16.mxu0 0
  %5151 = vmatpush1.bf16.msra.mxu0 0
  %5152 = vmatprep.subr.bf16.mxu0 0
  %5153 = vmatpush1.bf16.msra.mxu0 0
  %5154 = vmatprep.mubr.bf16.mxu0 0
  %5155 = vmatmul.mubr.bf16.gmra.mrb[0].mxu0 %v5090
  %v5156 = vpop.f32.mrb[0].mxu0
  %v5157 = vadd.f32 0.0, %v5156
  %v5158 = vpop.f32.mrb[0].mxu0
  %v5159 = vpop.f32.mrb[0].mxu0
  %v5160 = vadd.f32 0.0, %v5159
  %v5161 = vpop.f32.mrb[0].mxu0
  %5162 = vmatprep.mubr.bf16.mxu0 0
  %5163 = vmatmul.mubr.bf16.gmra.mrb[0].mxu0 %v5093
  %v5164 = vpop.f32.mrb[0].mxu0
  %v5165 = vadd.f32 0.0, %v5164
  %v5166 = vpop.f32.mrb[0].mxu0
  %v5167 = vpop.f32.mrb[0].mxu0
  %v5168 = vadd.f32 0.0, %v5167
  %v5169 = vpop.f32.mrb[0].mxu0
  %5170 = vmatprep.mubr.bf16.mxu0 0
  %5171 = vmatmul.mubr.bf16.gmra.mrb[0].mxu0 %v5096
  %v5172 = vpop.f32.mrb[0].mxu0
  %v5173 = vadd.f32 0.0, %v5172
  %v5174 = vpop.f32.mrb[0].mxu0
  %v5175 = vpop.f32.mrb[0].mxu0
  %v5176 = vadd.f32 0.0, %v5175
  %v5177 = vpop.f32.mrb[0].mxu0
  %5178 = vmatprep.mubr.bf16.mxu0 0
  %5179 = vmatmul.mubr.bf16.gmra.mrb[0].mxu0 %v5099
  %v5180 = vpop.f32.mrb[0].mxu0
  %v5181 = vadd.f32 0.0, %v5180
  %v5182 = vpop.f32.mrb[0].mxu0
  %v5183 = vpop.f32.mrb[0].mxu0
  %v5184 = vadd.f32 0.0, %v5183
  %v5185 = vpop.f32.mrb[0].mxu0
  %5186 = vmatprep.mubr.bf16.mxu0 0
  %5187 = vmatmul.mubr.bf16.gmra.mrb[0].mxu0 %v5102
  %v5188 = vpop.f32.mrb[0].mxu0
  %v5189 = vadd.f32 0.0, %v5188
  %v5190 = vpop.f32.mrb[0].mxu0
  %v5191 = vpop.f32.mrb[0].mxu0
  %v5192 = vadd.f32 0.0, %v5191
  %v5193 = vpop.f32.mrb[0].mxu0
  %5194 = vmatprep.mubr.bf16.mxu0 0
  %5195 = vmatmul.mubr.bf16.gmra.mrb[0].mxu0 %v5105
  %v5196 = vpop.f32.mrb[0].mxu0
  %v5197 = vadd.f32 0.0, %v5196
  %v5198 = vpop.f32.mrb[0].mxu0
  %v5199 = vpop.f32.mrb[0].mxu0
  %v5200 = vadd.f32 0.0, %v5199
  %v5201 = vpop.f32.mrb[0].mxu0
  %5202 = vmatprep.mubr.bf16.mxu0 0
  %5203 = vmatmul.mubr.bf16.gmra.mrb[0].mxu0 %v5108
  %v5204 = vpop.f32.mrb[0].mxu0
  %v5205 = vadd.f32 0.0, %v5204
  %v5206 = vpop.f32.mrb[0].mxu0
  %v5207 = vpop.f32.mrb[0].mxu0
  %v5208 = vadd.f32 0.0, %v5207
  %v5209 = vpop.f32.mrb[0].mxu0
  %5210 = vmatprep.mubr.bf16.mxu0 0
  %5211 = vmatmul.mubr.bf16.gmra.mrb[0].mxu0 %v5111
  %v5212 = vpop.f32.mrb[0].mxu0
  %v5213 = vadd.f32 0.0, %v5212
  %v5214 = vpop.f32.mrb[0].mxu0
  %v5215 = vpop.f32.mrb[0].mxu0
  %v5216 = vadd.f32 0.0, %v5215
  %v5217 = vpop.f32.mrb[0].mxu0
  %5218 = vmatprep.mubr.bf16.mxu0 0
  %5219 = vmatmul.mubr.bf16.gmra.mrb[0].mxu0 %v5114
  %v5220 = vpop.f32.mrb[0].mxu0
  %v5221 = vadd.f32 0.0, %v5220
  %v5222 = vpop.f32.mrb[0].mxu0
  %v5223 = vpop.f32.mrb[0].mxu0
  %v5224 = vadd.f32 0.0, %v5223
  %v5225 = vpop.f32.mrb[0].mxu0
  %5226 = vmatprep.mubr.bf16.mxu0 0
  %5227 = vmatmul.mubr.bf16.gmra.mrb[0].mxu0 %v5117
  %v5228 = vpop.f32.mrb[0].mxu0
  %v5229 = vadd.f32 0.0, %v5228
  %v5230 = vpop.f32.mrb[0].mxu0
  %v5231 = vpop.f32.mrb[0].mxu0
  %v5232 = vadd.f32 0.0, %v5231
  %v5233 = vpop.f32.mrb[0].mxu0
  %5234 = vmatprep.mubr.bf16.mxu0 0
  %5235 = vmatmul.mubr.bf16.gmra.mrb[0].mxu0 %v5120
  %v5236 = vpop.f32.mrb[0].mxu0
  %v5237 = vadd.f32 0.0, %v5236
  %v5238 = vpop.f32.mrb[0].mxu0
  %v5239 = vpop.f32.mrb[0].mxu0
  %v5240 = vpop.f32.mrb[0].mxu0
  %5241 = vdwg.mxu0
  %v5242 = vadd.f32 %v4774, %v5157
  %v5243 = vadd.f32 %v4775, %v5160
  %v5244 = vadd.f32 %v4776, %v5165
  %v5245 = vadd.f32 %v4777, %v5168
  %v5246 = vadd.f32 %v4778, %v5173
  %v5247 = vadd.f32 %v4779, %v5176
  %v5248 = vadd.f32 %v4780, %v5181
  %v5249 = vadd.f32 %v4781, %v5184
  %v5250 = vadd.f32 %v4782, %v5189
  %v5251 = vadd.f32 %v4783, %v5192
  %v5252 = vadd.f32 %v4784, %v5197
  %v5253 = vadd.f32 %v4785, %v5200
  %v5254 = vadd.f32 %v4786, %v5205
  %v5255 = vadd.f32 %v4787, %v5208
  %v5256 = vadd.f32 %v4788, %v5213
  %v5257 = vadd.f32 %v4789, %v5216
  %v5258 = vadd.f32 %v4790, %v5221
  %v5259 = vadd.f32 %v4791, %v5224
  %v5260 = vadd.f32 %v4792, %v5229
  %v5261 = vadd.f32 %v4793, %v5232
  %v5262 = vadd.f32 %v4794, %v5237
  %v5263 = vld [vmem:[%s0 + $0x790] sm:$0xff]
  %v5264 = vld [vmem:[%s0 + $0x798] sm:$0xff]
  %v5265 = vld [vmem:[%s0 + $0x7a0] sm:$0xff]
  %v5266 = vld [vmem:[%s0 + $0x7a8] sm:$0xff]
  %v5267 = vld [vmem:[%s0 + $0x7b0] sm:$0xff]
  %v5268 = vld [vmem:[%s0 + $0x7b8] sm:$0xff]
  %v5269 = vld [vmem:[%s0 + $0x7c0] sm:$0xff]
  %v5270 = vld [vmem:[%s0 + $0x7c8] sm:$0xff]
  %v5271 = vld [vmem:[%s0 + $0x7d0] sm:$0xff]
  %v5272 = vld [vmem:[%s0 + $0x7d8] sm:$0xff]
  %v5273 = vld [vmem:[%s0 + $0x7e0] sm:$0xff]
  %v5274 = vld [vmem:[%s0 + $0x7e8] sm:$0xff]
  %v5275 = vld [vmem:[%s0 + $0x7f0] sm:$0xff]
  %v5276 = vld [vmem:[%s0 + $0x7f8] sm:$0xff]
  %v5277 = vld [vmem:[%s0 + $0x800] sm:$0xff]
  %v5278 = vld [vmem:[%s0 + $0x808] sm:$0xff]
  %v5279 = vld [vmem:[%s0 + $0x810] sm:$0xff]
  %v5280 = vld [vmem:[%s0 + $0x818] sm:$0xff]
  %v5281 = vld [vmem:[%s0 + $0x820] sm:$0xff]
  %v5282 = vld [vmem:[%s0 + $0x828] sm:$0xff]
  %v5283 = vld [vmem:[%s0 + $0x830] sm:$0xff]
  %v5284 = vld [vmem:[%s0 + $0x838] sm:$0xff]
  %v5307 = vunpack.c.l.b16 %v5263
  %v5308 = vunpack.c.h.b16 %v5263
  %v5309 = vunpack.c.l.b16 %v5264
  %v5310 = vunpack.c.h.b16 %v5264
  %v5311 = vunpack.c.l.b16 %v5265
  %v5312 = vunpack.c.h.b16 %v5265
  %v5313 = vunpack.c.l.b16 %v5266
  %v5314 = vunpack.c.h.b16 %v5266
  %v5315 = vunpack.c.l.b16 %v5267
  %v5316 = vunpack.c.h.b16 %v5267
  %v5317 = vunpack.c.l.b16 %v5268
  %v5318 = vunpack.c.h.b16 %v5268
  %v5319 = vunpack.c.l.b16 %v5269
  %v5320 = vunpack.c.h.b16 %v5269
  %v5321 = vunpack.c.l.b16 %v5270
  %v5322 = vunpack.c.h.b16 %v5270
  %v5323 = vunpack.c.l.b16 %v5271
  %v5324 = vunpack.c.h.b16 %v5271
  %v5325 = vunpack.c.l.b16 %v5272
  %v5326 = vunpack.c.h.b16 %v5272
  %v5327 = vunpack.c.l.b16 %v5273
  %v5328 = vunpack.c.h.b16 %v5273
  %v5329 = vunpack.c.l.b16 %v5274
  %v5330 = vunpack.c.h.b16 %v5274
  %v5331 = vunpack.c.l.b16 %v5275
  %v5332 = vunpack.c.h.b16 %v5275
  %v5333 = vunpack.c.l.b16 %v5276
  %v5334 = vunpack.c.h.b16 %v5276
  %v5335 = vunpack.c.l.b16 %v5277
  %v5336 = vunpack.c.h.b16 %v5277
  %v5337 = vunpack.c.l.b16 %v5278
  %v5338 = vunpack.c.h.b16 %v5278
  %v5339 = vunpack.c.l.b16 %v5279
  %v5340 = vunpack.c.h.b16 %v5279
  %v5341 = vunpack.c.l.b16 %v5280
  %v5342 = vunpack.c.h.b16 %v5280
  %v5343 = vunpack.c.l.b16 %v5281
  %v5344 = vunpack.c.h.b16 %v5281
  %v5345 = vunpack.c.l.b16 %v5282
  %v5346 = vunpack.c.h.b16 %v5282
  %v5347 = vunpack.c.l.b16 %v5283
  %v5348 = vunpack.c.h.b16 %v5283
  %v5349 = vunpack.c.l.b16 %v5284
  %v5350 = vunpack.c.h.b16 %v5284
  %v5351 = vpack.c.b16 %v5309, %v5307
  %v5352 = vpack.c.b16 %v5310, %v5308
  %v5353 = vpack.c.b16 %v5313, %v5311
  %v5354 = vpack.c.b16 %v5314, %v5312
  %v5355 = vpack.c.b16 %v5317, %v5315
  %v5356 = vpack.c.b16 %v5318, %v5316
  %v5357 = vpack.c.b16 %v5321, %v5319
  %v5358 = vpack.c.b16 %v5322, %v5320
  %v5359 = vpack.c.b16 %v5325, %v5323
  %v5360 = vpack.c.b16 %v5326, %v5324
  %v5361 = vpack.c.b16 %v5329, %v5327
  %v5362 = vpack.c.b16 %v5330, %v5328
  %v5363 = vpack.c.b16 %v5333, %v5331
  %v5364 = vpack.c.b16 %v5334, %v5332
  %v5365 = vpack.c.b16 %v5337, %v5335
  %v5366 = vpack.c.b16 %v5338, %v5336
  %v5367 = vpack.c.b16 %v5341, %v5339
  %v5368 = vpack.c.b16 %v5342, %v5340
  %v5369 = vpack.c.b16 %v5345, %v5343
  %v5370 = vpack.c.b16 %v5346, %v5344
  %v5371 = vpack.c.b16 %v5349, %v5347
  %v5372 = vpack.c.b16 %v5350, %v5348
  %5395 = vmatprep.subr.bf16.mxu0 0
  %5396 = vmatpush1.bf16.msra.mxu0 %v256
  %5397 = vmatprep.subr.bf16.mxu0 0
  %5398 = vmatpush1.bf16.msra.mxu0 %v257
  %5399 = vmatprep.subr.bf16.mxu0 0
  %5400 = vmatpush1.bf16.msra.mxu0 %v258
  %5401 = vmatprep.subr.bf16.mxu0 0
  %5402 = vmatpush1.bf16.msra.mxu0 %v259
  %5403 = vmatprep.subr.bf16.mxu0 0
  %5404 = vmatpush1.bf16.msra.mxu0 %v260
  %5405 = vmatprep.subr.bf16.mxu0 0
  %5406 = vmatpush1.bf16.msra.mxu0 %v261
  %5407 = vmatprep.subr.bf16.mxu0 0
  %5408 = vmatpush1.bf16.msra.mxu0 %v262
  %5409 = vmatprep.subr.bf16.mxu0 0
  %5410 = vmatpush1.bf16.msra.mxu0 %v263
  %5411 = vmatprep.subr.bf16.mxu0 0
  %5412 = vmatpush1.bf16.msra.mxu0 %v264
  %5413 = vmatprep.subr.bf16.mxu0 0
  %5414 = vmatpush1.bf16.msra.mxu0 %v265
  %5415 = vmatprep.subr.bf16.mxu0 0
  %5416 = vmatpush1.bf16.msra.mxu0 %v266
  %5417 = vmatprep.subr.bf16.mxu0 0
  %5418 = vmatpush1.bf16.msra.mxu0 %v267
  %5419 = vmatprep.subr.bf16.mxu0 0
  %5420 = vmatpush1.bf16.msra.mxu0 %v268
  %5421 = vmatprep.subr.bf16.mxu0 0
  %5422 = vmatpush1.bf16.msra.mxu0 %v269
  %5423 = vmatprep.subr.bf16.mxu0 0
  %5424 = vmatpush1.bf16.msra.mxu0 %v270
  %5425 = vmatprep.subr.bf16.mxu0 0
  %5426 = vmatpush1.bf16.msra.mxu0 %v271
  %5427 = vmatprep.mubr.bf16.mxu0 %v5352
  %5428 = vmatmul.mubr.bf16.gmra.mrb[0].mxu0 %v5351
  %v5429 = vpop.f32.mrb[0].mxu0
  %v5430 = vadd.f32 %v80, %v5429
  %v5431 = vpop.f32.mrb[0].mxu0
  %v5432 = vpop.f32.mrb[0].mxu0
  %v5433 = vadd.f32 %v80, %v5432
  %v5434 = vpop.f32.mrb[0].mxu0
  %5435 = vmatprep.mubr.bf16.mxu0 %v5354
  %5436 = vmatmul.mubr.bf16.gmra.mrb[0].mxu0 %v5353
  %v5437 = vpop.f32.mrb[0].mxu0
  %v5438 = vadd.f32 %v80, %v5437
  %v5439 = vpop.f32.mrb[0].mxu0
  %v5440 = vpop.f32.mrb[0].mxu0
  %v5441 = vadd.f32 %v80, %v5440
  %v5442 = vpop.f32.mrb[0].mxu0
  %5443 = vmatprep.mubr.bf16.mxu0 %v5356
  %5444 = vmatmul.mubr.bf16.gmra.mrb[0].mxu0 %v5355
  %v5445 = vpop.f32.mrb[0].mxu0
  %v5446 = vadd.f32 %v80, %v5445
  %v5447 = vpop.f32.mrb[0].mxu0
  %v5448 = vpop.f32.mrb[0].mxu0
  %v5449 = vadd.f32 %v80, %v5448
  %v5450 = vpop.f32.mrb[0].mxu0
  %5451 = vmatprep.mubr.bf16.mxu0 %v5358
  %5452 = vmatmul.mubr.bf16.gmra.mrb[0].mxu0 %v5357
  %v5453 = vpop.f32.mrb[0].mxu0
  %v5454 = vadd.f32 %v80, %v5453
  %v5455 = vpop.f32.mrb[0].mxu0
  %v5456 = vpop.f32.mrb[0].mxu0
  %v5457 = vadd.f32 %v80, %v5456
  %v5458 = vpop.f32.mrb[0].mxu0
  %5459 = vmatprep.mubr.bf16.mxu0 %v5360
  %5460 = vmatmul.mubr.bf16.gmra.mrb[0].mxu0 %v5359
  %v5461 = vpop.f32.mrb[0].mxu0
  %v5462 = vadd.f32 %v80, %v5461
  %v5463 = vpop.f32.mrb[0].mxu0
  %v5464 = vpop.f32.mrb[0].mxu0
  %v5465 = vadd.f32 %v80, %v5464
  %v5466 = vpop.f32.mrb[0].mxu0
  %5467 = vmatprep.mubr.bf16.mxu0 %v5362
  %5468 = vmatmul.mubr.bf16.gmra.mrb[0].mxu0 %v5361
  %v5469 = vpop.f32.mrb[0].mxu0
  %v5470 = vadd.f32 %v80, %v5469
  %v5471 = vpop.f32.mrb[0].mxu0
  %v5472 = vpop.f32.mrb[0].mxu0
  %v5473 = vadd.f32 %v80, %v5472
  %v5474 = vpop.f32.mrb[0].mxu0
  %5475 = vmatprep.mubr.bf16.mxu0 %v5364
  %5476 = vmatmul.mubr.bf16.gmra.mrb[0].mxu0 %v5363
  %v5477 = vpop.f32.mrb[0].mxu0
  %v5478 = vadd.f32 %v80, %v5477
  %v5479 = vpop.f32.mrb[0].mxu0
  %v5480 = vpop.f32.mrb[0].mxu0
  %v5481 = vadd.f32 %v80, %v5480
  %v5482 = vpop.f32.mrb[0].mxu0
  %5483 = vmatprep.mubr.bf16.mxu0 %v5366
  %5484 = vmatmul.mubr.bf16.gmra.mrb[0].mxu0 %v5365
  %v5485 = vpop.f32.mrb[0].mxu0
  %v5486 = vadd.f32 %v80, %v5485
  %v5487 = vpop.f32.mrb[0].mxu0
  %v5488 = vpop.f32.mrb[0].mxu0
  %v5489 = vadd.f32 %v80, %v5488
  %v5490 = vpop.f32.mrb[0].mxu0
  %5491 = vmatprep.mubr.bf16.mxu0 %v5368
  %5492 = vmatmul.mubr.bf16.gmra.mrb[0].mxu0 %v5367
  %v5493 = vpop.f32.mrb[0].mxu0
  %v5494 = vadd.f32 %v80, %v5493
  %v5495 = vpop.f32.mrb[0].mxu0
  %v5496 = vpop.f32.mrb[0].mxu0
  %v5497 = vadd.f32 %v80, %v5496
  %v5498 = vpop.f32.mrb[0].mxu0
  %5499 = vmatprep.mubr.bf16.mxu0 %v5370
  %5500 = vmatmul.mubr.bf16.gmra.mrb[0].mxu0 %v5369
  %v5501 = vpop.f32.mrb[0].mxu0
  %v5502 = vadd.f32 %v80, %v5501
  %v5503 = vpop.f32.mrb[0].mxu0
  %v5504 = vpop.f32.mrb[0].mxu0
  %v5505 = vadd.f32 %v80, %v5504
  %v5506 = vpop.f32.mrb[0].mxu0
  %5507 = vmatprep.mubr.bf16.mxu0 %v5372
  %5508 = vmatmul.mubr.bf16.gmra.mrb[0].mxu0 %v5371
  %v5509 = vpop.f32.mrb[0].mxu0
  %v5510 = vadd.f32 %v80, %v5509
  %v5511 = vpop.f32.mrb[0].mxu0
  %v5512 = vpop.f32.mrb[0].mxu0
  %v5513 = vadd.f32 %v80, %v5512
  %v5514 = vpop.f32.mrb[0].mxu0
  %5515 = vdwg.mxu0
  %v5516 = vmax.f32 %v5430, 0.0
  %v5517 = vmax.f32 %v5433, 0.0
  %v5518 = vmax.f32 %v5438, 0.0
  %v5519 = vmax.f32 %v5441, 0.0
  %v5520 = vmax.f32 %v5446, 0.0
  %v5521 = vmax.f32 %v5449, 0.0
  %v5522 = vmax.f32 %v5454, 0.0
  %v5523 = vmax.f32 %v5457, 0.0
  %v5524 = vmax.f32 %v5462, 0.0
  %v5525 = vmax.f32 %v5465, 0.0
  %v5526 = vmax.f32 %v5470, 0.0
  %v5527 = vmax.f32 %v5473, 0.0
  %v5528 = vmax.f32 %v5478, 0.0
  %v5529 = vmax.f32 %v5481, 0.0
  %v5530 = vmax.f32 %v5486, 0.0
  %v5531 = vmax.f32 %v5489, 0.0
  %v5532 = vmax.f32 %v5494, 0.0
  %v5533 = vmax.f32 %v5497, 0.0
  %v5534 = vmax.f32 %v5502, 0.0
  %v5535 = vmax.f32 %v5505, 0.0
  %v5536 = vmax.f32 %v5510, 0.0
  %v5537 = vmax.f32 %v5513, 0.0
  %v5538 = vpack.c.bf16 %v5517, %v5516
  %v5539 = vpack.c.bf16 %v5519, %v5518
  %v5540 = vpack.c.bf16 %v5521, %v5520
  %v5541 = vpack.c.bf16 %v5523, %v5522
  %v5542 = vpack.c.bf16 %v5525, %v5524
  %v5543 = vpack.c.bf16 %v5527, %v5526
  %v5544 = vpack.c.bf16 %v5529, %v5528
  %v5545 = vpack.c.bf16 %v5531, %v5530
  %v5546 = vpack.c.bf16 %v5533, %v5532
  %v5547 = vpack.c.bf16 %v5535, %v5534
  %v5548 = vpack.c.bf16 %v5537, %v5536
  %v5549 = vld [vmem:[%s3 + $0x58] sm:$0xf]
  %v5550 = vld [vmem:[%s3 + $0x5c] sm:$0xf]
  %v5553 = vunpack.c.l.b16 %v5549
  %v5554 = vunpack.c.l.b16 %v5550
  %v5555 = vpack.c.b16 %v5554, %v5553
  %v5558 = vsel %vm738, %v5538, 0
  %v5561 = vsel %vm738, %v5539, 0
  %v5564 = vsel %vm738, %v5540, 0
  %v5567 = vsel %vm738, %v5541, 0
  %v5570 = vsel %vm738, %v5542, 0
  %v5573 = vsel %vm738, %v5543, 0
  %v5576 = vsel %vm738, %v5544, 0
  %v5579 = vsel %vm738, %v5545, 0
  %v5582 = vsel %vm738, %v5546, 0
  %v5585 = vsel %vm738, %v5547, 0
  %v5588 = vsel %vm738, %v5548, 0
  %5590 = vmatprep.subr.bf16.mxu0 0
  %5591 = vmatpush1.bf16.msra.mxu0 %v5555
  %5592 = vmatprep.subr.bf16.mxu0 0
  %5593 = vmatpush1.bf16.msra.mxu0 0
  %5594 = vmatprep.subr.bf16.mxu0 0
  %5595 = vmatpush1.bf16.msra.mxu0 0
  %5596 = vmatprep.subr.bf16.mxu0 0
  %5597 = vmatpush1.bf16.msra.mxu0 0
  %5598 = vmatprep.subr.bf16.mxu0 0
  %5599 = vmatpush1.bf16.msra.mxu0 0
  %5600 = vmatprep.subr.bf16.mxu0 0
  %5601 = vmatpush1.bf16.msra.mxu0 0
  %5602 = vmatprep.subr.bf16.mxu0 0
  %5603 = vmatpush1.bf16.msra.mxu0 0
  %5604 = vmatprep.subr.bf16.mxu0 0
  %5605 = vmatpush1.bf16.msra.mxu0 0
  %5606 = vmatprep.subr.bf16.mxu0 0
  %5607 = vmatpush1.bf16.msra.mxu0 0
  %5608 = vmatprep.subr.bf16.mxu0 0
  %5609 = vmatpush1.bf16.msra.mxu0 0
  %5610 = vmatprep.subr.bf16.mxu0 0
  %5611 = vmatpush1.bf16.msra.mxu0 0
  %5612 = vmatprep.subr.bf16.mxu0 0
  %5613 = vmatpush1.bf16.msra.mxu0 0
  %5614 = vmatprep.subr.bf16.mxu0 0
  %5615 = vmatpush1.bf16.msra.mxu0 0
  %5616 = vmatprep.subr.bf16.mxu0 0
  %5617 = vmatpush1.bf16.msra.mxu0 0
  %5618 = vmatprep.subr.bf16.mxu0 0
  %5619 = vmatpush1.bf16.msra.mxu0 0
  %5620 = vmatprep.subr.bf16.mxu0 0
  %5621 = vmatpush1.bf16.msra.mxu0 0
  %5622 = vmatprep.mubr.bf16.mxu0 0
  %5623 = vmatmul.mubr.bf16.gmra.mrb[0].mxu0 %v5558
  %v5624 = vpop.f32.mrb[0].mxu0
  %v5625 = vadd.f32 0.0, %v5624
  %v5626 = vpop.f32.mrb[0].mxu0
  %v5627 = vpop.f32.mrb[0].mxu0
  %v5628 = vadd.f32 0.0, %v5627
  %v5629 = vpop.f32.mrb[0].mxu0
  %5630 = vmatprep.mubr.bf16.mxu0 0
  %5631 = vmatmul.mubr.bf16.gmra.mrb[0].mxu0 %v5561
  %v5632 = vpop.f32.mrb[0].mxu0
  %v5633 = vadd.f32 0.0, %v5632
  %v5634 = vpop.f32.mrb[0].mxu0
  %v5635 = vpop.f32.mrb[0].mxu0
  %v5636 = vadd.f32 0.0, %v5635
  %v5637 = vpop.f32.mrb[0].mxu0
  %5638 = vmatprep.mubr.bf16.mxu0 0
  %5639 = vmatmul.mubr.bf16.gmra.mrb[0].mxu0 %v5564
  %v5640 = vpop.f32.mrb[0].mxu0
  %v5641 = vadd.f32 0.0, %v5640
  %v5642 = vpop.f32.mrb[0].mxu0
  %v5643 = vpop.f32.mrb[0].mxu0
  %v5644 = vadd.f32 0.0, %v5643
  %v5645 = vpop.f32.mrb[0].mxu0
  %5646 = vmatprep.mubr.bf16.mxu0 0
  %5647 = vmatmul.mubr.bf16.gmra.mrb[0].mxu0 %v5567
  %v5648 = vpop.f32.mrb[0].mxu0
  %v5649 = vadd.f32 0.0, %v5648
  %v5650 = vpop.f32.mrb[0].mxu0
  %v5651 = vpop.f32.mrb[0].mxu0
  %v5652 = vadd.f32 0.0, %v5651
  %v5653 = vpop.f32.mrb[0].mxu0
  %5654 = vmatprep.mubr.bf16.mxu0 0
  %5655 = vmatmul.mubr.bf16.gmra.mrb[0].mxu0 %v5570
  %v5656 = vpop.f32.mrb[0].mxu0
  %v5657 = vadd.f32 0.0, %v5656
  %v5658 = vpop.f32.mrb[0].mxu0
  %v5659 = vpop.f32.mrb[0].mxu0
  %v5660 = vadd.f32 0.0, %v5659
  %v5661 = vpop.f32.mrb[0].mxu0
  %5662 = vmatprep.mubr.bf16.mxu0 0
  %5663 = vmatmul.mubr.bf16.gmra.mrb[0].mxu0 %v5573
  %v5664 = vpop.f32.mrb[0].mxu0
  %v5665 = vadd.f32 0.0, %v5664
  %v5666 = vpop.f32.mrb[0].mxu0
  %v5667 = vpop.f32.mrb[0].mxu0
  %v5668 = vadd.f32 0.0, %v5667
  %v5669 = vpop.f32.mrb[0].mxu0
  %5670 = vmatprep.mubr.bf16.mxu0 0
  %5671 = vmatmul.mubr.bf16.gmra.mrb[0].mxu0 %v5576
  %v5672 = vpop.f32.mrb[0].mxu0
  %v5673 = vadd.f32 0.0, %v5672
  %v5674 = vpop.f32.mrb[0].mxu0
  %v5675 = vpop.f32.mrb[0].mxu0
  %v5676 = vadd.f32 0.0, %v5675
  %v5677 = vpop.f32.mrb[0].mxu0
  %5678 = vmatprep.mubr.bf16.mxu0 0
  %5679 = vmatmul.mubr.bf16.gmra.mrb[0].mxu0 %v5579
  %v5680 = vpop.f32.mrb[0].mxu0
  %v5681 = vadd.f32 0.0, %v5680
  %v5682 = vpop.f32.mrb[0].mxu0
  %v5683 = vpop.f32.mrb[0].mxu0
  %v5684 = vadd.f32 0.0, %v5683
  %v5685 = vpop.f32.mrb[0].mxu0
  %5686 = vmatprep.mubr.bf16.mxu0 0
  %5687 = vmatmul.mubr.bf16.gmra.mrb[0].mxu0 %v5582
  %v5688 = vpop.f32.mrb[0].mxu0
  %v5689 = vadd.f32 0.0, %v5688
  %v5690 = vpop.f32.mrb[0].mxu0
  %v5691 = vpop.f32.mrb[0].mxu0
  %v5692 = vadd.f32 0.0, %v5691
  %v5693 = vpop.f32.mrb[0].mxu0
  %5694 = vmatprep.mubr.bf16.mxu0 0
  %5695 = vmatmul.mubr.bf16.gmra.mrb[0].mxu0 %v5585
  %v5696 = vpop.f32.mrb[0].mxu0
  %v5697 = vadd.f32 0.0, %v5696
  %v5698 = vpop.f32.mrb[0].mxu0
  %v5699 = vpop.f32.mrb[0].mxu0
  %v5700 = vadd.f32 0.0, %v5699
  %v5701 = vpop.f32.mrb[0].mxu0
  %5702 = vmatprep.mubr.bf16.mxu0 0
  %5703 = vmatmul.mubr.bf16.gmra.mrb[0].mxu0 %v5588
  %v5704 = vpop.f32.mrb[0].mxu0
  %v5705 = vadd.f32 0.0, %v5704
  %v5706 = vpop.f32.mrb[0].mxu0
  %v5707 = vpop.f32.mrb[0].mxu0
  %v5708 = vpop.f32.mrb[0].mxu0
  %5709 = vdwg.mxu0
  %v5710 = vadd.f32 %v5242, %v5625
  %v5711 = vadd.f32 %v5243, %v5628
  %v5712 = vadd.f32 %v5244, %v5633
  %v5713 = vadd.f32 %v5245, %v5636
  %v5714 = vadd.f32 %v5246, %v5641
  %v5715 = vadd.f32 %v5247, %v5644
  %v5716 = vadd.f32 %v5248, %v5649
  %v5717 = vadd.f32 %v5249, %v5652
  %v5718 = vadd.f32 %v5250, %v5657
  %v5719 = vadd.f32 %v5251, %v5660
  %v5720 = vadd.f32 %v5252, %v5665
  %v5721 = vadd.f32 %v5253, %v5668
  %v5722 = vadd.f32 %v5254, %v5673
  %v5723 = vadd.f32 %v5255, %v5676
  %v5724 = vadd.f32 %v5256, %v5681
  %v5725 = vadd.f32 %v5257, %v5684
  %v5726 = vadd.f32 %v5258, %v5689
  %v5727 = vadd.f32 %v5259, %v5692
  %v5728 = vadd.f32 %v5260, %v5697
  %v5729 = vadd.f32 %v5261, %v5700
  %v5730 = vadd.f32 %v5262, %v5705
  %v5731 = vld [vmem:[%s0 + $0x840] sm:$0xff]
  %v5732 = vld [vmem:[%s0 + $0x848] sm:$0xff]
  %v5733 = vld [vmem:[%s0 + $0x850] sm:$0xff]
  %v5734 = vld [vmem:[%s0 + $0x858] sm:$0xff]
  %v5735 = vld [vmem:[%s0 + $0x860] sm:$0xff]
  %v5736 = vld [vmem:[%s0 + $0x868] sm:$0xff]
  %v5737 = vld [vmem:[%s0 + $0x870] sm:$0xff]
  %v5738 = vld [vmem:[%s0 + $0x878] sm:$0xff]
  %v5739 = vld [vmem:[%s0 + $0x880] sm:$0xff]
  %v5740 = vld [vmem:[%s0 + $0x888] sm:$0xff]
  %v5741 = vld [vmem:[%s0 + $0x890] sm:$0xff]
  %v5742 = vld [vmem:[%s0 + $0x898] sm:$0xff]
  %v5743 = vld [vmem:[%s0 + $0x8a0] sm:$0xff]
  %v5744 = vld [vmem:[%s0 + $0x8a8] sm:$0xff]
  %v5745 = vld [vmem:[%s0 + $0x8b0] sm:$0xff]
  %v5746 = vld [vmem:[%s0 + $0x8b8] sm:$0xff]
  %v5747 = vld [vmem:[%s0 + $0x8c0] sm:$0xff]
  %v5748 = vld [vmem:[%s0 + $0x8c8] sm:$0xff]
  %v5749 = vld [vmem:[%s0 + $0x8d0] sm:$0xff]
  %v5750 = vld [vmem:[%s0 + $0x8d8] sm:$0xff]
  %v5751 = vld [vmem:[%s0 + $0x8e0] sm:$0xff]
  %v5752 = vld [vmem:[%s0 + $0x8e8] sm:$0xff]
  %v5775 = vunpack.c.l.b16 %v5731
  %v5776 = vunpack.c.h.b16 %v5731
  %v5777 = vunpack.c.l.b16 %v5732
  %v5778 = vunpack.c.h.b16 %v5732
  %v5779 = vunpack.c.l.b16 %v5733
  %v5780 = vunpack.c.h.b16 %v5733
  %v5781 = vunpack.c.l.b16 %v5734
  %v5782 = vunpack.c.h.b16 %v5734
  %v5783 = vunpack.c.l.b16 %v5735
  %v5784 = vunpack.c.h.b16 %v5735
  %v5785 = vunpack.c.l.b16 %v5736
  %v5786 = vunpack.c.h.b16 %v5736
  %v5787 = vunpack.c.l.b16 %v5737
  %v5788 = vunpack.c.h.b16 %v5737
  %v5789 = vunpack.c.l.b16 %v5738
  %v5790 = vunpack.c.h.b16 %v5738
  %v5791 = vunpack.c.l.b16 %v5739
  %v5792 = vunpack.c.h.b16 %v5739
  %v5793 = vunpack.c.l.b16 %v5740
  %v5794 = vunpack.c.h.b16 %v5740
  %v5795 = vunpack.c.l.b16 %v5741
  %v5796 = vunpack.c.h.b16 %v5741
  %v5797 = vunpack.c.l.b16 %v5742
  %v5798 = vunpack.c.h.b16 %v5742
  %v5799 = vunpack.c.l.b16 %v5743
  %v5800 = vunpack.c.h.b16 %v5743
  %v5801 = vunpack.c.l.b16 %v5744
  %v5802 = vunpack.c.h.b16 %v5744
  %v5803 = vunpack.c.l.b16 %v5745
  %v5804 = vunpack.c.h.b16 %v5745
  %v5805 = vunpack.c.l.b16 %v5746
  %v5806 = vunpack.c.h.b16 %v5746
  %v5807 = vunpack.c.l.b16 %v5747
  %v5808 = vunpack.c.h.b16 %v5747
  %v5809 = vunpack.c.l.b16 %v5748
  %v5810 = vunpack.c.h.b16 %v5748
  %v5811 = vunpack.c.l.b16 %v5749
  %v5812 = vunpack.c.h.b16 %v5749
  %v5813 = vunpack.c.l.b16 %v5750
  %v5814 = vunpack.c.h.b16 %v5750
  %v5815 = vunpack.c.l.b16 %v5751
  %v5816 = vunpack.c.h.b16 %v5751
  %v5817 = vunpack.c.l.b16 %v5752
  %v5818 = vunpack.c.h.b16 %v5752
  %v5819 = vpack.c.b16 %v5777, %v5775
  %v5820 = vpack.c.b16 %v5778, %v5776
  %v5821 = vpack.c.b16 %v5781, %v5779
  %v5822 = vpack.c.b16 %v5782, %v5780
  %v5823 = vpack.c.b16 %v5785, %v5783
  %v5824 = vpack.c.b16 %v5786, %v5784
  %v5825 = vpack.c.b16 %v5789, %v5787
  %v5826 = vpack.c.b16 %v5790, %v5788
  %v5827 = vpack.c.b16 %v5793, %v5791
  %v5828 = vpack.c.b16 %v5794, %v5792
  %v5829 = vpack.c.b16 %v5797, %v5795
  %v5830 = vpack.c.b16 %v5798, %v5796
  %v5831 = vpack.c.b16 %v5801, %v5799
  %v5832 = vpack.c.b16 %v5802, %v5800
  %v5833 = vpack.c.b16 %v5805, %v5803
  %v5834 = vpack.c.b16 %v5806, %v5804
  %v5835 = vpack.c.b16 %v5809, %v5807
  %v5836 = vpack.c.b16 %v5810, %v5808
  %v5837 = vpack.c.b16 %v5813, %v5811
  %v5838 = vpack.c.b16 %v5814, %v5812
  %v5839 = vpack.c.b16 %v5817, %v5815
  %v5840 = vpack.c.b16 %v5818, %v5816
  %5863 = vmatprep.subr.bf16.mxu0 0
  %5864 = vmatpush1.bf16.msra.mxu0 %v256
  %5865 = vmatprep.subr.bf16.mxu0 0
  %5866 = vmatpush1.bf16.msra.mxu0 %v257
  %5867 = vmatprep.subr.bf16.mxu0 0
  %5868 = vmatpush1.bf16.msra.mxu0 %v258
  %5869 = vmatprep.subr.bf16.mxu0 0
  %5870 = vmatpush1.bf16.msra.mxu0 %v259
  %5871 = vmatprep.subr.bf16.mxu0 0
  %5872 = vmatpush1.bf16.msra.mxu0 %v260
  %5873 = vmatprep.subr.bf16.mxu0 0
  %5874 = vmatpush1.bf16.msra.mxu0 %v261
  %5875 = vmatprep.subr.bf16.mxu0 0
  %5876 = vmatpush1.bf16.msra.mxu0 %v262
  %5877 = vmatprep.subr.bf16.mxu0 0
  %5878 = vmatpush1.bf16.msra.mxu0 %v263
  %5879 = vmatprep.subr.bf16.mxu0 0
  %5880 = vmatpush1.bf16.msra.mxu0 %v264
  %5881 = vmatprep.subr.bf16.mxu0 0
  %5882 = vmatpush1.bf16.msra.mxu0 %v265
  %5883 = vmatprep.subr.bf16.mxu0 0
  %5884 = vmatpush1.bf16.msra.mxu0 %v266
  %5885 = vmatprep.subr.bf16.mxu0 0
  %5886 = vmatpush1.bf16.msra.mxu0 %v267
  %5887 = vmatprep.subr.bf16.mxu0 0
  %5888 = vmatpush1.bf16.msra.mxu0 %v268
  %5889 = vmatprep.subr.bf16.mxu0 0
  %5890 = vmatpush1.bf16.msra.mxu0 %v269
  %5891 = vmatprep.subr.bf16.mxu0 0
  %5892 = vmatpush1.bf16.msra.mxu0 %v270
  %5893 = vmatprep.subr.bf16.mxu0 0
  %5894 = vmatpush1.bf16.msra.mxu0 %v271
  %5895 = vmatprep.mubr.bf16.mxu0 %v5820
  %5896 = vmatmul.mubr.bf16.gmra.mrb[0].mxu0 %v5819
  %v5897 = vpop.f32.mrb[0].mxu0
  %v5898 = vadd.f32 %v80, %v5897
  %v5899 = vpop.f32.mrb[0].mxu0
  %v5900 = vpop.f32.mrb[0].mxu0
  %v5901 = vadd.f32 %v80, %v5900
  %v5902 = vpop.f32.mrb[0].mxu0
  %5903 = vmatprep.mubr.bf16.mxu0 %v5822
  %5904 = vmatmul.mubr.bf16.gmra.mrb[0].mxu0 %v5821
  %v5905 = vpop.f32.mrb[0].mxu0
  %v5906 = vadd.f32 %v80, %v5905
  %v5907 = vpop.f32.mrb[0].mxu0
  %v5908 = vpop.f32.mrb[0].mxu0
  %v5909 = vadd.f32 %v80, %v5908
  %v5910 = vpop.f32.mrb[0].mxu0
  %5911 = vmatprep.mubr.bf16.mxu0 %v5824
  %5912 = vmatmul.mubr.bf16.gmra.mrb[0].mxu0 %v5823
  %v5913 = vpop.f32.mrb[0].mxu0
  %v5914 = vadd.f32 %v80, %v5913
  %v5915 = vpop.f32.mrb[0].mxu0
  %v5916 = vpop.f32.mrb[0].mxu0
  %v5917 = vadd.f32 %v80, %v5916
  %v5918 = vpop.f32.mrb[0].mxu0
  %5919 = vmatprep.mubr.bf16.mxu0 %v5826
  %5920 = vmatmul.mubr.bf16.gmra.mrb[0].mxu0 %v5825
  %v5921 = vpop.f32.mrb[0].mxu0
  %v5922 = vadd.f32 %v80, %v5921
  %v5923 = vpop.f32.mrb[0].mxu0
  %v5924 = vpop.f32.mrb[0].mxu0
  %v5925 = vadd.f32 %v80, %v5924
  %v5926 = vpop.f32.mrb[0].mxu0
  %5927 = vmatprep.mubr.bf16.mxu0 %v5828
  %5928 = vmatmul.mubr.bf16.gmra.mrb[0].mxu0 %v5827
  %v5929 = vpop.f32.mrb[0].mxu0
  %v5930 = vadd.f32 %v80, %v5929
  %v5931 = vpop.f32.mrb[0].mxu0
  %v5932 = vpop.f32.mrb[0].mxu0
  %v5933 = vadd.f32 %v80, %v5932
  %v5934 = vpop.f32.mrb[0].mxu0
  %5935 = vmatprep.mubr.bf16.mxu0 %v5830
  %5936 = vmatmul.mubr.bf16.gmra.mrb[0].mxu0 %v5829
  %v5937 = vpop.f32.mrb[0].mxu0
  %v5938 = vadd.f32 %v80, %v5937
  %v5939 = vpop.f32.mrb[0].mxu0
  %v5940 = vpop.f32.mrb[0].mxu0
  %v5941 = vadd.f32 %v80, %v5940
  %v5942 = vpop.f32.mrb[0].mxu0
  %5943 = vmatprep.mubr.bf16.mxu0 %v5832
  %5944 = vmatmul.mubr.bf16.gmra.mrb[0].mxu0 %v5831
  %v5945 = vpop.f32.mrb[0].mxu0
  %v5946 = vadd.f32 %v80, %v5945
  %v5947 = vpop.f32.mrb[0].mxu0
  %v5948 = vpop.f32.mrb[0].mxu0
  %v5949 = vadd.f32 %v80, %v5948
  %v5950 = vpop.f32.mrb[0].mxu0
  %5951 = vmatprep.mubr.bf16.mxu0 %v5834
  %5952 = vmatmul.mubr.bf16.gmra.mrb[0].mxu0 %v5833
  %v5953 = vpop.f32.mrb[0].mxu0
  %v5954 = vadd.f32 %v80, %v5953
  %v5955 = vpop.f32.mrb[0].mxu0
  %v5956 = vpop.f32.mrb[0].mxu0
  %v5957 = vadd.f32 %v80, %v5956
  %v5958 = vpop.f32.mrb[0].mxu0
  %5959 = vmatprep.mubr.bf16.mxu0 %v5836
  %5960 = vmatmul.mubr.bf16.gmra.mrb[0].mxu0 %v5835
  %v5961 = vpop.f32.mrb[0].mxu0
  %v5962 = vadd.f32 %v80, %v5961
  %v5963 = vpop.f32.mrb[0].mxu0
  %v5964 = vpop.f32.mrb[0].mxu0
  %v5965 = vadd.f32 %v80, %v5964
  %v5966 = vpop.f32.mrb[0].mxu0
  %5967 = vmatprep.mubr.bf16.mxu0 %v5838
  %5968 = vmatmul.mubr.bf16.gmra.mrb[0].mxu0 %v5837
  %v5969 = vpop.f32.mrb[0].mxu0
  %v5970 = vadd.f32 %v80, %v5969
  %v5971 = vpop.f32.mrb[0].mxu0
  %v5972 = vpop.f32.mrb[0].mxu0
  %v5973 = vadd.f32 %v80, %v5972
  %v5974 = vpop.f32.mrb[0].mxu0
  %5975 = vmatprep.mubr.bf16.mxu0 %v5840
  %5976 = vmatmul.mubr.bf16.gmra.mrb[0].mxu0 %v5839
  %v5977 = vpop.f32.mrb[0].mxu0
  %v5978 = vadd.f32 %v80, %v5977
  %v5979 = vpop.f32.mrb[0].mxu0
  %v5980 = vpop.f32.mrb[0].mxu0
  %v5981 = vadd.f32 %v80, %v5980
  %v5982 = vpop.f32.mrb[0].mxu0
  %5983 = vdwg.mxu0
  %v5984 = vmax.f32 %v5898, 0.0
  %v5985 = vmax.f32 %v5901, 0.0
  %v5986 = vmax.f32 %v5906, 0.0
  %v5987 = vmax.f32 %v5909, 0.0
  %v5988 = vmax.f32 %v5914, 0.0
  %v5989 = vmax.f32 %v5917, 0.0
  %v5990 = vmax.f32 %v5922, 0.0
  %v5991 = vmax.f32 %v5925, 0.0
  %v5992 = vmax.f32 %v5930, 0.0
  %v5993 = vmax.f32 %v5933, 0.0
  %v5994 = vmax.f32 %v5938, 0.0
  %v5995 = vmax.f32 %v5941, 0.0
  %v5996 = vmax.f32 %v5946, 0.0
  %v5997 = vmax.f32 %v5949, 0.0
  %v5998 = vmax.f32 %v5954, 0.0
  %v5999 = vmax.f32 %v5957, 0.0
  %v6000 = vmax.f32 %v5962, 0.0
  %v6001 = vmax.f32 %v5965, 0.0
  %v6002 = vmax.f32 %v5970, 0.0
  %v6003 = vmax.f32 %v5973, 0.0
  %v6004 = vmax.f32 %v5978, 0.0
  %v6005 = vmax.f32 %v5981, 0.0
  %v6006 = vpack.c.bf16 %v5985, %v5984
  %v6007 = vpack.c.bf16 %v5987, %v5986
  %v6008 = vpack.c.bf16 %v5989, %v5988
  %v6009 = vpack.c.bf16 %v5991, %v5990
  %v6010 = vpack.c.bf16 %v5993, %v5992
  %v6011 = vpack.c.bf16 %v5995, %v5994
  %v6012 = vpack.c.bf16 %v5997, %v5996
  %v6013 = vpack.c.bf16 %v5999, %v5998
  %v6014 = vpack.c.bf16 %v6001, %v6000
  %v6015 = vpack.c.bf16 %v6003, %v6002
  %v6016 = vpack.c.bf16 %v6005, %v6004
  %v6017 = vld [vmem:[%s3 + $0x60] sm:$0xf]
  %v6018 = vld [vmem:[%s3 + $0x64] sm:$0xf]
  %v6021 = vunpack.c.l.b16 %v6017
  %v6022 = vunpack.c.l.b16 %v6018
  %v6023 = vpack.c.b16 %v6022, %v6021
  %v6026 = vsel %vm738, %v6006, 0
  %v6029 = vsel %vm738, %v6007, 0
  %v6032 = vsel %vm738, %v6008, 0
  %v6035 = vsel %vm738, %v6009, 0
  %v6038 = vsel %vm738, %v6010, 0
  %v6041 = vsel %vm738, %v6011, 0
  %v6044 = vsel %vm738, %v6012, 0
  %v6047 = vsel %vm738, %v6013, 0
  %v6050 = vsel %vm738, %v6014, 0
  %v6053 = vsel %vm738, %v6015, 0
  %v6056 = vsel %vm738, %v6016, 0
  %6058 = vmatprep.subr.bf16.mxu0 0
  %6059 = vmatpush1.bf16.msra.mxu0 %v6023
  %6060 = vmatprep.subr.bf16.mxu0 0
  %6061 = vmatpush1.bf16.msra.mxu0 0
  %6062 = vmatprep.subr.bf16.mxu0 0
  %6063 = vmatpush1.bf16.msra.mxu0 0
  %6064 = vmatprep.subr.bf16.mxu0 0
  %6065 = vmatpush1.bf16.msra.mxu0 0
  %6066 = vmatprep.subr.bf16.mxu0 0
  %6067 = vmatpush1.bf16.msra.mxu0 0
  %6068 = vmatprep.subr.bf16.mxu0 0
  %6069 = vmatpush1.bf16.msra.mxu0 0
  %6070 = vmatprep.subr.bf16.mxu0 0
  %6071 = vmatpush1.bf16.msra.mxu0 0
  %6072 = vmatprep.subr.bf16.mxu0 0
  %6073 = vmatpush1.bf16.msra.mxu0 0
  %6074 = vmatprep.subr.bf16.mxu0 0
  %6075 = vmatpush1.bf16.msra.mxu0 0
  %6076 = vmatprep.subr.bf16.mxu0 0
  %6077 = vmatpush1.bf16.msra.mxu0 0
  %6078 = vmatprep.subr.bf16.mxu0 0
  %6079 = vmatpush1.bf16.msra.mxu0 0
  %6080 = vmatprep.subr.bf16.mxu0 0
  %6081 = vmatpush1.bf16.msra.mxu0 0
  %6082 = vmatprep.subr.bf16.mxu0 0
  %6083 = vmatpush1.bf16.msra.mxu0 0
  %6084 = vmatprep.subr.bf16.mxu0 0
  %6085 = vmatpush1.bf16.msra.mxu0 0
  %6086 = vmatprep.subr.bf16.mxu0 0
  %6087 = vmatpush1.bf16.msra.mxu0 0
  %6088 = vmatprep.subr.bf16.mxu0 0
  %6089 = vmatpush1.bf16.msra.mxu0 0
  %6090 = vmatprep.mubr.bf16.mxu0 0
  %6091 = vmatmul.mubr.bf16.gmra.mrb[0].mxu0 %v6026
  %v6092 = vpop.f32.mrb[0].mxu0
  %v6093 = vadd.f32 0.0, %v6092
  %v6094 = vpop.f32.mrb[0].mxu0
  %v6095 = vpop.f32.mrb[0].mxu0
  %v6096 = vadd.f32 0.0, %v6095
  %v6097 = vpop.f32.mrb[0].mxu0
  %6098 = vmatprep.mubr.bf16.mxu0 0
  %6099 = vmatmul.mubr.bf16.gmra.mrb[0].mxu0 %v6029
  %v6100 = vpop.f32.mrb[0].mxu0
  %v6101 = vadd.f32 0.0, %v6100
  %v6102 = vpop.f32.mrb[0].mxu0
  %v6103 = vpop.f32.mrb[0].mxu0
  %v6104 = vadd.f32 0.0, %v6103
  %v6105 = vpop.f32.mrb[0].mxu0
  %6106 = vmatprep.mubr.bf16.mxu0 0
  %6107 = vmatmul.mubr.bf16.gmra.mrb[0].mxu0 %v6032
  %v6108 = vpop.f32.mrb[0].mxu0
  %v6109 = vadd.f32 0.0, %v6108
  %v6110 = vpop.f32.mrb[0].mxu0
  %v6111 = vpop.f32.mrb[0].mxu0
  %v6112 = vadd.f32 0.0, %v6111
  %v6113 = vpop.f32.mrb[0].mxu0
  %6114 = vmatprep.mubr.bf16.mxu0 0
  %6115 = vmatmul.mubr.bf16.gmra.mrb[0].mxu0 %v6035
  %v6116 = vpop.f32.mrb[0].mxu0
  %v6117 = vadd.f32 0.0, %v6116
  %v6118 = vpop.f32.mrb[0].mxu0
  %v6119 = vpop.f32.mrb[0].mxu0
  %v6120 = vadd.f32 0.0, %v6119
  %v6121 = vpop.f32.mrb[0].mxu0
  %6122 = vmatprep.mubr.bf16.mxu0 0
  %6123 = vmatmul.mubr.bf16.gmra.mrb[0].mxu0 %v6038
  %v6124 = vpop.f32.mrb[0].mxu0
  %v6125 = vadd.f32 0.0, %v6124
  %v6126 = vpop.f32.mrb[0].mxu0
  %v6127 = vpop.f32.mrb[0].mxu0
  %v6128 = vadd.f32 0.0, %v6127
  %v6129 = vpop.f32.mrb[0].mxu0
  %6130 = vmatprep.mubr.bf16.mxu0 0
  %6131 = vmatmul.mubr.bf16.gmra.mrb[0].mxu0 %v6041
  %v6132 = vpop.f32.mrb[0].mxu0
  %v6133 = vadd.f32 0.0, %v6132
  %v6134 = vpop.f32.mrb[0].mxu0
  %v6135 = vpop.f32.mrb[0].mxu0
  %v6136 = vadd.f32 0.0, %v6135
  %v6137 = vpop.f32.mrb[0].mxu0
  %6138 = vmatprep.mubr.bf16.mxu0 0
  %6139 = vmatmul.mubr.bf16.gmra.mrb[0].mxu0 %v6044
  %v6140 = vpop.f32.mrb[0].mxu0
  %v6141 = vadd.f32 0.0, %v6140
  %v6142 = vpop.f32.mrb[0].mxu0
  %v6143 = vpop.f32.mrb[0].mxu0
  %v6144 = vadd.f32 0.0, %v6143
  %v6145 = vpop.f32.mrb[0].mxu0
  %6146 = vmatprep.mubr.bf16.mxu0 0
  %6147 = vmatmul.mubr.bf16.gmra.mrb[0].mxu0 %v6047
  %v6148 = vpop.f32.mrb[0].mxu0
  %v6149 = vadd.f32 0.0, %v6148
  %v6150 = vpop.f32.mrb[0].mxu0
  %v6151 = vpop.f32.mrb[0].mxu0
  %v6152 = vadd.f32 0.0, %v6151
  %v6153 = vpop.f32.mrb[0].mxu0
  %6154 = vmatprep.mubr.bf16.mxu0 0
  %6155 = vmatmul.mubr.bf16.gmra.mrb[0].mxu0 %v6050
  %v6156 = vpop.f32.mrb[0].mxu0
  %v6157 = vadd.f32 0.0, %v6156
  %v6158 = vpop.f32.mrb[0].mxu0
  %v6159 = vpop.f32.mrb[0].mxu0
  %v6160 = vadd.f32 0.0, %v6159
  %v6161 = vpop.f32.mrb[0].mxu0
  %6162 = vmatprep.mubr.bf16.mxu0 0
  %6163 = vmatmul.mubr.bf16.gmra.mrb[0].mxu0 %v6053
  %v6164 = vpop.f32.mrb[0].mxu0
  %v6165 = vadd.f32 0.0, %v6164
  %v6166 = vpop.f32.mrb[0].mxu0
  %v6167 = vpop.f32.mrb[0].mxu0
  %v6168 = vadd.f32 0.0, %v6167
  %v6169 = vpop.f32.mrb[0].mxu0
  %6170 = vmatprep.mubr.bf16.mxu0 0
  %6171 = vmatmul.mubr.bf16.gmra.mrb[0].mxu0 %v6056
  %v6172 = vpop.f32.mrb[0].mxu0
  %v6173 = vadd.f32 0.0, %v6172
  %v6174 = vpop.f32.mrb[0].mxu0
  %v6175 = vpop.f32.mrb[0].mxu0
  %v6176 = vpop.f32.mrb[0].mxu0
  %6177 = vdwg.mxu0
  %v6178 = vadd.f32 %v5710, %v6093
  %v6179 = vadd.f32 %v5711, %v6096
  %v6180 = vadd.f32 %v5712, %v6101
  %v6181 = vadd.f32 %v5713, %v6104
  %v6182 = vadd.f32 %v5714, %v6109
  %v6183 = vadd.f32 %v5715, %v6112
  %v6184 = vadd.f32 %v5716, %v6117
  %v6185 = vadd.f32 %v5717, %v6120
  %v6186 = vadd.f32 %v5718, %v6125
  %v6187 = vadd.f32 %v5719, %v6128
  %v6188 = vadd.f32 %v5720, %v6133
  %v6189 = vadd.f32 %v5721, %v6136
  %v6190 = vadd.f32 %v5722, %v6141
  %v6191 = vadd.f32 %v5723, %v6144
  %v6192 = vadd.f32 %v5724, %v6149
  %v6193 = vadd.f32 %v5725, %v6152
  %v6194 = vadd.f32 %v5726, %v6157
  %v6195 = vadd.f32 %v5727, %v6160
  %v6196 = vadd.f32 %v5728, %v6165
  %v6197 = vadd.f32 %v5729, %v6168
  %v6198 = vadd.f32 %v5730, %v6173
  %v6199 = vld [vmem:[%s0 + $0x8f0] sm:$0xff]
  %v6200 = vld [vmem:[%s0 + $0x8f8] sm:$0xff]
  %v6201 = vld [vmem:[%s0 + $0x900] sm:$0xff]
  %v6202 = vld [vmem:[%s0 + $0x908] sm:$0xff]
  %v6203 = vld [vmem:[%s0 + $0x910] sm:$0xff]
  %v6204 = vld [vmem:[%s0 + $0x918] sm:$0xff]
  %v6205 = vld [vmem:[%s0 + $0x920] sm:$0xff]
  %v6206 = vld [vmem:[%s0 + $0x928] sm:$0xff]
  %v6207 = vld [vmem:[%s0 + $0x930] sm:$0xff]
  %v6208 = vld [vmem:[%s0 + $0x938] sm:$0xff]
  %v6209 = vld [vmem:[%s0 + $0x940] sm:$0xff]
  %v6210 = vld [vmem:[%s0 + $0x948] sm:$0xff]
  %v6211 = vld [vmem:[%s0 + $0x950] sm:$0xff]
  %v6212 = vld [vmem:[%s0 + $0x958] sm:$0xff]
  %v6213 = vld [vmem:[%s0 + $0x960] sm:$0xff]
  %v6214 = vld [vmem:[%s0 + $0x968] sm:$0xff]
  %v6215 = vld [vmem:[%s0 + $0x970] sm:$0xff]
  %v6216 = vld [vmem:[%s0 + $0x978] sm:$0xff]
  %v6217 = vld [vmem:[%s0 + $0x980] sm:$0xff]
  %v6218 = vld [vmem:[%s0 + $0x988] sm:$0xff]
  %v6219 = vld [vmem:[%s0 + $0x990] sm:$0xff]
  %v6220 = vld [vmem:[%s0 + $0x998] sm:$0xff]
  %v6243 = vunpack.c.l.b16 %v6199
  %v6244 = vunpack.c.h.b16 %v6199
  %v6245 = vunpack.c.l.b16 %v6200
  %v6246 = vunpack.c.h.b16 %v6200
  %v6247 = vunpack.c.l.b16 %v6201
  %v6248 = vunpack.c.h.b16 %v6201
  %v6249 = vunpack.c.l.b16 %v6202
  %v6250 = vunpack.c.h.b16 %v6202
  %v6251 = vunpack.c.l.b16 %v6203
  %v6252 = vunpack.c.h.b16 %v6203
  %v6253 = vunpack.c.l.b16 %v6204
  %v6254 = vunpack.c.h.b16 %v6204
  %v6255 = vunpack.c.l.b16 %v6205
  %v6256 = vunpack.c.h.b16 %v6205
  %v6257 = vunpack.c.l.b16 %v6206
  %v6258 = vunpack.c.h.b16 %v6206
  %v6259 = vunpack.c.l.b16 %v6207
  %v6260 = vunpack.c.h.b16 %v6207
  %v6261 = vunpack.c.l.b16 %v6208
  %v6262 = vunpack.c.h.b16 %v6208
  %v6263 = vunpack.c.l.b16 %v6209
  %v6264 = vunpack.c.h.b16 %v6209
  %v6265 = vunpack.c.l.b16 %v6210
  %v6266 = vunpack.c.h.b16 %v6210
  %v6267 = vunpack.c.l.b16 %v6211
  %v6268 = vunpack.c.h.b16 %v6211
  %v6269 = vunpack.c.l.b16 %v6212
  %v6270 = vunpack.c.h.b16 %v6212
  %v6271 = vunpack.c.l.b16 %v6213
  %v6272 = vunpack.c.h.b16 %v6213
  %v6273 = vunpack.c.l.b16 %v6214
  %v6274 = vunpack.c.h.b16 %v6214
  %v6275 = vunpack.c.l.b16 %v6215
  %v6276 = vunpack.c.h.b16 %v6215
  %v6277 = vunpack.c.l.b16 %v6216
  %v6278 = vunpack.c.h.b16 %v6216
  %v6279 = vunpack.c.l.b16 %v6217
  %v6280 = vunpack.c.h.b16 %v6217
  %v6281 = vunpack.c.l.b16 %v6218
  %v6282 = vunpack.c.h.b16 %v6218
  %v6283 = vunpack.c.l.b16 %v6219
  %v6284 = vunpack.c.h.b16 %v6219
  %v6285 = vunpack.c.l.b16 %v6220
  %v6286 = vunpack.c.h.b16 %v6220
  %v6287 = vpack.c.b16 %v6245, %v6243
  %v6288 = vpack.c.b16 %v6246, %v6244
  %v6289 = vpack.c.b16 %v6249, %v6247
  %v6290 = vpack.c.b16 %v6250, %v6248
  %v6291 = vpack.c.b16 %v6253, %v6251
  %v6292 = vpack.c.b16 %v6254, %v6252
  %v6293 = vpack.c.b16 %v6257, %v6255
  %v6294 = vpack.c.b16 %v6258, %v6256
  %v6295 = vpack.c.b16 %v6261, %v6259
  %v6296 = vpack.c.b16 %v6262, %v6260
  %v6297 = vpack.c.b16 %v6265, %v6263
  %v6298 = vpack.c.b16 %v6266, %v6264
  %v6299 = vpack.c.b16 %v6269, %v6267
  %v6300 = vpack.c.b16 %v6270, %v6268
  %v6301 = vpack.c.b16 %v6273, %v6271
  %v6302 = vpack.c.b16 %v6274, %v6272
  %v6303 = vpack.c.b16 %v6277, %v6275
  %v6304 = vpack.c.b16 %v6278, %v6276
  %v6305 = vpack.c.b16 %v6281, %v6279
  %v6306 = vpack.c.b16 %v6282, %v6280
  %v6307 = vpack.c.b16 %v6285, %v6283
  %v6308 = vpack.c.b16 %v6286, %v6284
  %6331 = vmatprep.subr.bf16.mxu0 0
  %6332 = vmatpush1.bf16.msra.mxu0 %v256
  %6333 = vmatprep.subr.bf16.mxu0 0
  %6334 = vmatpush1.bf16.msra.mxu0 %v257
  %6335 = vmatprep.subr.bf16.mxu0 0
  %6336 = vmatpush1.bf16.msra.mxu0 %v258
  %6337 = vmatprep.subr.bf16.mxu0 0
  %6338 = vmatpush1.bf16.msra.mxu0 %v259
  %6339 = vmatprep.subr.bf16.mxu0 0
  %6340 = vmatpush1.bf16.msra.mxu0 %v260
  %6341 = vmatprep.subr.bf16.mxu0 0
  %6342 = vmatpush1.bf16.msra.mxu0 %v261
  %6343 = vmatprep.subr.bf16.mxu0 0
  %6344 = vmatpush1.bf16.msra.mxu0 %v262
  %6345 = vmatprep.subr.bf16.mxu0 0
  %6346 = vmatpush1.bf16.msra.mxu0 %v263
  %6347 = vmatprep.subr.bf16.mxu0 0
  %6348 = vmatpush1.bf16.msra.mxu0 %v264
  %6349 = vmatprep.subr.bf16.mxu0 0
  %6350 = vmatpush1.bf16.msra.mxu0 %v265
  %6351 = vmatprep.subr.bf16.mxu0 0
  %6352 = vmatpush1.bf16.msra.mxu0 %v266
  %6353 = vmatprep.subr.bf16.mxu0 0
  %6354 = vmatpush1.bf16.msra.mxu0 %v267
  %6355 = vmatprep.subr.bf16.mxu0 0
  %6356 = vmatpush1.bf16.msra.mxu0 %v268
  %6357 = vmatprep.subr.bf16.mxu0 0
  %6358 = vmatpush1.bf16.msra.mxu0 %v269
  %6359 = vmatprep.subr.bf16.mxu0 0
  %6360 = vmatpush1.bf16.msra.mxu0 %v270
  %6361 = vmatprep.subr.bf16.mxu0 0
  %6362 = vmatpush1.bf16.msra.mxu0 %v271
  %6363 = vmatprep.mubr.bf16.mxu0 %v6288
  %6364 = vmatmul.mubr.bf16.gmra.mrb[0].mxu0 %v6287
  %v6365 = vpop.f32.mrb[0].mxu0
  %v6366 = vadd.f32 %v80, %v6365
  %v6367 = vpop.f32.mrb[0].mxu0
  %v6368 = vpop.f32.mrb[0].mxu0
  %v6369 = vadd.f32 %v80, %v6368
  %v6370 = vpop.f32.mrb[0].mxu0
  %6371 = vmatprep.mubr.bf16.mxu0 %v6290
  %6372 = vmatmul.mubr.bf16.gmra.mrb[0].mxu0 %v6289
  %v6373 = vpop.f32.mrb[0].mxu0
  %v6374 = vadd.f32 %v80, %v6373
  %v6375 = vpop.f32.mrb[0].mxu0
  %v6376 = vpop.f32.mrb[0].mxu0
  %v6377 = vadd.f32 %v80, %v6376
  %v6378 = vpop.f32.mrb[0].mxu0
  %6379 = vmatprep.mubr.bf16.mxu0 %v6292
  %6380 = vmatmul.mubr.bf16.gmra.mrb[0].mxu0 %v6291
  %v6381 = vpop.f32.mrb[0].mxu0
  %v6382 = vadd.f32 %v80, %v6381
  %v6383 = vpop.f32.mrb[0].mxu0
  %v6384 = vpop.f32.mrb[0].mxu0
  %v6385 = vadd.f32 %v80, %v6384
  %v6386 = vpop.f32.mrb[0].mxu0
  %6387 = vmatprep.mubr.bf16.mxu0 %v6294
  %6388 = vmatmul.mubr.bf16.gmra.mrb[0].mxu0 %v6293
  %v6389 = vpop.f32.mrb[0].mxu0
  %v6390 = vadd.f32 %v80, %v6389
  %v6391 = vpop.f32.mrb[0].mxu0
  %v6392 = vpop.f32.mrb[0].mxu0
  %v6393 = vadd.f32 %v80, %v6392
  %v6394 = vpop.f32.mrb[0].mxu0
  %6395 = vmatprep.mubr.bf16.mxu0 %v6296
  %6396 = vmatmul.mubr.bf16.gmra.mrb[0].mxu0 %v6295
  %v6397 = vpop.f32.mrb[0].mxu0
  %v6398 = vadd.f32 %v80, %v6397
  %v6399 = vpop.f32.mrb[0].mxu0
  %v6400 = vpop.f32.mrb[0].mxu0
  %v6401 = vadd.f32 %v80, %v6400
  %v6402 = vpop.f32.mrb[0].mxu0
  %6403 = vmatprep.mubr.bf16.mxu0 %v6298
  %6404 = vmatmul.mubr.bf16.gmra.mrb[0].mxu0 %v6297
  %v6405 = vpop.f32.mrb[0].mxu0
  %v6406 = vadd.f32 %v80, %v6405
  %v6407 = vpop.f32.mrb[0].mxu0
  %v6408 = vpop.f32.mrb[0].mxu0
  %v6409 = vadd.f32 %v80, %v6408
  %v6410 = vpop.f32.mrb[0].mxu0
  %6411 = vmatprep.mubr.bf16.mxu0 %v6300
  %6412 = vmatmul.mubr.bf16.gmra.mrb[0].mxu0 %v6299
  %v6413 = vpop.f32.mrb[0].mxu0
  %v6414 = vadd.f32 %v80, %v6413
  %v6415 = vpop.f32.mrb[0].mxu0
  %v6416 = vpop.f32.mrb[0].mxu0
  %v6417 = vadd.f32 %v80, %v6416
  %v6418 = vpop.f32.mrb[0].mxu0
  %6419 = vmatprep.mubr.bf16.mxu0 %v6302
  %6420 = vmatmul.mubr.bf16.gmra.mrb[0].mxu0 %v6301
  %v6421 = vpop.f32.mrb[0].mxu0
  %v6422 = vadd.f32 %v80, %v6421
  %v6423 = vpop.f32.mrb[0].mxu0
  %v6424 = vpop.f32.mrb[0].mxu0
  %v6425 = vadd.f32 %v80, %v6424
  %v6426 = vpop.f32.mrb[0].mxu0
  %6427 = vmatprep.mubr.bf16.mxu0 %v6304
  %6428 = vmatmul.mubr.bf16.gmra.mrb[0].mxu0 %v6303
  %v6429 = vpop.f32.mrb[0].mxu0
  %v6430 = vadd.f32 %v80, %v6429
  %v6431 = vpop.f32.mrb[0].mxu0
  %v6432 = vpop.f32.mrb[0].mxu0
  %v6433 = vadd.f32 %v80, %v6432
  %v6434 = vpop.f32.mrb[0].mxu0
  %6435 = vmatprep.mubr.bf16.mxu0 %v6306
  %6436 = vmatmul.mubr.bf16.gmra.mrb[0].mxu0 %v6305
  %v6437 = vpop.f32.mrb[0].mxu0
  %v6438 = vadd.f32 %v80, %v6437
  %v6439 = vpop.f32.mrb[0].mxu0
  %v6440 = vpop.f32.mrb[0].mxu0
  %v6441 = vadd.f32 %v80, %v6440
  %v6442 = vpop.f32.mrb[0].mxu0
  %6443 = vmatprep.mubr.bf16.mxu0 %v6308
  %6444 = vmatmul.mubr.bf16.gmra.mrb[0].mxu0 %v6307
  %v6445 = vpop.f32.mrb[0].mxu0
  %v6446 = vadd.f32 %v80, %v6445
  %v6447 = vpop.f32.mrb[0].mxu0
  %v6448 = vpop.f32.mrb[0].mxu0
  %v6449 = vadd.f32 %v80, %v6448
  %v6450 = vpop.f32.mrb[0].mxu0
  %6451 = vdwg.mxu0
  %v6452 = vmax.f32 %v6366, 0.0
  %v6453 = vmax.f32 %v6369, 0.0
  %v6454 = vmax.f32 %v6374, 0.0
  %v6455 = vmax.f32 %v6377, 0.0
  %v6456 = vmax.f32 %v6382, 0.0
  %v6457 = vmax.f32 %v6385, 0.0
  %v6458 = vmax.f32 %v6390, 0.0
  %v6459 = vmax.f32 %v6393, 0.0
  %v6460 = vmax.f32 %v6398, 0.0
  %v6461 = vmax.f32 %v6401, 0.0
  %v6462 = vmax.f32 %v6406, 0.0
  %v6463 = vmax.f32 %v6409, 0.0
  %v6464 = vmax.f32 %v6414, 0.0
  %v6465 = vmax.f32 %v6417, 0.0
  %v6466 = vmax.f32 %v6422, 0.0
  %v6467 = vmax.f32 %v6425, 0.0
  %v6468 = vmax.f32 %v6430, 0.0
  %v6469 = vmax.f32 %v6433, 0.0
  %v6470 = vmax.f32 %v6438, 0.0
  %v6471 = vmax.f32 %v6441, 0.0
  %v6472 = vmax.f32 %v6446, 0.0
  %v6473 = vmax.f32 %v6449, 0.0
  %v6474 = vpack.c.bf16 %v6453, %v6452
  %v6475 = vpack.c.bf16 %v6455, %v6454
  %v6476 = vpack.c.bf16 %v6457, %v6456
  %v6477 = vpack.c.bf16 %v6459, %v6458
  %v6478 = vpack.c.bf16 %v6461, %v6460
  %v6479 = vpack.c.bf16 %v6463, %v6462
  %v6480 = vpack.c.bf16 %v6465, %v6464
  %v6481 = vpack.c.bf16 %v6467, %v6466
  %v6482 = vpack.c.bf16 %v6469, %v6468
  %v6483 = vpack.c.bf16 %v6471, %v6470
  %v6484 = vpack.c.bf16 %v6473, %v6472
  %v6485 = vld [vmem:[%s3 + $0x68] sm:$0xf]
  %v6486 = vld [vmem:[%s3 + $0x6c] sm:$0xf]
  %v6489 = vunpack.c.l.b16 %v6485
  %v6490 = vunpack.c.l.b16 %v6486
  %v6491 = vpack.c.b16 %v6490, %v6489
  %v6494 = vsel %vm738, %v6474, 0
  %v6497 = vsel %vm738, %v6475, 0
  %v6500 = vsel %vm738, %v6476, 0
  %v6503 = vsel %vm738, %v6477, 0
  %v6506 = vsel %vm738, %v6478, 0
  %v6509 = vsel %vm738, %v6479, 0
  %v6512 = vsel %vm738, %v6480, 0
  %v6515 = vsel %vm738, %v6481, 0
  %v6518 = vsel %vm738, %v6482, 0
  %v6521 = vsel %vm738, %v6483, 0
  %v6524 = vsel %vm738, %v6484, 0
  %6526 = vmatprep.subr.bf16.mxu0 0
  %6527 = vmatpush1.bf16.msra.mxu0 %v6491
  %6528 = vmatprep.subr.bf16.mxu0 0
  %6529 = vmatpush1.bf16.msra.mxu0 0
  %6530 = vmatprep.subr.bf16.mxu0 0
  %6531 = vmatpush1.bf16.msra.mxu0 0
  %6532 = vmatprep.subr.bf16.mxu0 0
  %6533 = vmatpush1.bf16.msra.mxu0 0
  %6534 = vmatprep.subr.bf16.mxu0 0
  %6535 = vmatpush1.bf16.msra.mxu0 0
  %6536 = vmatprep.subr.bf16.mxu0 0
  %6537 = vmatpush1.bf16.msra.mxu0 0
  %6538 = vmatprep.subr.bf16.mxu0 0
  %6539 = vmatpush1.bf16.msra.mxu0 0
  %6540 = vmatprep.subr.bf16.mxu0 0
  %6541 = vmatpush1.bf16.msra.mxu0 0
  %6542 = vmatprep.subr.bf16.mxu0 0
  %6543 = vmatpush1.bf16.msra.mxu0 0
  %6544 = vmatprep.subr.bf16.mxu0 0
  %6545 = vmatpush1.bf16.msra.mxu0 0
  %6546 = vmatprep.subr.bf16.mxu0 0
  %6547 = vmatpush1.bf16.msra.mxu0 0
  %6548 = vmatprep.subr.bf16.mxu0 0
  %6549 = vmatpush1.bf16.msra.mxu0 0
  %6550 = vmatprep.subr.bf16.mxu0 0
  %6551 = vmatpush1.bf16.msra.mxu0 0
  %6552 = vmatprep.subr.bf16.mxu0 0
  %6553 = vmatpush1.bf16.msra.mxu0 0
  %6554 = vmatprep.subr.bf16.mxu0 0
  %6555 = vmatpush1.bf16.msra.mxu0 0
  %6556 = vmatprep.subr.bf16.mxu0 0
  %6557 = vmatpush1.bf16.msra.mxu0 0
  %6558 = vmatprep.mubr.bf16.mxu0 0
  %6559 = vmatmul.mubr.bf16.gmra.mrb[0].mxu0 %v6494
  %v6560 = vpop.f32.mrb[0].mxu0
  %v6561 = vadd.f32 0.0, %v6560
  %v6562 = vpop.f32.mrb[0].mxu0
  %v6563 = vpop.f32.mrb[0].mxu0
  %v6564 = vadd.f32 0.0, %v6563
  %v6565 = vpop.f32.mrb[0].mxu0
  %6566 = vmatprep.mubr.bf16.mxu0 0
  %6567 = vmatmul.mubr.bf16.gmra.mrb[0].mxu0 %v6497
  %v6568 = vpop.f32.mrb[0].mxu0
  %v6569 = vadd.f32 0.0, %v6568
  %v6570 = vpop.f32.mrb[0].mxu0
  %v6571 = vpop.f32.mrb[0].mxu0
  %v6572 = vadd.f32 0.0, %v6571
  %v6573 = vpop.f32.mrb[0].mxu0
  %6574 = vmatprep.mubr.bf16.mxu0 0
  %6575 = vmatmul.mubr.bf16.gmra.mrb[0].mxu0 %v6500
  %v6576 = vpop.f32.mrb[0].mxu0
  %v6577 = vadd.f32 0.0, %v6576
  %v6578 = vpop.f32.mrb[0].mxu0
  %v6579 = vpop.f32.mrb[0].mxu0
  %v6580 = vadd.f32 0.0, %v6579
  %v6581 = vpop.f32.mrb[0].mxu0
  %6582 = vmatprep.mubr.bf16.mxu0 0
  %6583 = vmatmul.mubr.bf16.gmra.mrb[0].mxu0 %v6503
  %v6584 = vpop.f32.mrb[0].mxu0
  %v6585 = vadd.f32 0.0, %v6584
  %v6586 = vpop.f32.mrb[0].mxu0
  %v6587 = vpop.f32.mrb[0].mxu0
  %v6588 = vadd.f32 0.0, %v6587
  %v6589 = vpop.f32.mrb[0].mxu0
  %6590 = vmatprep.mubr.bf16.mxu0 0
  %6591 = vmatmul.mubr.bf16.gmra.mrb[0].mxu0 %v6506
  %v6592 = vpop.f32.mrb[0].mxu0
  %v6593 = vadd.f32 0.0, %v6592
  %v6594 = vpop.f32.mrb[0].mxu0
  %v6595 = vpop.f32.mrb[0].mxu0
  %v6596 = vadd.f32 0.0, %v6595
  %v6597 = vpop.f32.mrb[0].mxu0
  %6598 = vmatprep.mubr.bf16.mxu0 0
  %6599 = vmatmul.mubr.bf16.gmra.mrb[0].mxu0 %v6509
  %v6600 = vpop.f32.mrb[0].mxu0
  %v6601 = vadd.f32 0.0, %v6600
  %v6602 = vpop.f32.mrb[0].mxu0
  %v6603 = vpop.f32.mrb[0].mxu0
  %v6604 = vadd.f32 0.0, %v6603
  %v6605 = vpop.f32.mrb[0].mxu0
  %6606 = vmatprep.mubr.bf16.mxu0 0
  %6607 = vmatmul.mubr.bf16.gmra.mrb[0].mxu0 %v6512
  %v6608 = vpop.f32.mrb[0].mxu0
  %v6609 = vadd.f32 0.0, %v6608
  %v6610 = vpop.f32.mrb[0].mxu0
  %v6611 = vpop.f32.mrb[0].mxu0
  %v6612 = vadd.f32 0.0, %v6611
  %v6613 = vpop.f32.mrb[0].mxu0
  %6614 = vmatprep.mubr.bf16.mxu0 0
  %6615 = vmatmul.mubr.bf16.gmra.mrb[0].mxu0 %v6515
  %v6616 = vpop.f32.mrb[0].mxu0
  %v6617 = vadd.f32 0.0, %v6616
  %v6618 = vpop.f32.mrb[0].mxu0
  %v6619 = vpop.f32.mrb[0].mxu0
  %v6620 = vadd.f32 0.0, %v6619
  %v6621 = vpop.f32.mrb[0].mxu0
  %6622 = vmatprep.mubr.bf16.mxu0 0
  %6623 = vmatmul.mubr.bf16.gmra.mrb[0].mxu0 %v6518
  %v6624 = vpop.f32.mrb[0].mxu0
  %v6625 = vadd.f32 0.0, %v6624
  %v6626 = vpop.f32.mrb[0].mxu0
  %v6627 = vpop.f32.mrb[0].mxu0
  %v6628 = vadd.f32 0.0, %v6627
  %v6629 = vpop.f32.mrb[0].mxu0
  %6630 = vmatprep.mubr.bf16.mxu0 0
  %6631 = vmatmul.mubr.bf16.gmra.mrb[0].mxu0 %v6521
  %v6632 = vpop.f32.mrb[0].mxu0
  %v6633 = vadd.f32 0.0, %v6632
  %v6634 = vpop.f32.mrb[0].mxu0
  %v6635 = vpop.f32.mrb[0].mxu0
  %v6636 = vadd.f32 0.0, %v6635
  %v6637 = vpop.f32.mrb[0].mxu0
  %6638 = vmatprep.mubr.bf16.mxu0 0
  %6639 = vmatmul.mubr.bf16.gmra.mrb[0].mxu0 %v6524
  %v6640 = vpop.f32.mrb[0].mxu0
  %v6641 = vadd.f32 0.0, %v6640
  %v6642 = vpop.f32.mrb[0].mxu0
  %v6643 = vpop.f32.mrb[0].mxu0
  %v6644 = vpop.f32.mrb[0].mxu0
  %6645 = vdwg.mxu0
  %v6646 = vadd.f32 %v6178, %v6561
  %v6647 = vadd.f32 %v6179, %v6564
  %v6648 = vadd.f32 %v6180, %v6569
  %v6649 = vadd.f32 %v6181, %v6572
  %v6650 = vadd.f32 %v6182, %v6577
  %v6651 = vadd.f32 %v6183, %v6580
  %v6652 = vadd.f32 %v6184, %v6585
  %v6653 = vadd.f32 %v6185, %v6588
  %v6654 = vadd.f32 %v6186, %v6593
  %v6655 = vadd.f32 %v6187, %v6596
  %v6656 = vadd.f32 %v6188, %v6601
  %v6657 = vadd.f32 %v6189, %v6604
  %v6658 = vadd.f32 %v6190, %v6609
  %v6659 = vadd.f32 %v6191, %v6612
  %v6660 = vadd.f32 %v6192, %v6617
  %v6661 = vadd.f32 %v6193, %v6620
  %v6662 = vadd.f32 %v6194, %v6625
  %v6663 = vadd.f32 %v6195, %v6628
  %v6664 = vadd.f32 %v6196, %v6633
  %v6665 = vadd.f32 %v6197, %v6636
  %v6666 = vadd.f32 %v6198, %v6641
  %v6667 = vld [vmem:[%s0 + $0x9a0] sm:$0xff]
  %v6668 = vld [vmem:[%s0 + $0x9a8] sm:$0xff]
  %v6669 = vld [vmem:[%s0 + $0x9b0] sm:$0xff]
  %v6670 = vld [vmem:[%s0 + $0x9b8] sm:$0xff]
  %v6671 = vld [vmem:[%s0 + $0x9c0] sm:$0xff]
  %v6672 = vld [vmem:[%s0 + $0x9c8] sm:$0xff]
  %v6673 = vld [vmem:[%s0 + $0x9d0] sm:$0xff]
  %v6674 = vld [vmem:[%s0 + $0x9d8] sm:$0xff]
  %v6675 = vld [vmem:[%s0 + $0x9e0] sm:$0xff]
  %v6676 = vld [vmem:[%s0 + $0x9e8] sm:$0xff]
  %v6677 = vld [vmem:[%s0 + $0x9f0] sm:$0xff]
  %v6678 = vld [vmem:[%s0 + $0x9f8] sm:$0xff]
  %v6679 = vld [vmem:[%s0 + $0xa00] sm:$0xff]
  %v6680 = vld [vmem:[%s0 + $0xa08] sm:$0xff]
  %v6681 = vld [vmem:[%s0 + $0xa10] sm:$0xff]
  %v6682 = vld [vmem:[%s0 + $0xa18] sm:$0xff]
  %v6683 = vld [vmem:[%s0 + $0xa20] sm:$0xff]
  %v6684 = vld [vmem:[%s0 + $0xa28] sm:$0xff]
  %v6685 = vld [vmem:[%s0 + $0xa30] sm:$0xff]
  %v6686 = vld [vmem:[%s0 + $0xa38] sm:$0xff]
  %v6687 = vld [vmem:[%s0 + $0xa40] sm:$0xff]
  %v6688 = vld [vmem:[%s0 + $0xa48] sm:$0xff]
  %v6711 = vunpack.c.l.b16 %v6667
  %v6712 = vunpack.c.h.b16 %v6667
  %v6713 = vunpack.c.l.b16 %v6668
  %v6714 = vunpack.c.h.b16 %v6668
  %v6715 = vunpack.c.l.b16 %v6669
  %v6716 = vunpack.c.h.b16 %v6669
  %v6717 = vunpack.c.l.b16 %v6670
  %v6718 = vunpack.c.h.b16 %v6670
  %v6719 = vunpack.c.l.b16 %v6671
  %v6720 = vunpack.c.h.b16 %v6671
  %v6721 = vunpack.c.l.b16 %v6672
  %v6722 = vunpack.c.h.b16 %v6672
  %v6723 = vunpack.c.l.b16 %v6673
  %v6724 = vunpack.c.h.b16 %v6673
  %v6725 = vunpack.c.l.b16 %v6674
  %v6726 = vunpack.c.h.b16 %v6674
  %v6727 = vunpack.c.l.b16 %v6675
  %v6728 = vunpack.c.h.b16 %v6675
  %v6729 = vunpack.c.l.b16 %v6676
  %v6730 = vunpack.c.h.b16 %v6676
  %v6731 = vunpack.c.l.b16 %v6677
  %v6732 = vunpack.c.h.b16 %v6677
  %v6733 = vunpack.c.l.b16 %v6678
  %v6734 = vunpack.c.h.b16 %v6678
  %v6735 = vunpack.c.l.b16 %v6679
  %v6736 = vunpack.c.h.b16 %v6679
  %v6737 = vunpack.c.l.b16 %v6680
  %v6738 = vunpack.c.h.b16 %v6680
  %v6739 = vunpack.c.l.b16 %v6681
  %v6740 = vunpack.c.h.b16 %v6681
  %v6741 = vunpack.c.l.b16 %v6682
  %v6742 = vunpack.c.h.b16 %v6682
  %v6743 = vunpack.c.l.b16 %v6683
  %v6744 = vunpack.c.h.b16 %v6683
  %v6745 = vunpack.c.l.b16 %v6684
  %v6746 = vunpack.c.h.b16 %v6684
  %v6747 = vunpack.c.l.b16 %v6685
  %v6748 = vunpack.c.h.b16 %v6685
  %v6749 = vunpack.c.l.b16 %v6686
  %v6750 = vunpack.c.h.b16 %v6686
  %v6751 = vunpack.c.l.b16 %v6687
  %v6752 = vunpack.c.h.b16 %v6687
  %v6753 = vunpack.c.l.b16 %v6688
  %v6754 = vunpack.c.h.b16 %v6688
  %v6755 = vpack.c.b16 %v6713, %v6711
  %v6756 = vpack.c.b16 %v6714, %v6712
  %v6757 = vpack.c.b16 %v6717, %v6715
  %v6758 = vpack.c.b16 %v6718, %v6716
  %v6759 = vpack.c.b16 %v6721, %v6719
  %v6760 = vpack.c.b16 %v6722, %v6720
  %v6761 = vpack.c.b16 %v6725, %v6723
  %v6762 = vpack.c.b16 %v6726, %v6724
  %v6763 = vpack.c.b16 %v6729, %v6727
  %v6764 = vpack.c.b16 %v6730, %v6728
  %v6765 = vpack.c.b16 %v6733, %v6731
  %v6766 = vpack.c.b16 %v6734, %v6732
  %v6767 = vpack.c.b16 %v6737, %v6735
  %v6768 = vpack.c.b16 %v6738, %v6736
  %v6769 = vpack.c.b16 %v6741, %v6739
  %v6770 = vpack.c.b16 %v6742, %v6740
  %v6771 = vpack.c.b16 %v6745, %v6743
  %v6772 = vpack.c.b16 %v6746, %v6744
  %v6773 = vpack.c.b16 %v6749, %v6747
  %v6774 = vpack.c.b16 %v6750, %v6748
  %v6775 = vpack.c.b16 %v6753, %v6751
  %v6776 = vpack.c.b16 %v6754, %v6752
  %6799 = vmatprep.subr.bf16.mxu0 0
  %6800 = vmatpush1.bf16.msra.mxu0 %v256
  %6801 = vmatprep.subr.bf16.mxu0 0
  %6802 = vmatpush1.bf16.msra.mxu0 %v257
  %6803 = vmatprep.subr.bf16.mxu0 0
  %6804 = vmatpush1.bf16.msra.mxu0 %v258
  %6805 = vmatprep.subr.bf16.mxu0 0
  %6806 = vmatpush1.bf16.msra.mxu0 %v259
  %6807 = vmatprep.subr.bf16.mxu0 0
  %6808 = vmatpush1.bf16.msra.mxu0 %v260
  %6809 = vmatprep.subr.bf16.mxu0 0
  %6810 = vmatpush1.bf16.msra.mxu0 %v261
  %6811 = vmatprep.subr.bf16.mxu0 0
  %6812 = vmatpush1.bf16.msra.mxu0 %v262
  %6813 = vmatprep.subr.bf16.mxu0 0
  %6814 = vmatpush1.bf16.msra.mxu0 %v263
  %6815 = vmatprep.subr.bf16.mxu0 0
  %6816 = vmatpush1.bf16.msra.mxu0 %v264
  %6817 = vmatprep.subr.bf16.mxu0 0
  %6818 = vmatpush1.bf16.msra.mxu0 %v265
  %6819 = vmatprep.subr.bf16.mxu0 0
  %6820 = vmatpush1.bf16.msra.mxu0 %v266
  %6821 = vmatprep.subr.bf16.mxu0 0
  %6822 = vmatpush1.bf16.msra.mxu0 %v267
  %6823 = vmatprep.subr.bf16.mxu0 0
  %6824 = vmatpush1.bf16.msra.mxu0 %v268
  %6825 = vmatprep.subr.bf16.mxu0 0
  %6826 = vmatpush1.bf16.msra.mxu0 %v269
  %6827 = vmatprep.subr.bf16.mxu0 0
  %6828 = vmatpush1.bf16.msra.mxu0 %v270
  %6829 = vmatprep.subr.bf16.mxu0 0
  %6830 = vmatpush1.bf16.msra.mxu0 %v271
  %6831 = vmatprep.mubr.bf16.mxu0 %v6756
  %6832 = vmatmul.mubr.bf16.gmra.mrb[0].mxu0 %v6755
  %v6833 = vpop.f32.mrb[0].mxu0
  %v6834 = vadd.f32 %v80, %v6833
  %v6835 = vpop.f32.mrb[0].mxu0
  %v6836 = vpop.f32.mrb[0].mxu0
  %v6837 = vadd.f32 %v80, %v6836
  %v6838 = vpop.f32.mrb[0].mxu0
  %6839 = vmatprep.mubr.bf16.mxu0 %v6758
  %6840 = vmatmul.mubr.bf16.gmra.mrb[0].mxu0 %v6757
  %v6841 = vpop.f32.mrb[0].mxu0
  %v6842 = vadd.f32 %v80, %v6841
  %v6843 = vpop.f32.mrb[0].mxu0
  %v6844 = vpop.f32.mrb[0].mxu0
  %v6845 = vadd.f32 %v80, %v6844
  %v6846 = vpop.f32.mrb[0].mxu0
  %6847 = vmatprep.mubr.bf16.mxu0 %v6760
  %6848 = vmatmul.mubr.bf16.gmra.mrb[0].mxu0 %v6759
  %v6849 = vpop.f32.mrb[0].mxu0
  %v6850 = vadd.f32 %v80, %v6849
  %v6851 = vpop.f32.mrb[0].mxu0
  %v6852 = vpop.f32.mrb[0].mxu0
  %v6853 = vadd.f32 %v80, %v6852
  %v6854 = vpop.f32.mrb[0].mxu0
  %6855 = vmatprep.mubr.bf16.mxu0 %v6762
  %6856 = vmatmul.mubr.bf16.gmra.mrb[0].mxu0 %v6761
  %v6857 = vpop.f32.mrb[0].mxu0
  %v6858 = vadd.f32 %v80, %v6857
  %v6859 = vpop.f32.mrb[0].mxu0
  %v6860 = vpop.f32.mrb[0].mxu0
  %v6861 = vadd.f32 %v80, %v6860
  %v6862 = vpop.f32.mrb[0].mxu0
  %6863 = vmatprep.mubr.bf16.mxu0 %v6764
  %6864 = vmatmul.mubr.bf16.gmra.mrb[0].mxu0 %v6763
  %v6865 = vpop.f32.mrb[0].mxu0
  %v6866 = vadd.f32 %v80, %v6865
  %v6867 = vpop.f32.mrb[0].mxu0
  %v6868 = vpop.f32.mrb[0].mxu0
  %v6869 = vadd.f32 %v80, %v6868
  %v6870 = vpop.f32.mrb[0].mxu0
  %6871 = vmatprep.mubr.bf16.mxu0 %v6766
  %6872 = vmatmul.mubr.bf16.gmra.mrb[0].mxu0 %v6765
  %v6873 = vpop.f32.mrb[0].mxu0
  %v6874 = vadd.f32 %v80, %v6873
  %v6875 = vpop.f32.mrb[0].mxu0
  %v6876 = vpop.f32.mrb[0].mxu0
  %v6877 = vadd.f32 %v80, %v6876
  %v6878 = vpop.f32.mrb[0].mxu0
  %6879 = vmatprep.mubr.bf16.mxu0 %v6768
  %6880 = vmatmul.mubr.bf16.gmra.mrb[0].mxu0 %v6767
  %v6881 = vpop.f32.mrb[0].mxu0
  %v6882 = vadd.f32 %v80, %v6881
  %v6883 = vpop.f32.mrb[0].mxu0
  %v6884 = vpop.f32.mrb[0].mxu0
  %v6885 = vadd.f32 %v80, %v6884
  %v6886 = vpop.f32.mrb[0].mxu0
  %6887 = vmatprep.mubr.bf16.mxu0 %v6770
  %6888 = vmatmul.mubr.bf16.gmra.mrb[0].mxu0 %v6769
  %v6889 = vpop.f32.mrb[0].mxu0
  %v6890 = vadd.f32 %v80, %v6889
  %v6891 = vpop.f32.mrb[0].mxu0
  %v6892 = vpop.f32.mrb[0].mxu0
  %v6893 = vadd.f32 %v80, %v6892
  %v6894 = vpop.f32.mrb[0].mxu0
  %6895 = vmatprep.mubr.bf16.mxu0 %v6772
  %6896 = vmatmul.mubr.bf16.gmra.mrb[0].mxu0 %v6771
  %v6897 = vpop.f32.mrb[0].mxu0
  %v6898 = vadd.f32 %v80, %v6897
  %v6899 = vpop.f32.mrb[0].mxu0
  %v6900 = vpop.f32.mrb[0].mxu0
  %v6901 = vadd.f32 %v80, %v6900
  %v6902 = vpop.f32.mrb[0].mxu0
  %6903 = vmatprep.mubr.bf16.mxu0 %v6774
  %6904 = vmatmul.mubr.bf16.gmra.mrb[0].mxu0 %v6773
  %v6905 = vpop.f32.mrb[0].mxu0
  %v6906 = vadd.f32 %v80, %v6905
  %v6907 = vpop.f32.mrb[0].mxu0
  %v6908 = vpop.f32.mrb[0].mxu0
  %v6909 = vadd.f32 %v80, %v6908
  %v6910 = vpop.f32.mrb[0].mxu0
  %6911 = vmatprep.mubr.bf16.mxu0 %v6776
  %6912 = vmatmul.mubr.bf16.gmra.mrb[0].mxu0 %v6775
  %v6913 = vpop.f32.mrb[0].mxu0
  %v6914 = vadd.f32 %v80, %v6913
  %v6915 = vpop.f32.mrb[0].mxu0
  %v6916 = vpop.f32.mrb[0].mxu0
  %v6917 = vadd.f32 %v80, %v6916
  %v6918 = vpop.f32.mrb[0].mxu0
  %6919 = vdwg.mxu0
  %v6920 = vmax.f32 %v6834, 0.0
  %v6921 = vmax.f32 %v6837, 0.0
  %v6922 = vmax.f32 %v6842, 0.0
  %v6923 = vmax.f32 %v6845, 0.0
  %v6924 = vmax.f32 %v6850, 0.0
  %v6925 = vmax.f32 %v6853, 0.0
  %v6926 = vmax.f32 %v6858, 0.0
  %v6927 = vmax.f32 %v6861, 0.0
  %v6928 = vmax.f32 %v6866, 0.0
  %v6929 = vmax.f32 %v6869, 0.0
  %v6930 = vmax.f32 %v6874, 0.0
  %v6931 = vmax.f32 %v6877, 0.0
  %v6932 = vmax.f32 %v6882, 0.0
  %v6933 = vmax.f32 %v6885, 0.0
  %v6934 = vmax.f32 %v6890, 0.0
  %v6935 = vmax.f32 %v6893, 0.0
  %v6936 = vmax.f32 %v6898, 0.0
  %v6937 = vmax.f32 %v6901, 0.0
  %v6938 = vmax.f32 %v6906, 0.0
  %v6939 = vmax.f32 %v6909, 0.0
  %v6940 = vmax.f32 %v6914, 0.0
  %v6941 = vmax.f32 %v6917, 0.0
  %v6942 = vpack.c.bf16 %v6921, %v6920
  %v6943 = vpack.c.bf16 %v6923, %v6922
  %v6944 = vpack.c.bf16 %v6925, %v6924
  %v6945 = vpack.c.bf16 %v6927, %v6926
  %v6946 = vpack.c.bf16 %v6929, %v6928
  %v6947 = vpack.c.bf16 %v6931, %v6930
  %v6948 = vpack.c.bf16 %v6933, %v6932
  %v6949 = vpack.c.bf16 %v6935, %v6934
  %v6950 = vpack.c.bf16 %v6937, %v6936
  %v6951 = vpack.c.bf16 %v6939, %v6938
  %v6952 = vpack.c.bf16 %v6941, %v6940
  %v6953 = vld [vmem:[%s3 + $0x70] sm:$0xf]
  %v6954 = vld [vmem:[%s3 + $0x74] sm:$0xf]
  %v6957 = vunpack.c.l.b16 %v6953
  %v6958 = vunpack.c.l.b16 %v6954
  %v6959 = vpack.c.b16 %v6958, %v6957
  %v6962 = vsel %vm738, %v6942, 0
  %v6965 = vsel %vm738, %v6943, 0
  %v6968 = vsel %vm738, %v6944, 0
  %v6971 = vsel %vm738, %v6945, 0
  %v6974 = vsel %vm738, %v6946, 0
  %v6977 = vsel %vm738, %v6947, 0
  %v6980 = vsel %vm738, %v6948, 0
  %v6983 = vsel %vm738, %v6949, 0
  %v6986 = vsel %vm738, %v6950, 0
  %v6989 = vsel %vm738, %v6951, 0
  %v6992 = vsel %vm738, %v6952, 0
  %6994 = vmatprep.subr.bf16.mxu0 0
  %6995 = vmatpush1.bf16.msra.mxu0 %v6959
  %6996 = vmatprep.subr.bf16.mxu0 0
  %6997 = vmatpush1.bf16.msra.mxu0 0
  %6998 = vmatprep.subr.bf16.mxu0 0
  %6999 = vmatpush1.bf16.msra.mxu0 0
  %7000 = vmatprep.subr.bf16.mxu0 0
  %7001 = vmatpush1.bf16.msra.mxu0 0
  %7002 = vmatprep.subr.bf16.mxu0 0
  %7003 = vmatpush1.bf16.msra.mxu0 0
  %7004 = vmatprep.subr.bf16.mxu0 0
  %7005 = vmatpush1.bf16.msra.mxu0 0
  %7006 = vmatprep.subr.bf16.mxu0 0
  %7007 = vmatpush1.bf16.msra.mxu0 0
  %7008 = vmatprep.subr.bf16.mxu0 0
  %7009 = vmatpush1.bf16.msra.mxu0 0
  %7010 = vmatprep.subr.bf16.mxu0 0
  %7011 = vmatpush1.bf16.msra.mxu0 0
  %7012 = vmatprep.subr.bf16.mxu0 0
  %7013 = vmatpush1.bf16.msra.mxu0 0
  %7014 = vmatprep.subr.bf16.mxu0 0
  %7015 = vmatpush1.bf16.msra.mxu0 0
  %7016 = vmatprep.subr.bf16.mxu0 0
  %7017 = vmatpush1.bf16.msra.mxu0 0
  %7018 = vmatprep.subr.bf16.mxu0 0
  %7019 = vmatpush1.bf16.msra.mxu0 0
  %7020 = vmatprep.subr.bf16.mxu0 0
  %7021 = vmatpush1.bf16.msra.mxu0 0
  %7022 = vmatprep.subr.bf16.mxu0 0
  %7023 = vmatpush1.bf16.msra.mxu0 0
  %7024 = vmatprep.subr.bf16.mxu0 0
  %7025 = vmatpush1.bf16.msra.mxu0 0
  %7026 = vmatprep.mubr.bf16.mxu0 0
  %7027 = vmatmul.mubr.bf16.gmra.mrb[0].mxu0 %v6962
  %v7028 = vpop.f32.mrb[0].mxu0
  %v7029 = vadd.f32 0.0, %v7028
  %v7030 = vpop.f32.mrb[0].mxu0
  %v7031 = vpop.f32.mrb[0].mxu0
  %v7032 = vadd.f32 0.0, %v7031
  %v7033 = vpop.f32.mrb[0].mxu0
  %7034 = vmatprep.mubr.bf16.mxu0 0
  %7035 = vmatmul.mubr.bf16.gmra.mrb[0].mxu0 %v6965
  %v7036 = vpop.f32.mrb[0].mxu0
  %v7037 = vadd.f32 0.0, %v7036
  %v7038 = vpop.f32.mrb[0].mxu0
  %v7039 = vpop.f32.mrb[0].mxu0
  %v7040 = vadd.f32 0.0, %v7039
  %v7041 = vpop.f32.mrb[0].mxu0
  %7042 = vmatprep.mubr.bf16.mxu0 0
  %7043 = vmatmul.mubr.bf16.gmra.mrb[0].mxu0 %v6968
  %v7044 = vpop.f32.mrb[0].mxu0
  %v7045 = vadd.f32 0.0, %v7044
  %v7046 = vpop.f32.mrb[0].mxu0
  %v7047 = vpop.f32.mrb[0].mxu0
  %v7048 = vadd.f32 0.0, %v7047
  %v7049 = vpop.f32.mrb[0].mxu0
  %7050 = vmatprep.mubr.bf16.mxu0 0
  %7051 = vmatmul.mubr.bf16.gmra.mrb[0].mxu0 %v6971
  %v7052 = vpop.f32.mrb[0].mxu0
  %v7053 = vadd.f32 0.0, %v7052
  %v7054 = vpop.f32.mrb[0].mxu0
  %v7055 = vpop.f32.mrb[0].mxu0
  %v7056 = vadd.f32 0.0, %v7055
  %v7057 = vpop.f32.mrb[0].mxu0
  %7058 = vmatprep.mubr.bf16.mxu0 0
  %7059 = vmatmul.mubr.bf16.gmra.mrb[0].mxu0 %v6974
  %v7060 = vpop.f32.mrb[0].mxu0
  %v7061 = vadd.f32 0.0, %v7060
  %v7062 = vpop.f32.mrb[0].mxu0
  %v7063 = vpop.f32.mrb[0].mxu0
  %v7064 = vadd.f32 0.0, %v7063
  %v7065 = vpop.f32.mrb[0].mxu0
  %7066 = vmatprep.mubr.bf16.mxu0 0
  %7067 = vmatmul.mubr.bf16.gmra.mrb[0].mxu0 %v6977
  %v7068 = vpop.f32.mrb[0].mxu0
  %v7069 = vadd.f32 0.0, %v7068
  %v7070 = vpop.f32.mrb[0].mxu0
  %v7071 = vpop.f32.mrb[0].mxu0
  %v7072 = vadd.f32 0.0, %v7071
  %v7073 = vpop.f32.mrb[0].mxu0
  %7074 = vmatprep.mubr.bf16.mxu0 0
  %7075 = vmatmul.mubr.bf16.gmra.mrb[0].mxu0 %v6980
  %v7076 = vpop.f32.mrb[0].mxu0
  %v7077 = vadd.f32 0.0, %v7076
  %v7078 = vpop.f32.mrb[0].mxu0
  %v7079 = vpop.f32.mrb[0].mxu0
  %v7080 = vadd.f32 0.0, %v7079
  %v7081 = vpop.f32.mrb[0].mxu0
  %7082 = vmatprep.mubr.bf16.mxu0 0
  %7083 = vmatmul.mubr.bf16.gmra.mrb[0].mxu0 %v6983
  %v7084 = vpop.f32.mrb[0].mxu0
  %v7085 = vadd.f32 0.0, %v7084
  %v7086 = vpop.f32.mrb[0].mxu0
  %v7087 = vpop.f32.mrb[0].mxu0
  %v7088 = vadd.f32 0.0, %v7087
  %v7089 = vpop.f32.mrb[0].mxu0
  %7090 = vmatprep.mubr.bf16.mxu0 0
  %7091 = vmatmul.mubr.bf16.gmra.mrb[0].mxu0 %v6986
  %v7092 = vpop.f32.mrb[0].mxu0
  %v7093 = vadd.f32 0.0, %v7092
  %v7094 = vpop.f32.mrb[0].mxu0
  %v7095 = vpop.f32.mrb[0].mxu0
  %v7096 = vadd.f32 0.0, %v7095
  %v7097 = vpop.f32.mrb[0].mxu0
  %7098 = vmatprep.mubr.bf16.mxu0 0
  %7099 = vmatmul.mubr.bf16.gmra.mrb[0].mxu0 %v6989
  %v7100 = vpop.f32.mrb[0].mxu0
  %v7101 = vadd.f32 0.0, %v7100
  %v7102 = vpop.f32.mrb[0].mxu0
  %v7103 = vpop.f32.mrb[0].mxu0
  %v7104 = vadd.f32 0.0, %v7103
  %v7105 = vpop.f32.mrb[0].mxu0
  %7106 = vmatprep.mubr.bf16.mxu0 0
  %7107 = vmatmul.mubr.bf16.gmra.mrb[0].mxu0 %v6992
  %v7108 = vpop.f32.mrb[0].mxu0
  %v7109 = vadd.f32 0.0, %v7108
  %v7110 = vpop.f32.mrb[0].mxu0
  %v7111 = vpop.f32.mrb[0].mxu0
  %v7112 = vpop.f32.mrb[0].mxu0
  %7113 = vdwg.mxu0
  %v7114 = vadd.f32 %v6646, %v7029
  %v7115 = vadd.f32 %v6647, %v7032
  %v7116 = vadd.f32 %v6648, %v7037
  %v7117 = vadd.f32 %v6649, %v7040
  %v7118 = vadd.f32 %v6650, %v7045
  %v7119 = vadd.f32 %v6651, %v7048
  %v7120 = vadd.f32 %v6652, %v7053
  %v7121 = vadd.f32 %v6653, %v7056
  %v7122 = vadd.f32 %v6654, %v7061
  %v7123 = vadd.f32 %v6655, %v7064
  %v7124 = vadd.f32 %v6656, %v7069
  %v7125 = vadd.f32 %v6657, %v7072
  %v7126 = vadd.f32 %v6658, %v7077
  %v7127 = vadd.f32 %v6659, %v7080
  %v7128 = vadd.f32 %v6660, %v7085
  %v7129 = vadd.f32 %v6661, %v7088
  %v7130 = vadd.f32 %v6662, %v7093
  %v7131 = vadd.f32 %v6663, %v7096
  %v7132 = vadd.f32 %v6664, %v7101
  %v7133 = vadd.f32 %v6665, %v7104
  %v7134 = vadd.f32 %v6666, %v7109
  %v7135 = vld [vmem:[%s0 + $0xa50] sm:$0xff]
  %v7136 = vld [vmem:[%s0 + $0xa58] sm:$0xff]
  %v7137 = vld [vmem:[%s0 + $0xa60] sm:$0xff]
  %v7138 = vld [vmem:[%s0 + $0xa68] sm:$0xff]
  %v7139 = vld [vmem:[%s0 + $0xa70] sm:$0xff]
  %v7140 = vld [vmem:[%s0 + $0xa78] sm:$0xff]
  %v7141 = vld [vmem:[%s0 + $0xa80] sm:$0xff]
  %v7142 = vld [vmem:[%s0 + $0xa88] sm:$0xff]
  %v7143 = vld [vmem:[%s0 + $0xa90] sm:$0xff]
  %v7144 = vld [vmem:[%s0 + $0xa98] sm:$0xff]
  %v7145 = vld [vmem:[%s0 + $0xaa0] sm:$0xff]
  %v7146 = vld [vmem:[%s0 + $0xaa8] sm:$0xff]
  %v7147 = vld [vmem:[%s0 + $0xab0] sm:$0xff]
  %v7148 = vld [vmem:[%s0 + $0xab8] sm:$0xff]
  %v7149 = vld [vmem:[%s0 + $0xac0] sm:$0xff]
  %v7150 = vld [vmem:[%s0 + $0xac8] sm:$0xff]
  %v7151 = vld [vmem:[%s0 + $0xad0] sm:$0xff]
  %v7152 = vld [vmem:[%s0 + $0xad8] sm:$0xff]
  %v7153 = vld [vmem:[%s0 + $0xae0] sm:$0xff]
  %v7154 = vld [vmem:[%s0 + $0xae8] sm:$0xff]
  %v7155 = vld [vmem:[%s0 + $0xaf0] sm:$0xff]
  %v7156 = vld [vmem:[%s0 + $0xaf8] sm:$0xff]
  %v7179 = vunpack.c.l.b16 %v7135
  %v7180 = vunpack.c.h.b16 %v7135
  %v7181 = vunpack.c.l.b16 %v7136
  %v7182 = vunpack.c.h.b16 %v7136
  %v7183 = vunpack.c.l.b16 %v7137
  %v7184 = vunpack.c.h.b16 %v7137
  %v7185 = vunpack.c.l.b16 %v7138
  %v7186 = vunpack.c.h.b16 %v7138
  %v7187 = vunpack.c.l.b16 %v7139
  %v7188 = vunpack.c.h.b16 %v7139
  %v7189 = vunpack.c.l.b16 %v7140
  %v7190 = vunpack.c.h.b16 %v7140
  %v7191 = vunpack.c.l.b16 %v7141
  %v7192 = vunpack.c.h.b16 %v7141
  %v7193 = vunpack.c.l.b16 %v7142
  %v7194 = vunpack.c.h.b16 %v7142
  %v7195 = vunpack.c.l.b16 %v7143
  %v7196 = vunpack.c.h.b16 %v7143
  %v7197 = vunpack.c.l.b16 %v7144
  %v7198 = vunpack.c.h.b16 %v7144
  %v7199 = vunpack.c.l.b16 %v7145
  %v7200 = vunpack.c.h.b16 %v7145
  %v7201 = vunpack.c.l.b16 %v7146
  %v7202 = vunpack.c.h.b16 %v7146
  %v7203 = vunpack.c.l.b16 %v7147
  %v7204 = vunpack.c.h.b16 %v7147
  %v7205 = vunpack.c.l.b16 %v7148
  %v7206 = vunpack.c.h.b16 %v7148
  %v7207 = vunpack.c.l.b16 %v7149
  %v7208 = vunpack.c.h.b16 %v7149
  %v7209 = vunpack.c.l.b16 %v7150
  %v7210 = vunpack.c.h.b16 %v7150
  %v7211 = vunpack.c.l.b16 %v7151
  %v7212 = vunpack.c.h.b16 %v7151
  %v7213 = vunpack.c.l.b16 %v7152
  %v7214 = vunpack.c.h.b16 %v7152
  %v7215 = vunpack.c.l.b16 %v7153
  %v7216 = vunpack.c.h.b16 %v7153
  %v7217 = vunpack.c.l.b16 %v7154
  %v7218 = vunpack.c.h.b16 %v7154
  %v7219 = vunpack.c.l.b16 %v7155
  %v7220 = vunpack.c.h.b16 %v7155
  %v7221 = vunpack.c.l.b16 %v7156
  %v7222 = vunpack.c.h.b16 %v7156
  %v7223 = vpack.c.b16 %v7181, %v7179
  %v7224 = vpack.c.b16 %v7182, %v7180
  %v7225 = vpack.c.b16 %v7185, %v7183
  %v7226 = vpack.c.b16 %v7186, %v7184
  %v7227 = vpack.c.b16 %v7189, %v7187
  %v7228 = vpack.c.b16 %v7190, %v7188
  %v7229 = vpack.c.b16 %v7193, %v7191
  %v7230 = vpack.c.b16 %v7194, %v7192
  %v7231 = vpack.c.b16 %v7197, %v7195
  %v7232 = vpack.c.b16 %v7198, %v7196
  %v7233 = vpack.c.b16 %v7201, %v7199
  %v7234 = vpack.c.b16 %v7202, %v7200
  %v7235 = vpack.c.b16 %v7205, %v7203
  %v7236 = vpack.c.b16 %v7206, %v7204
  %v7237 = vpack.c.b16 %v7209, %v7207
  %v7238 = vpack.c.b16 %v7210, %v7208
  %v7239 = vpack.c.b16 %v7213, %v7211
  %v7240 = vpack.c.b16 %v7214, %v7212
  %v7241 = vpack.c.b16 %v7217, %v7215
  %v7242 = vpack.c.b16 %v7218, %v7216
  %v7243 = vpack.c.b16 %v7221, %v7219
  %v7244 = vpack.c.b16 %v7222, %v7220
  %7267 = vmatprep.subr.bf16.mxu0 0
  %7268 = vmatpush1.bf16.msra.mxu0 %v256
  %7269 = vmatprep.subr.bf16.mxu0 0
  %7270 = vmatpush1.bf16.msra.mxu0 %v257
  %7271 = vmatprep.subr.bf16.mxu0 0
  %7272 = vmatpush1.bf16.msra.mxu0 %v258
  %7273 = vmatprep.subr.bf16.mxu0 0
  %7274 = vmatpush1.bf16.msra.mxu0 %v259
  %7275 = vmatprep.subr.bf16.mxu0 0
  %7276 = vmatpush1.bf16.msra.mxu0 %v260
  %7277 = vmatprep.subr.bf16.mxu0 0
  %7278 = vmatpush1.bf16.msra.mxu0 %v261
  %7279 = vmatprep.subr.bf16.mxu0 0
  %7280 = vmatpush1.bf16.msra.mxu0 %v262
  %7281 = vmatprep.subr.bf16.mxu0 0
  %7282 = vmatpush1.bf16.msra.mxu0 %v263
  %7283 = vmatprep.subr.bf16.mxu0 0
  %7284 = vmatpush1.bf16.msra.mxu0 %v264
  %7285 = vmatprep.subr.bf16.mxu0 0
  %7286 = vmatpush1.bf16.msra.mxu0 %v265
  %7287 = vmatprep.subr.bf16.mxu0 0
  %7288 = vmatpush1.bf16.msra.mxu0 %v266
  %7289 = vmatprep.subr.bf16.mxu0 0
  %7290 = vmatpush1.bf16.msra.mxu0 %v267
  %7291 = vmatprep.subr.bf16.mxu0 0
  %7292 = vmatpush1.bf16.msra.mxu0 %v268
  %7293 = vmatprep.subr.bf16.mxu0 0
  %7294 = vmatpush1.bf16.msra.mxu0 %v269
  %7295 = vmatprep.subr.bf16.mxu0 0
  %7296 = vmatpush1.bf16.msra.mxu0 %v270
  %7297 = vmatprep.subr.bf16.mxu0 0
  %7298 = vmatpush1.bf16.msra.mxu0 %v271
  %7299 = vmatprep.mubr.bf16.mxu0 %v7224
  %7300 = vmatmul.mubr.bf16.gmra.mrb[0].mxu0 %v7223
  %v7301 = vpop.f32.mrb[0].mxu0
  %v7302 = vadd.f32 %v80, %v7301
  %v7303 = vpop.f32.mrb[0].mxu0
  %v7304 = vpop.f32.mrb[0].mxu0
  %v7305 = vadd.f32 %v80, %v7304
  %v7306 = vpop.f32.mrb[0].mxu0
  %7307 = vmatprep.mubr.bf16.mxu0 %v7226
  %7308 = vmatmul.mubr.bf16.gmra.mrb[0].mxu0 %v7225
  %v7309 = vpop.f32.mrb[0].mxu0
  %v7310 = vadd.f32 %v80, %v7309
  %v7311 = vpop.f32.mrb[0].mxu0
  %v7312 = vpop.f32.mrb[0].mxu0
  %v7313 = vadd.f32 %v80, %v7312
  %v7314 = vpop.f32.mrb[0].mxu0
  %7315 = vmatprep.mubr.bf16.mxu0 %v7228
  %7316 = vmatmul.mubr.bf16.gmra.mrb[0].mxu0 %v7227
  %v7317 = vpop.f32.mrb[0].mxu0
  %v7318 = vadd.f32 %v80, %v7317
  %v7319 = vpop.f32.mrb[0].mxu0
  %v7320 = vpop.f32.mrb[0].mxu0
  %v7321 = vadd.f32 %v80, %v7320
  %v7322 = vpop.f32.mrb[0].mxu0
  %7323 = vmatprep.mubr.bf16.mxu0 %v7230
  %7324 = vmatmul.mubr.bf16.gmra.mrb[0].mxu0 %v7229
  %v7325 = vpop.f32.mrb[0].mxu0
  %v7326 = vadd.f32 %v80, %v7325
  %v7327 = vpop.f32.mrb[0].mxu0
  %v7328 = vpop.f32.mrb[0].mxu0
  %v7329 = vadd.f32 %v80, %v7328
  %v7330 = vpop.f32.mrb[0].mxu0
  %7331 = vmatprep.mubr.bf16.mxu0 %v7232
  %7332 = vmatmul.mubr.bf16.gmra.mrb[0].mxu0 %v7231
  %v7333 = vpop.f32.mrb[0].mxu0
  %v7334 = vadd.f32 %v80, %v7333
  %v7335 = vpop.f32.mrb[0].mxu0
  %v7336 = vpop.f32.mrb[0].mxu0
  %v7337 = vadd.f32 %v80, %v7336
  %v7338 = vpop.f32.mrb[0].mxu0
  %7339 = vmatprep.mubr.bf16.mxu0 %v7234
  %7340 = vmatmul.mubr.bf16.gmra.mrb[0].mxu0 %v7233
  %v7341 = vpop.f32.mrb[0].mxu0
  %v7342 = vadd.f32 %v80, %v7341
  %v7343 = vpop.f32.mrb[0].mxu0
  %v7344 = vpop.f32.mrb[0].mxu0
  %v7345 = vadd.f32 %v80, %v7344
  %v7346 = vpop.f32.mrb[0].mxu0
  %7347 = vmatprep.mubr.bf16.mxu0 %v7236
  %7348 = vmatmul.mubr.bf16.gmra.mrb[0].mxu0 %v7235
  %v7349 = vpop.f32.mrb[0].mxu0
  %v7350 = vadd.f32 %v80, %v7349
  %v7351 = vpop.f32.mrb[0].mxu0
  %v7352 = vpop.f32.mrb[0].mxu0
  %v7353 = vadd.f32 %v80, %v7352
  %v7354 = vpop.f32.mrb[0].mxu0
  %7355 = vmatprep.mubr.bf16.mxu0 %v7238
  %7356 = vmatmul.mubr.bf16.gmra.mrb[0].mxu0 %v7237
  %v7357 = vpop.f32.mrb[0].mxu0
  %v7358 = vadd.f32 %v80, %v7357
  %v7359 = vpop.f32.mrb[0].mxu0
  %v7360 = vpop.f32.mrb[0].mxu0
  %v7361 = vadd.f32 %v80, %v7360
  %v7362 = vpop.f32.mrb[0].mxu0
  %7363 = vmatprep.mubr.bf16.mxu0 %v7240
  %7364 = vmatmul.mubr.bf16.gmra.mrb[0].mxu0 %v7239
  %v7365 = vpop.f32.mrb[0].mxu0
  %v7366 = vadd.f32 %v80, %v7365
  %v7367 = vpop.f32.mrb[0].mxu0
  %v7368 = vpop.f32.mrb[0].mxu0
  %v7369 = vadd.f32 %v80, %v7368
  %v7370 = vpop.f32.mrb[0].mxu0
  %7371 = vmatprep.mubr.bf16.mxu0 %v7242
  %7372 = vmatmul.mubr.bf16.gmra.mrb[0].mxu0 %v7241
  %v7373 = vpop.f32.mrb[0].mxu0
  %v7374 = vadd.f32 %v80, %v7373
  %v7375 = vpop.f32.mrb[0].mxu0
  %v7376 = vpop.f32.mrb[0].mxu0
  %v7377 = vadd.f32 %v80, %v7376
  %v7378 = vpop.f32.mrb[0].mxu0
  %7379 = vmatprep.mubr.bf16.mxu0 %v7244
  %7380 = vmatmul.mubr.bf16.gmra.mrb[0].mxu0 %v7243
  %v7381 = vpop.f32.mrb[0].mxu0
  %v7382 = vadd.f32 %v80, %v7381
  %v7383 = vpop.f32.mrb[0].mxu0
  %v7384 = vpop.f32.mrb[0].mxu0
  %v7385 = vadd.f32 %v80, %v7384
  %v7386 = vpop.f32.mrb[0].mxu0
  %7387 = vdwg.mxu0
  %v7388 = vmax.f32 %v7302, 0.0
  %v7389 = vmax.f32 %v7305, 0.0
  %v7390 = vmax.f32 %v7310, 0.0
  %v7391 = vmax.f32 %v7313, 0.0
  %v7392 = vmax.f32 %v7318, 0.0
  %v7393 = vmax.f32 %v7321, 0.0
  %v7394 = vmax.f32 %v7326, 0.0
  %v7395 = vmax.f32 %v7329, 0.0
  %v7396 = vmax.f32 %v7334, 0.0
  %v7397 = vmax.f32 %v7337, 0.0
  %v7398 = vmax.f32 %v7342, 0.0
  %v7399 = vmax.f32 %v7345, 0.0
  %v7400 = vmax.f32 %v7350, 0.0
  %v7401 = vmax.f32 %v7353, 0.0
  %v7402 = vmax.f32 %v7358, 0.0
  %v7403 = vmax.f32 %v7361, 0.0
  %v7404 = vmax.f32 %v7366, 0.0
  %v7405 = vmax.f32 %v7369, 0.0
  %v7406 = vmax.f32 %v7374, 0.0
  %v7407 = vmax.f32 %v7377, 0.0
  %v7408 = vmax.f32 %v7382, 0.0
  %v7409 = vmax.f32 %v7385, 0.0
  %v7410 = vpack.c.bf16 %v7389, %v7388
  %v7411 = vpack.c.bf16 %v7391, %v7390
  %v7412 = vpack.c.bf16 %v7393, %v7392
  %v7413 = vpack.c.bf16 %v7395, %v7394
  %v7414 = vpack.c.bf16 %v7397, %v7396
  %v7415 = vpack.c.bf16 %v7399, %v7398
  %v7416 = vpack.c.bf16 %v7401, %v7400
  %v7417 = vpack.c.bf16 %v7403, %v7402
  %v7418 = vpack.c.bf16 %v7405, %v7404
  %v7419 = vpack.c.bf16 %v7407, %v7406
  %v7420 = vpack.c.bf16 %v7409, %v7408
  %v7421 = vld [vmem:[%s3 + $0x78] sm:$0xf]
  %v7422 = vld [vmem:[%s3 + $0x7c] sm:$0xf]
  %v7425 = vunpack.c.l.b16 %v7421
  %v7426 = vunpack.c.l.b16 %v7422
  %v7427 = vpack.c.b16 %v7426, %v7425
  %v7430 = vsel %vm738, %v7410, 0
  %v7433 = vsel %vm738, %v7411, 0
  %v7436 = vsel %vm738, %v7412, 0
  %v7439 = vsel %vm738, %v7413, 0
  %v7442 = vsel %vm738, %v7414, 0
  %v7445 = vsel %vm738, %v7415, 0
  %v7448 = vsel %vm738, %v7416, 0
  %v7451 = vsel %vm738, %v7417, 0
  %v7454 = vsel %vm738, %v7418, 0
  %v7457 = vsel %vm738, %v7419, 0
  %v7460 = vsel %vm738, %v7420, 0
  %7462 = vmatprep.subr.bf16.mxu0 0
  %7463 = vmatpush1.bf16.msra.mxu0 %v7427
  %7464 = vmatprep.subr.bf16.mxu0 0
  %7465 = vmatpush1.bf16.msra.mxu0 0
  %7466 = vmatprep.subr.bf16.mxu0 0
  %7467 = vmatpush1.bf16.msra.mxu0 0
  %7468 = vmatprep.subr.bf16.mxu0 0
  %7469 = vmatpush1.bf16.msra.mxu0 0
  %7470 = vmatprep.subr.bf16.mxu0 0
  %7471 = vmatpush1.bf16.msra.mxu0 0
  %7472 = vmatprep.subr.bf16.mxu0 0
  %7473 = vmatpush1.bf16.msra.mxu0 0
  %7474 = vmatprep.subr.bf16.mxu0 0
  %7475 = vmatpush1.bf16.msra.mxu0 0
  %7476 = vmatprep.subr.bf16.mxu0 0
  %7477 = vmatpush1.bf16.msra.mxu0 0
  %7478 = vmatprep.subr.bf16.mxu0 0
  %7479 = vmatpush1.bf16.msra.mxu0 0
  %7480 = vmatprep.subr.bf16.mxu0 0
  %7481 = vmatpush1.bf16.msra.mxu0 0
  %7482 = vmatprep.subr.bf16.mxu0 0
  %7483 = vmatpush1.bf16.msra.mxu0 0
  %7484 = vmatprep.subr.bf16.mxu0 0
  %7485 = vmatpush1.bf16.msra.mxu0 0
  %7486 = vmatprep.subr.bf16.mxu0 0
  %7487 = vmatpush1.bf16.msra.mxu0 0
  %7488 = vmatprep.subr.bf16.mxu0 0
  %7489 = vmatpush1.bf16.msra.mxu0 0
  %7490 = vmatprep.subr.bf16.mxu0 0
  %7491 = vmatpush1.bf16.msra.mxu0 0
  %7492 = vmatprep.subr.bf16.mxu0 0
  %7493 = vmatpush1.bf16.msra.mxu0 0
  %7494 = vmatprep.mubr.bf16.mxu0 0
  %7495 = vmatmul.mubr.bf16.gmra.mrb[0].mxu0 %v7430
  %v7496 = vpop.f32.mrb[0].mxu0
  %v7497 = vadd.f32 0.0, %v7496
  %v7498 = vpop.f32.mrb[0].mxu0
  %v7499 = vpop.f32.mrb[0].mxu0
  %v7500 = vadd.f32 0.0, %v7499
  %v7501 = vpop.f32.mrb[0].mxu0
  %7502 = vmatprep.mubr.bf16.mxu0 0
  %7503 = vmatmul.mubr.bf16.gmra.mrb[0].mxu0 %v7433
  %v7504 = vpop.f32.mrb[0].mxu0
  %v7505 = vadd.f32 0.0, %v7504
  %v7506 = vpop.f32.mrb[0].mxu0
  %v7507 = vpop.f32.mrb[0].mxu0
  %v7508 = vadd.f32 0.0, %v7507
  %v7509 = vpop.f32.mrb[0].mxu0
  %7510 = vmatprep.mubr.bf16.mxu0 0
  %7511 = vmatmul.mubr.bf16.gmra.mrb[0].mxu0 %v7436
  %v7512 = vpop.f32.mrb[0].mxu0
  %v7513 = vadd.f32 0.0, %v7512
  %v7514 = vpop.f32.mrb[0].mxu0
  %v7515 = vpop.f32.mrb[0].mxu0
  %v7516 = vadd.f32 0.0, %v7515
  %v7517 = vpop.f32.mrb[0].mxu0
  %7518 = vmatprep.mubr.bf16.mxu0 0
  %7519 = vmatmul.mubr.bf16.gmra.mrb[0].mxu0 %v7439
  %v7520 = vpop.f32.mrb[0].mxu0
  %v7521 = vadd.f32 0.0, %v7520
  %v7522 = vpop.f32.mrb[0].mxu0
  %v7523 = vpop.f32.mrb[0].mxu0
  %v7524 = vadd.f32 0.0, %v7523
  %v7525 = vpop.f32.mrb[0].mxu0
  %7526 = vmatprep.mubr.bf16.mxu0 0
  %7527 = vmatmul.mubr.bf16.gmra.mrb[0].mxu0 %v7442
  %v7528 = vpop.f32.mrb[0].mxu0
  %v7529 = vadd.f32 0.0, %v7528
  %v7530 = vpop.f32.mrb[0].mxu0
  %v7531 = vpop.f32.mrb[0].mxu0
  %v7532 = vadd.f32 0.0, %v7531
  %v7533 = vpop.f32.mrb[0].mxu0
  %7534 = vmatprep.mubr.bf16.mxu0 0
  %7535 = vmatmul.mubr.bf16.gmra.mrb[0].mxu0 %v7445
  %v7536 = vpop.f32.mrb[0].mxu0
  %v7537 = vadd.f32 0.0, %v7536
  %v7538 = vpop.f32.mrb[0].mxu0
  %v7539 = vpop.f32.mrb[0].mxu0
  %v7540 = vadd.f32 0.0, %v7539
  %v7541 = vpop.f32.mrb[0].mxu0
  %7542 = vmatprep.mubr.bf16.mxu0 0
  %7543 = vmatmul.mubr.bf16.gmra.mrb[0].mxu0 %v7448
  %v7544 = vpop.f32.mrb[0].mxu0
  %v7545 = vadd.f32 0.0, %v7544
  %v7546 = vpop.f32.mrb[0].mxu0
  %v7547 = vpop.f32.mrb[0].mxu0
  %v7548 = vadd.f32 0.0, %v7547
  %v7549 = vpop.f32.mrb[0].mxu0
  %7550 = vmatprep.mubr.bf16.mxu0 0
  %7551 = vmatmul.mubr.bf16.gmra.mrb[0].mxu0 %v7451
  %v7552 = vpop.f32.mrb[0].mxu0
  %v7553 = vadd.f32 0.0, %v7552
  %v7554 = vpop.f32.mrb[0].mxu0
  %v7555 = vpop.f32.mrb[0].mxu0
  %v7556 = vadd.f32 0.0, %v7555
  %v7557 = vpop.f32.mrb[0].mxu0
  %7558 = vmatprep.mubr.bf16.mxu0 0
  %7559 = vmatmul.mubr.bf16.gmra.mrb[0].mxu0 %v7454
  %v7560 = vpop.f32.mrb[0].mxu0
  %v7561 = vadd.f32 0.0, %v7560
  %v7562 = vpop.f32.mrb[0].mxu0
  %v7563 = vpop.f32.mrb[0].mxu0
  %v7564 = vadd.f32 0.0, %v7563
  %v7565 = vpop.f32.mrb[0].mxu0
  %7566 = vmatprep.mubr.bf16.mxu0 0
  %7567 = vmatmul.mubr.bf16.gmra.mrb[0].mxu0 %v7457
  %v7568 = vpop.f32.mrb[0].mxu0
  %v7569 = vadd.f32 0.0, %v7568
  %v7570 = vpop.f32.mrb[0].mxu0
  %v7571 = vpop.f32.mrb[0].mxu0
  %v7572 = vadd.f32 0.0, %v7571
  %v7573 = vpop.f32.mrb[0].mxu0
  %7574 = vmatprep.mubr.bf16.mxu0 0
  %7575 = vmatmul.mubr.bf16.gmra.mrb[0].mxu0 %v7460
  %v7576 = vpop.f32.mrb[0].mxu0
  %v7577 = vadd.f32 0.0, %v7576
  %v7578 = vpop.f32.mrb[0].mxu0
  %v7579 = vpop.f32.mrb[0].mxu0
  %v7580 = vpop.f32.mrb[0].mxu0
  %7581 = vdwg.mxu0
  %v7582 = vadd.f32 %v7114, %v7497
  %v7583 = vadd.f32 %v7115, %v7500
  %v7584 = vadd.f32 %v7116, %v7505
  %v7585 = vadd.f32 %v7117, %v7508
  %v7586 = vadd.f32 %v7118, %v7513
  %v7587 = vadd.f32 %v7119, %v7516
  %v7588 = vadd.f32 %v7120, %v7521
  %v7589 = vadd.f32 %v7121, %v7524
  %v7590 = vadd.f32 %v7122, %v7529
  %v7591 = vadd.f32 %v7123, %v7532
  %v7592 = vadd.f32 %v7124, %v7537
  %v7593 = vadd.f32 %v7125, %v7540
  %v7594 = vadd.f32 %v7126, %v7545
  %v7595 = vadd.f32 %v7127, %v7548
  %v7596 = vadd.f32 %v7128, %v7553
  %v7597 = vadd.f32 %v7129, %v7556
  %v7598 = vadd.f32 %v7130, %v7561
  %v7599 = vadd.f32 %v7131, %v7564
  %v7600 = vadd.f32 %v7132, %v7569
  %v7601 = vadd.f32 %v7133, %v7572
  %v7602 = vadd.f32 %v7134, %v7577
  %v7603 = vld [vmem:[%s4] sm:$0x1]
  %v7605 = vlaneseq
  %v7606 = vshrl.u32 %v7605, 7
  %v7607 = vsub.s32 0, %v7606
  %v7608 = vrot.slane %v7603, %v7607
  %v7610 = vadd.f32 %v7582, %v7608
  %v7611 = vadd.f32 %v7583, %v7608
  %v7612 = vadd.f32 %v7584, %v7608
  %v7613 = vadd.f32 %v7585, %v7608
  %v7614 = vadd.f32 %v7586, %v7608
  %v7615 = vadd.f32 %v7587, %v7608
  %v7616 = vadd.f32 %v7588, %v7608
  %v7617 = vadd.f32 %v7589, %v7608
  %v7618 = vadd.f32 %v7590, %v7608
  %v7619 = vadd.f32 %v7591, %v7608
  %v7620 = vadd.f32 %v7592, %v7608
  %v7621 = vadd.f32 %v7593, %v7608
  %v7622 = vadd.f32 %v7594, %v7608
  %v7623 = vadd.f32 %v7595, %v7608
  %v7624 = vadd.f32 %v7596, %v7608
  %v7625 = vadd.f32 %v7597, %v7608
  %v7626 = vadd.f32 %v7598, %v7608
  %v7627 = vadd.f32 %v7599, %v7608
  %v7628 = vadd.f32 %v7600, %v7608
  %v7629 = vadd.f32 %v7601, %v7608
  %v7630 = vadd.f32 %v7602, %v7608
  %v7631 = vmax.f32 %v7610, 0.0
  %v7632 = vmax.f32 %v7611, 0.0
  %v7633 = vmax.f32 %v7612, 0.0
  %v7634 = vmax.f32 %v7613, 0.0
  %v7635 = vmax.f32 %v7614, 0.0
  %v7636 = vmax.f32 %v7615, 0.0
  %v7637 = vmax.f32 %v7616, 0.0
  %v7638 = vmax.f32 %v7617, 0.0
  %v7639 = vmax.f32 %v7618, 0.0
  %v7640 = vmax.f32 %v7619, 0.0
  %v7641 = vmax.f32 %v7620, 0.0
  %v7642 = vmax.f32 %v7621, 0.0
  %v7643 = vmax.f32 %v7622, 0.0
  %v7644 = vmax.f32 %v7623, 0.0
  %v7645 = vmax.f32 %v7624, 0.0
  %v7646 = vmax.f32 %v7625, 0.0
  %v7647 = vmax.f32 %v7626, 0.0
  %v7648 = vmax.f32 %v7627, 0.0
  %v7649 = vmax.f32 %v7628, 0.0
  %v7650 = vmax.f32 %v7629, 0.0
  %v7651 = vmax.f32 %v7630, 0.0
  %v7652 = vpack.c.bf16 %v7632, %v7631
  %v7653 = vpack.c.bf16 %v7634, %v7633
  %v7654 = vpack.c.bf16 %v7636, %v7635
  %v7655 = vpack.c.bf16 %v7638, %v7637
  %v7656 = vpack.c.bf16 %v7640, %v7639
  %v7657 = vpack.c.bf16 %v7642, %v7641
  %v7658 = vpack.c.bf16 %v7644, %v7643
  %v7659 = vpack.c.bf16 %v7646, %v7645
  %v7660 = vpack.c.bf16 %v7648, %v7647
  %v7661 = vpack.c.bf16 %v7650, %v7649
  %v7662 = vpack.c.bf16 %v7651, %v7651
  %v7674 = vunpack.c.l.b16 %v7652
  %v7675 = vunpack.c.h.b16 %v7652
  %v7676 = vunpack.c.l.b16 %v7653
  %v7677 = vunpack.c.h.b16 %v7653
  %v7678 = vunpack.c.l.b16 %v7654
  %v7679 = vunpack.c.h.b16 %v7654
  %v7680 = vunpack.c.l.b16 %v7655
  %v7681 = vunpack.c.h.b16 %v7655
  %v7682 = vunpack.c.l.b16 %v7656
  %v7683 = vunpack.c.h.b16 %v7656
  %v7684 = vunpack.c.l.b16 %v7657
  %v7685 = vunpack.c.h.b16 %v7657
  %v7686 = vunpack.c.l.b16 %v7658
  %v7687 = vunpack.c.h.b16 %v7658
  %v7688 = vunpack.c.l.b16 %v7659
  %v7689 = vunpack.c.h.b16 %v7659
  %v7690 = vunpack.c.l.b16 %v7660
  %v7691 = vunpack.c.h.b16 %v7660
  %v7692 = vunpack.c.l.b16 %v7661
  %v7693 = vunpack.c.h.b16 %v7661
  %v7694 = vunpack.c.l.b16 %v7662
  %v7695 = vpack.c.b16 %v7674, %v7674
  %v7696 = vpack.c.b16 %v7675, %v7675
  %v7697 = vpack.c.b16 %v7676, %v7676
  %v7698 = vpack.c.b16 %v7677, %v7677
  %v7699 = vpack.c.b16 %v7678, %v7678
  %v7700 = vpack.c.b16 %v7679, %v7679
  %v7701 = vpack.c.b16 %v7680, %v7680
  %v7702 = vpack.c.b16 %v7681, %v7681
  %v7703 = vpack.c.b16 %v7682, %v7682
  %v7704 = vpack.c.b16 %v7683, %v7683
  %v7705 = vpack.c.b16 %v7684, %v7684
  %v7706 = vpack.c.b16 %v7685, %v7685
  %v7707 = vpack.c.b16 %v7686, %v7686
  %v7708 = vpack.c.b16 %v7687, %v7687
  %v7709 = vpack.c.b16 %v7688, %v7688
  %v7710 = vpack.c.b16 %v7689, %v7689
  %v7711 = vpack.c.b16 %v7690, %v7690
  %v7712 = vpack.c.b16 %v7691, %v7691
  %v7713 = vpack.c.b16 %v7692, %v7692
  %v7714 = vpack.c.b16 %v7693, %v7693
  %v7715 = vpack.c.b16 %v7694, %v7694
  %vm7737 = vcmask 257024
  %7738 = vst.msk [vmem:[%s5] sm:$0xf] %vm7737, %v7695
  %7739 = vst.msk [vmem:[%s5 + $0x4] sm:$0xf] %vm7737, %v7696
  %7740 = vst.msk [vmem:[%s5 + $0x8] sm:$0xf] %vm7737, %v7697
  %7741 = vst.msk [vmem:[%s5 + $0xc] sm:$0xf] %vm7737, %v7698
  %7742 = vst.msk [vmem:[%s5 + $0x10] sm:$0xf] %vm7737, %v7699
  %7743 = vst.msk [vmem:[%s5 + $0x14] sm:$0xf] %vm7737, %v7700
  %7744 = vst.msk [vmem:[%s5 + $0x18] sm:$0xf] %vm7737, %v7701
  %7745 = vst.msk [vmem:[%s5 + $0x1c] sm:$0xf] %vm7737, %v7702
  %7746 = vst.msk [vmem:[%s5 + $0x20] sm:$0xf] %vm7737, %v7703
  %7747 = vst.msk [vmem:[%s5 + $0x24] sm:$0xf] %vm7737, %v7704
  %7748 = vst.msk [vmem:[%s5 + $0x28] sm:$0xf] %vm7737, %v7705
  %7749 = vst.msk [vmem:[%s5 + $0x2c] sm:$0xf] %vm7737, %v7706
  %7750 = vst.msk [vmem:[%s5 + $0x30] sm:$0xf] %vm7737, %v7707
  %7751 = vst.msk [vmem:[%s5 + $0x34] sm:$0xf] %vm7737, %v7708
  %7752 = vst.msk [vmem:[%s5 + $0x38] sm:$0xf] %vm7737, %v7709
  %7753 = vst.msk [vmem:[%s5 + $0x3c] sm:$0xf] %vm7737, %v7710
  %7754 = vst.msk [vmem:[%s5 + $0x40] sm:$0xf] %vm7737, %v7711
  %7755 = vst.msk [vmem:[%s5 + $0x44] sm:$0xf] %vm7737, %v7712
  %7756 = vst.msk [vmem:[%s5 + $0x48] sm:$0xf] %vm7737, %v7713
  %7757 = vst.msk [vmem:[%s5 + $0x4c] sm:$0xf] %vm7737, %v7714
  %vm7758 = vcmask 253952
  %7759 = vst.msk [vmem:[%s5 + $0x50] sm:$0x1] %vm7758, %v7715
  // Predicated region
  $region22: #{dqn_forward.2} parent=0 // pred_check
    _
  $region23: #{dqn_forward.2} parent=0 // pred_check_branch
    %7761 = sbr.rel (0) target = $region25
  $region24: #{dqn_forward.2} parent=0 // pred_region
    _
  $region25: #{dqn_forward.2} parent=0 // pred_fallthru
    _
  // Predicated region
  $region26: #{dqn_forward.2} parent=0 // pred_check
    _
  $region27: #{dqn_forward.2} parent=0 // pred_check_branch
    %7763 = sbr.rel (0) target = $region29
  $region28: #{dqn_forward.2} parent=0 // pred_region
    _
  $region29: #{dqn_forward.2} parent=0 // pred_fallthru
    _

</llo_original>
